<compile_context>
chip_gen: v7x
topology: tpu7x:2x2x1
jax: 0.10.0
libtpu: 0.0.40
codegen_flags: <defaults>
</compile_context>

<pallas_src>
import jax
import jax.numpy as jnp
from jax.experimental import pallas as pl
from jax.experimental.pallas import tpu as pltpu

T_CHUNK = 16   # timesteps processed per grid step of the recurrence kernel
LANE = 128     # per-gate width is padded to a multiple of this for lane-aligned gate slices


# --------------------------- fused bi-LSTM chunk kernel --------------------------- #

def _bilstm_chunk_kernel(lens_ref, xf_ref, xb_ref, wih_ref, whh_ref, b_ref,
                         yf_ref, yb_ref,
                         gf_scr, gb_scr, hf_scr, cf_scr, hb_scr, cb_scr):
    """One grid step = forward chunk c and backward chunk nc-1-c, interleaved.

    lens_ref: (B, 1)      int32  sequence lengths (packed-sequence validity)
    xf_ref:   (tc*B, D)   bf16   embeddings, forward time-chunk (time-major rows)
    xb_ref:   (tc*B, D)   bf16   embeddings, backward time-chunk
    wih_ref:  (2, D, 4Hp) bf16   input weights (gate columns lane-aligned, dir 0=fwd, 1=bwd)
    whh_ref:  (2, Hp, 4Hp)bf16   recurrent weights
    b_ref:    (2, 1, 4Hp) f32    b_ih + b_hh
    yf_ref:   (tc, B, Hp) bf16   forward outputs for this chunk
    yb_ref:   (tc, B, Hp) bf16   backward outputs for this chunk
    gf/gb_scr:(tc, B, 4Hp) f32   fused input-projection results (VMEM only, never HBM)
    h*/c*_scr:(B, Hp)     f32    per-direction carries, persistent across grid steps
    """
    c = pl.program_id(0)
    nc = pl.num_programs(0)
    tc, B, G4 = gf_scr.shape
    Hp = hf_scr.shape[-1]

    @pl.when(c == 0)
    def _():
        hf_scr[...] = jnp.zeros_like(hf_scr)
        cf_scr[...] = jnp.zeros_like(cf_scr)
        hb_scr[...] = jnp.zeros_like(hb_scr)
        cb_scr[...] = jnp.zeros_like(cb_scr)

    # ---- fused, time-parallel input projection for this chunk (one MXU matmul / direction) ----
    gates_f = jnp.dot(xf_ref[...], wih_ref[0], preferred_element_type=jnp.float32) + b_ref[0]
    gates_b = jnp.dot(xb_ref[...], wih_ref[1], preferred_element_type=jnp.float32) + b_ref[1]
    for j in range(tc):                         # static scatter into per-timestep scratch tiles
        gf_scr[j] = gates_f[j * B:(j + 1) * B]
        gb_scr[j] = gates_b[j * B:(j + 1) * B]

    lens = lens_ref[...]                        # (B, 1) int32
    t0_f = c * tc                               # global time offset of the forward chunk
    t0_b = (nc - 1 - c) * tc                    # global time offset of the backward chunk

    def act(g):
        # torch gate order i, f, g, o; each slice is 128-lane aligned (Hp % 128 == 0).
        i = jax.nn.sigmoid(g[:, 0 * Hp:1 * Hp])
        f = jax.nn.sigmoid(g[:, 1 * Hp:2 * Hp])
        gg = jnp.tanh(g[:, 2 * Hp:3 * Hp])
        o = jax.nn.sigmoid(g[:, 3 * Hp:4 * Hp])
        return i, f, gg, o

    def cell(j, carry):
        jb = tc - 1 - j
        hf_prev, cf_prev = hf_scr[...], cf_scr[...]
        hb_prev, cb_prev = hb_scr[...], cb_scr[...]
        # Two independent (B,Hp)x(Hp,4Hp) recurrent matmuls back-to-back: the fwd and bwd chains
        # are independent, so MXU / EUP pipelines overlap across them (latency-bound cell).
        gf = gf_scr[j] + jnp.dot(hf_prev.astype(jnp.bfloat16), whh_ref[0],
                                 preferred_element_type=jnp.float32)
        gb = gb_scr[jb] + jnp.dot(hb_prev.astype(jnp.bfloat16), whh_ref[1],
                                  preferred_element_type=jnp.float32)
        i_f, f_f, g_f, o_f = act(gf)
        i_b, f_b, g_b, o_b = act(gb)
        cf_new = f_f * cf_prev + i_f * g_f
        cb_new = f_b * cb_prev + i_b * g_b
        hf_new = o_f * jnp.tanh(cf_new)
        hb_new = o_b * jnp.tanh(cb_new)
        mf = (t0_f + j) < lens                  # (B,1) packed-sequence validity, forward
        mb = (t0_b + jb) < lens                 # backward
        cf_scr[...] = jnp.where(mf, cf_new, cf_prev)   # freeze carries on padded steps
        hf_scr[...] = jnp.where(mf, hf_new, hf_prev)
        cb_scr[...] = jnp.where(mb, cb_new, cb_prev)
        hb_scr[...] = jnp.where(mb, hb_new, hb_prev)
        yf_ref[j] = jnp.where(mf, hf_new, 0.0).astype(yf_ref.dtype)    # pad_packed zeros
        yb_ref[jb] = jnp.where(mb, hb_new, 0.0).astype(yb_ref.dtype)
        return carry

    jax.lax.fori_loop(0, tc, cell, 0, unroll=True)


def _bilstm_recurrence(x_flat, lens2d, wih, whh, b, tc, nc):
    """x_flat: (Tp*B, D) bf16 time-major rows.  Returns (y_fwd, y_bwd), each (Tp, B, Hp) bf16."""
    TB, D = x_flat.shape
    B = lens2d.shape[0]
    Tp = TB // B
    Hp = whh.shape[1]
    G4 = 4 * Hp

    return pl.pallas_call(
        _bilstm_chunk_kernel,
        out_shape=(jax.ShapeDtypeStruct((Tp, B, Hp), jnp.bfloat16),
                   jax.ShapeDtypeStruct((Tp, B, Hp), jnp.bfloat16)),
        grid=(nc,),
        in_specs=[
            pl.BlockSpec((B, 1), lambda c: (0, 0)),                    # lens
            pl.BlockSpec((tc * B, D), lambda c: (c, 0)),               # x rows, forward chunk c
            pl.BlockSpec((tc * B, D), lambda c: (nc - 1 - c, 0)),      # x rows, backward chunk
            pl.BlockSpec((2, D, G4), lambda c: (0, 0, 0)),             # W_ih (both directions)
            pl.BlockSpec((2, Hp, G4), lambda c: (0, 0, 0)),            # W_hh
            pl.BlockSpec((2, 1, G4), lambda c: (0, 0, 0)),             # bias (b_ih + b_hh)
        ],
        out_specs=(pl.BlockSpec((tc, B, Hp), lambda c: (c, 0, 0)),
                   pl.BlockSpec((tc, B, Hp), lambda c: (nc - 1 - c, 0, 0))),
        scratch_shapes=[
            pltpu.VMEM((tc, B, G4), jnp.float32),   # fwd gate pre-activations (chunk-local)
            pltpu.VMEM((tc, B, G4), jnp.float32),   # bwd gate pre-activations
            pltpu.VMEM((B, Hp), jnp.float32),       # h carry, forward
            pltpu.VMEM((B, Hp), jnp.float32),       # c carry, forward
            pltpu.VMEM((B, Hp), jnp.float32),       # h carry, backward
            pltpu.VMEM((B, Hp), jnp.float32),       # c carry, backward
        ],
        compiler_params=pltpu.CompilerParams(
            # Carries live in scratch across chunks -> the time-chunk axis must stay sequential.
            # TODO(synk): on v7x (2 TCs) shard the batch (or direction) across cores via
            # pltpu.CORE_PARALLEL / pl.core_map; single-TC v5e/v6e rely on the in-kernel
            # fwd/bwd interleave instead.
            dimension_semantics=("arbitrary",)),
    )(lens2d, x_flat, x_flat, wih, whh, b)


# ------------------------------- hidden2tag kernel -------------------------------- #

def _hidden2tag_kernel(yf_ref, yb_ref, wtf_ref, wtb_ref, b_ref, o_ref):
    # Split-weight linear == Linear over concat([y_f, y_b], -1), without materializing the concat.
    o_ref[...] = (jnp.dot(yf_ref[...], wtf_ref[...], preferred_element_type=jnp.float32)
                  + jnp.dot(yb_ref[...], wtb_ref[...], preferred_element_type=jnp.float32)
                  + b_ref[...])


def _hidden2tag(y_f, y_b, wt_f, wt_b, b_tag, block_rows=512):
    """y_f/y_b: (N, Hp) bf16; wt_f/wt_b: (Hp, Lp) bf16; b_tag: (1, Lp) f32 -> (N, Lp) f32."""
    N, Hp = y_f.shape
    Lp = wt_f.shape[1]
    bn = min(block_rows, pl.cdiv(N, 8) * 8)       # row tile decoupled from recurrence tiling
    Np = pl.cdiv(N, bn) * bn
    if Np != N:
        y_f = jnp.pad(y_f, ((0, Np - N), (0, 0)))
        y_b = jnp.pad(y_b, ((0, Np - N), (0, 0)))
    out = pl.pallas_call(
        _hidden2tag_kernel,
        out_shape=jax.ShapeDtypeStruct((Np, Lp), jnp.float32),
        grid=(Np // bn,),
        in_specs=[pl.BlockSpec((bn, Hp), lambda i: (i, 0)),
                  pl.BlockSpec((bn, Hp), lambda i: (i, 0)),
                  pl.BlockSpec((Hp, Lp), lambda i: (0, 0)),
                  pl.BlockSpec((Hp, Lp), lambda i: (0, 0)),
                  pl.BlockSpec((1, Lp), lambda i: (0, 0))],
        out_specs=pl.BlockSpec((bn, Lp), lambda i: (i, 0)),
        compiler_params=pltpu.CompilerParams(dimension_semantics=("parallel",)),
    )(y_f, y_b, wt_f, wt_b, b_tag)
    return out[:N]


# --------------------------------- weight prep ------------------------------------- #

def prepare_params(params, lane=LANE):
    """One-time prep: transpose, lane-align gates (pad per-gate width H -> Hp multiple of 128),
    stack directions, cast MXU operands to bf16, pad label dim, split hidden2tag per direction.

    Zero padding is exact: padded gate columns see pre-activation 0 (zero weights + zero bias),
    so padded c stays 0, padded h stays 0, and padded rows of W_tag are 0 -> logits unchanged."""
    H = params["w_hh_f"].shape[1]
    L = params["w_tag"].shape[0]
    Hp = pl.cdiv(H, lane) * lane
    Lp = pl.cdiv(L, lane) * lane
    G4 = 4 * Hp

    def lane_align_gate_cols(w_t):   # (rows, 4H) -> (rows, 4Hp), gate k placed at offset k*Hp
        out = jnp.zeros((w_t.shape[0], G4), w_t.dtype)
        for k in range(4):
            out = out.at[:, k * Hp:k * Hp + H].set(w_t[:, k * H:(k + 1) * H])
        return out

    def prep_ih(w):                  # (4H, D) -> (D, 4Hp) bf16
        return lane_align_gate_cols(w.T).astype(jnp.bfloat16)

    def prep_hh(w):                  # (4H, H) -> (Hp, 4Hp) bf16 (rows H..Hp zero)
        wt = lane_align_gate_cols(w.T).astype(jnp.bfloat16)
        return jnp.zeros((Hp, G4), jnp.bfloat16).at[:H].set(wt)

    def prep_b(bv):                  # (4H,) -> (1, 4Hp) f32
        return lane_align_gate_cols(bv.astype(jnp.float32)[None, :])

    w_tag_t = params["w_tag"].T      # (2H, L)

    def prep_tag(half):              # (H, L) -> (Hp, Lp) bf16
        return jnp.zeros((Hp, Lp), jnp.bfloat16).at[:H, :L].set(half.astype(jnp.bfloat16))

    return dict(
        word_emb=params["word_emb"].astype(jnp.bfloat16),                       # (V, D) bf16
        wih=jnp.stack([prep_ih(params["w_ih_f"]), prep_ih(params["w_ih_b"])]),  # (2, D, 4Hp)
        whh=jnp.stack([prep_hh(params["w_hh_f"]), prep_hh(params["w_hh_b"])]),  # (2, Hp, 4Hp)
        b=jnp.stack([prep_b(params["b_f"]), prep_b(params["b_b"])]),            # (2, 1, 4Hp)
        wt_f=prep_tag(w_tag_t[:H]), wt_b=prep_tag(w_tag_t[H:]),                 # (Hp, Lp)
        b_tag=jnp.zeros((1, Lp), jnp.float32).at[:, :L].set(
            params["b_tag"].astype(jnp.float32)),                               # (1, Lp)
    )


# --------------------------- model forward (glue) ------------------------------ #

@jax.jit
def _lstm1_core(kp, word_inputs, lens):
    """Returns (Tp, B, Lp) logits over the full (static) padded length."""
    # WordRep: word-embedding lookup, gathered directly in (T, B) order, bf16 table.
    # TODO(synk): char-CNN / extra feature embeddings of WordRep omitted (the module sets
    # input_size = word_emb_dim, which this matches); dropout is identity in eval mode.
    x_tbd = jnp.take(kp["word_emb"], word_inputs.T, axis=0)          # (T, B, D) bf16
    T, B, D = x_tbd.shape
    Hp = kp["whh"].shape[1]

    tc = min(T_CHUNK, T)
    nc = pl.cdiv(T, tc)
    Tp = nc * tc
    if Tp != T:
        x_tbd = jnp.pad(x_tbd, ((0, Tp - T), (0, 0), (0, 0)))

    lens2d = lens.astype(jnp.int32).reshape(B, 1)
    x_flat = x_tbd.reshape(Tp * B, D)                                 # time-major rows (view)

    # Fused projection + recurrence, both directions interleaved, bf16 outputs.
    y_f, y_b = _bilstm_recurrence(x_flat, lens2d, kp["wih"], kp["whh"], kp["b"], tc, nc)

    # hidden2tag without materializing concat([y_f, y_b]); label dim padded to 128 lanes.
    logits = _hidden2tag(y_f.reshape(Tp * B, Hp), y_b.reshape(Tp * B, Hp),
                         kp["wt_f"], kp["wt_b"], kp["b_tag"])
    return logits.reshape(Tp, B, -1)                                  # (Tp, B, Lp)


def lstm1_forward(kp, word_inputs, feature_inputs, word_seq_lengths,
                  char_inputs, char_seq_lengths, char_seq_recover, n_labels):
    """Mirrors LSTM1.forward (eval mode)."""
    lens = jnp.asarray(word_seq_lengths, jnp.int32)
    logits_full = _lstm1_core(kp, word_inputs, lens)
    # pad_packed_sequence trims to the max valid length.  torch needs host-side lengths for
    # pack_padded_sequence anyway, so this host max mirrors the reference module (jit-safe core).
    t_max = int(jax.device_get(jnp.max(lens)))
    return logits_full[:t_max, :, :n_labels]                          # (T_max, B, label_size)


# ------------------------------- plain-JAX ref ---------------------------------- #

def lstm1_forward_ref(params, word_inputs, word_seq_lengths):
    word_represent = params["word_emb"][word_inputs]                  # (B, T, D)
    B, T, D = word_represent.shape
    H = params["w_hh_f"].shape[1]
    lens = jnp.asarray(word_seq_lengths, jnp.int32)
    x_tbd = jnp.transpose(word_represent, (1, 0, 2)).astype(jnp.float32)
    mask = (jnp.arange(T)[:, None] < lens[None, :]).astype(jnp.float32)   # (T, B)

    def run_dir(w_ih, w_hh, b, reverse):
        def step(carry, inp):
            h, c = carry
            x_t, m = inp
            gates = x_t @ w_ih.T + h @ w_hh.T + b
            i, f, g, o = jnp.split(gates, 4, axis=-1)
            i, f, o = jax.nn.sigmoid(i), jax.nn.sigmoid(f), jax.nn.sigmoid(o)
            g = jnp.tanh(g)
            c_new = f * c + i * g
            h_new = o * jnp.tanh(c_new)
            m = m[:, None]
            c = m * c_new + (1.0 - m) * c
            h = m * h_new + (1.0 - m) * h
            return (h, c), m * h_new

        zeros = jnp.zeros((B, H), jnp.float32)
        _, ys = jax.lax.scan(step, (zeros, zeros), (x_tbd, mask), reverse=reverse)
        return ys

    y_f = run_dir(params["w_ih_f"], params["w_hh_f"], params["b_f"], reverse=False)
    y_b = run_dir(params["w_ih_b"], params["w_hh_b"], params["b_b"], reverse=True)
    lstm_out = jnp.concatenate([y_f, y_b], axis=-1)
    t_max = int(jax.device_get(jnp.max(lens)))
    lstm_out = lstm_out[:t_max]
    return lstm_out @ params["w_tag"].T + params["b_tag"]


# ---------------------------------- params -------------------------------------- #

def init_params(key, vocab, D, H, L):
    ks = jax.random.split(key, 11)
    s = 1.0 / jnp.sqrt(H)

    def u(k, shape):
        return jax.random.uniform(k, shape, jnp.float32, -s, s)

    return dict(
        word_emb=jax.random.normal(ks[0], (vocab, D), jnp.float32) * 0.1,
        w_ih_f=u(ks[1], (4 * H, D)), w_hh_f=u(ks[2], (4 * H, H)),
        b_f=u(ks[3], (4 * H,)) + u(ks[4], (4 * H,)),       # b_ih + b_hh folded
        w_ih_b=u(ks[5], (4 * H, D)), w_hh_b=u(ks[6], (4 * H, H)),
        b_b=u(ks[7], (4 * H,)) + u(ks[8], (4 * H,)),
        w_tag=u(ks[9], (L, 2 * H)), b_tag=u(ks[10], (L,)),
    )


# ----------------------------------- main ---------------------------------------- #

if __name__ == "__main__":
    key = jax.random.PRNGKey(0)
    B, T, word_emb_dim, hidden_dim, label_size, vocab = 2, 8, 32, 32, 10, 20
    H = hidden_dim // 2                                     # bilstm -> half per direction

    pkey, dkey = jax.random.split(key)
    params = init_params(pkey, vocab, word_emb_dim, H, label_size)
    kp = prepare_params(params)

    word_inputs = jax.random.randint(dkey, (B, T), 1, vocab)          # (B, T) token ids
    word_seq_lengths = jnp.array([8, 5], dtype=jnp.int32)             # sorted desc (pack req.)
    # Unused WordRep extras, kept for interface parity with the torch module.
    feature_inputs = []
    char_inputs = char_seq_lengths = char_seq_recover = None

    out = lstm1_forward(kp, word_inputs, feature_inputs, word_seq_lengths,
                        char_inputs, char_seq_lengths, char_seq_recover,
                        n_labels=label_size)
    out = jax.block_until_ready(out)

    ref = lstm1_forward_ref(params, word_inputs, word_seq_lengths)
    ref = jax.block_until_ready(ref)

    assert out.shape == ref.shape == (int(word_seq_lengths.max()), B, label_size), (out.shape, ref.shape)
    max_err = float(jnp.max(jnp.abs(out - ref)))
    assert jnp.allclose(out, ref, atol=3e-2, rtol=3e-2), max_err
    print("KERNEL_OK")
</pallas_src>

<mosaic_0001>
module attributes {stable_mosaic.version = 11 : i64} {
  func.func @_hidden2tag_kernel(%arg0: i32, %arg1: memref<16x128xbf16, #tpu.memory_space<vmem>>, %arg2: memref<16x128xbf16, #tpu.memory_space<vmem>>, %arg3: memref<128x128xbf16, #tpu.memory_space<vmem>>, %arg4: memref<128x128xbf16, #tpu.memory_space<vmem>>, %arg5: memref<1x128xf32, #tpu.memory_space<vmem>>, %arg6: memref<16x128xf32, #tpu.memory_space<vmem>>) attributes {dimension_semantics = [#tpu.dimension_semantics<parallel>], iteration_bounds = array<i64: 1>, scalar_prefetch = 0 : i64, scratch_operands = 0 : i64, tpu.core_type = #tpu.core_type<tc>, window_params = [{transform_indices = @transform_0, window_bounds = array<i64: 16, 128>}, {transform_indices = @transform_1, window_bounds = array<i64: 16, 128>}, {pipeline_mode = #tpu.pipeline_mode<synchronous>, transform_indices = @transform_2, window_bounds = array<i64: 128, 128>}, {pipeline_mode = #tpu.pipeline_mode<synchronous>, transform_indices = @transform_3, window_bounds = array<i64: 128, 128>}, {pipeline_mode = #tpu.pipeline_mode<synchronous>, transform_indices = @transform_4, window_bounds = array<i64: 1, 128>}, {transform_indices = @transform_5, window_bounds = array<i64: 16, 128>}]} {
    %c0 = arith.constant 0 : index
    %c0_0 = arith.constant 0 : index
    %0 = vector.load %arg1[%c0, %c0_0] : memref<16x128xbf16, #tpu.memory_space<vmem>>, vector<16x128xbf16>
    %c0_1 = arith.constant 0 : index
    %c0_2 = arith.constant 0 : index
    %1 = vector.load %arg3[%c0_1, %c0_2] : memref<128x128xbf16, #tpu.memory_space<vmem>>, vector<128x128xbf16>
    %cst = arith.constant dense<0.000000e+00> : vector<16x128xf32>
    %2 = tpu.matmul %0, %1, %cst {dimension_numbers = #tpu.dot_dimension_numbers<[1], [0], [0], [1], [0, 0, 1, 1], [], []>} : vector<16x128xbf16>, vector<128x128xbf16>, vector<16x128xf32> -> vector<16x128xf32>
    %c0_3 = arith.constant 0 : index
    %c0_4 = arith.constant 0 : index
    %3 = vector.load %arg2[%c0_3, %c0_4] : memref<16x128xbf16, #tpu.memory_space<vmem>>, vector<16x128xbf16>
    %c0_5 = arith.constant 0 : index
    %c0_6 = arith.constant 0 : index
    %4 = vector.load %arg4[%c0_5, %c0_6] : memref<128x128xbf16, #tpu.memory_space<vmem>>, vector<128x128xbf16>
    %cst_7 = arith.constant dense<0.000000e+00> : vector<16x128xf32>
    %5 = tpu.matmul %3, %4, %cst_7 {dimension_numbers = #tpu.dot_dimension_numbers<[1], [0], [0], [1], [0, 0, 1, 1], [], []>} : vector<16x128xbf16>, vector<128x128xbf16>, vector<16x128xf32> -> vector<16x128xf32>
    %6 = arith.addf %2, %5 : vector<16x128xf32>
    %c0_8 = arith.constant 0 : index
    %c0_9 = arith.constant 0 : index
    %7 = vector.load %arg5[%c0_8, %c0_9] : memref<1x128xf32, #tpu.memory_space<vmem>>, vector<1x128xf32>
    %8 = vector.broadcast %7 : vector<1x128xf32> to vector<16x128xf32>
    %9 = arith.addf %6, %8 : vector<16x128xf32>
    %c0_10 = arith.constant 0 : index
    %c0_11 = arith.constant 0 : index
    %10 = vector.load %arg6[%c0_10, %c0_11] : memref<16x128xf32, #tpu.memory_space<vmem>>, vector<16x128xf32>
    tpu.vector_store %arg6[%c0_10, %c0_11], %9 {strides = array<i32>} : memref<16x128xf32, #tpu.memory_space<vmem>>, vector<16x128xf32>,
    return
  }
  func.func @transform_0(%arg0: i32) -> (i32, i32) {
    %c0_i32 = arith.constant 0 : i32
    %c0_i32_0 = arith.constant 0 : i32
    return %arg0, %c0_i32 : i32, i32
  }
  func.func @transform_1(%arg0: i32) -> (i32, i32) {
    %c0_i32 = arith.constant 0 : i32
    %c0_i32_0 = arith.constant 0 : i32
    return %arg0, %c0_i32 : i32, i32
  }
  func.func @transform_2(%arg0: i32) -> (i32, i32) {
    %c0_i32 = arith.constant 0 : i32
    %c0_i32_0 = arith.constant 0 : i32
    %c0_i32_1 = arith.constant 0 : i32
    return %c0_i32, %c0_i32_0 : i32, i32
  }
  func.func @transform_3(%arg0: i32) -> (i32, i32) {
    %c0_i32 = arith.constant 0 : i32
    %c0_i32_0 = arith.constant 0 : i32
    %c0_i32_1 = arith.constant 0 : i32
    return %c0_i32, %c0_i32_0 : i32, i32
  }
  func.func @transform_4(%arg0: i32) -> (i32, i32) {
    %c0_i32 = arith.constant 0 : i32
    %c0_i32_0 = arith.constant 0 : i32
    %c0_i32_1 = arith.constant 0 : i32
    return %c0_i32, %c0_i32_0 : i32, i32
  }
  func.func @transform_5(%arg0: i32) -> (i32, i32) {
    %c0_i32 = arith.constant 0 : i32
    %c0_i32_0 = arith.constant 0 : i32
    return %arg0, %c0_i32 : i32, i32
  }
}

module attributes {stable_mosaic.version = 11 : i64} {
  func.func @_bilstm_chunk_kernel(%arg0: i32, %arg1: memref<2x1xi32, #tpu.memory_space<vmem>>, %arg2: memref<16x32xbf16, #tpu.memory_space<vmem>>, %arg3: memref<16x32xbf16, #tpu.memory_space<vmem>>, %arg4: memref<2x32x512xbf16, #tpu.memory_space<vmem>>, %arg5: memref<2x128x512xbf16, #tpu.memory_space<vmem>>, %arg6: memref<2x1x512xf32, #tpu.memory_space<vmem>>, %arg7: memref<8x2x128xbf16, #tpu.memory_space<vmem>>, %arg8: memref<8x2x128xbf16, #tpu.memory_space<vmem>>, %arg9: memref<8x2x512xf32, #tpu.memory_space<vmem>>, %arg10: memref<8x2x512xf32, #tpu.memory_space<vmem>>, %arg11: memref<2x128xf32, #tpu.memory_space<vmem>>, %arg12: memref<2x128xf32, #tpu.memory_space<vmem>>, %arg13: memref<2x128xf32, #tpu.memory_space<vmem>>, %arg14: memref<2x128xf32, #tpu.memory_space<vmem>>) attributes {dimension_semantics = [#tpu.dimension_semantics<arbitrary>], iteration_bounds = array<i64: 1>, scalar_prefetch = 0 : i64, scratch_operands = 6 : i64, tpu.core_type = #tpu.core_type<tc>, window_params = [{pipeline_mode = #tpu.pipeline_mode<synchronous>, transform_indices = @transform_0, window_bounds = array<i64: 2, 1>}, {transform_indices = @transform_1, window_bounds = array<i64: 16, 32>}, {transform_indices = @transform_2, window_bounds = array<i64: 16, 32>}, {pipeline_mode = #tpu.pipeline_mode<synchronous>, transform_indices = @transform_3, window_bounds = array<i64: 2, 32, 512>}, {pipeline_mode = #tpu.pipeline_mode<synchronous>, transform_indices = @transform_4, window_bounds = array<i64: 2, 128, 512>}, {pipeline_mode = #tpu.pipeline_mode<synchronous>, transform_indices = @transform_5, window_bounds = array<i64: 2, 1, 512>}, {transform_indices = @transform_6, window_bounds = array<i64: 8, 2, 128>}, {transform_indices = @transform_7, window_bounds = array<i64: 8, 2, 128>}]} {
    %c0_i32 = arith.constant 0 : i32
    %0 = arith.cmpi eq, %arg0, %c0_i32 : i32
    %1 = arith.extui %0 : i1 to i32
    %c0_i32_0 = arith.constant 0 : i32
    %2 = arith.cmpi ne, %1, %c0_i32_0 : i32
    scf.if %2 {
      %cst_392 = arith.constant 0.000000e+00 : f32
      %975 = vector.broadcast %cst_392 : f32 to vector<2x128xf32>
      %c0_393 = arith.constant 0 : index
      %c0_394 = arith.constant 0 : index
      %976 = vector.load %arg11[%c0_393, %c0_394] : memref<2x128xf32, #tpu.memory_space<vmem>>, vector<2x128xf32>
      tpu.vector_store %arg11[%c0_393, %c0_394], %975 {strides = array<i32>} : memref<2x128xf32, #tpu.memory_space<vmem>>, vector<2x128xf32>,
      %cst_395 = arith.constant 0.000000e+00 : f32
      %977 = vector.broadcast %cst_395 : f32 to vector<2x128xf32>
      %c0_396 = arith.constant 0 : index
      %c0_397 = arith.constant 0 : index
      %978 = vector.load %arg12[%c0_396, %c0_397] : memref<2x128xf32, #tpu.memory_space<vmem>>, vector<2x128xf32>
      tpu.vector_store %arg12[%c0_396, %c0_397], %977 {strides = array<i32>} : memref<2x128xf32, #tpu.memory_space<vmem>>, vector<2x128xf32>,
      %cst_398 = arith.constant 0.000000e+00 : f32
      %979 = vector.broadcast %cst_398 : f32 to vector<2x128xf32>
      %c0_399 = arith.constant 0 : index
      %c0_400 = arith.constant 0 : index
      %980 = vector.load %arg13[%c0_399, %c0_400] : memref<2x128xf32, #tpu.memory_space<vmem>>, vector<2x128xf32>
      tpu.vector_store %arg13[%c0_399, %c0_400], %979 {strides = array<i32>} : memref<2x128xf32, #tpu.memory_space<vmem>>, vector<2x128xf32>,
      %cst_401 = arith.constant 0.000000e+00 : f32
      %981 = vector.broadcast %cst_401 : f32 to vector<2x128xf32>
      %c0_402 = arith.constant 0 : index
      %c0_403 = arith.constant 0 : index
      %982 = vector.load %arg14[%c0_402, %c0_403] : memref<2x128xf32, #tpu.memory_space<vmem>>, vector<2x128xf32>
      tpu.vector_store %arg14[%c0_402, %c0_403], %981 {strides = array<i32>} : memref<2x128xf32, #tpu.memory_space<vmem>>, vector<2x128xf32>,
    } else {
    }
    %c0 = arith.constant 0 : index
    %c0_1 = arith.constant 0 : index
    %3 = vector.load %arg2[%c0, %c0_1] : memref<16x32xbf16, #tpu.memory_space<vmem>>, vector<16x32xbf16>
    %c0_2 = arith.constant 0 : index
    %c0_3 = arith.constant 0 : index
    %c0_4 = arith.constant 0 : index
    %4 = vector.load %arg4[%c0_2, %c0_3, %c0_4] : memref<2x32x512xbf16, #tpu.memory_space<vmem>>, vector<1x32x512xbf16>
    %5 = vector.shape_cast %4 : vector<1x32x512xbf16> to vector<32x512xbf16>
    %cst = arith.constant dense<0.000000e+00> : vector<16x512xf32>
    %6 = tpu.matmul %3, %5, %cst {dimension_numbers = #tpu.dot_dimension_numbers<[1], [0], [0], [1], [0, 0, 1, 1], [], []>} : vector<16x32xbf16>, vector<32x512xbf16>, vector<16x512xf32> -> vector<16x512xf32>
    %c0_5 = arith.constant 0 : index
    %c0_6 = arith.constant 0 : index
    %c0_7 = arith.constant 0 : index
    %7 = vector.load %arg6[%c0_5, %c0_6, %c0_7] : memref<2x1x512xf32, #tpu.memory_space<vmem>>, vector<1x1x512xf32>
    %8 = vector.shape_cast %7 : vector<1x1x512xf32> to vector<1x512xf32>
    %9 = vector.broadcast %8 : vector<1x512xf32> to vector<16x512xf32>
    %10 = arith.addf %6, %9 : vector<16x512xf32>
    %c0_8 = arith.constant 0 : index
    %c0_9 = arith.constant 0 : index
    %11 = vector.load %arg3[%c0_8, %c0_9] : memref<16x32xbf16, #tpu.memory_space<vmem>>, vector<16x32xbf16>
    %c1 = arith.constant 1 : index
    %c0_10 = arith.constant 0 : index
    %c0_11 = arith.constant 0 : index
    %12 = vector.load %arg4[%c1, %c0_10, %c0_11] : memref<2x32x512xbf16, #tpu.memory_space<vmem>>, vector<1x32x512xbf16>
    %13 = vector.shape_cast %12 : vector<1x32x512xbf16> to vector<32x512xbf16>
    %cst_12 = arith.constant dense<0.000000e+00> : vector<16x512xf32>
    %14 = tpu.matmul %11, %13, %cst_12 {dimension_numbers = #tpu.dot_dimension_numbers<[1], [0], [0], [1], [0, 0, 1, 1], [], []>} : vector<16x32xbf16>, vector<32x512xbf16>, vector<16x512xf32> -> vector<16x512xf32>
    %c1_13 = arith.constant 1 : index
    %c0_14 = arith.constant 0 : index
    %c0_15 = arith.constant 0 : index
    %15 = vector.load %arg6[%c1_13, %c0_14, %c0_15] : memref<2x1x512xf32, #tpu.memory_space<vmem>>, vector<1x1x512xf32>
    %16 = vector.shape_cast %15 : vector<1x1x512xf32> to vector<1x512xf32>
    %17 = vector.broadcast %16 : vector<1x512xf32> to vector<16x512xf32>
    %18 = arith.addf %14, %17 : vector<16x512xf32>
    %19 = vector.extract_strided_slice %10 {offsets = [0, 0], sizes = [2, 512], strides = [1, 1]} : vector<16x512xf32> to vector<2x512xf32>
    %c0_16 = arith.constant 0 : index
    %c0_17 = arith.constant 0 : index
    %c0_18 = arith.constant 0 : index
    %20 = vector.load %arg9[%c0_16, %c0_17, %c0_18] : memref<8x2x512xf32, #tpu.memory_space<vmem>>, vector<1x2x512xf32>
    %21 = vector.shape_cast %20 : vector<1x2x512xf32> to vector<2x512xf32>
    %22 = vector.shape_cast %19 : vector<2x512xf32> to vector<1x2x512xf32>
    tpu.vector_store %arg9[%c0_16, %c0_17, %c0_18], %22 {strides = array<i32>} : memref<8x2x512xf32, #tpu.memory_space<vmem>>, vector<1x2x512xf32>,
    %23 = vector.extract_strided_slice %18 {offsets = [0, 0], sizes = [2, 512], strides = [1, 1]} : vector<16x512xf32> to vector<2x512xf32>
    %c0_19 = arith.constant 0 : index
    %c0_20 = arith.constant 0 : index
    %c0_21 = arith.constant 0 : index
    %24 = vector.load %arg10[%c0_19, %c0_20, %c0_21] : memref<8x2x512xf32, #tpu.memory_space<vmem>>, vector<1x2x512xf32>
    %25 = vector.shape_cast %24 : vector<1x2x512xf32> to vector<2x512xf32>
    %26 = vector.shape_cast %23 : vector<2x512xf32> to vector<1x2x512xf32>
    tpu.vector_store %arg10[%c0_19, %c0_20, %c0_21], %26 {strides = array<i32>} : memref<8x2x512xf32, #tpu.memory_space<vmem>>, vector<1x2x512xf32>,
    %27 = vector.extract_strided_slice %10 {offsets = [2, 0], sizes = [2, 512], strides = [1, 1]} : vector<16x512xf32> to vector<2x512xf32>
    %c1_22 = arith.constant 1 : index
    %c0_23 = arith.constant 0 : index
    %c0_24 = arith.constant 0 : index
    %28 = vector.load %arg9[%c1_22, %c0_23, %c0_24] : memref<8x2x512xf32, #tpu.memory_space<vmem>>, vector<1x2x512xf32>
    %29 = vector.shape_cast %28 : vector<1x2x512xf32> to vector<2x512xf32>
    %30 = vector.shape_cast %27 : vector<2x512xf32> to vector<1x2x512xf32>
    tpu.vector_store %arg9[%c1_22, %c0_23, %c0_24], %30 {strides = array<i32>} : memref<8x2x512xf32, #tpu.memory_space<vmem>>, vector<1x2x512xf32>,
    %31 = vector.extract_strided_slice %18 {offsets = [2, 0], sizes = [2, 512], strides = [1, 1]} : vector<16x512xf32> to vector<2x512xf32>
    %c1_25 = arith.constant 1 : index
    %c0_26 = arith.constant 0 : index
    %c0_27 = arith.constant 0 : index
    %32 = vector.load %arg10[%c1_25, %c0_26, %c0_27] : memref<8x2x512xf32, #tpu.memory_space<vmem>>, vector<1x2x512xf32>
    %33 = vector.shape_cast %32 : vector<1x2x512xf32> to vector<2x512xf32>
    %34 = vector.shape_cast %31 : vector<2x512xf32> to vector<1x2x512xf32>
    tpu.vector_store %arg10[%c1_25, %c0_26, %c0_27], %34 {strides = array<i32>} : memref<8x2x512xf32, #tpu.memory_space<vmem>>, vector<1x2x512xf32>,
    %35 = vector.extract_strided_slice %10 {offsets = [4, 0], sizes = [2, 512], strides = [1, 1]} : vector<16x512xf32> to vector<2x512xf32>
    %c2 = arith.constant 2 : index
    %c0_28 = arith.constant 0 : index
    %c0_29 = arith.constant 0 : index
    %36 = vector.load %arg9[%c2, %c0_28, %c0_29] : memref<8x2x512xf32, #tpu.memory_space<vmem>>, vector<1x2x512xf32>
    %37 = vector.shape_cast %36 : vector<1x2x512xf32> to vector<2x512xf32>
    %38 = vector.shape_cast %35 : vector<2x512xf32> to vector<1x2x512xf32>
    tpu.vector_store %arg9[%c2, %c0_28, %c0_29], %38 {strides = array<i32>} : memref<8x2x512xf32, #tpu.memory_space<vmem>>, vector<1x2x512xf32>,
    %39 = vector.extract_strided_slice %18 {offsets = [4, 0], sizes = [2, 512], strides = [1, 1]} : vector<16x512xf32> to vector<2x512xf32>
    %c2_30 = arith.constant 2 : index
    %c0_31 = arith.constant 0 : index
    %c0_32 = arith.constant 0 : index
    %40 = vector.load %arg10[%c2_30, %c0_31, %c0_32] : memref<8x2x512xf32, #tpu.memory_space<vmem>>, vector<1x2x512xf32>
    %41 = vector.shape_cast %40 : vector<1x2x512xf32> to vector<2x512xf32>
    %42 = vector.shape_cast %39 : vector<2x512xf32> to vector<1x2x512xf32>
    tpu.vector_store %arg10[%c2_30, %c0_31, %c0_32], %42 {strides = array<i32>} : memref<8x2x512xf32, #tpu.memory_space<vmem>>, vector<1x2x512xf32>,
    %43 = vector.extract_strided_slice %10 {offsets = [6, 0], sizes = [2, 512], strides = [1, 1]} : vector<16x512xf32> to vector<2x512xf32>
    %c3 = arith.constant 3 : index
    %c0_33 = arith.constant 0 : index
    %c0_34 = arith.constant 0 : index
    %44 = vector.load %arg9[%c3, %c0_33, %c0_34] : memref<8x2x512xf32, #tpu.memory_space<vmem>>, vector<1x2x512xf32>
    %45 = vector.shape_cast %44 : vector<1x2x512xf32> to vector<2x512xf32>
    %46 = vector.shape_cast %43 : vector<2x512xf32> to vector<1x2x512xf32>
    tpu.vector_store %arg9[%c3, %c0_33, %c0_34], %46 {strides = array<i32>} : memref<8x2x512xf32, #tpu.memory_space<vmem>>, vector<1x2x512xf32>,
    %47 = vector.extract_strided_slice %18 {offsets = [6, 0], sizes = [2, 512], strides = [1, 1]} : vector<16x512xf32> to vector<2x512xf32>
    %c3_35 = arith.constant 3 : index
    %c0_36 = arith.constant 0 : index
    %c0_37 = arith.constant 0 : index
    %48 = vector.load %arg10[%c3_35, %c0_36, %c0_37] : memref<8x2x512xf32, #tpu.memory_space<vmem>>, vector<1x2x512xf32>
    %49 = vector.shape_cast %48 : vector<1x2x512xf32> to vector<2x512xf32>
    %50 = vector.shape_cast %47 : vector<2x512xf32> to vector<1x2x512xf32>
    tpu.vector_store %arg10[%c3_35, %c0_36, %c0_37], %50 {strides = array<i32>} : memref<8x2x512xf32, #tpu.memory_space<vmem>>, vector<1x2x512xf32>,
    %51 = vector.extract_strided_slice %10 {offsets = [8, 0], sizes = [2, 512], strides = [1, 1]} : vector<16x512xf32> to vector<2x512xf32>
    %c4 = arith.constant 4 : index
    %c0_38 = arith.constant 0 : index
    %c0_39 = arith.constant 0 : index
    %52 = vector.load %arg9[%c4, %c0_38, %c0_39] : memref<8x2x512xf32, #tpu.memory_space<vmem>>, vector<1x2x512xf32>
    %53 = vector.shape_cast %52 : vector<1x2x512xf32> to vector<2x512xf32>
    %54 = vector.shape_cast %51 : vector<2x512xf32> to vector<1x2x512xf32>
    tpu.vector_store %arg9[%c4, %c0_38, %c0_39], %54 {strides = array<i32>} : memref<8x2x512xf32, #tpu.memory_space<vmem>>, vector<1x2x512xf32>,
    %55 = vector.extract_strided_slice %18 {offsets = [8, 0], sizes = [2, 512], strides = [1, 1]} : vector<16x512xf32> to vector<2x512xf32>
    %c4_40 = arith.constant 4 : index
    %c0_41 = arith.constant 0 : index
    %c0_42 = arith.constant 0 : index
    %56 = vector.load %arg10[%c4_40, %c0_41, %c0_42] : memref<8x2x512xf32, #tpu.memory_space<vmem>>, vector<1x2x512xf32>
    %57 = vector.shape_cast %56 : vector<1x2x512xf32> to vector<2x512xf32>
    %58 = vector.shape_cast %55 : vector<2x512xf32> to vector<1x2x512xf32>
    tpu.vector_store %arg10[%c4_40, %c0_41, %c0_42], %58 {strides = array<i32>} : memref<8x2x512xf32, #tpu.memory_space<vmem>>, vector<1x2x512xf32>,
    %59 = vector.extract_strided_slice %10 {offsets = [10, 0], sizes = [2, 512], strides = [1, 1]} : vector<16x512xf32> to vector<2x512xf32>
    %c5 = arith.constant 5 : index
    %c0_43 = arith.constant 0 : index
    %c0_44 = arith.constant 0 : index
    %60 = vector.load %arg9[%c5, %c0_43, %c0_44] : memref<8x2x512xf32, #tpu.memory_space<vmem>>, vector<1x2x512xf32>
    %61 = vector.shape_cast %60 : vector<1x2x512xf32> to vector<2x512xf32>
    %62 = vector.shape_cast %59 : vector<2x512xf32> to vector<1x2x512xf32>
    tpu.vector_store %arg9[%c5, %c0_43, %c0_44], %62 {strides = array<i32>} : memref<8x2x512xf32, #tpu.memory_space<vmem>>, vector<1x2x512xf32>,
    %63 = vector.extract_strided_slice %18 {offsets = [10, 0], sizes = [2, 512], strides = [1, 1]} : vector<16x512xf32> to vector<2x512xf32>
    %c5_45 = arith.constant 5 : index
    %c0_46 = arith.constant 0 : index
    %c0_47 = arith.constant 0 : index
    %64 = vector.load %arg10[%c5_45, %c0_46, %c0_47] : memref<8x2x512xf32, #tpu.memory_space<vmem>>, vector<1x2x512xf32>
    %65 = vector.shape_cast %64 : vector<1x2x512xf32> to vector<2x512xf32>
    %66 = vector.shape_cast %63 : vector<2x512xf32> to vector<1x2x512xf32>
    tpu.vector_store %arg10[%c5_45, %c0_46, %c0_47], %66 {strides = array<i32>} : memref<8x2x512xf32, #tpu.memory_space<vmem>>, vector<1x2x512xf32>,
    %67 = vector.extract_strided_slice %10 {offsets = [12, 0], sizes = [2, 512], strides = [1, 1]} : vector<16x512xf32> to vector<2x512xf32>
    %c6 = arith.constant 6 : index
    %c0_48 = arith.constant 0 : index
    %c0_49 = arith.constant 0 : index
    %68 = vector.load %arg9[%c6, %c0_48, %c0_49] : memref<8x2x512xf32, #tpu.memory_space<vmem>>, vector<1x2x512xf32>
    %69 = vector.shape_cast %68 : vector<1x2x512xf32> to vector<2x512xf32>
    %70 = vector.shape_cast %67 : vector<2x512xf32> to vector<1x2x512xf32>
    tpu.vector_store %arg9[%c6, %c0_48, %c0_49], %70 {strides = array<i32>} : memref<8x2x512xf32, #tpu.memory_space<vmem>>, vector<1x2x512xf32>,
    %71 = vector.extract_strided_slice %18 {offsets = [12, 0], sizes = [2, 512], strides = [1, 1]} : vector<16x512xf32> to vector<2x512xf32>
    %c6_50 = arith.constant 6 : index
    %c0_51 = arith.constant 0 : index
    %c0_52 = arith.constant 0 : index
    %72 = vector.load %arg10[%c6_50, %c0_51, %c0_52] : memref<8x2x512xf32, #tpu.memory_space<vmem>>, vector<1x2x512xf32>
    %73 = vector.shape_cast %72 : vector<1x2x512xf32> to vector<2x512xf32>
    %74 = vector.shape_cast %71 : vector<2x512xf32> to vector<1x2x512xf32>
    tpu.vector_store %arg10[%c6_50, %c0_51, %c0_52], %74 {strides = array<i32>} : memref<8x2x512xf32, #tpu.memory_space<vmem>>, vector<1x2x512xf32>,
    %75 = vector.extract_strided_slice %10 {offsets = [14, 0], sizes = [2, 512], strides = [1, 1]} : vector<16x512xf32> to vector<2x512xf32>
    %c7 = arith.constant 7 : index
    %c0_53 = arith.constant 0 : index
    %c0_54 = arith.constant 0 : index
    %76 = vector.load %arg9[%c7, %c0_53, %c0_54] : memref<8x2x512xf32, #tpu.memory_space<vmem>>, vector<1x2x512xf32>
    %77 = vector.shape_cast %76 : vector<1x2x512xf32> to vector<2x512xf32>
    %78 = vector.shape_cast %75 : vector<2x512xf32> to vector<1x2x512xf32>
    tpu.vector_store %arg9[%c7, %c0_53, %c0_54], %78 {strides = array<i32>} : memref<8x2x512xf32, #tpu.memory_space<vmem>>, vector<1x2x512xf32>,
    %79 = vector.extract_strided_slice %18 {offsets = [14, 0], sizes = [2, 512], strides = [1, 1]} : vector<16x512xf32> to vector<2x512xf32>
    %c7_55 = arith.constant 7 : index
    %c0_56 = arith.constant 0 : index
    %c0_57 = arith.constant 0 : index
    %80 = vector.load %arg10[%c7_55, %c0_56, %c0_57] : memref<8x2x512xf32, #tpu.memory_space<vmem>>, vector<1x2x512xf32>
    %81 = vector.shape_cast %80 : vector<1x2x512xf32> to vector<2x512xf32>
    %82 = vector.shape_cast %79 : vector<2x512xf32> to vector<1x2x512xf32>
    tpu.vector_store %arg10[%c7_55, %c0_56, %c0_57], %82 {strides = array<i32>} : memref<8x2x512xf32, #tpu.memory_space<vmem>>, vector<1x2x512xf32>,
    %c0_58 = arith.constant 0 : index
    %c0_59 = arith.constant 0 : index
    %83 = vector.load %arg1[%c0_58, %c0_59] : memref<2x1xi32, #tpu.memory_space<vmem>>, vector<2x1xi32>
    %c8_i32 = arith.constant 8 : i32
    %84 = arith.muli %arg0, %c8_i32 : i32
    %c0_i32_60 = arith.constant 0 : i32
    %85 = arith.subi %c0_i32_60, %arg0 : i32
    %c8_i32_61 = arith.constant 8 : i32
    %86 = arith.muli %85, %c8_i32_61 : i32
    %c0_i32_62 = arith.constant 0 : i32
    %c7_i32 = arith.constant 7 : i32
    %87 = arith.subi %c7_i32, %c0_i32_62 : i32
    %c0_63 = arith.constant 0 : index
    %c0_64 = arith.constant 0 : index
    %88 = vector.load %arg11[%c0_63, %c0_64] : memref<2x128xf32, #tpu.memory_space<vmem>>, vector<2x128xf32>
    %c0_65 = arith.constant 0 : index
    %c0_66 = arith.constant 0 : index
    %89 = vector.load %arg12[%c0_65, %c0_66] : memref<2x128xf32, #tpu.memory_space<vmem>>, vector<2x128xf32>
    %c0_67 = arith.constant 0 : index
    %c0_68 = arith.constant 0 : index
    %90 = vector.load %arg13[%c0_67, %c0_68] : memref<2x128xf32, #tpu.memory_space<vmem>>, vector<2x128xf32>
    %c0_69 = arith.constant 0 : index
    %c0_70 = arith.constant 0 : index
    %91 = vector.load %arg14[%c0_69, %c0_70] : memref<2x128xf32, #tpu.memory_space<vmem>>, vector<2x128xf32>
    %92 = arith.index_cast %c0_i32_62 : i32 to index
    %c0_71 = arith.constant 0 : index
    %c0_72 = arith.constant 0 : index
    %93 = vector.load %arg9[%92, %c0_71, %c0_72] : memref<8x2x512xf32, #tpu.memory_space<vmem>>, vector<1x2x512xf32>
    %94 = vector.shape_cast %93 : vector<1x2x512xf32> to vector<2x512xf32>
    %95 = arith.truncf %88 : vector<2x128xf32> to vector<2x128xbf16>
    %c0_73 = arith.constant 0 : index
    %c0_74 = arith.constant 0 : index
    %c0_75 = arith.constant 0 : index
    %96 = vector.load %arg5[%c0_73, %c0_74, %c0_75] : memref<2x128x512xbf16, #tpu.memory_space<vmem>>, vector<1x128x512xbf16>
    %97 = vector.shape_cast %96 : vector<1x128x512xbf16> to vector<128x512xbf16>
    %cst_76 = arith.constant dense<0.000000e+00> : vector<2x512xf32>
    %98 = tpu.matmul %95, %97, %cst_76 {dimension_numbers = #tpu.dot_dimension_numbers<[1], [0], [0], [1], [0, 0, 1, 1], [], []>} : vector<2x128xbf16>, vector<128x512xbf16>, vector<2x512xf32> -> vector<2x512xf32>
    %99 = arith.addf %94, %98 : vector<2x512xf32>
    %100 = arith.index_cast %87 : i32 to index
    %c0_77 = arith.constant 0 : index
    %c0_78 = arith.constant 0 : index
    %101 = vector.load %arg10[%100, %c0_77, %c0_78] : memref<8x2x512xf32, #tpu.memory_space<vmem>>, vector<1x2x512xf32>
    %102 = vector.shape_cast %101 : vector<1x2x512xf32> to vector<2x512xf32>
    %103 = arith.truncf %90 : vector<2x128xf32> to vector<2x128xbf16>
    %c1_79 = arith.constant 1 : index
    %c0_80 = arith.constant 0 : index
    %c0_81 = arith.constant 0 : index
    %104 = vector.load %arg5[%c1_79, %c0_80, %c0_81] : memref<2x128x512xbf16, #tpu.memory_space<vmem>>, vector<1x128x512xbf16>
    %105 = vector.shape_cast %104 : vector<1x128x512xbf16> to vector<128x512xbf16>
    %cst_82 = arith.constant dense<0.000000e+00> : vector<2x512xf32>
    %106 = tpu.matmul %103, %105, %cst_82 {dimension_numbers = #tpu.dot_dimension_numbers<[1], [0], [0], [1], [0, 0, 1, 1], [], []>} : vector<2x128xbf16>, vector<128x512xbf16>, vector<2x512xf32> -> vector<2x512xf32>
    %107 = arith.addf %102, %106 : vector<2x512xf32>
    %108 = vector.extract_strided_slice %99 {offsets = [0, 0], sizes = [2, 128], strides = [1, 1]} : vector<2x512xf32> to vector<2x128xf32>
    %109 = arith.negf %108 : vector<2x128xf32>
    %110 = math.exp %109 : vector<2x128xf32>
    %cst_83 = arith.constant 1.000000e+00 : f32
    %111 = vector.broadcast %cst_83 : f32 to vector<2x128xf32>
    %112 = arith.addf %111, %110 : vector<2x128xf32>
    %113 = arith.divf %111, %112 : vector<2x128xf32>
    %114 = vector.extract_strided_slice %99 {offsets = [0, 128], sizes = [2, 128], strides = [1, 1]} : vector<2x512xf32> to vector<2x128xf32>
    %115 = arith.negf %114 : vector<2x128xf32>
    %116 = math.exp %115 : vector<2x128xf32>
    %cst_84 = arith.constant 1.000000e+00 : f32
    %117 = vector.broadcast %cst_84 : f32 to vector<2x128xf32>
    %118 = arith.addf %117, %116 : vector<2x128xf32>
    %119 = arith.divf %117, %118 : vector<2x128xf32>
    %120 = vector.extract_strided_slice %99 {offsets = [0, 256], sizes = [2, 128], strides = [1, 1]} : vector<2x512xf32> to vector<2x128xf32>
    %121 = math.tanh %120 : vector<2x128xf32>
    %122 = vector.extract_strided_slice %99 {offsets = [0, 384], sizes = [2, 128], strides = [1, 1]} : vector<2x512xf32> to vector<2x128xf32>
    %123 = arith.negf %122 : vector<2x128xf32>
    %124 = math.exp %123 : vector<2x128xf32>
    %cst_85 = arith.constant 1.000000e+00 : f32
    %125 = vector.broadcast %cst_85 : f32 to vector<2x128xf32>
    %126 = arith.addf %125, %124 : vector<2x128xf32>
    %127 = arith.divf %125, %126 : vector<2x128xf32>
    %128 = vector.extract_strided_slice %107 {offsets = [0, 0], sizes = [2, 128], strides = [1, 1]} : vector<2x512xf32> to vector<2x128xf32>
    %129 = arith.negf %128 : vector<2x128xf32>
    %130 = math.exp %129 : vector<2x128xf32>
    %cst_86 = arith.constant 1.000000e+00 : f32
    %131 = vector.broadcast %cst_86 : f32 to vector<2x128xf32>
    %132 = arith.addf %131, %130 : vector<2x128xf32>
    %133 = arith.divf %131, %132 : vector<2x128xf32>
    %134 = vector.extract_strided_slice %107 {offsets = [0, 128], sizes = [2, 128], strides = [1, 1]} : vector<2x512xf32> to vector<2x128xf32>
    %135 = arith.negf %134 : vector<2x128xf32>
    %136 = math.exp %135 : vector<2x128xf32>
    %cst_87 = arith.constant 1.000000e+00 : f32
    %137 = vector.broadcast %cst_87 : f32 to vector<2x128xf32>
    %138 = arith.addf %137, %136 : vector<2x128xf32>
    %139 = arith.divf %137, %138 : vector<2x128xf32>
    %140 = vector.extract_strided_slice %107 {offsets = [0, 256], sizes = [2, 128], strides = [1, 1]} : vector<2x512xf32> to vector<2x128xf32>
    %141 = math.tanh %140 : vector<2x128xf32>
    %142 = vector.extract_strided_slice %107 {offsets = [0, 384], sizes = [2, 128], strides = [1, 1]} : vector<2x512xf32> to vector<2x128xf32>
    %143 = arith.negf %142 : vector<2x128xf32>
    %144 = math.exp %143 : vector<2x128xf32>
    %cst_88 = arith.constant 1.000000e+00 : f32
    %145 = vector.broadcast %cst_88 : f32 to vector<2x128xf32>
    %146 = arith.addf %145, %144 : vector<2x128xf32>
    %147 = arith.divf %145, %146 : vector<2x128xf32>
    %148 = arith.mulf %119, %89 : vector<2x128xf32>
    %149 = arith.mulf %113, %121 : vector<2x128xf32>
    %150 = arith.addf %148, %149 : vector<2x128xf32>
    %151 = arith.mulf %139, %91 : vector<2x128xf32>
    %152 = arith.mulf %133, %141 : vector<2x128xf32>
    %153 = arith.addf %151, %152 : vector<2x128xf32>
    %154 = math.tanh %150 : vector<2x128xf32>
    %155 = arith.mulf %127, %154 : vector<2x128xf32>
    %156 = math.tanh %153 : vector<2x128xf32>
    %157 = arith.mulf %147, %156 : vector<2x128xf32>
    %158 = arith.addi %84, %c0_i32_62 : i32
    %159 = vector.broadcast %158 : i32 to vector<2x1xi32>
    %160 = arith.cmpi slt, %159, %83 : vector<2x1xi32>
    %161 = arith.addi %86, %87 : i32
    %162 = vector.broadcast %161 : i32 to vector<2x1xi32>
    %163 = arith.cmpi slt, %162, %83 : vector<2x1xi32>
    %164 = vector.shape_cast %160 : vector<2x1xi1> to vector<2x1xi1>
    %165 = vector.broadcast %164 : vector<2x1xi1> to vector<2x128xi1>
    %166 = arith.select %165, %150, %89 : vector<2x128xi1>, vector<2x128xf32>
    %c0_89 = arith.constant 0 : index
    %c0_90 = arith.constant 0 : index
    %167 = vector.load %arg12[%c0_89, %c0_90] : memref<2x128xf32, #tpu.memory_space<vmem>>, vector<2x128xf32>
    tpu.vector_store %arg12[%c0_89, %c0_90], %166 {strides = array<i32>} : memref<2x128xf32, #tpu.memory_space<vmem>>, vector<2x128xf32>,
    %168 = vector.shape_cast %160 : vector<2x1xi1> to vector<2x1xi1>
    %169 = vector.broadcast %168 : vector<2x1xi1> to vector<2x128xi1>
    %170 = arith.select %169, %155, %88 : vector<2x128xi1>, vector<2x128xf32>
    %c0_91 = arith.constant 0 : index
    %c0_92 = arith.constant 0 : index
    %171 = vector.load %arg11[%c0_91, %c0_92] : memref<2x128xf32, #tpu.memory_space<vmem>>, vector<2x128xf32>
    tpu.vector_store %arg11[%c0_91, %c0_92], %170 {strides = array<i32>} : memref<2x128xf32, #tpu.memory_space<vmem>>, vector<2x128xf32>,
    %172 = vector.shape_cast %163 : vector<2x1xi1> to vector<2x1xi1>
    %173 = vector.broadcast %172 : vector<2x1xi1> to vector<2x128xi1>
    %174 = arith.select %173, %153, %91 : vector<2x128xi1>, vector<2x128xf32>
    %c0_93 = arith.constant 0 : index
    %c0_94 = arith.constant 0 : index
    %175 = vector.load %arg14[%c0_93, %c0_94] : memref<2x128xf32, #tpu.memory_space<vmem>>, vector<2x128xf32>
    tpu.vector_store %arg14[%c0_93, %c0_94], %174 {strides = array<i32>} : memref<2x128xf32, #tpu.memory_space<vmem>>, vector<2x128xf32>,
    %176 = vector.shape_cast %163 : vector<2x1xi1> to vector<2x1xi1>
    %177 = vector.broadcast %176 : vector<2x1xi1> to vector<2x128xi1>
    %178 = arith.select %177, %157, %90 : vector<2x128xi1>, vector<2x128xf32>
    %c0_95 = arith.constant 0 : index
    %c0_96 = arith.constant 0 : index
    %179 = vector.load %arg13[%c0_95, %c0_96] : memref<2x128xf32, #tpu.memory_space<vmem>>, vector<2x128xf32>
    tpu.vector_store %arg13[%c0_95, %c0_96], %178 {strides = array<i32>} : memref<2x128xf32, #tpu.memory_space<vmem>>, vector<2x128xf32>,
    %cst_97 = arith.constant 0.000000e+00 : f32
    %180 = vector.shape_cast %160 : vector<2x1xi1> to vector<2x1xi1>
    %181 = vector.broadcast %180 : vector<2x1xi1> to vector<2x128xi1>
    %182 = vector.broadcast %cst_97 : f32 to vector<2x128xf32>
    %183 = arith.select %181, %155, %182 : vector<2x128xi1>, vector<2x128xf32>
    %184 = arith.truncf %183 : vector<2x128xf32> to vector<2x128xbf16>
    %185 = arith.index_cast %c0_i32_62 : i32 to index
    %c0_98 = arith.constant 0 : index
    %c0_99 = arith.constant 0 : index
    %186 = vector.load %arg7[%185, %c0_98, %c0_99] : memref<8x2x128xbf16, #tpu.memory_space<vmem>>, vector<1x2x128xbf16>
    %187 = vector.shape_cast %186 : vector<1x2x128xbf16> to vector<2x128xbf16>
    %188 = vector.shape_cast %184 : vector<2x128xbf16> to vector<1x2x128xbf16>
    tpu.vector_store %arg7[%185, %c0_98, %c0_99], %188 {strides = array<i32>} : memref<8x2x128xbf16, #tpu.memory_space<vmem>>, vector<1x2x128xbf16>,
    %cst_100 = arith.constant 0.000000e+00 : f32
    %189 = vector.shape_cast %163 : vector<2x1xi1> to vector<2x1xi1>
    %190 = vector.broadcast %189 : vector<2x1xi1> to vector<2x128xi1>
    %191 = vector.broadcast %cst_100 : f32 to vector<2x128xf32>
    %192 = arith.select %190, %157, %191 : vector<2x128xi1>, vector<2x128xf32>
    %193 = arith.truncf %192 : vector<2x128xf32> to vector<2x128xbf16>
    %194 = arith.index_cast %87 : i32 to index
    %c0_101 = arith.constant 0 : index
    %c0_102 = arith.constant 0 : index
    %195 = vector.load %arg8[%194, %c0_101, %c0_102] : memref<8x2x128xbf16, #tpu.memory_space<vmem>>, vector<1x2x128xbf16>
    %196 = vector.shape_cast %195 : vector<1x2x128xbf16> to vector<2x128xbf16>
    %197 = vector.shape_cast %193 : vector<2x128xbf16> to vector<1x2x128xbf16>
    tpu.vector_store %arg8[%194, %c0_101, %c0_102], %197 {strides = array<i32>} : memref<8x2x128xbf16, #tpu.memory_space<vmem>>, vector<1x2x128xbf16>,
    %c1_i32 = arith.constant 1 : i32
    %c7_i32_103 = arith.constant 7 : i32
    %198 = arith.subi %c7_i32_103, %c1_i32 : i32
    %c0_104 = arith.constant 0 : index
    %c0_105 = arith.constant 0 : index
    %199 = vector.load %arg11[%c0_104, %c0_105] : memref<2x128xf32, #tpu.memory_space<vmem>>, vector<2x128xf32>
    %c0_106 = arith.constant 0 : index
    %c0_107 = arith.constant 0 : index
    %200 = vector.load %arg12[%c0_106, %c0_107] : memref<2x128xf32, #tpu.memory_space<vmem>>, vector<2x128xf32>
    %c0_108 = arith.constant 0 : index
    %c0_109 = arith.constant 0 : index
    %201 = vector.load %arg13[%c0_108, %c0_109] : memref<2x128xf32, #tpu.memory_space<vmem>>, vector<2x128xf32>
    %c0_110 = arith.constant 0 : index
    %c0_111 = arith.constant 0 : index
    %202 = vector.load %arg14[%c0_110, %c0_111] : memref<2x128xf32, #tpu.memory_space<vmem>>, vector<2x128xf32>
    %203 = arith.index_cast %c1_i32 : i32 to index
    %c0_112 = arith.constant 0 : index
    %c0_113 = arith.constant 0 : index
    %204 = vector.load %arg9[%203, %c0_112, %c0_113] : memref<8x2x512xf32, #tpu.memory_space<vmem>>, vector<1x2x512xf32>
    %205 = vector.shape_cast %204 : vector<1x2x512xf32> to vector<2x512xf32>
    %206 = arith.truncf %199 : vector<2x128xf32> to vector<2x128xbf16>
    %c0_114 = arith.constant 0 : index
    %c0_115 = arith.constant 0 : index
    %c0_116 = arith.constant 0 : index
    %207 = vector.load %arg5[%c0_114, %c0_115, %c0_116] : memref<2x128x512xbf16, #tpu.memory_space<vmem>>, vector<1x128x512xbf16>
    %208 = vector.shape_cast %207 : vector<1x128x512xbf16> to vector<128x512xbf16>
    %cst_117 = arith.constant dense<0.000000e+00> : vector<2x512xf32>
    %209 = tpu.matmul %206, %208, %cst_117 {dimension_numbers = #tpu.dot_dimension_numbers<[1], [0], [0], [1], [0, 0, 1, 1], [], []>} : vector<2x128xbf16>, vector<128x512xbf16>, vector<2x512xf32> -> vector<2x512xf32>
    %210 = arith.addf %205, %209 : vector<2x512xf32>
    %211 = arith.index_cast %198 : i32 to index
    %c0_118 = arith.constant 0 : index
    %c0_119 = arith.constant 0 : index
    %212 = vector.load %arg10[%211, %c0_118, %c0_119] : memref<8x2x512xf32, #tpu.memory_space<vmem>>, vector<1x2x512xf32>
    %213 = vector.shape_cast %212 : vector<1x2x512xf32> to vector<2x512xf32>
    %214 = arith.truncf %201 : vector<2x128xf32> to vector<2x128xbf16>
    %c1_120 = arith.constant 1 : index
    %c0_121 = arith.constant 0 : index
    %c0_122 = arith.constant 0 : index
    %215 = vector.load %arg5[%c1_120, %c0_121, %c0_122] : memref<2x128x512xbf16, #tpu.memory_space<vmem>>, vector<1x128x512xbf16>
    %216 = vector.shape_cast %215 : vector<1x128x512xbf16> to vector<128x512xbf16>
    %cst_123 = arith.constant dense<0.000000e+00> : vector<2x512xf32>
    %217 = tpu.matmul %214, %216, %cst_123 {dimension_numbers = #tpu.dot_dimension_numbers<[1], [0], [0], [1], [0, 0, 1, 1], [], []>} : vector<2x128xbf16>, vector<128x512xbf16>, vector<2x512xf32> -> vector<2x512xf32>
    %218 = arith.addf %213, %217 : vector<2x512xf32>
    %219 = vector.extract_strided_slice %210 {offsets = [0, 0], sizes = [2, 128], strides = [1, 1]} : vector<2x512xf32> to vector<2x128xf32>
    %220 = arith.negf %219 : vector<2x128xf32>
    %221 = math.exp %220 : vector<2x128xf32>
    %cst_124 = arith.constant 1.000000e+00 : f32
    %222 = vector.broadcast %cst_124 : f32 to vector<2x128xf32>
    %223 = arith.addf %222, %221 : vector<2x128xf32>
    %224 = arith.divf %222, %223 : vector<2x128xf32>
    %225 = vector.extract_strided_slice %210 {offsets = [0, 128], sizes = [2, 128], strides = [1, 1]} : vector<2x512xf32> to vector<2x128xf32>
    %226 = arith.negf %225 : vector<2x128xf32>
    %227 = math.exp %226 : vector<2x128xf32>
    %cst_125 = arith.constant 1.000000e+00 : f32
    %228 = vector.broadcast %cst_125 : f32 to vector<2x128xf32>
    %229 = arith.addf %228, %227 : vector<2x128xf32>
    %230 = arith.divf %228, %229 : vector<2x128xf32>
    %231 = vector.extract_strided_slice %210 {offsets = [0, 256], sizes = [2, 128], strides = [1, 1]} : vector<2x512xf32> to vector<2x128xf32>
    %232 = math.tanh %231 : vector<2x128xf32>
    %233 = vector.extract_strided_slice %210 {offsets = [0, 384], sizes = [2, 128], strides = [1, 1]} : vector<2x512xf32> to vector<2x128xf32>
    %234 = arith.negf %233 : vector<2x128xf32>
    %235 = math.exp %234 : vector<2x128xf32>
    %cst_126 = arith.constant 1.000000e+00 : f32
    %236 = vector.broadcast %cst_126 : f32 to vector<2x128xf32>
    %237 = arith.addf %236, %235 : vector<2x128xf32>
    %238 = arith.divf %236, %237 : vector<2x128xf32>
    %239 = vector.extract_strided_slice %218 {offsets = [0, 0], sizes = [2, 128], strides = [1, 1]} : vector<2x512xf32> to vector<2x128xf32>
    %240 = arith.negf %239 : vector<2x128xf32>
    %241 = math.exp %240 : vector<2x128xf32>
    %cst_127 = arith.constant 1.000000e+00 : f32
    %242 = vector.broadcast %cst_127 : f32 to vector<2x128xf32>
    %243 = arith.addf %242, %241 : vector<2x128xf32>
    %244 = arith.divf %242, %243 : vector<2x128xf32>
    %245 = vector.extract_strided_slice %218 {offsets = [0, 128], sizes = [2, 128], strides = [1, 1]} : vector<2x512xf32> to vector<2x128xf32>
    %246 = arith.negf %245 : vector<2x128xf32>
    %247 = math.exp %246 : vector<2x128xf32>
    %cst_128 = arith.constant 1.000000e+00 : f32
    %248 = vector.broadcast %cst_128 : f32 to vector<2x128xf32>
    %249 = arith.addf %248, %247 : vector<2x128xf32>
    %250 = arith.divf %248, %249 : vector<2x128xf32>
    %251 = vector.extract_strided_slice %218 {offsets = [0, 256], sizes = [2, 128], strides = [1, 1]} : vector<2x512xf32> to vector<2x128xf32>
    %252 = math.tanh %251 : vector<2x128xf32>
    %253 = vector.extract_strided_slice %218 {offsets = [0, 384], sizes = [2, 128], strides = [1, 1]} : vector<2x512xf32> to vector<2x128xf32>
    %254 = arith.negf %253 : vector<2x128xf32>
    %255 = math.exp %254 : vector<2x128xf32>
    %cst_129 = arith.constant 1.000000e+00 : f32
    %256 = vector.broadcast %cst_129 : f32 to vector<2x128xf32>
    %257 = arith.addf %256, %255 : vector<2x128xf32>
    %258 = arith.divf %256, %257 : vector<2x128xf32>
    %259 = arith.mulf %230, %200 : vector<2x128xf32>
    %260 = arith.mulf %224, %232 : vector<2x128xf32>
    %261 = arith.addf %259, %260 : vector<2x128xf32>
    %262 = arith.mulf %250, %202 : vector<2x128xf32>
    %263 = arith.mulf %244, %252 : vector<2x128xf32>
    %264 = arith.addf %262, %263 : vector<2x128xf32>
    %265 = math.tanh %261 : vector<2x128xf32>
    %266 = arith.mulf %238, %265 : vector<2x128xf32>
    %267 = math.tanh %264 : vector<2x128xf32>
    %268 = arith.mulf %258, %267 : vector<2x128xf32>
    %269 = arith.addi %84, %c1_i32 : i32
    %270 = vector.broadcast %269 : i32 to vector<2x1xi32>
    %271 = arith.cmpi slt, %270, %83 : vector<2x1xi32>
    %272 = arith.addi %86, %198 : i32
    %273 = vector.broadcast %272 : i32 to vector<2x1xi32>
    %274 = arith.cmpi slt, %273, %83 : vector<2x1xi32>
    %275 = vector.shape_cast %271 : vector<2x1xi1> to vector<2x1xi1>
    %276 = vector.broadcast %275 : vector<2x1xi1> to vector<2x128xi1>
    %277 = arith.select %276, %261, %200 : vector<2x128xi1>, vector<2x128xf32>
    %c0_130 = arith.constant 0 : index
    %c0_131 = arith.constant 0 : index
    %278 = vector.load %arg12[%c0_130, %c0_131] : memref<2x128xf32, #tpu.memory_space<vmem>>, vector<2x128xf32>
    tpu.vector_store %arg12[%c0_130, %c0_131], %277 {strides = array<i32>} : memref<2x128xf32, #tpu.memory_space<vmem>>, vector<2x128xf32>,
    %279 = vector.shape_cast %271 : vector<2x1xi1> to vector<2x1xi1>
    %280 = vector.broadcast %279 : vector<2x1xi1> to vector<2x128xi1>
    %281 = arith.select %280, %266, %199 : vector<2x128xi1>, vector<2x128xf32>
    %c0_132 = arith.constant 0 : index
    %c0_133 = arith.constant 0 : index
    %282 = vector.load %arg11[%c0_132, %c0_133] : memref<2x128xf32, #tpu.memory_space<vmem>>, vector<2x128xf32>
    tpu.vector_store %arg11[%c0_132, %c0_133], %281 {strides = array<i32>} : memref<2x128xf32, #tpu.memory_space<vmem>>, vector<2x128xf32>,
    %283 = vector.shape_cast %274 : vector<2x1xi1> to vector<2x1xi1>
    %284 = vector.broadcast %283 : vector<2x1xi1> to vector<2x128xi1>
    %285 = arith.select %284, %264, %202 : vector<2x128xi1>, vector<2x128xf32>
    %c0_134 = arith.constant 0 : index
    %c0_135 = arith.constant 0 : index
    %286 = vector.load %arg14[%c0_134, %c0_135] : memref<2x128xf32, #tpu.memory_space<vmem>>, vector<2x128xf32>
    tpu.vector_store %arg14[%c0_134, %c0_135], %285 {strides = array<i32>} : memref<2x128xf32, #tpu.memory_space<vmem>>, vector<2x128xf32>,
    %287 = vector.shape_cast %274 : vector<2x1xi1> to vector<2x1xi1>
    %288 = vector.broadcast %287 : vector<2x1xi1> to vector<2x128xi1>
    %289 = arith.select %288, %268, %201 : vector<2x128xi1>, vector<2x128xf32>
    %c0_136 = arith.constant 0 : index
    %c0_137 = arith.constant 0 : index
    %290 = vector.load %arg13[%c0_136, %c0_137] : memref<2x128xf32, #tpu.memory_space<vmem>>, vector<2x128xf32>
    tpu.vector_store %arg13[%c0_136, %c0_137], %289 {strides = array<i32>} : memref<2x128xf32, #tpu.memory_space<vmem>>, vector<2x128xf32>,
    %cst_138 = arith.constant 0.000000e+00 : f32
    %291 = vector.shape_cast %271 : vector<2x1xi1> to vector<2x1xi1>
    %292 = vector.broadcast %291 : vector<2x1xi1> to vector<2x128xi1>
    %293 = vector.broadcast %cst_138 : f32 to vector<2x128xf32>
    %294 = arith.select %292, %266, %293 : vector<2x128xi1>, vector<2x128xf32>
    %295 = arith.truncf %294 : vector<2x128xf32> to vector<2x128xbf16>
    %296 = arith.index_cast %c1_i32 : i32 to index
    %c0_139 = arith.constant 0 : index
    %c0_140 = arith.constant 0 : index
    %297 = vector.load %arg7[%296, %c0_139, %c0_140] : memref<8x2x128xbf16, #tpu.memory_space<vmem>>, vector<1x2x128xbf16>
    %298 = vector.shape_cast %297 : vector<1x2x128xbf16> to vector<2x128xbf16>
    %299 = vector.shape_cast %295 : vector<2x128xbf16> to vector<1x2x128xbf16>
    tpu.vector_store %arg7[%296, %c0_139, %c0_140], %299 {strides = array<i32>} : memref<8x2x128xbf16, #tpu.memory_space<vmem>>, vector<1x2x128xbf16>,
    %cst_141 = arith.constant 0.000000e+00 : f32
    %300 = vector.shape_cast %274 : vector<2x1xi1> to vector<2x1xi1>
    %301 = vector.broadcast %300 : vector<2x1xi1> to vector<2x128xi1>
    %302 = vector.broadcast %cst_141 : f32 to vector<2x128xf32>
    %303 = arith.select %301, %268, %302 : vector<2x128xi1>, vector<2x128xf32>
    %304 = arith.truncf %303 : vector<2x128xf32> to vector<2x128xbf16>
    %305 = arith.index_cast %198 : i32 to index
    %c0_142 = arith.constant 0 : index
    %c0_143 = arith.constant 0 : index
    %306 = vector.load %arg8[%305, %c0_142, %c0_143] : memref<8x2x128xbf16, #tpu.memory_space<vmem>>, vector<1x2x128xbf16>
    %307 = vector.shape_cast %306 : vector<1x2x128xbf16> to vector<2x128xbf16>
    %308 = vector.shape_cast %304 : vector<2x128xbf16> to vector<1x2x128xbf16>
    tpu.vector_store %arg8[%305, %c0_142, %c0_143], %308 {strides = array<i32>} : memref<8x2x128xbf16, #tpu.memory_space<vmem>>, vector<1x2x128xbf16>,
    %c2_i32 = arith.constant 2 : i32
    %c7_i32_144 = arith.constant 7 : i32
    %309 = arith.subi %c7_i32_144, %c2_i32 : i32
    %c0_145 = arith.constant 0 : index
    %c0_146 = arith.constant 0 : index
    %310 = vector.load %arg11[%c0_145, %c0_146] : memref<2x128xf32, #tpu.memory_space<vmem>>, vector<2x128xf32>
    %c0_147 = arith.constant 0 : index
    %c0_148 = arith.constant 0 : index
    %311 = vector.load %arg12[%c0_147, %c0_148] : memref<2x128xf32, #tpu.memory_space<vmem>>, vector<2x128xf32>
    %c0_149 = arith.constant 0 : index
    %c0_150 = arith.constant 0 : index
    %312 = vector.load %arg13[%c0_149, %c0_150] : memref<2x128xf32, #tpu.memory_space<vmem>>, vector<2x128xf32>
    %c0_151 = arith.constant 0 : index
    %c0_152 = arith.constant 0 : index
    %313 = vector.load %arg14[%c0_151, %c0_152] : memref<2x128xf32, #tpu.memory_space<vmem>>, vector<2x128xf32>
    %314 = arith.index_cast %c2_i32 : i32 to index
    %c0_153 = arith.constant 0 : index
    %c0_154 = arith.constant 0 : index
    %315 = vector.load %arg9[%314, %c0_153, %c0_154] : memref<8x2x512xf32, #tpu.memory_space<vmem>>, vector<1x2x512xf32>
    %316 = vector.shape_cast %315 : vector<1x2x512xf32> to vector<2x512xf32>
    %317 = arith.truncf %310 : vector<2x128xf32> to vector<2x128xbf16>
    %c0_155 = arith.constant 0 : index
    %c0_156 = arith.constant 0 : index
    %c0_157 = arith.constant 0 : index
    %318 = vector.load %arg5[%c0_155, %c0_156, %c0_157] : memref<2x128x512xbf16, #tpu.memory_space<vmem>>, vector<1x128x512xbf16>
    %319 = vector.shape_cast %318 : vector<1x128x512xbf16> to vector<128x512xbf16>
    %cst_158 = arith.constant dense<0.000000e+00> : vector<2x512xf32>
    %320 = tpu.matmul %317, %319, %cst_158 {dimension_numbers = #tpu.dot_dimension_numbers<[1], [0], [0], [1], [0, 0, 1, 1], [], []>} : vector<2x128xbf16>, vector<128x512xbf16>, vector<2x512xf32> -> vector<2x512xf32>
    %321 = arith.addf %316, %320 : vector<2x512xf32>
    %322 = arith.index_cast %309 : i32 to index
    %c0_159 = arith.constant 0 : index
    %c0_160 = arith.constant 0 : index
    %323 = vector.load %arg10[%322, %c0_159, %c0_160] : memref<8x2x512xf32, #tpu.memory_space<vmem>>, vector<1x2x512xf32>
    %324 = vector.shape_cast %323 : vector<1x2x512xf32> to vector<2x512xf32>
    %325 = arith.truncf %312 : vector<2x128xf32> to vector<2x128xbf16>
    %c1_161 = arith.constant 1 : index
    %c0_162 = arith.constant 0 : index
    %c0_163 = arith.constant 0 : index
    %326 = vector.load %arg5[%c1_161, %c0_162, %c0_163] : memref<2x128x512xbf16, #tpu.memory_space<vmem>>, vector<1x128x512xbf16>
    %327 = vector.shape_cast %326 : vector<1x128x512xbf16> to vector<128x512xbf16>
    %cst_164 = arith.constant dense<0.000000e+00> : vector<2x512xf32>
    %328 = tpu.matmul %325, %327, %cst_164 {dimension_numbers = #tpu.dot_dimension_numbers<[1], [0], [0], [1], [0, 0, 1, 1], [], []>} : vector<2x128xbf16>, vector<128x512xbf16>, vector<2x512xf32> -> vector<2x512xf32>
    %329 = arith.addf %324, %328 : vector<2x512xf32>
    %330 = vector.extract_strided_slice %321 {offsets = [0, 0], sizes = [2, 128], strides = [1, 1]} : vector<2x512xf32> to vector<2x128xf32>
    %331 = arith.negf %330 : vector<2x128xf32>
    %332 = math.exp %331 : vector<2x128xf32>
    %cst_165 = arith.constant 1.000000e+00 : f32
    %333 = vector.broadcast %cst_165 : f32 to vector<2x128xf32>
    %334 = arith.addf %333, %332 : vector<2x128xf32>
    %335 = arith.divf %333, %334 : vector<2x128xf32>
    %336 = vector.extract_strided_slice %321 {offsets = [0, 128], sizes = [2, 128], strides = [1, 1]} : vector<2x512xf32> to vector<2x128xf32>
    %337 = arith.negf %336 : vector<2x128xf32>
    %338 = math.exp %337 : vector<2x128xf32>
    %cst_166 = arith.constant 1.000000e+00 : f32
    %339 = vector.broadcast %cst_166 : f32 to vector<2x128xf32>
    %340 = arith.addf %339, %338 : vector<2x128xf32>
    %341 = arith.divf %339, %340 : vector<2x128xf32>
    %342 = vector.extract_strided_slice %321 {offsets = [0, 256], sizes = [2, 128], strides = [1, 1]} : vector<2x512xf32> to vector<2x128xf32>
    %343 = math.tanh %342 : vector<2x128xf32>
    %344 = vector.extract_strided_slice %321 {offsets = [0, 384], sizes = [2, 128], strides = [1, 1]} : vector<2x512xf32> to vector<2x128xf32>
    %345 = arith.negf %344 : vector<2x128xf32>
    %346 = math.exp %345 : vector<2x128xf32>
    %cst_167 = arith.constant 1.000000e+00 : f32
    %347 = vector.broadcast %cst_167 : f32 to vector<2x128xf32>
    %348 = arith.addf %347, %346 : vector<2x128xf32>
    %349 = arith.divf %347, %348 : vector<2x128xf32>
    %350 = vector.extract_strided_slice %329 {offsets = [0, 0], sizes = [2, 128], strides = [1, 1]} : vector<2x512xf32> to vector<2x128xf32>
    %351 = arith.negf %350 : vector<2x128xf32>
    %352 = math.exp %351 : vector<2x128xf32>
    %cst_168 = arith.constant 1.000000e+00 : f32
    %353 = vector.broadcast %cst_168 : f32 to vector<2x128xf32>
    %354 = arith.addf %353, %352 : vector<2x128xf32>
    %355 = arith.divf %353, %354 : vector<2x128xf32>
    %356 = vector.extract_strided_slice %329 {offsets = [0, 128], sizes = [2, 128], strides = [1, 1]} : vector<2x512xf32> to vector<2x128xf32>
    %357 = arith.negf %356 : vector<2x128xf32>
    %358 = math.exp %357 : vector<2x128xf32>
    %cst_169 = arith.constant 1.000000e+00 : f32
    %359 = vector.broadcast %cst_169 : f32 to vector<2x128xf32>
    %360 = arith.addf %359, %358 : vector<2x128xf32>
    %361 = arith.divf %359, %360 : vector<2x128xf32>
    %362 = vector.extract_strided_slice %329 {offsets = [0, 256], sizes = [2, 128], strides = [1, 1]} : vector<2x512xf32> to vector<2x128xf32>
    %363 = math.tanh %362 : vector<2x128xf32>
    %364 = vector.extract_strided_slice %329 {offsets = [0, 384], sizes = [2, 128], strides = [1, 1]} : vector<2x512xf32> to vector<2x128xf32>
    %365 = arith.negf %364 : vector<2x128xf32>
    %366 = math.exp %365 : vector<2x128xf32>
    %cst_170 = arith.constant 1.000000e+00 : f32
    %367 = vector.broadcast %cst_170 : f32 to vector<2x128xf32>
    %368 = arith.addf %367, %366 : vector<2x128xf32>
    %369 = arith.divf %367, %368 : vector<2x128xf32>
    %370 = arith.mulf %341, %311 : vector<2x128xf32>
    %371 = arith.mulf %335, %343 : vector<2x128xf32>
    %372 = arith.addf %370, %371 : vector<2x128xf32>
    %373 = arith.mulf %361, %313 : vector<2x128xf32>
    %374 = arith.mulf %355, %363 : vector<2x128xf32>
    %375 = arith.addf %373, %374 : vector<2x128xf32>
    %376 = math.tanh %372 : vector<2x128xf32>
    %377 = arith.mulf %349, %376 : vector<2x128xf32>
    %378 = math.tanh %375 : vector<2x128xf32>
    %379 = arith.mulf %369, %378 : vector<2x128xf32>
    %380 = arith.addi %84, %c2_i32 : i32
    %381 = vector.broadcast %380 : i32 to vector<2x1xi32>
    %382 = arith.cmpi slt, %381, %83 : vector<2x1xi32>
    %383 = arith.addi %86, %309 : i32
    %384 = vector.broadcast %383 : i32 to vector<2x1xi32>
    %385 = arith.cmpi slt, %384, %83 : vector<2x1xi32>
    %386 = vector.shape_cast %382 : vector<2x1xi1> to vector<2x1xi1>
    %387 = vector.broadcast %386 : vector<2x1xi1> to vector<2x128xi1>
    %388 = arith.select %387, %372, %311 : vector<2x128xi1>, vector<2x128xf32>
    %c0_171 = arith.constant 0 : index
    %c0_172 = arith.constant 0 : index
    %389 = vector.load %arg12[%c0_171, %c0_172] : memref<2x128xf32, #tpu.memory_space<vmem>>, vector<2x128xf32>
    tpu.vector_store %arg12[%c0_171, %c0_172], %388 {strides = array<i32>} : memref<2x128xf32, #tpu.memory_space<vmem>>, vector<2x128xf32>,
    %390 = vector.shape_cast %382 : vector<2x1xi1> to vector<2x1xi1>
    %391 = vector.broadcast %390 : vector<2x1xi1> to vector<2x128xi1>
    %392 = arith.select %391, %377, %310 : vector<2x128xi1>, vector<2x128xf32>
    %c0_173 = arith.constant 0 : index
    %c0_174 = arith.constant 0 : index
    %393 = vector.load %arg11[%c0_173, %c0_174] : memref<2x128xf32, #tpu.memory_space<vmem>>, vector<2x128xf32>
    tpu.vector_store %arg11[%c0_173, %c0_174], %392 {strides = array<i32>} : memref<2x128xf32, #tpu.memory_space<vmem>>, vector<2x128xf32>,
    %394 = vector.shape_cast %385 : vector<2x1xi1> to vector<2x1xi1>
    %395 = vector.broadcast %394 : vector<2x1xi1> to vector<2x128xi1>
    %396 = arith.select %395, %375, %313 : vector<2x128xi1>, vector<2x128xf32>
    %c0_175 = arith.constant 0 : index
    %c0_176 = arith.constant 0 : index
    %397 = vector.load %arg14[%c0_175, %c0_176] : memref<2x128xf32, #tpu.memory_space<vmem>>, vector<2x128xf32>
    tpu.vector_store %arg14[%c0_175, %c0_176], %396 {strides = array<i32>} : memref<2x128xf32, #tpu.memory_space<vmem>>, vector<2x128xf32>,
    %398 = vector.shape_cast %385 : vector<2x1xi1> to vector<2x1xi1>
    %399 = vector.broadcast %398 : vector<2x1xi1> to vector<2x128xi1>
    %400 = arith.select %399, %379, %312 : vector<2x128xi1>, vector<2x128xf32>
    %c0_177 = arith.constant 0 : index
    %c0_178 = arith.constant 0 : index
    %401 = vector.load %arg13[%c0_177, %c0_178] : memref<2x128xf32, #tpu.memory_space<vmem>>, vector<2x128xf32>
    tpu.vector_store %arg13[%c0_177, %c0_178], %400 {strides = array<i32>} : memref<2x128xf32, #tpu.memory_space<vmem>>, vector<2x128xf32>,
    %cst_179 = arith.constant 0.000000e+00 : f32
    %402 = vector.shape_cast %382 : vector<2x1xi1> to vector<2x1xi1>
    %403 = vector.broadcast %402 : vector<2x1xi1> to vector<2x128xi1>
    %404 = vector.broadcast %cst_179 : f32 to vector<2x128xf32>
    %405 = arith.select %403, %377, %404 : vector<2x128xi1>, vector<2x128xf32>
    %406 = arith.truncf %405 : vector<2x128xf32> to vector<2x128xbf16>
    %407 = arith.index_cast %c2_i32 : i32 to index
    %c0_180 = arith.constant 0 : index
    %c0_181 = arith.constant 0 : index
    %408 = vector.load %arg7[%407, %c0_180, %c0_181] : memref<8x2x128xbf16, #tpu.memory_space<vmem>>, vector<1x2x128xbf16>
    %409 = vector.shape_cast %408 : vector<1x2x128xbf16> to vector<2x128xbf16>
    %410 = vector.shape_cast %406 : vector<2x128xbf16> to vector<1x2x128xbf16>
    tpu.vector_store %arg7[%407, %c0_180, %c0_181], %410 {strides = array<i32>} : memref<8x2x128xbf16, #tpu.memory_space<vmem>>, vector<1x2x128xbf16>,
    %cst_182 = arith.constant 0.000000e+00 : f32
    %411 = vector.shape_cast %385 : vector<2x1xi1> to vector<2x1xi1>
    %412 = vector.broadcast %411 : vector<2x1xi1> to vector<2x128xi1>
    %413 = vector.broadcast %cst_182 : f32 to vector<2x128xf32>
    %414 = arith.select %412, %379, %413 : vector<2x128xi1>, vector<2x128xf32>
    %415 = arith.truncf %414 : vector<2x128xf32> to vector<2x128xbf16>
    %416 = arith.index_cast %309 : i32 to index
    %c0_183 = arith.constant 0 : index
    %c0_184 = arith.constant 0 : index
    %417 = vector.load %arg8[%416, %c0_183, %c0_184] : memref<8x2x128xbf16, #tpu.memory_space<vmem>>, vector<1x2x128xbf16>
    %418 = vector.shape_cast %417 : vector<1x2x128xbf16> to vector<2x128xbf16>
    %419 = vector.shape_cast %415 : vector<2x128xbf16> to vector<1x2x128xbf16>
    tpu.vector_store %arg8[%416, %c0_183, %c0_184], %419 {strides = array<i32>} : memref<8x2x128xbf16, #tpu.memory_space<vmem>>, vector<1x2x128xbf16>,
    %c3_i32 = arith.constant 3 : i32
    %c7_i32_185 = arith.constant 7 : i32
    %420 = arith.subi %c7_i32_185, %c3_i32 : i32
    %c0_186 = arith.constant 0 : index
    %c0_187 = arith.constant 0 : index
    %421 = vector.load %arg11[%c0_186, %c0_187] : memref<2x128xf32, #tpu.memory_space<vmem>>, vector<2x128xf32>
    %c0_188 = arith.constant 0 : index
    %c0_189 = arith.constant 0 : index
    %422 = vector.load %arg12[%c0_188, %c0_189] : memref<2x128xf32, #tpu.memory_space<vmem>>, vector<2x128xf32>
    %c0_190 = arith.constant 0 : index
    %c0_191 = arith.constant 0 : index
    %423 = vector.load %arg13[%c0_190, %c0_191] : memref<2x128xf32, #tpu.memory_space<vmem>>, vector<2x128xf32>
    %c0_192 = arith.constant 0 : index
    %c0_193 = arith.constant 0 : index
    %424 = vector.load %arg14[%c0_192, %c0_193] : memref<2x128xf32, #tpu.memory_space<vmem>>, vector<2x128xf32>
    %425 = arith.index_cast %c3_i32 : i32 to index
    %c0_194 = arith.constant 0 : index
    %c0_195 = arith.constant 0 : index
    %426 = vector.load %arg9[%425, %c0_194, %c0_195] : memref<8x2x512xf32, #tpu.memory_space<vmem>>, vector<1x2x512xf32>
    %427 = vector.shape_cast %426 : vector<1x2x512xf32> to vector<2x512xf32>
    %428 = arith.truncf %421 : vector<2x128xf32> to vector<2x128xbf16>
    %c0_196 = arith.constant 0 : index
    %c0_197 = arith.constant 0 : index
    %c0_198 = arith.constant 0 : index
    %429 = vector.load %arg5[%c0_196, %c0_197, %c0_198] : memref<2x128x512xbf16, #tpu.memory_space<vmem>>, vector<1x128x512xbf16>
    %430 = vector.shape_cast %429 : vector<1x128x512xbf16> to vector<128x512xbf16>
    %cst_199 = arith.constant dense<0.000000e+00> : vector<2x512xf32>
    %431 = tpu.matmul %428, %430, %cst_199 {dimension_numbers = #tpu.dot_dimension_numbers<[1], [0], [0], [1], [0, 0, 1, 1], [], []>} : vector<2x128xbf16>, vector<128x512xbf16>, vector<2x512xf32> -> vector<2x512xf32>
    %432 = arith.addf %427, %431 : vector<2x512xf32>
    %433 = arith.index_cast %420 : i32 to index
    %c0_200 = arith.constant 0 : index
    %c0_201 = arith.constant 0 : index
    %434 = vector.load %arg10[%433, %c0_200, %c0_201] : memref<8x2x512xf32, #tpu.memory_space<vmem>>, vector<1x2x512xf32>
    %435 = vector.shape_cast %434 : vector<1x2x512xf32> to vector<2x512xf32>
    %436 = arith.truncf %423 : vector<2x128xf32> to vector<2x128xbf16>
    %c1_202 = arith.constant 1 : index
    %c0_203 = arith.constant 0 : index
    %c0_204 = arith.constant 0 : index
    %437 = vector.load %arg5[%c1_202, %c0_203, %c0_204] : memref<2x128x512xbf16, #tpu.memory_space<vmem>>, vector<1x128x512xbf16>
    %438 = vector.shape_cast %437 : vector<1x128x512xbf16> to vector<128x512xbf16>
    %cst_205 = arith.constant dense<0.000000e+00> : vector<2x512xf32>
    %439 = tpu.matmul %436, %438, %cst_205 {dimension_numbers = #tpu.dot_dimension_numbers<[1], [0], [0], [1], [0, 0, 1, 1], [], []>} : vector<2x128xbf16>, vector<128x512xbf16>, vector<2x512xf32> -> vector<2x512xf32>
    %440 = arith.addf %435, %439 : vector<2x512xf32>
    %441 = vector.extract_strided_slice %432 {offsets = [0, 0], sizes = [2, 128], strides = [1, 1]} : vector<2x512xf32> to vector<2x128xf32>
    %442 = arith.negf %441 : vector<2x128xf32>
    %443 = math.exp %442 : vector<2x128xf32>
    %cst_206 = arith.constant 1.000000e+00 : f32
    %444 = vector.broadcast %cst_206 : f32 to vector<2x128xf32>
    %445 = arith.addf %444, %443 : vector<2x128xf32>
    %446 = arith.divf %444, %445 : vector<2x128xf32>
    %447 = vector.extract_strided_slice %432 {offsets = [0, 128], sizes = [2, 128], strides = [1, 1]} : vector<2x512xf32> to vector<2x128xf32>
    %448 = arith.negf %447 : vector<2x128xf32>
    %449 = math.exp %448 : vector<2x128xf32>
    %cst_207 = arith.constant 1.000000e+00 : f32
    %450 = vector.broadcast %cst_207 : f32 to vector<2x128xf32>
    %451 = arith.addf %450, %449 : vector<2x128xf32>
    %452 = arith.divf %450, %451 : vector<2x128xf32>
    %453 = vector.extract_strided_slice %432 {offsets = [0, 256], sizes = [2, 128], strides = [1, 1]} : vector<2x512xf32> to vector<2x128xf32>
    %454 = math.tanh %453 : vector<2x128xf32>
    %455 = vector.extract_strided_slice %432 {offsets = [0, 384], sizes = [2, 128], strides = [1, 1]} : vector<2x512xf32> to vector<2x128xf32>
    %456 = arith.negf %455 : vector<2x128xf32>
    %457 = math.exp %456 : vector<2x128xf32>
    %cst_208 = arith.constant 1.000000e+00 : f32
    %458 = vector.broadcast %cst_208 : f32 to vector<2x128xf32>
    %459 = arith.addf %458, %457 : vector<2x128xf32>
    %460 = arith.divf %458, %459 : vector<2x128xf32>
    %461 = vector.extract_strided_slice %440 {offsets = [0, 0], sizes = [2, 128], strides = [1, 1]} : vector<2x512xf32> to vector<2x128xf32>
    %462 = arith.negf %461 : vector<2x128xf32>
    %463 = math.exp %462 : vector<2x128xf32>
    %cst_209 = arith.constant 1.000000e+00 : f32
    %464 = vector.broadcast %cst_209 : f32 to vector<2x128xf32>
    %465 = arith.addf %464, %463 : vector<2x128xf32>
    %466 = arith.divf %464, %465 : vector<2x128xf32>
    %467 = vector.extract_strided_slice %440 {offsets = [0, 128], sizes = [2, 128], strides = [1, 1]} : vector<2x512xf32> to vector<2x128xf32>
    %468 = arith.negf %467 : vector<2x128xf32>
    %469 = math.exp %468 : vector<2x128xf32>
    %cst_210 = arith.constant 1.000000e+00 : f32
    %470 = vector.broadcast %cst_210 : f32 to vector<2x128xf32>
    %471 = arith.addf %470, %469 : vector<2x128xf32>
    %472 = arith.divf %470, %471 : vector<2x128xf32>
    %473 = vector.extract_strided_slice %440 {offsets = [0, 256], sizes = [2, 128], strides = [1, 1]} : vector<2x512xf32> to vector<2x128xf32>
    %474 = math.tanh %473 : vector<2x128xf32>
    %475 = vector.extract_strided_slice %440 {offsets = [0, 384], sizes = [2, 128], strides = [1, 1]} : vector<2x512xf32> to vector<2x128xf32>
    %476 = arith.negf %475 : vector<2x128xf32>
    %477 = math.exp %476 : vector<2x128xf32>
    %cst_211 = arith.constant 1.000000e+00 : f32
    %478 = vector.broadcast %cst_211 : f32 to vector<2x128xf32>
    %479 = arith.addf %478, %477 : vector<2x128xf32>
    %480 = arith.divf %478, %479 : vector<2x128xf32>
    %481 = arith.mulf %452, %422 : vector<2x128xf32>
    %482 = arith.mulf %446, %454 : vector<2x128xf32>
    %483 = arith.addf %481, %482 : vector<2x128xf32>
    %484 = arith.mulf %472, %424 : vector<2x128xf32>
    %485 = arith.mulf %466, %474 : vector<2x128xf32>
    %486 = arith.addf %484, %485 : vector<2x128xf32>
    %487 = math.tanh %483 : vector<2x128xf32>
    %488 = arith.mulf %460, %487 : vector<2x128xf32>
    %489 = math.tanh %486 : vector<2x128xf32>
    %490 = arith.mulf %480, %489 : vector<2x128xf32>
    %491 = arith.addi %84, %c3_i32 : i32
    %492 = vector.broadcast %491 : i32 to vector<2x1xi32>
    %493 = arith.cmpi slt, %492, %83 : vector<2x1xi32>
    %494 = arith.addi %86, %420 : i32
    %495 = vector.broadcast %494 : i32 to vector<2x1xi32>
    %496 = arith.cmpi slt, %495, %83 : vector<2x1xi32>
    %497 = vector.shape_cast %493 : vector<2x1xi1> to vector<2x1xi1>
    %498 = vector.broadcast %497 : vector<2x1xi1> to vector<2x128xi1>
    %499 = arith.select %498, %483, %422 : vector<2x128xi1>, vector<2x128xf32>
    %c0_212 = arith.constant 0 : index
    %c0_213 = arith.constant 0 : index
    %500 = vector.load %arg12[%c0_212, %c0_213] : memref<2x128xf32, #tpu.memory_space<vmem>>, vector<2x128xf32>
    tpu.vector_store %arg12[%c0_212, %c0_213], %499 {strides = array<i32>} : memref<2x128xf32, #tpu.memory_space<vmem>>, vector<2x128xf32>,
    %501 = vector.shape_cast %493 : vector<2x1xi1> to vector<2x1xi1>
    %502 = vector.broadcast %501 : vector<2x1xi1> to vector<2x128xi1>
    %503 = arith.select %502, %488, %421 : vector<2x128xi1>, vector<2x128xf32>
    %c0_214 = arith.constant 0 : index
    %c0_215 = arith.constant 0 : index
    %504 = vector.load %arg11[%c0_214, %c0_215] : memref<2x128xf32, #tpu.memory_space<vmem>>, vector<2x128xf32>
    tpu.vector_store %arg11[%c0_214, %c0_215], %503 {strides = array<i32>} : memref<2x128xf32, #tpu.memory_space<vmem>>, vector<2x128xf32>,
    %505 = vector.shape_cast %496 : vector<2x1xi1> to vector<2x1xi1>
    %506 = vector.broadcast %505 : vector<2x1xi1> to vector<2x128xi1>
    %507 = arith.select %506, %486, %424 : vector<2x128xi1>, vector<2x128xf32>
    %c0_216 = arith.constant 0 : index
    %c0_217 = arith.constant 0 : index
    %508 = vector.load %arg14[%c0_216, %c0_217] : memref<2x128xf32, #tpu.memory_space<vmem>>, vector<2x128xf32>
    tpu.vector_store %arg14[%c0_216, %c0_217], %507 {strides = array<i32>} : memref<2x128xf32, #tpu.memory_space<vmem>>, vector<2x128xf32>,
    %509 = vector.shape_cast %496 : vector<2x1xi1> to vector<2x1xi1>
    %510 = vector.broadcast %509 : vector<2x1xi1> to vector<2x128xi1>
    %511 = arith.select %510, %490, %423 : vector<2x128xi1>, vector<2x128xf32>
    %c0_218 = arith.constant 0 : index
    %c0_219 = arith.constant 0 : index
    %512 = vector.load %arg13[%c0_218, %c0_219] : memref<2x128xf32, #tpu.memory_space<vmem>>, vector<2x128xf32>
    tpu.vector_store %arg13[%c0_218, %c0_219], %511 {strides = array<i32>} : memref<2x128xf32, #tpu.memory_space<vmem>>, vector<2x128xf32>,
    %cst_220 = arith.constant 0.000000e+00 : f32
    %513 = vector.shape_cast %493 : vector<2x1xi1> to vector<2x1xi1>
    %514 = vector.broadcast %513 : vector<2x1xi1> to vector<2x128xi1>
    %515 = vector.broadcast %cst_220 : f32 to vector<2x128xf32>
    %516 = arith.select %514, %488, %515 : vector<2x128xi1>, vector<2x128xf32>
    %517 = arith.truncf %516 : vector<2x128xf32> to vector<2x128xbf16>
    %518 = arith.index_cast %c3_i32 : i32 to index
    %c0_221 = arith.constant 0 : index
    %c0_222 = arith.constant 0 : index
    %519 = vector.load %arg7[%518, %c0_221, %c0_222] : memref<8x2x128xbf16, #tpu.memory_space<vmem>>, vector<1x2x128xbf16>
    %520 = vector.shape_cast %519 : vector<1x2x128xbf16> to vector<2x128xbf16>
    %521 = vector.shape_cast %517 : vector<2x128xbf16> to vector<1x2x128xbf16>
    tpu.vector_store %arg7[%518, %c0_221, %c0_222], %521 {strides = array<i32>} : memref<8x2x128xbf16, #tpu.memory_space<vmem>>, vector<1x2x128xbf16>,
    %cst_223 = arith.constant 0.000000e+00 : f32
    %522 = vector.shape_cast %496 : vector<2x1xi1> to vector<2x1xi1>
    %523 = vector.broadcast %522 : vector<2x1xi1> to vector<2x128xi1>
    %524 = vector.broadcast %cst_223 : f32 to vector<2x128xf32>
    %525 = arith.select %523, %490, %524 : vector<2x128xi1>, vector<2x128xf32>
    %526 = arith.truncf %525 : vector<2x128xf32> to vector<2x128xbf16>
    %527 = arith.index_cast %420 : i32 to index
    %c0_224 = arith.constant 0 : index
    %c0_225 = arith.constant 0 : index
    %528 = vector.load %arg8[%527, %c0_224, %c0_225] : memref<8x2x128xbf16, #tpu.memory_space<vmem>>, vector<1x2x128xbf16>
    %529 = vector.shape_cast %528 : vector<1x2x128xbf16> to vector<2x128xbf16>
    %530 = vector.shape_cast %526 : vector<2x128xbf16> to vector<1x2x128xbf16>
    tpu.vector_store %arg8[%527, %c0_224, %c0_225], %530 {strides = array<i32>} : memref<8x2x128xbf16, #tpu.memory_space<vmem>>, vector<1x2x128xbf16>,
    %c4_i32 = arith.constant 4 : i32
    %c7_i32_226 = arith.constant 7 : i32
    %531 = arith.subi %c7_i32_226, %c4_i32 : i32
    %c0_227 = arith.constant 0 : index
    %c0_228 = arith.constant 0 : index
    %532 = vector.load %arg11[%c0_227, %c0_228] : memref<2x128xf32, #tpu.memory_space<vmem>>, vector<2x128xf32>
    %c0_229 = arith.constant 0 : index
    %c0_230 = arith.constant 0 : index
    %533 = vector.load %arg12[%c0_229, %c0_230] : memref<2x128xf32, #tpu.memory_space<vmem>>, vector<2x128xf32>
    %c0_231 = arith.constant 0 : index
    %c0_232 = arith.constant 0 : index
    %534 = vector.load %arg13[%c0_231, %c0_232] : memref<2x128xf32, #tpu.memory_space<vmem>>, vector<2x128xf32>
    %c0_233 = arith.constant 0 : index
    %c0_234 = arith.constant 0 : index
    %535 = vector.load %arg14[%c0_233, %c0_234] : memref<2x128xf32, #tpu.memory_space<vmem>>, vector<2x128xf32>
    %536 = arith.index_cast %c4_i32 : i32 to index
    %c0_235 = arith.constant 0 : index
    %c0_236 = arith.constant 0 : index
    %537 = vector.load %arg9[%536, %c0_235, %c0_236] : memref<8x2x512xf32, #tpu.memory_space<vmem>>, vector<1x2x512xf32>
    %538 = vector.shape_cast %537 : vector<1x2x512xf32> to vector<2x512xf32>
    %539 = arith.truncf %532 : vector<2x128xf32> to vector<2x128xbf16>
    %c0_237 = arith.constant 0 : index
    %c0_238 = arith.constant 0 : index
    %c0_239 = arith.constant 0 : index
    %540 = vector.load %arg5[%c0_237, %c0_238, %c0_239] : memref<2x128x512xbf16, #tpu.memory_space<vmem>>, vector<1x128x512xbf16>
    %541 = vector.shape_cast %540 : vector<1x128x512xbf16> to vector<128x512xbf16>
    %cst_240 = arith.constant dense<0.000000e+00> : vector<2x512xf32>
    %542 = tpu.matmul %539, %541, %cst_240 {dimension_numbers = #tpu.dot_dimension_numbers<[1], [0], [0], [1], [0, 0, 1, 1], [], []>} : vector<2x128xbf16>, vector<128x512xbf16>, vector<2x512xf32> -> vector<2x512xf32>
    %543 = arith.addf %538, %542 : vector<2x512xf32>
    %544 = arith.index_cast %531 : i32 to index
    %c0_241 = arith.constant 0 : index
    %c0_242 = arith.constant 0 : index
    %545 = vector.load %arg10[%544, %c0_241, %c0_242] : memref<8x2x512xf32, #tpu.memory_space<vmem>>, vector<1x2x512xf32>
    %546 = vector.shape_cast %545 : vector<1x2x512xf32> to vector<2x512xf32>
    %547 = arith.truncf %534 : vector<2x128xf32> to vector<2x128xbf16>
    %c1_243 = arith.constant 1 : index
    %c0_244 = arith.constant 0 : index
    %c0_245 = arith.constant 0 : index
    %548 = vector.load %arg5[%c1_243, %c0_244, %c0_245] : memref<2x128x512xbf16, #tpu.memory_space<vmem>>, vector<1x128x512xbf16>
    %549 = vector.shape_cast %548 : vector<1x128x512xbf16> to vector<128x512xbf16>
    %cst_246 = arith.constant dense<0.000000e+00> : vector<2x512xf32>
    %550 = tpu.matmul %547, %549, %cst_246 {dimension_numbers = #tpu.dot_dimension_numbers<[1], [0], [0], [1], [0, 0, 1, 1], [], []>} : vector<2x128xbf16>, vector<128x512xbf16>, vector<2x512xf32> -> vector<2x512xf32>
    %551 = arith.addf %546, %550 : vector<2x512xf32>
    %552 = vector.extract_strided_slice %543 {offsets = [0, 0], sizes = [2, 128], strides = [1, 1]} : vector<2x512xf32> to vector<2x128xf32>
    %553 = arith.negf %552 : vector<2x128xf32>
    %554 = math.exp %553 : vector<2x128xf32>
    %cst_247 = arith.constant 1.000000e+00 : f32
    %555 = vector.broadcast %cst_247 : f32 to vector<2x128xf32>
    %556 = arith.addf %555, %554 : vector<2x128xf32>
    %557 = arith.divf %555, %556 : vector<2x128xf32>
    %558 = vector.extract_strided_slice %543 {offsets = [0, 128], sizes = [2, 128], strides = [1, 1]} : vector<2x512xf32> to vector<2x128xf32>
    %559 = arith.negf %558 : vector<2x128xf32>
    %560 = math.exp %559 : vector<2x128xf32>
    %cst_248 = arith.constant 1.000000e+00 : f32
    %561 = vector.broadcast %cst_248 : f32 to vector<2x128xf32>
    %562 = arith.addf %561, %560 : vector<2x128xf32>
    %563 = arith.divf %561, %562 : vector<2x128xf32>
    %564 = vector.extract_strided_slice %543 {offsets = [0, 256], sizes = [2, 128], strides = [1, 1]} : vector<2x512xf32> to vector<2x128xf32>
    %565 = math.tanh %564 : vector<2x128xf32>
    %566 = vector.extract_strided_slice %543 {offsets = [0, 384], sizes = [2, 128], strides = [1, 1]} : vector<2x512xf32> to vector<2x128xf32>
    %567 = arith.negf %566 : vector<2x128xf32>
    %568 = math.exp %567 : vector<2x128xf32>
    %cst_249 = arith.constant 1.000000e+00 : f32
    %569 = vector.broadcast %cst_249 : f32 to vector<2x128xf32>
    %570 = arith.addf %569, %568 : vector<2x128xf32>
    %571 = arith.divf %569, %570 : vector<2x128xf32>
    %572 = vector.extract_strided_slice %551 {offsets = [0, 0], sizes = [2, 128], strides = [1, 1]} : vector<2x512xf32> to vector<2x128xf32>
    %573 = arith.negf %572 : vector<2x128xf32>
    %574 = math.exp %573 : vector<2x128xf32>
    %cst_250 = arith.constant 1.000000e+00 : f32
    %575 = vector.broadcast %cst_250 : f32 to vector<2x128xf32>
    %576 = arith.addf %575, %574 : vector<2x128xf32>
    %577 = arith.divf %575, %576 : vector<2x128xf32>
    %578 = vector.extract_strided_slice %551 {offsets = [0, 128], sizes = [2, 128], strides = [1, 1]} : vector<2x512xf32> to vector<2x128xf32>
    %579 = arith.negf %578 : vector<2x128xf32>
    %580 = math.exp %579 : vector<2x128xf32>
    %cst_251 = arith.constant 1.000000e+00 : f32
    %581 = vector.broadcast %cst_251 : f32 to vector<2x128xf32>
    %582 = arith.addf %581, %580 : vector<2x128xf32>
    %583 = arith.divf %581, %582 : vector<2x128xf32>
    %584 = vector.extract_strided_slice %551 {offsets = [0, 256], sizes = [2, 128], strides = [1, 1]} : vector<2x512xf32> to vector<2x128xf32>
    %585 = math.tanh %584 : vector<2x128xf32>
    %586 = vector.extract_strided_slice %551 {offsets = [0, 384], sizes = [2, 128], strides = [1, 1]} : vector<2x512xf32> to vector<2x128xf32>
    %587 = arith.negf %586 : vector<2x128xf32>
    %588 = math.exp %587 : vector<2x128xf32>
    %cst_252 = arith.constant 1.000000e+00 : f32
    %589 = vector.broadcast %cst_252 : f32 to vector<2x128xf32>
    %590 = arith.addf %589, %588 : vector<2x128xf32>
    %591 = arith.divf %589, %590 : vector<2x128xf32>
    %592 = arith.mulf %563, %533 : vector<2x128xf32>
    %593 = arith.mulf %557, %565 : vector<2x128xf32>
    %594 = arith.addf %592, %593 : vector<2x128xf32>
    %595 = arith.mulf %583, %535 : vector<2x128xf32>
    %596 = arith.mulf %577, %585 : vector<2x128xf32>
    %597 = arith.addf %595, %596 : vector<2x128xf32>
    %598 = math.tanh %594 : vector<2x128xf32>
    %599 = arith.mulf %571, %598 : vector<2x128xf32>
    %600 = math.tanh %597 : vector<2x128xf32>
    %601 = arith.mulf %591, %600 : vector<2x128xf32>
    %602 = arith.addi %84, %c4_i32 : i32
    %603 = vector.broadcast %602 : i32 to vector<2x1xi32>
    %604 = arith.cmpi slt, %603, %83 : vector<2x1xi32>
    %605 = arith.addi %86, %531 : i32
    %606 = vector.broadcast %605 : i32 to vector<2x1xi32>
    %607 = arith.cmpi slt, %606, %83 : vector<2x1xi32>
    %608 = vector.shape_cast %604 : vector<2x1xi1> to vector<2x1xi1>
    %609 = vector.broadcast %608 : vector<2x1xi1> to vector<2x128xi1>
    %610 = arith.select %609, %594, %533 : vector<2x128xi1>, vector<2x128xf32>
    %c0_253 = arith.constant 0 : index
    %c0_254 = arith.constant 0 : index
    %611 = vector.load %arg12[%c0_253, %c0_254] : memref<2x128xf32, #tpu.memory_space<vmem>>, vector<2x128xf32>
    tpu.vector_store %arg12[%c0_253, %c0_254], %610 {strides = array<i32>} : memref<2x128xf32, #tpu.memory_space<vmem>>, vector<2x128xf32>,
    %612 = vector.shape_cast %604 : vector<2x1xi1> to vector<2x1xi1>
    %613 = vector.broadcast %612 : vector<2x1xi1> to vector<2x128xi1>
    %614 = arith.select %613, %599, %532 : vector<2x128xi1>, vector<2x128xf32>
    %c0_255 = arith.constant 0 : index
    %c0_256 = arith.constant 0 : index
    %615 = vector.load %arg11[%c0_255, %c0_256] : memref<2x128xf32, #tpu.memory_space<vmem>>, vector<2x128xf32>
    tpu.vector_store %arg11[%c0_255, %c0_256], %614 {strides = array<i32>} : memref<2x128xf32, #tpu.memory_space<vmem>>, vector<2x128xf32>,
    %616 = vector.shape_cast %607 : vector<2x1xi1> to vector<2x1xi1>
    %617 = vector.broadcast %616 : vector<2x1xi1> to vector<2x128xi1>
    %618 = arith.select %617, %597, %535 : vector<2x128xi1>, vector<2x128xf32>
    %c0_257 = arith.constant 0 : index
    %c0_258 = arith.constant 0 : index
    %619 = vector.load %arg14[%c0_257, %c0_258] : memref<2x128xf32, #tpu.memory_space<vmem>>, vector<2x128xf32>
    tpu.vector_store %arg14[%c0_257, %c0_258], %618 {strides = array<i32>} : memref<2x128xf32, #tpu.memory_space<vmem>>, vector<2x128xf32>,
    %620 = vector.shape_cast %607 : vector<2x1xi1> to vector<2x1xi1>
    %621 = vector.broadcast %620 : vector<2x1xi1> to vector<2x128xi1>
    %622 = arith.select %621, %601, %534 : vector<2x128xi1>, vector<2x128xf32>
    %c0_259 = arith.constant 0 : index
    %c0_260 = arith.constant 0 : index
    %623 = vector.load %arg13[%c0_259, %c0_260] : memref<2x128xf32, #tpu.memory_space<vmem>>, vector<2x128xf32>
    tpu.vector_store %arg13[%c0_259, %c0_260], %622 {strides = array<i32>} : memref<2x128xf32, #tpu.memory_space<vmem>>, vector<2x128xf32>,
    %cst_261 = arith.constant 0.000000e+00 : f32
    %624 = vector.shape_cast %604 : vector<2x1xi1> to vector<2x1xi1>
    %625 = vector.broadcast %624 : vector<2x1xi1> to vector<2x128xi1>
    %626 = vector.broadcast %cst_261 : f32 to vector<2x128xf32>
    %627 = arith.select %625, %599, %626 : vector<2x128xi1>, vector<2x128xf32>
    %628 = arith.truncf %627 : vector<2x128xf32> to vector<2x128xbf16>
    %629 = arith.index_cast %c4_i32 : i32 to index
    %c0_262 = arith.constant 0 : index
    %c0_263 = arith.constant 0 : index
    %630 = vector.load %arg7[%629, %c0_262, %c0_263] : memref<8x2x128xbf16, #tpu.memory_space<vmem>>, vector<1x2x128xbf16>
    %631 = vector.shape_cast %630 : vector<1x2x128xbf16> to vector<2x128xbf16>
    %632 = vector.shape_cast %628 : vector<2x128xbf16> to vector<1x2x128xbf16>
    tpu.vector_store %arg7[%629, %c0_262, %c0_263], %632 {strides = array<i32>} : memref<8x2x128xbf16, #tpu.memory_space<vmem>>, vector<1x2x128xbf16>,
    %cst_264 = arith.constant 0.000000e+00 : f32
    %633 = vector.shape_cast %607 : vector<2x1xi1> to vector<2x1xi1>
    %634 = vector.broadcast %633 : vector<2x1xi1> to vector<2x128xi1>
    %635 = vector.broadcast %cst_264 : f32 to vector<2x128xf32>
    %636 = arith.select %634, %601, %635 : vector<2x128xi1>, vector<2x128xf32>
    %637 = arith.truncf %636 : vector<2x128xf32> to vector<2x128xbf16>
    %638 = arith.index_cast %531 : i32 to index
    %c0_265 = arith.constant 0 : index
    %c0_266 = arith.constant 0 : index
    %639 = vector.load %arg8[%638, %c0_265, %c0_266] : memref<8x2x128xbf16, #tpu.memory_space<vmem>>, vector<1x2x128xbf16>
    %640 = vector.shape_cast %639 : vector<1x2x128xbf16> to vector<2x128xbf16>
    %641 = vector.shape_cast %637 : vector<2x128xbf16> to vector<1x2x128xbf16>
    tpu.vector_store %arg8[%638, %c0_265, %c0_266], %641 {strides = array<i32>} : memref<8x2x128xbf16, #tpu.memory_space<vmem>>, vector<1x2x128xbf16>,
    %c5_i32 = arith.constant 5 : i32
    %c7_i32_267 = arith.constant 7 : i32
    %642 = arith.subi %c7_i32_267, %c5_i32 : i32
    %c0_268 = arith.constant 0 : index
    %c0_269 = arith.constant 0 : index
    %643 = vector.load %arg11[%c0_268, %c0_269] : memref<2x128xf32, #tpu.memory_space<vmem>>, vector<2x128xf32>
    %c0_270 = arith.constant 0 : index
    %c0_271 = arith.constant 0 : index
    %644 = vector.load %arg12[%c0_270, %c0_271] : memref<2x128xf32, #tpu.memory_space<vmem>>, vector<2x128xf32>
    %c0_272 = arith.constant 0 : index
    %c0_273 = arith.constant 0 : index
    %645 = vector.load %arg13[%c0_272, %c0_273] : memref<2x128xf32, #tpu.memory_space<vmem>>, vector<2x128xf32>
    %c0_274 = arith.constant 0 : index
    %c0_275 = arith.constant 0 : index
    %646 = vector.load %arg14[%c0_274, %c0_275] : memref<2x128xf32, #tpu.memory_space<vmem>>, vector<2x128xf32>
    %647 = arith.index_cast %c5_i32 : i32 to index
    %c0_276 = arith.constant 0 : index
    %c0_277 = arith.constant 0 : index
    %648 = vector.load %arg9[%647, %c0_276, %c0_277] : memref<8x2x512xf32, #tpu.memory_space<vmem>>, vector<1x2x512xf32>
    %649 = vector.shape_cast %648 : vector<1x2x512xf32> to vector<2x512xf32>
    %650 = arith.truncf %643 : vector<2x128xf32> to vector<2x128xbf16>
    %c0_278 = arith.constant 0 : index
    %c0_279 = arith.constant 0 : index
    %c0_280 = arith.constant 0 : index
    %651 = vector.load %arg5[%c0_278, %c0_279, %c0_280] : memref<2x128x512xbf16, #tpu.memory_space<vmem>>, vector<1x128x512xbf16>
    %652 = vector.shape_cast %651 : vector<1x128x512xbf16> to vector<128x512xbf16>
    %cst_281 = arith.constant dense<0.000000e+00> : vector<2x512xf32>
    %653 = tpu.matmul %650, %652, %cst_281 {dimension_numbers = #tpu.dot_dimension_numbers<[1], [0], [0], [1], [0, 0, 1, 1], [], []>} : vector<2x128xbf16>, vector<128x512xbf16>, vector<2x512xf32> -> vector<2x512xf32>
    %654 = arith.addf %649, %653 : vector<2x512xf32>
    %655 = arith.index_cast %642 : i32 to index
    %c0_282 = arith.constant 0 : index
    %c0_283 = arith.constant 0 : index
    %656 = vector.load %arg10[%655, %c0_282, %c0_283] : memref<8x2x512xf32, #tpu.memory_space<vmem>>, vector<1x2x512xf32>
    %657 = vector.shape_cast %656 : vector<1x2x512xf32> to vector<2x512xf32>
    %658 = arith.truncf %645 : vector<2x128xf32> to vector<2x128xbf16>
    %c1_284 = arith.constant 1 : index
    %c0_285 = arith.constant 0 : index
    %c0_286 = arith.constant 0 : index
    %659 = vector.load %arg5[%c1_284, %c0_285, %c0_286] : memref<2x128x512xbf16, #tpu.memory_space<vmem>>, vector<1x128x512xbf16>
    %660 = vector.shape_cast %659 : vector<1x128x512xbf16> to vector<128x512xbf16>
    %cst_287 = arith.constant dense<0.000000e+00> : vector<2x512xf32>
    %661 = tpu.matmul %658, %660, %cst_287 {dimension_numbers = #tpu.dot_dimension_numbers<[1], [0], [0], [1], [0, 0, 1, 1], [], []>} : vector<2x128xbf16>, vector<128x512xbf16>, vector<2x512xf32> -> vector<2x512xf32>
    %662 = arith.addf %657, %661 : vector<2x512xf32>
    %663 = vector.extract_strided_slice %654 {offsets = [0, 0], sizes = [2, 128], strides = [1, 1]} : vector<2x512xf32> to vector<2x128xf32>
    %664 = arith.negf %663 : vector<2x128xf32>
    %665 = math.exp %664 : vector<2x128xf32>
    %cst_288 = arith.constant 1.000000e+00 : f32
    %666 = vector.broadcast %cst_288 : f32 to vector<2x128xf32>
    %667 = arith.addf %666, %665 : vector<2x128xf32>
    %668 = arith.divf %666, %667 : vector<2x128xf32>
    %669 = vector.extract_strided_slice %654 {offsets = [0, 128], sizes = [2, 128], strides = [1, 1]} : vector<2x512xf32> to vector<2x128xf32>
    %670 = arith.negf %669 : vector<2x128xf32>
    %671 = math.exp %670 : vector<2x128xf32>
    %cst_289 = arith.constant 1.000000e+00 : f32
    %672 = vector.broadcast %cst_289 : f32 to vector<2x128xf32>
    %673 = arith.addf %672, %671 : vector<2x128xf32>
    %674 = arith.divf %672, %673 : vector<2x128xf32>
    %675 = vector.extract_strided_slice %654 {offsets = [0, 256], sizes = [2, 128], strides = [1, 1]} : vector<2x512xf32> to vector<2x128xf32>
    %676 = math.tanh %675 : vector<2x128xf32>
    %677 = vector.extract_strided_slice %654 {offsets = [0, 384], sizes = [2, 128], strides = [1, 1]} : vector<2x512xf32> to vector<2x128xf32>
    %678 = arith.negf %677 : vector<2x128xf32>
    %679 = math.exp %678 : vector<2x128xf32>
    %cst_290 = arith.constant 1.000000e+00 : f32
    %680 = vector.broadcast %cst_290 : f32 to vector<2x128xf32>
    %681 = arith.addf %680, %679 : vector<2x128xf32>
    %682 = arith.divf %680, %681 : vector<2x128xf32>
    %683 = vector.extract_strided_slice %662 {offsets = [0, 0], sizes = [2, 128], strides = [1, 1]} : vector<2x512xf32> to vector<2x128xf32>
    %684 = arith.negf %683 : vector<2x128xf32>
    %685 = math.exp %684 : vector<2x128xf32>
    %cst_291 = arith.constant 1.000000e+00 : f32
    %686 = vector.broadcast %cst_291 : f32 to vector<2x128xf32>
    %687 = arith.addf %686, %685 : vector<2x128xf32>
    %688 = arith.divf %686, %687 : vector<2x128xf32>
    %689 = vector.extract_strided_slice %662 {offsets = [0, 128], sizes = [2, 128], strides = [1, 1]} : vector<2x512xf32> to vector<2x128xf32>
    %690 = arith.negf %689 : vector<2x128xf32>
    %691 = math.exp %690 : vector<2x128xf32>
    %cst_292 = arith.constant 1.000000e+00 : f32
    %692 = vector.broadcast %cst_292 : f32 to vector<2x128xf32>
    %693 = arith.addf %692, %691 : vector<2x128xf32>
    %694 = arith.divf %692, %693 : vector<2x128xf32>
    %695 = vector.extract_strided_slice %662 {offsets = [0, 256], sizes = [2, 128], strides = [1, 1]} : vector<2x512xf32> to vector<2x128xf32>
    %696 = math.tanh %695 : vector<2x128xf32>
    %697 = vector.extract_strided_slice %662 {offsets = [0, 384], sizes = [2, 128], strides = [1, 1]} : vector<2x512xf32> to vector<2x128xf32>
    %698 = arith.negf %697 : vector<2x128xf32>
    %699 = math.exp %698 : vector<2x128xf32>
    %cst_293 = arith.constant 1.000000e+00 : f32
    %700 = vector.broadcast %cst_293 : f32 to vector<2x128xf32>
    %701 = arith.addf %700, %699 : vector<2x128xf32>
    %702 = arith.divf %700, %701 : vector<2x128xf32>
    %703 = arith.mulf %674, %644 : vector<2x128xf32>
    %704 = arith.mulf %668, %676 : vector<2x128xf32>
    %705 = arith.addf %703, %704 : vector<2x128xf32>
    %706 = arith.mulf %694, %646 : vector<2x128xf32>
    %707 = arith.mulf %688, %696 : vector<2x128xf32>
    %708 = arith.addf %706, %707 : vector<2x128xf32>
    %709 = math.tanh %705 : vector<2x128xf32>
    %710 = arith.mulf %682, %709 : vector<2x128xf32>
    %711 = math.tanh %708 : vector<2x128xf32>
    %712 = arith.mulf %702, %711 : vector<2x128xf32>
    %713 = arith.addi %84, %c5_i32 : i32
    %714 = vector.broadcast %713 : i32 to vector<2x1xi32>
    %715 = arith.cmpi slt, %714, %83 : vector<2x1xi32>
    %716 = arith.addi %86, %642 : i32
    %717 = vector.broadcast %716 : i32 to vector<2x1xi32>
    %718 = arith.cmpi slt, %717, %83 : vector<2x1xi32>
    %719 = vector.shape_cast %715 : vector<2x1xi1> to vector<2x1xi1>
    %720 = vector.broadcast %719 : vector<2x1xi1> to vector<2x128xi1>
    %721 = arith.select %720, %705, %644 : vector<2x128xi1>, vector<2x128xf32>
    %c0_294 = arith.constant 0 : index
    %c0_295 = arith.constant 0 : index
    %722 = vector.load %arg12[%c0_294, %c0_295] : memref<2x128xf32, #tpu.memory_space<vmem>>, vector<2x128xf32>
    tpu.vector_store %arg12[%c0_294, %c0_295], %721 {strides = array<i32>} : memref<2x128xf32, #tpu.memory_space<vmem>>, vector<2x128xf32>,
    %723 = vector.shape_cast %715 : vector<2x1xi1> to vector<2x1xi1>
    %724 = vector.broadcast %723 : vector<2x1xi1> to vector<2x128xi1>
    %725 = arith.select %724, %710, %643 : vector<2x128xi1>, vector<2x128xf32>
    %c0_296 = arith.constant 0 : index
    %c0_297 = arith.constant 0 : index
    %726 = vector.load %arg11[%c0_296, %c0_297] : memref<2x128xf32, #tpu.memory_space<vmem>>, vector<2x128xf32>
    tpu.vector_store %arg11[%c0_296, %c0_297], %725 {strides = array<i32>} : memref<2x128xf32, #tpu.memory_space<vmem>>, vector<2x128xf32>,
    %727 = vector.shape_cast %718 : vector<2x1xi1> to vector<2x1xi1>
    %728 = vector.broadcast %727 : vector<2x1xi1> to vector<2x128xi1>
    %729 = arith.select %728, %708, %646 : vector<2x128xi1>, vector<2x128xf32>
    %c0_298 = arith.constant 0 : index
    %c0_299 = arith.constant 0 : index
    %730 = vector.load %arg14[%c0_298, %c0_299] : memref<2x128xf32, #tpu.memory_space<vmem>>, vector<2x128xf32>
    tpu.vector_store %arg14[%c0_298, %c0_299], %729 {strides = array<i32>} : memref<2x128xf32, #tpu.memory_space<vmem>>, vector<2x128xf32>,
    %731 = vector.shape_cast %718 : vector<2x1xi1> to vector<2x1xi1>
    %732 = vector.broadcast %731 : vector<2x1xi1> to vector<2x128xi1>
    %733 = arith.select %732, %712, %645 : vector<2x128xi1>, vector<2x128xf32>
    %c0_300 = arith.constant 0 : index
    %c0_301 = arith.constant 0 : index
    %734 = vector.load %arg13[%c0_300, %c0_301] : memref<2x128xf32, #tpu.memory_space<vmem>>, vector<2x128xf32>
    tpu.vector_store %arg13[%c0_300, %c0_301], %733 {strides = array<i32>} : memref<2x128xf32, #tpu.memory_space<vmem>>, vector<2x128xf32>,
    %cst_302 = arith.constant 0.000000e+00 : f32
    %735 = vector.shape_cast %715 : vector<2x1xi1> to vector<2x1xi1>
    %736 = vector.broadcast %735 : vector<2x1xi1> to vector<2x128xi1>
    %737 = vector.broadcast %cst_302 : f32 to vector<2x128xf32>
    %738 = arith.select %736, %710, %737 : vector<2x128xi1>, vector<2x128xf32>
    %739 = arith.truncf %738 : vector<2x128xf32> to vector<2x128xbf16>
    %740 = arith.index_cast %c5_i32 : i32 to index
    %c0_303 = arith.constant 0 : index
    %c0_304 = arith.constant 0 : index
    %741 = vector.load %arg7[%740, %c0_303, %c0_304] : memref<8x2x128xbf16, #tpu.memory_space<vmem>>, vector<1x2x128xbf16>
    %742 = vector.shape_cast %741 : vector<1x2x128xbf16> to vector<2x128xbf16>
    %743 = vector.shape_cast %739 : vector<2x128xbf16> to vector<1x2x128xbf16>
    tpu.vector_store %arg7[%740, %c0_303, %c0_304], %743 {strides = array<i32>} : memref<8x2x128xbf16, #tpu.memory_space<vmem>>, vector<1x2x128xbf16>,
    %cst_305 = arith.constant 0.000000e+00 : f32
    %744 = vector.shape_cast %718 : vector<2x1xi1> to vector<2x1xi1>
    %745 = vector.broadcast %744 : vector<2x1xi1> to vector<2x128xi1>
    %746 = vector.broadcast %cst_305 : f32 to vector<2x128xf32>
    %747 = arith.select %745, %712, %746 : vector<2x128xi1>, vector<2x128xf32>
    %748 = arith.truncf %747 : vector<2x128xf32> to vector<2x128xbf16>
    %749 = arith.index_cast %642 : i32 to index
    %c0_306 = arith.constant 0 : index
    %c0_307 = arith.constant 0 : index
    %750 = vector.load %arg8[%749, %c0_306, %c0_307] : memref<8x2x128xbf16, #tpu.memory_space<vmem>>, vector<1x2x128xbf16>
    %751 = vector.shape_cast %750 : vector<1x2x128xbf16> to vector<2x128xbf16>
    %752 = vector.shape_cast %748 : vector<2x128xbf16> to vector<1x2x128xbf16>
    tpu.vector_store %arg8[%749, %c0_306, %c0_307], %752 {strides = array<i32>} : memref<8x2x128xbf16, #tpu.memory_space<vmem>>, vector<1x2x128xbf16>,
    %c6_i32 = arith.constant 6 : i32
    %c7_i32_308 = arith.constant 7 : i32
    %753 = arith.subi %c7_i32_308, %c6_i32 : i32
    %c0_309 = arith.constant 0 : index
    %c0_310 = arith.constant 0 : index
    %754 = vector.load %arg11[%c0_309, %c0_310] : memref<2x128xf32, #tpu.memory_space<vmem>>, vector<2x128xf32>
    %c0_311 = arith.constant 0 : index
    %c0_312 = arith.constant 0 : index
    %755 = vector.load %arg12[%c0_311, %c0_312] : memref<2x128xf32, #tpu.memory_space<vmem>>, vector<2x128xf32>
    %c0_313 = arith.constant 0 : index
    %c0_314 = arith.constant 0 : index
    %756 = vector.load %arg13[%c0_313, %c0_314] : memref<2x128xf32, #tpu.memory_space<vmem>>, vector<2x128xf32>
    %c0_315 = arith.constant 0 : index
    %c0_316 = arith.constant 0 : index
    %757 = vector.load %arg14[%c0_315, %c0_316] : memref<2x128xf32, #tpu.memory_space<vmem>>, vector<2x128xf32>
    %758 = arith.index_cast %c6_i32 : i32 to index
    %c0_317 = arith.constant 0 : index
    %c0_318 = arith.constant 0 : index
    %759 = vector.load %arg9[%758, %c0_317, %c0_318] : memref<8x2x512xf32, #tpu.memory_space<vmem>>, vector<1x2x512xf32>
    %760 = vector.shape_cast %759 : vector<1x2x512xf32> to vector<2x512xf32>
    %761 = arith.truncf %754 : vector<2x128xf32> to vector<2x128xbf16>
    %c0_319 = arith.constant 0 : index
    %c0_320 = arith.constant 0 : index
    %c0_321 = arith.constant 0 : index
    %762 = vector.load %arg5[%c0_319, %c0_320, %c0_321] : memref<2x128x512xbf16, #tpu.memory_space<vmem>>, vector<1x128x512xbf16>
    %763 = vector.shape_cast %762 : vector<1x128x512xbf16> to vector<128x512xbf16>
    %cst_322 = arith.constant dense<0.000000e+00> : vector<2x512xf32>
    %764 = tpu.matmul %761, %763, %cst_322 {dimension_numbers = #tpu.dot_dimension_numbers<[1], [0], [0], [1], [0, 0, 1, 1], [], []>} : vector<2x128xbf16>, vector<128x512xbf16>, vector<2x512xf32> -> vector<2x512xf32>
    %765 = arith.addf %760, %764 : vector<2x512xf32>
    %766 = arith.index_cast %753 : i32 to index
    %c0_323 = arith.constant 0 : index
    %c0_324 = arith.constant 0 : index
    %767 = vector.load %arg10[%766, %c0_323, %c0_324] : memref<8x2x512xf32, #tpu.memory_space<vmem>>, vector<1x2x512xf32>
    %768 = vector.shape_cast %767 : vector<1x2x512xf32> to vector<2x512xf32>
    %769 = arith.truncf %756 : vector<2x128xf32> to vector<2x128xbf16>
    %c1_325 = arith.constant 1 : index
    %c0_326 = arith.constant 0 : index
    %c0_327 = arith.constant 0 : index
    %770 = vector.load %arg5[%c1_325, %c0_326, %c0_327] : memref<2x128x512xbf16, #tpu.memory_space<vmem>>, vector<1x128x512xbf16>
    %771 = vector.shape_cast %770 : vector<1x128x512xbf16> to vector<128x512xbf16>
    %cst_328 = arith.constant dense<0.000000e+00> : vector<2x512xf32>
    %772 = tpu.matmul %769, %771, %cst_328 {dimension_numbers = #tpu.dot_dimension_numbers<[1], [0], [0], [1], [0, 0, 1, 1], [], []>} : vector<2x128xbf16>, vector<128x512xbf16>, vector<2x512xf32> -> vector<2x512xf32>
    %773 = arith.addf %768, %772 : vector<2x512xf32>
    %774 = vector.extract_strided_slice %765 {offsets = [0, 0], sizes = [2, 128], strides = [1, 1]} : vector<2x512xf32> to vector<2x128xf32>
    %775 = arith.negf %774 : vector<2x128xf32>
    %776 = math.exp %775 : vector<2x128xf32>
    %cst_329 = arith.constant 1.000000e+00 : f32
    %777 = vector.broadcast %cst_329 : f32 to vector<2x128xf32>
    %778 = arith.addf %777, %776 : vector<2x128xf32>
    %779 = arith.divf %777, %778 : vector<2x128xf32>
    %780 = vector.extract_strided_slice %765 {offsets = [0, 128], sizes = [2, 128], strides = [1, 1]} : vector<2x512xf32> to vector<2x128xf32>
    %781 = arith.negf %780 : vector<2x128xf32>
    %782 = math.exp %781 : vector<2x128xf32>
    %cst_330 = arith.constant 1.000000e+00 : f32
    %783 = vector.broadcast %cst_330 : f32 to vector<2x128xf32>
    %784 = arith.addf %783, %782 : vector<2x128xf32>
    %785 = arith.divf %783, %784 : vector<2x128xf32>
    %786 = vector.extract_strided_slice %765 {offsets = [0, 256], sizes = [2, 128], strides = [1, 1]} : vector<2x512xf32> to vector<2x128xf32>
    %787 = math.tanh %786 : vector<2x128xf32>
    %788 = vector.extract_strided_slice %765 {offsets = [0, 384], sizes = [2, 128], strides = [1, 1]} : vector<2x512xf32> to vector<2x128xf32>
    %789 = arith.negf %788 : vector<2x128xf32>
    %790 = math.exp %789 : vector<2x128xf32>
    %cst_331 = arith.constant 1.000000e+00 : f32
    %791 = vector.broadcast %cst_331 : f32 to vector<2x128xf32>
    %792 = arith.addf %791, %790 : vector<2x128xf32>
    %793 = arith.divf %791, %792 : vector<2x128xf32>
    %794 = vector.extract_strided_slice %773 {offsets = [0, 0], sizes = [2, 128], strides = [1, 1]} : vector<2x512xf32> to vector<2x128xf32>
    %795 = arith.negf %794 : vector<2x128xf32>
    %796 = math.exp %795 : vector<2x128xf32>
    %cst_332 = arith.constant 1.000000e+00 : f32
    %797 = vector.broadcast %cst_332 : f32 to vector<2x128xf32>
    %798 = arith.addf %797, %796 : vector<2x128xf32>
    %799 = arith.divf %797, %798 : vector<2x128xf32>
    %800 = vector.extract_strided_slice %773 {offsets = [0, 128], sizes = [2, 128], strides = [1, 1]} : vector<2x512xf32> to vector<2x128xf32>
    %801 = arith.negf %800 : vector<2x128xf32>
    %802 = math.exp %801 : vector<2x128xf32>
    %cst_333 = arith.constant 1.000000e+00 : f32
    %803 = vector.broadcast %cst_333 : f32 to vector<2x128xf32>
    %804 = arith.addf %803, %802 : vector<2x128xf32>
    %805 = arith.divf %803, %804 : vector<2x128xf32>
    %806 = vector.extract_strided_slice %773 {offsets = [0, 256], sizes = [2, 128], strides = [1, 1]} : vector<2x512xf32> to vector<2x128xf32>
    %807 = math.tanh %806 : vector<2x128xf32>
    %808 = vector.extract_strided_slice %773 {offsets = [0, 384], sizes = [2, 128], strides = [1, 1]} : vector<2x512xf32> to vector<2x128xf32>
    %809 = arith.negf %808 : vector<2x128xf32>
    %810 = math.exp %809 : vector<2x128xf32>
    %cst_334 = arith.constant 1.000000e+00 : f32
    %811 = vector.broadcast %cst_334 : f32 to vector<2x128xf32>
    %812 = arith.addf %811, %810 : vector<2x128xf32>
    %813 = arith.divf %811, %812 : vector<2x128xf32>
    %814 = arith.mulf %785, %755 : vector<2x128xf32>
    %815 = arith.mulf %779, %787 : vector<2x128xf32>
    %816 = arith.addf %814, %815 : vector<2x128xf32>
    %817 = arith.mulf %805, %757 : vector<2x128xf32>
    %818 = arith.mulf %799, %807 : vector<2x128xf32>
    %819 = arith.addf %817, %818 : vector<2x128xf32>
    %820 = math.tanh %816 : vector<2x128xf32>
    %821 = arith.mulf %793, %820 : vector<2x128xf32>
    %822 = math.tanh %819 : vector<2x128xf32>
    %823 = arith.mulf %813, %822 : vector<2x128xf32>
    %824 = arith.addi %84, %c6_i32 : i32
    %825 = vector.broadcast %824 : i32 to vector<2x1xi32>
    %826 = arith.cmpi slt, %825, %83 : vector<2x1xi32>
    %827 = arith.addi %86, %753 : i32
    %828 = vector.broadcast %827 : i32 to vector<2x1xi32>
    %829 = arith.cmpi slt, %828, %83 : vector<2x1xi32>
    %830 = vector.shape_cast %826 : vector<2x1xi1> to vector<2x1xi1>
    %831 = vector.broadcast %830 : vector<2x1xi1> to vector<2x128xi1>
    %832 = arith.select %831, %816, %755 : vector<2x128xi1>, vector<2x128xf32>
    %c0_335 = arith.constant 0 : index
    %c0_336 = arith.constant 0 : index
    %833 = vector.load %arg12[%c0_335, %c0_336] : memref<2x128xf32, #tpu.memory_space<vmem>>, vector<2x128xf32>
    tpu.vector_store %arg12[%c0_335, %c0_336], %832 {strides = array<i32>} : memref<2x128xf32, #tpu.memory_space<vmem>>, vector<2x128xf32>,
    %834 = vector.shape_cast %826 : vector<2x1xi1> to vector<2x1xi1>
    %835 = vector.broadcast %834 : vector<2x1xi1> to vector<2x128xi1>
    %836 = arith.select %835, %821, %754 : vector<2x128xi1>, vector<2x128xf32>
    %c0_337 = arith.constant 0 : index
    %c0_338 = arith.constant 0 : index
    %837 = vector.load %arg11[%c0_337, %c0_338] : memref<2x128xf32, #tpu.memory_space<vmem>>, vector<2x128xf32>
    tpu.vector_store %arg11[%c0_337, %c0_338], %836 {strides = array<i32>} : memref<2x128xf32, #tpu.memory_space<vmem>>, vector<2x128xf32>,
    %838 = vector.shape_cast %829 : vector<2x1xi1> to vector<2x1xi1>
    %839 = vector.broadcast %838 : vector<2x1xi1> to vector<2x128xi1>
    %840 = arith.select %839, %819, %757 : vector<2x128xi1>, vector<2x128xf32>
    %c0_339 = arith.constant 0 : index
    %c0_340 = arith.constant 0 : index
    %841 = vector.load %arg14[%c0_339, %c0_340] : memref<2x128xf32, #tpu.memory_space<vmem>>, vector<2x128xf32>
    tpu.vector_store %arg14[%c0_339, %c0_340], %840 {strides = array<i32>} : memref<2x128xf32, #tpu.memory_space<vmem>>, vector<2x128xf32>,
    %842 = vector.shape_cast %829 : vector<2x1xi1> to vector<2x1xi1>
    %843 = vector.broadcast %842 : vector<2x1xi1> to vector<2x128xi1>
    %844 = arith.select %843, %823, %756 : vector<2x128xi1>, vector<2x128xf32>
    %c0_341 = arith.constant 0 : index
    %c0_342 = arith.constant 0 : index
    %845 = vector.load %arg13[%c0_341, %c0_342] : memref<2x128xf32, #tpu.memory_space<vmem>>, vector<2x128xf32>
    tpu.vector_store %arg13[%c0_341, %c0_342], %844 {strides = array<i32>} : memref<2x128xf32, #tpu.memory_space<vmem>>, vector<2x128xf32>,
    %cst_343 = arith.constant 0.000000e+00 : f32
    %846 = vector.shape_cast %826 : vector<2x1xi1> to vector<2x1xi1>
    %847 = vector.broadcast %846 : vector<2x1xi1> to vector<2x128xi1>
    %848 = vector.broadcast %cst_343 : f32 to vector<2x128xf32>
    %849 = arith.select %847, %821, %848 : vector<2x128xi1>, vector<2x128xf32>
    %850 = arith.truncf %849 : vector<2x128xf32> to vector<2x128xbf16>
    %851 = arith.index_cast %c6_i32 : i32 to index
    %c0_344 = arith.constant 0 : index
    %c0_345 = arith.constant 0 : index
    %852 = vector.load %arg7[%851, %c0_344, %c0_345] : memref<8x2x128xbf16, #tpu.memory_space<vmem>>, vector<1x2x128xbf16>
    %853 = vector.shape_cast %852 : vector<1x2x128xbf16> to vector<2x128xbf16>
    %854 = vector.shape_cast %850 : vector<2x128xbf16> to vector<1x2x128xbf16>
    tpu.vector_store %arg7[%851, %c0_344, %c0_345], %854 {strides = array<i32>} : memref<8x2x128xbf16, #tpu.memory_space<vmem>>, vector<1x2x128xbf16>,
    %cst_346 = arith.constant 0.000000e+00 : f32
    %855 = vector.shape_cast %829 : vector<2x1xi1> to vector<2x1xi1>
    %856 = vector.broadcast %855 : vector<2x1xi1> to vector<2x128xi1>
    %857 = vector.broadcast %cst_346 : f32 to vector<2x128xf32>
    %858 = arith.select %856, %823, %857 : vector<2x128xi1>, vector<2x128xf32>
    %859 = arith.truncf %858 : vector<2x128xf32> to vector<2x128xbf16>
    %860 = arith.index_cast %753 : i32 to index
    %c0_347 = arith.constant 0 : index
    %c0_348 = arith.constant 0 : index
    %861 = vector.load %arg8[%860, %c0_347, %c0_348] : memref<8x2x128xbf16, #tpu.memory_space<vmem>>, vector<1x2x128xbf16>
    %862 = vector.shape_cast %861 : vector<1x2x128xbf16> to vector<2x128xbf16>
    %863 = vector.shape_cast %859 : vector<2x128xbf16> to vector<1x2x128xbf16>
    tpu.vector_store %arg8[%860, %c0_347, %c0_348], %863 {strides = array<i32>} : memref<8x2x128xbf16, #tpu.memory_space<vmem>>, vector<1x2x128xbf16>,
    %c7_i32_349 = arith.constant 7 : i32
    %c7_i32_350 = arith.constant 7 : i32
    %864 = arith.subi %c7_i32_350, %c7_i32_349 : i32
    %c0_351 = arith.constant 0 : index
    %c0_352 = arith.constant 0 : index
    %865 = vector.load %arg11[%c0_351, %c0_352] : memref<2x128xf32, #tpu.memory_space<vmem>>, vector<2x128xf32>
    %c0_353 = arith.constant 0 : index
    %c0_354 = arith.constant 0 : index
    %866 = vector.load %arg12[%c0_353, %c0_354] : memref<2x128xf32, #tpu.memory_space<vmem>>, vector<2x128xf32>
    %c0_355 = arith.constant 0 : index
    %c0_356 = arith.constant 0 : index
    %867 = vector.load %arg13[%c0_355, %c0_356] : memref<2x128xf32, #tpu.memory_space<vmem>>, vector<2x128xf32>
    %c0_357 = arith.constant 0 : index
    %c0_358 = arith.constant 0 : index
    %868 = vector.load %arg14[%c0_357, %c0_358] : memref<2x128xf32, #tpu.memory_space<vmem>>, vector<2x128xf32>
    %869 = arith.index_cast %c7_i32_349 : i32 to index
    %c0_359 = arith.constant 0 : index
    %c0_360 = arith.constant 0 : index
    %870 = vector.load %arg9[%869, %c0_359, %c0_360] : memref<8x2x512xf32, #tpu.memory_space<vmem>>, vector<1x2x512xf32>
    %871 = vector.shape_cast %870 : vector<1x2x512xf32> to vector<2x512xf32>
    %872 = arith.truncf %865 : vector<2x128xf32> to vector<2x128xbf16>
    %c0_361 = arith.constant 0 : index
    %c0_362 = arith.constant 0 : index
    %c0_363 = arith.constant 0 : index
    %873 = vector.load %arg5[%c0_361, %c0_362, %c0_363] : memref<2x128x512xbf16, #tpu.memory_space<vmem>>, vector<1x128x512xbf16>
    %874 = vector.shape_cast %873 : vector<1x128x512xbf16> to vector<128x512xbf16>
    %cst_364 = arith.constant dense<0.000000e+00> : vector<2x512xf32>
    %875 = tpu.matmul %872, %874, %cst_364 {dimension_numbers = #tpu.dot_dimension_numbers<[1], [0], [0], [1], [0, 0, 1, 1], [], []>} : vector<2x128xbf16>, vector<128x512xbf16>, vector<2x512xf32> -> vector<2x512xf32>
    %876 = arith.addf %871, %875 : vector<2x512xf32>
    %877 = arith.index_cast %864 : i32 to index
    %c0_365 = arith.constant 0 : index
    %c0_366 = arith.constant 0 : index
    %878 = vector.load %arg10[%877, %c0_365, %c0_366] : memref<8x2x512xf32, #tpu.memory_space<vmem>>, vector<1x2x512xf32>
    %879 = vector.shape_cast %878 : vector<1x2x512xf32> to vector<2x512xf32>
    %880 = arith.truncf %867 : vector<2x128xf32> to vector<2x128xbf16>
    %c1_367 = arith.constant 1 : index
    %c0_368 = arith.constant 0 : index
    %c0_369 = arith.constant 0 : index
    %881 = vector.load %arg5[%c1_367, %c0_368, %c0_369] : memref<2x128x512xbf16, #tpu.memory_space<vmem>>, vector<1x128x512xbf16>
    %882 = vector.shape_cast %881 : vector<1x128x512xbf16> to vector<128x512xbf16>
    %cst_370 = arith.constant dense<0.000000e+00> : vector<2x512xf32>
    %883 = tpu.matmul %880, %882, %cst_370 {dimension_numbers = #tpu.dot_dimension_numbers<[1], [0], [0], [1], [0, 0, 1, 1], [], []>} : vector<2x128xbf16>, vector<128x512xbf16>, vector<2x512xf32> -> vector<2x512xf32>
    %884 = arith.addf %879, %883 : vector<2x512xf32>
    %885 = vector.extract_strided_slice %876 {offsets = [0, 0], sizes = [2, 128], strides = [1, 1]} : vector<2x512xf32> to vector<2x128xf32>
    %886 = arith.negf %885 : vector<2x128xf32>
    %887 = math.exp %886 : vector<2x128xf32>
    %cst_371 = arith.constant 1.000000e+00 : f32
    %888 = vector.broadcast %cst_371 : f32 to vector<2x128xf32>
    %889 = arith.addf %888, %887 : vector<2x128xf32>
    %890 = arith.divf %888, %889 : vector<2x128xf32>
    %891 = vector.extract_strided_slice %876 {offsets = [0, 128], sizes = [2, 128], strides = [1, 1]} : vector<2x512xf32> to vector<2x128xf32>
    %892 = arith.negf %891 : vector<2x128xf32>
    %893 = math.exp %892 : vector<2x128xf32>
    %cst_372 = arith.constant 1.000000e+00 : f32
    %894 = vector.broadcast %cst_372 : f32 to vector<2x128xf32>
    %895 = arith.addf %894, %893 : vector<2x128xf32>
    %896 = arith.divf %894, %895 : vector<2x128xf32>
    %897 = vector.extract_strided_slice %876 {offsets = [0, 256], sizes = [2, 128], strides = [1, 1]} : vector<2x512xf32> to vector<2x128xf32>
    %898 = math.tanh %897 : vector<2x128xf32>
    %899 = vector.extract_strided_slice %876 {offsets = [0, 384], sizes = [2, 128], strides = [1, 1]} : vector<2x512xf32> to vector<2x128xf32>
    %900 = arith.negf %899 : vector<2x128xf32>
    %901 = math.exp %900 : vector<2x128xf32>
    %cst_373 = arith.constant 1.000000e+00 : f32
    %902 = vector.broadcast %cst_373 : f32 to vector<2x128xf32>
    %903 = arith.addf %902, %901 : vector<2x128xf32>
    %904 = arith.divf %902, %903 : vector<2x128xf32>
    %905 = vector.extract_strided_slice %884 {offsets = [0, 0], sizes = [2, 128], strides = [1, 1]} : vector<2x512xf32> to vector<2x128xf32>
    %906 = arith.negf %905 : vector<2x128xf32>
    %907 = math.exp %906 : vector<2x128xf32>
    %cst_374 = arith.constant 1.000000e+00 : f32
    %908 = vector.broadcast %cst_374 : f32 to vector<2x128xf32>
    %909 = arith.addf %908, %907 : vector<2x128xf32>
    %910 = arith.divf %908, %909 : vector<2x128xf32>
    %911 = vector.extract_strided_slice %884 {offsets = [0, 128], sizes = [2, 128], strides = [1, 1]} : vector<2x512xf32> to vector<2x128xf32>
    %912 = arith.negf %911 : vector<2x128xf32>
    %913 = math.exp %912 : vector<2x128xf32>
    %cst_375 = arith.constant 1.000000e+00 : f32
    %914 = vector.broadcast %cst_375 : f32 to vector<2x128xf32>
    %915 = arith.addf %914, %913 : vector<2x128xf32>
    %916 = arith.divf %914, %915 : vector<2x128xf32>
    %917 = vector.extract_strided_slice %884 {offsets = [0, 256], sizes = [2, 128], strides = [1, 1]} : vector<2x512xf32> to vector<2x128xf32>
    %918 = math.tanh %917 : vector<2x128xf32>
    %919 = vector.extract_strided_slice %884 {offsets = [0, 384], sizes = [2, 128], strides = [1, 1]} : vector<2x512xf32> to vector<2x128xf32>
    %920 = arith.negf %919 : vector<2x128xf32>
    %921 = math.exp %920 : vector<2x128xf32>
    %cst_376 = arith.constant 1.000000e+00 : f32
    %922 = vector.broadcast %cst_376 : f32 to vector<2x128xf32>
    %923 = arith.addf %922, %921 : vector<2x128xf32>
    %924 = arith.divf %922, %923 : vector<2x128xf32>
    %925 = arith.mulf %896, %866 : vector<2x128xf32>
    %926 = arith.mulf %890, %898 : vector<2x128xf32>
    %927 = arith.addf %925, %926 : vector<2x128xf32>
    %928 = arith.mulf %916, %868 : vector<2x128xf32>
    %929 = arith.mulf %910, %918 : vector<2x128xf32>
    %930 = arith.addf %928, %929 : vector<2x128xf32>
    %931 = math.tanh %927 : vector<2x128xf32>
    %932 = arith.mulf %904, %931 : vector<2x128xf32>
    %933 = math.tanh %930 : vector<2x128xf32>
    %934 = arith.mulf %924, %933 : vector<2x128xf32>
    %935 = arith.addi %84, %c7_i32_349 : i32
    %936 = vector.broadcast %935 : i32 to vector<2x1xi32>
    %937 = arith.cmpi slt, %936, %83 : vector<2x1xi32>
    %938 = arith.addi %86, %864 : i32
    %939 = vector.broadcast %938 : i32 to vector<2x1xi32>
    %940 = arith.cmpi slt, %939, %83 : vector<2x1xi32>
    %941 = vector.shape_cast %937 : vector<2x1xi1> to vector<2x1xi1>
    %942 = vector.broadcast %941 : vector<2x1xi1> to vector<2x128xi1>
    %943 = arith.select %942, %927, %866 : vector<2x128xi1>, vector<2x128xf32>
    %c0_377 = arith.constant 0 : index
    %c0_378 = arith.constant 0 : index
    %944 = vector.load %arg12[%c0_377, %c0_378] : memref<2x128xf32, #tpu.memory_space<vmem>>, vector<2x128xf32>
    tpu.vector_store %arg12[%c0_377, %c0_378], %943 {strides = array<i32>} : memref<2x128xf32, #tpu.memory_space<vmem>>, vector<2x128xf32>,
    %945 = vector.shape_cast %937 : vector<2x1xi1> to vector<2x1xi1>
    %946 = vector.broadcast %945 : vector<2x1xi1> to vector<2x128xi1>
    %947 = arith.select %946, %932, %865 : vector<2x128xi1>, vector<2x128xf32>
    %c0_379 = arith.constant 0 : index
    %c0_380 = arith.constant 0 : index
    %948 = vector.load %arg11[%c0_379, %c0_380] : memref<2x128xf32, #tpu.memory_space<vmem>>, vector<2x128xf32>
    tpu.vector_store %arg11[%c0_379, %c0_380], %947 {strides = array<i32>} : memref<2x128xf32, #tpu.memory_space<vmem>>, vector<2x128xf32>,
    %949 = vector.shape_cast %940 : vector<2x1xi1> to vector<2x1xi1>
    %950 = vector.broadcast %949 : vector<2x1xi1> to vector<2x128xi1>
    %951 = arith.select %950, %930, %868 : vector<2x128xi1>, vector<2x128xf32>
    %c0_381 = arith.constant 0 : index
    %c0_382 = arith.constant 0 : index
    %952 = vector.load %arg14[%c0_381, %c0_382] : memref<2x128xf32, #tpu.memory_space<vmem>>, vector<2x128xf32>
    tpu.vector_store %arg14[%c0_381, %c0_382], %951 {strides = array<i32>} : memref<2x128xf32, #tpu.memory_space<vmem>>, vector<2x128xf32>,
    %953 = vector.shape_cast %940 : vector<2x1xi1> to vector<2x1xi1>
    %954 = vector.broadcast %953 : vector<2x1xi1> to vector<2x128xi1>
    %955 = arith.select %954, %934, %867 : vector<2x128xi1>, vector<2x128xf32>
    %c0_383 = arith.constant 0 : index
    %c0_384 = arith.constant 0 : index
    %956 = vector.load %arg13[%c0_383, %c0_384] : memref<2x128xf32, #tpu.memory_space<vmem>>, vector<2x128xf32>
    tpu.vector_store %arg13[%c0_383, %c0_384], %955 {strides = array<i32>} : memref<2x128xf32, #tpu.memory_space<vmem>>, vector<2x128xf32>,
    %cst_385 = arith.constant 0.000000e+00 : f32
    %957 = vector.shape_cast %937 : vector<2x1xi1> to vector<2x1xi1>
    %958 = vector.broadcast %957 : vector<2x1xi1> to vector<2x128xi1>
    %959 = vector.broadcast %cst_385 : f32 to vector<2x128xf32>
    %960 = arith.select %958, %932, %959 : vector<2x128xi1>, vector<2x128xf32>
    %961 = arith.truncf %960 : vector<2x128xf32> to vector<2x128xbf16>
    %962 = arith.index_cast %c7_i32_349 : i32 to index
    %c0_386 = arith.constant 0 : index
    %c0_387 = arith.constant 0 : index
    %963 = vector.load %arg7[%962, %c0_386, %c0_387] : memref<8x2x128xbf16, #tpu.memory_space<vmem>>, vector<1x2x128xbf16>
    %964 = vector.shape_cast %963 : vector<1x2x128xbf16> to vector<2x128xbf16>
    %965 = vector.shape_cast %961 : vector<2x128xbf16> to vector<1x2x128xbf16>
    tpu.vector_store %arg7[%962, %c0_386, %c0_387], %965 {strides = array<i32>} : memref<8x2x128xbf16, #tpu.memory_space<vmem>>, vector<1x2x128xbf16>,
    %cst_388 = arith.constant 0.000000e+00 : f32
    %966 = vector.shape_cast %940 : vector<2x1xi1> to vector<2x1xi1>
    %967 = vector.broadcast %966 : vector<2x1xi1> to vector<2x128xi1>
    %968 = vector.broadcast %cst_388 : f32 to vector<2x128xf32>
    %969 = arith.select %967, %934, %968 : vector<2x128xi1>, vector<2x128xf32>
    %970 = arith.truncf %969 : vector<2x128xf32> to vector<2x128xbf16>
    %971 = arith.index_cast %864 : i32 to index
    %c0_389 = arith.constant 0 : index
    %c0_390 = arith.constant 0 : index
    %972 = vector.load %arg8[%971, %c0_389, %c0_390] : memref<8x2x128xbf16, #tpu.memory_space<vmem>>, vector<1x2x128xbf16>
    %973 = vector.shape_cast %972 : vector<1x2x128xbf16> to vector<2x128xbf16>
    %974 = vector.shape_cast %970 : vector<2x128xbf16> to vector<1x2x128xbf16>
    tpu.vector_store %arg8[%971, %c0_389, %c0_390], %974 {strides = array<i32>} : memref<8x2x128xbf16, #tpu.memory_space<vmem>>, vector<1x2x128xbf16>,
    %c8_i32_391 = arith.constant 8 : i32
    return
  }
  func.func @transform_0(%arg0: i32) -> (i32, i32) {
    %c0_i32 = arith.constant 0 : i32
    %c0_i32_0 = arith.constant 0 : i32
    %c0_i32_1 = arith.constant 0 : i32
    return %c0_i32, %c0_i32_0 : i32, i32
  }
  func.func @transform_1(%arg0: i32) -> (i32, i32) {
    %c0_i32 = arith.constant 0 : i32
    %c0_i32_0 = arith.constant 0 : i32
    return %arg0, %c0_i32 : i32, i32
  }
  func.func @transform_2(%arg0: i32) -> (i32, i32) {
    %c0_i32 = arith.constant 0 : i32
    %0 = arith.subi %c0_i32, %arg0 : i32
    %c0_i32_0 = arith.constant 0 : i32
    %c0_i32_1 = arith.constant 0 : i32
    return %0, %c0_i32_0 : i32, i32
  }
  func.func @transform_3(%arg0: i32) -> (i32, i32, i32) {
    %c0_i32 = arith.constant 0 : i32
    %c0_i32_0 = arith.constant 0 : i32
    %c0_i32_1 = arith.constant 0 : i32
    %c0_i32_2 = arith.constant 0 : i32
    return %c0_i32, %c0_i32_0, %c0_i32_1 : i32, i32, i32
  }
  func.func @transform_4(%arg0: i32) -> (i32, i32, i32) {
    %c0_i32 = arith.constant 0 : i32
    %c0_i32_0 = arith.constant 0 : i32
    %c0_i32_1 = arith.constant 0 : i32
    %c0_i32_2 = arith.constant 0 : i32
    return %c0_i32, %c0_i32_0, %c0_i32_1 : i32, i32, i32
  }
  func.func @transform_5(%arg0: i32) -> (i32, i32, i32) {
    %c0_i32 = arith.constant 0 : i32
    %c0_i32_0 = arith.constant 0 : i32
    %c0_i32_1 = arith.constant 0 : i32
    %c0_i32_2 = arith.constant 0 : i32
    return %c0_i32, %c0_i32_0, %c0_i32_1 : i32, i32, i32
  }
  func.func @transform_6(%arg0: i32) -> (i32, i32, i32) {
    %c0_i32 = arith.constant 0 : i32
    %c0_i32_0 = arith.constant 0 : i32
    %c0_i32_1 = arith.constant 0 : i32
    return %arg0, %c0_i32, %c0_i32_0 : i32, i32, i32
  }
  func.func @transform_7(%arg0: i32) -> (i32, i32, i32) {
    %c0_i32 = arith.constant 0 : i32
    %0 = arith.subi %c0_i32, %arg0 : i32
    %c0_i32_0 = arith.constant 0 : i32
    %c0_i32_1 = arith.constant 0 : i32
    %c0_i32_2 = arith.constant 0 : i32
    return %0, %c0_i32_0, %c0_i32_1 : i32, i32, i32
  }
}

</mosaic_0001>

<llo_original>
// kernel: _lstm1_core.3
$region0: #{_lstm1_core.3}
  #allocation0 [shape = 'u32[]', space=smem, size = 0x4, offset = 0x4, fixed_abs, tag = 'smem constant byte address 0x4 - core index']
  #allocation1 [shape = 'u32[144,128]{1,0:T(1,128)}', space=vmem, size = 0x12000, scoped, tag = 'internal scratch']
  %s0 = inlined_call_operand.vmem [shape: bf16[16,128], index: 0, kind: input, shape index: {}]
  %s1 = inlined_call_operand.vmem [shape: bf16[16,128], index: 1, kind: input, shape index: {}]
  %s2 = inlined_call_operand.vmem [shape: bf16[128,128], index: 2, kind: input, shape index: {}]
  %s3 = inlined_call_operand.vmem [shape: bf16[128,128], index: 3, kind: input, shape index: {}]
  %s4 = inlined_call_operand.vmem [shape: f32[1,128], index: 4, kind: input, shape index: {}]
  %s5 = inlined_call_operand.hbm [shape: f32[16,128], index: 5, kind: output, shape index: {}]
  %s6 = sld [smem:[#allocation0]]
  $region30: #{_lstm1_core.3} parent=0
    _
  %s8 = ssub.s32 1, %s6
  %s9 = scalar_select 0, %s8, %s6
  $region1: #{_lstm1_core.3} parent=0
    #allocation2 [shape = 'u8[8192]{0}', space=vmem, size = 0x2000, scoped, tag = 'output window, operand 0, single buffered']
    #allocation3 [shape = 's32[1]{0}', space=sflag, size = 0x4, scoped, tag = 'scoped memory for _lstm1_core.3']
    %10 = vsyncpa [#allocation3], 0
    // Predicated region
    $region2: #{_lstm1_core.3} parent=1 // pred_check
      _
    $region3: #{_lstm1_core.3} parent=1 // pred_check_branch
      %12 = sbr.rel (0) target = $region5
    $region4: #{_lstm1_core.3} parent=1 // pred_region
      _
    $region5: #{_lstm1_core.3} parent=1 // pred_fallthru
      _
    // Predicated region
    $region6: #{_lstm1_core.3} parent=1 // pred_check
      _
    $region7: #{_lstm1_core.3} parent=1 // pred_check_branch
      %14 = sbr.rel (0) target = $region9
    $region8: #{_lstm1_core.3} parent=1 // pred_region
      _
    $region9: #{_lstm1_core.3} parent=1 // pred_fallthru
      _
    // Predicated region
    $region10: #{_lstm1_core.3} parent=1 // pred_check
      _
    $region11: #{_lstm1_core.3} parent=1 // pred_check_branch
      %16 = sbr.rel (0) target = $region13
    $region12: #{_lstm1_core.3} parent=1 // pred_region
      _
    $region13: #{_lstm1_core.3} parent=1 // pred_fallthru
      _
    // Predicated region
    $region14: #{_lstm1_core.3} parent=1 // pred_check
      _
    $region15: #{_lstm1_core.3} parent=1 // pred_check_branch
      %18 = sbr.rel (0) target = $region17
    $region16: #{_lstm1_core.3} parent=1 // pred_region
      _
    $region17: #{_lstm1_core.3} parent=1 // pred_fallthru
      _
    // Predicated region
    $region18: #{_lstm1_core.3} parent=1 // pred_check
      _
    $region19: #{_lstm1_core.3} parent=1 // pred_check_branch
      %20 = sbr.rel (0) target = $region21
    $region20: #{_lstm1_core.3} parent=1 // pred_region
      _
    $region21: #{_lstm1_core.3} parent=1 // pred_fallthru
      _
    %v22 = vld [vmem:[%s0] sm:$0xf]
    %v23 = vld [vmem:[%s0 + $0x4] sm:$0xf]
    %v24 = vld [vmem:[%s2] sm:$0xf]
    %v25 = vld [vmem:[%s2 + $0x4] sm:$0xf]
    %v26 = vld [vmem:[%s2 + $0x8] sm:$0xf]
    %v27 = vld [vmem:[%s2 + $0xc] sm:$0xf]
    %v28 = vld [vmem:[%s2 + $0x10] sm:$0xf]
    %v29 = vld [vmem:[%s2 + $0x14] sm:$0xf]
    %v30 = vld [vmem:[%s2 + $0x18] sm:$0xf]
    %v31 = vld [vmem:[%s2 + $0x1c] sm:$0xf]
    %v32 = vld [vmem:[%s2 + $0x20] sm:$0xf]
    %v33 = vld [vmem:[%s2 + $0x24] sm:$0xf]
    %v34 = vld [vmem:[%s2 + $0x28] sm:$0xf]
    %v35 = vld [vmem:[%s2 + $0x2c] sm:$0xf]
    %v36 = vld [vmem:[%s2 + $0x30] sm:$0xf]
    %v37 = vld [vmem:[%s2 + $0x34] sm:$0xf]
    %v38 = vld [vmem:[%s2 + $0x38] sm:$0xf]
    %v39 = vld [vmem:[%s2 + $0x3c] sm:$0xf]
    %v40 = vld [vmem:[%s1] sm:$0xf]
    %v41 = vld [vmem:[%s1 + $0x4] sm:$0xf]
    %v42 = vld [vmem:[%s3] sm:$0xf]
    %v43 = vld [vmem:[%s3 + $0x4] sm:$0xf]
    %v44 = vld [vmem:[%s3 + $0x8] sm:$0xf]
    %v45 = vld [vmem:[%s3 + $0xc] sm:$0xf]
    %v46 = vld [vmem:[%s3 + $0x10] sm:$0xf]
    %v47 = vld [vmem:[%s3 + $0x14] sm:$0xf]
    %v48 = vld [vmem:[%s3 + $0x18] sm:$0xf]
    %v49 = vld [vmem:[%s3 + $0x1c] sm:$0xf]
    %v50 = vld [vmem:[%s3 + $0x20] sm:$0xf]
    %v51 = vld [vmem:[%s3 + $0x24] sm:$0xf]
    %v52 = vld [vmem:[%s3 + $0x28] sm:$0xf]
    %v53 = vld [vmem:[%s3 + $0x2c] sm:$0xf]
    %v54 = vld [vmem:[%s3 + $0x30] sm:$0xf]
    %v55 = vld [vmem:[%s3 + $0x34] sm:$0xf]
    %v56 = vld [vmem:[%s3 + $0x38] sm:$0xf]
    %v57 = vld [vmem:[%s3 + $0x3c] sm:$0xf]
    %v60 = vunpack.c.l.b16 %v40
    %v61 = vunpack.c.l.b16 %v41
    %v62 = vpack.c.b16 %v61, %v60
    %v80 = vunpack.c.l.b16 %v42
    %v81 = vunpack.c.l.b16 %v43
    %v82 = vunpack.c.l.b16 %v44
    %v83 = vunpack.c.l.b16 %v45
    %v84 = vunpack.c.l.b16 %v46
    %v85 = vunpack.c.l.b16 %v47
    %v86 = vunpack.c.l.b16 %v48
    %v87 = vunpack.c.l.b16 %v49
    %v88 = vunpack.c.l.b16 %v50
    %v89 = vunpack.c.l.b16 %v51
    %v90 = vunpack.c.l.b16 %v52
    %v91 = vunpack.c.l.b16 %v53
    %v92 = vunpack.c.l.b16 %v54
    %v93 = vunpack.c.l.b16 %v55
    %v94 = vunpack.c.l.b16 %v56
    %v95 = vunpack.c.l.b16 %v57
    %v96 = vpack.c.b16 %v81, %v80
    %v97 = vpack.c.b16 %v83, %v82
    %v98 = vpack.c.b16 %v85, %v84
    %v99 = vpack.c.b16 %v87, %v86
    %v100 = vpack.c.b16 %v89, %v88
    %v101 = vpack.c.b16 %v91, %v90
    %v102 = vpack.c.b16 %v93, %v92
    %v103 = vpack.c.b16 %v95, %v94
    %112 = vmatprep.subr.bf16.mxu0 0
    %113 = vmatpush1.bf16.msra.mxu0 %v96
    %114 = vmatprep.subr.bf16.mxu0 0
    %115 = vmatpush1.bf16.msra.mxu0 %v97
    %116 = vmatprep.subr.bf16.mxu0 0
    %117 = vmatpush1.bf16.msra.mxu0 %v98
    %118 = vmatprep.subr.bf16.mxu0 0
    %119 = vmatpush1.bf16.msra.mxu0 %v99
    %120 = vmatprep.subr.bf16.mxu0 0
    %121 = vmatpush1.bf16.msra.mxu0 %v100
    %122 = vmatprep.subr.bf16.mxu0 0
    %123 = vmatpush1.bf16.msra.mxu0 %v101
    %124 = vmatprep.subr.bf16.mxu0 0
    %125 = vmatpush1.bf16.msra.mxu0 %v102
    %126 = vmatprep.subr.bf16.mxu0 0
    %127 = vmatpush1.bf16.msra.mxu0 %v103
    %128 = vmatprep.subr.bf16.mxu0 0
    %129 = vmatpush1.bf16.msra.mxu0 0
    %130 = vmatprep.subr.bf16.mxu0 0
    %131 = vmatpush1.bf16.msra.mxu0 0
    %132 = vmatprep.subr.bf16.mxu0 0
    %133 = vmatpush1.bf16.msra.mxu0 0
    %134 = vmatprep.subr.bf16.mxu0 0
    %135 = vmatpush1.bf16.msra.mxu0 0
    %136 = vmatprep.subr.bf16.mxu0 0
    %137 = vmatpush1.bf16.msra.mxu0 0
    %138 = vmatprep.subr.bf16.mxu0 0
    %139 = vmatpush1.bf16.msra.mxu0 0
    %140 = vmatprep.subr.bf16.mxu0 0
    %141 = vmatpush1.bf16.msra.mxu0 0
    %142 = vmatprep.subr.bf16.mxu0 0
    %143 = vmatpush1.bf16.msra.mxu0 0
    %144 = vmatprep.mubr.bf16.mxu0 0
    %145 = vmatmul.mubr.bf16.gmra.mrb[0].mxu0 %v62
    %v146 = vpop.f32.mrb[0].mxu0
    %v147 = vadd.f32 0.0, %v146
    %v148 = vpop.f32.mrb[0].mxu0
    %v149 = vpop.f32.mrb[0].mxu0
    %v150 = vadd.f32 0.0, %v149
    %v151 = vpop.f32.mrb[0].mxu0
    %152 = vdwg.mxu0
    %v155 = vunpack.c.l.b16 %v22
    %v156 = vunpack.c.l.b16 %v23
    %v157 = vpack.c.b16 %v156, %v155
    %v175 = vunpack.c.l.b16 %v24
    %v176 = vunpack.c.l.b16 %v25
    %v177 = vunpack.c.l.b16 %v26
    %v178 = vunpack.c.l.b16 %v27
    %v179 = vunpack.c.l.b16 %v28
    %v180 = vunpack.c.l.b16 %v29
    %v181 = vunpack.c.l.b16 %v30
    %v182 = vunpack.c.l.b16 %v31
    %v183 = vunpack.c.l.b16 %v32
    %v184 = vunpack.c.l.b16 %v33
    %v185 = vunpack.c.l.b16 %v34
    %v186 = vunpack.c.l.b16 %v35
    %v187 = vunpack.c.l.b16 %v36
    %v188 = vunpack.c.l.b16 %v37
    %v189 = vunpack.c.l.b16 %v38
    %v190 = vunpack.c.l.b16 %v39
    %v191 = vpack.c.b16 %v176, %v175
    %v192 = vpack.c.b16 %v178, %v177
    %v193 = vpack.c.b16 %v180, %v179
    %v194 = vpack.c.b16 %v182, %v181
    %v195 = vpack.c.b16 %v184, %v183
    %v196 = vpack.c.b16 %v186, %v185
    %v197 = vpack.c.b16 %v188, %v187
    %v198 = vpack.c.b16 %v190, %v189
    %207 = vmatprep.subr.bf16.mxu0 0
    %208 = vmatpush1.bf16.msra.mxu0 %v191
    %209 = vmatprep.subr.bf16.mxu0 0
    %210 = vmatpush1.bf16.msra.mxu0 %v192
    %211 = vmatprep.subr.bf16.mxu0 0
    %212 = vmatpush1.bf16.msra.mxu0 %v193
    %213 = vmatprep.subr.bf16.mxu0 0
    %214 = vmatpush1.bf16.msra.mxu0 %v194
    %215 = vmatprep.subr.bf16.mxu0 0
    %216 = vmatpush1.bf16.msra.mxu0 %v195
    %217 = vmatprep.subr.bf16.mxu0 0
    %218 = vmatpush1.bf16.msra.mxu0 %v196
    %219 = vmatprep.subr.bf16.mxu0 0
    %220 = vmatpush1.bf16.msra.mxu0 %v197
    %221 = vmatprep.subr.bf16.mxu0 0
    %222 = vmatpush1.bf16.msra.mxu0 %v198
    %223 = vmatprep.subr.bf16.mxu0 0
    %224 = vmatpush1.bf16.msra.mxu0 0
    %225 = vmatprep.subr.bf16.mxu0 0
    %226 = vmatpush1.bf16.msra.mxu0 0
    %227 = vmatprep.subr.bf16.mxu0 0
    %228 = vmatpush1.bf16.msra.mxu0 0
    %229 = vmatprep.subr.bf16.mxu0 0
    %230 = vmatpush1.bf16.msra.mxu0 0
    %231 = vmatprep.subr.bf16.mxu0 0
    %232 = vmatpush1.bf16.msra.mxu0 0
    %233 = vmatprep.subr.bf16.mxu0 0
    %234 = vmatpush1.bf16.msra.mxu0 0
    %235 = vmatprep.subr.bf16.mxu0 0
    %236 = vmatpush1.bf16.msra.mxu0 0
    %237 = vmatprep.subr.bf16.mxu0 0
    %238 = vmatpush1.bf16.msra.mxu0 0
    %239 = vmatprep.mubr.bf16.mxu0 0
    %240 = vmatmul.mubr.bf16.gmra.mrb[0].mxu0 %v157
    %v241 = vpop.f32.mrb[0].mxu0
    %v242 = vadd.f32 %v147, %v241
    %v243 = vpop.f32.mrb[0].mxu0
    %v244 = vpop.f32.mrb[0].mxu0
    %v245 = vadd.f32 %v150, %v244
    %v246 = vpop.f32.mrb[0].mxu0
    %247 = vdwg.mxu0
    %v248 = vld [vmem:[%s4] sm:$0x1]
    %v250 = vlaneseq
    %v251 = vshrl.u32 %v250, 7
    %v252 = vsub.s32 0, %v251
    %v253 = vrot.slane %v248, %v252
    %v255 = vadd.f32 %v242, %v253
    %v256 = vadd.f32 %v245, %v253
    %257 = vst [vmem:[#allocation2] sm:$0xff] %v255
    %258 = vst [vmem:[#allocation2 + $0x8] sm:$0xff] %v256
    // Predicated region
    $region22: #{_lstm1_core.3} parent=1 // pred_check
      _
    $region23: #{_lstm1_core.3} parent=1 // pred_check_branch
      %260 = sbr.rel (0) target = $region25
    $region24: #{_lstm1_core.3} parent=1 // pred_region
      %s262 = ssub.s32 256, 256
      %263 = vsyncadd [#allocation3], %s262
      %s264 = sshll.u32 [#allocation2], 4
      %s265 = int_to_ptr.vmem [resolvable:$true] %s264
      %270 = dma.vmem_to_hbm [thread:$0]  %s265, 256, %s5, [#allocation3], 128, 128, 8
    $region25: #{_lstm1_core.3} parent=1 // pred_fallthru
      _
    // Predicated region
    $region26: #{_lstm1_core.3} parent=1 // pred_check
      _
    $region27: #{_lstm1_core.3} parent=1 // pred_check_branch
      %272 = sbr.rel (0) target = $region29
    $region28: #{_lstm1_core.3} parent=1 // pred_region
      %273 = dma.done [#allocation3], 256
    $region29: #{_lstm1_core.3} parent=1 // pred_fallthru
      _
    %274 = vsyncpa [#allocation3], 1

// kernel: _lstm1_core.2
$region0: #{_lstm1_core.2}
  #allocation0 [shape = 'u32[]', space=smem, size = 0x4, offset = 0x4, fixed_abs, tag = 'smem constant byte address 0x4 - core index']
  #allocation1 [shape = 'u32[144,128]{1,0:T(1,128)}', space=vmem, size = 0x12000, scoped, tag = 'internal scratch']
  #allocation2 [shape = 'f32[8,2,512]{2,1,0:T(2,128)}', space=vmem, size = 0x8000, scoped, tag = 'scratch operand']
  #allocation3 [shape = 'f32[8,2,512]{2,1,0:T(2,128)}', space=vmem, size = 0x8000, scoped, tag = 'scratch operand']
  #allocation4 [shape = 'f32[2,128]{1,0:T(2,128)}', space=vmem, size = 0x400, scoped, tag = 'scratch operand']
  #allocation5 [shape = 'f32[2,128]{1,0:T(2,128)}', space=vmem, size = 0x400, scoped, tag = 'scratch operand']
  #allocation6 [shape = 'f32[2,128]{1,0:T(2,128)}', space=vmem, size = 0x400, scoped, tag = 'scratch operand']
  #allocation7 [shape = 'f32[2,128]{1,0:T(2,128)}', space=vmem, size = 0x400, scoped, tag = 'scratch operand']
  %s0 = inlined_call_operand.vmem [shape: s32[2,1], index: 0, kind: input, shape index: {}]
  %s1 = inlined_call_operand.vmem [shape: bf16[16,32], index: 1, kind: input, shape index: {}, may-alias: {1,2}]
  %s2 = inlined_call_operand.vmem [shape: bf16[16,32], index: 2, kind: input, shape index: {}, may-alias: {1,2}]
  %s3 = inlined_call_operand.vmem [shape: bf16[2,32,512], index: 3, kind: input, shape index: {}]
  %s4 = inlined_call_operand.hbm [shape: bf16[2,128,512], index: 4, kind: input, shape index: {}]
  %s5 = inlined_call_operand.vmem [shape: f32[2,1,512], index: 5, kind: input, shape index: {}]
  %s6 = inlined_call_operand.vmem [shape: bf16[8,2,128], index: 6, kind: output, shape index: {0}]
  %s7 = inlined_call_operand.vmem [shape: bf16[8,2,128], index: 7, kind: output, shape index: {1}]
  %8 = xla_tuple %s6, %s7
  %s9 = sld [smem:[#allocation0]]
  $region50: #{_lstm1_core.2} parent=0
    _
  %s11 = ssub.s32 1, %s9
  %s12 = scalar_select 0, %s11, %s9
  $region1: #{_lstm1_core.2} parent=0
    #allocation8 [shape = 'u8[262144]{0}', space=vmem, size = 0x40000, scoped, tag = 'input window, operand 4, single buffered']
    #allocation9 [shape = 's32[1]{0}', space=sflag, size = 0x4, scoped, tag = 'scoped memory for _lstm1_core.2']
    %13 = vsyncpa [#allocation9], 0
    // Predicated region
    $region2: #{_lstm1_core.2} parent=1 // pred_check
      _
    $region3: #{_lstm1_core.2} parent=1 // pred_check_branch
      %15 = sbr.rel (0) target = $region5
    $region4: #{_lstm1_core.2} parent=1 // pred_region
      _
    $region5: #{_lstm1_core.2} parent=1 // pred_fallthru
      _
    // Predicated region
    $region6: #{_lstm1_core.2} parent=1 // pred_check
      _
    $region7: #{_lstm1_core.2} parent=1 // pred_check_branch
      %17 = sbr.rel (0) target = $region9
    $region8: #{_lstm1_core.2} parent=1 // pred_region
      _
    $region9: #{_lstm1_core.2} parent=1 // pred_fallthru
      _
    // Predicated region
    $region10: #{_lstm1_core.2} parent=1 // pred_check
      _
    $region11: #{_lstm1_core.2} parent=1 // pred_check_branch
      %19 = sbr.rel (0) target = $region13
    $region12: #{_lstm1_core.2} parent=1 // pred_region
      %s20 = ssub.s32 0, 0
      %s21 = smul.u32 2, %s20
      %p22 = scmp.lt.s32.totalorder %s21, 1
      %s23 = scalar_select %p22, %s21, 1
      %s24 = smul.addr %s23, 4
      %s25 = scalar_lea.vmem %s2, %s24
      %s26 = ssub.s32 0, 0
      %s27 = smul.u32 2, %s26
    $region13: #{_lstm1_core.2} parent=1 // pred_fallthru
      _
    // Predicated region
    $region14: #{_lstm1_core.2} parent=1 // pred_check
      _
    $region15: #{_lstm1_core.2} parent=1 // pred_check_branch
      %29 = sbr.rel (0) target = $region17
    $region16: #{_lstm1_core.2} parent=1 // pred_region
      _
    $region17: #{_lstm1_core.2} parent=1 // pred_fallthru
      _
    // Predicated region
    $region18: #{_lstm1_core.2} parent=1 // pred_check
      _
    $region19: #{_lstm1_core.2} parent=1 // pred_check_branch
      %31 = sbr.rel (0) target = $region21
    $region20: #{_lstm1_core.2} parent=1 // pred_region
      %s33 = ssub.s32 8192, 8192
      %34 = vsyncadd [#allocation9], %s33
      %s35 = sshll.u32 [#allocation8], 4
      %s36 = int_to_ptr.vmem [resolvable:$true] %s35
      %41 = dma.hbm_to_vmem [thread:$0]  %s4, 8192, %s36, [#allocation9], 256, 256, 16
    $region21: #{_lstm1_core.2} parent=1 // pred_fallthru
      _
    // Predicated region
    $region22: #{_lstm1_core.2} parent=1 // pred_check
      _
    $region23: #{_lstm1_core.2} parent=1 // pred_check_branch
      %43 = sbr.rel (0) target = $region25
    $region24: #{_lstm1_core.2} parent=1 // pred_region
      _
    $region25: #{_lstm1_core.2} parent=1 // pred_fallthru
      _
    // Predicated region
    $region26: #{_lstm1_core.2} parent=1 // pred_check
      _
    $region27: #{_lstm1_core.2} parent=1 // pred_check_branch
      %45 = sbr.rel (0) target = $region29
    $region28: #{_lstm1_core.2} parent=1 // pred_region
      %46 = dma.done [#allocation9], 8192
    $region29: #{_lstm1_core.2} parent=1 // pred_fallthru
      _
    %s47 = ssub.s32 0, 0
    %s48 = smul.u32 2, %s47
    %p49 = scmp.lt.s32.totalorder %s48, 1
    %s50 = scalar_select %p49, %s48, 1
    %s51 = smul.addr %s50, 4
    %s52 = scalar_lea.vmem %s2, %s51
    %s53 = ssub.s32 0, 0
    %s54 = smul.u32 8, %s53
    %p55 = scmp.lt.s32.totalorder %s54, 7
    %s56 = scalar_select %p55, %s54, 7
    %s57 = scalar_lea.vmem %s7, %s56
    %s58 = ssub.s32 0, 0
    %s59 = smul.u32 2, %s58
    %p60 = scmp.lt.s32.totalorder %s59, 1
    %s61 = scalar_select %p60, %s59, 1
    %s62 = smul.addr %s61, 4
    %s63 = scalar_lea.vmem %s2, %s62
    %s64 = ssub.s32 0, 0
    %s65 = smul.u32 2, %s64
    %s66 = ssub.s32 0, 0
    %s67 = smul.u32 8, %s66
    %p68 = scmp.lt.s32.totalorder %s67, 7
    %s69 = scalar_select %p68, %s67, 7
    %s70 = scalar_lea.vmem %s7, %s69
    %s71 = ssub.s32 0, 0
    %s72 = smul.u32 8, %s71
    %p74 = scmp.eq.s32.totalorder 0, 0
    // Predicated region
    $region30: #{_lstm1_core.2} parent=1 // pred_check
      %p75 = pneg %p74
    $region31: #{_lstm1_core.2} parent=1 // pred_check_branch
      %77 = sbr.rel (%p75) target = $region33
    $region32: #{_lstm1_core.2} parent=1 // pred_region
      %78 = vst [vmem:[#allocation4] sm:$0x3] 0.0
      %79 = vst [vmem:[#allocation5] sm:$0x3] 0.0
      %80 = vst [vmem:[#allocation6] sm:$0x3] 0.0
      %81 = vst [vmem:[#allocation7] sm:$0x3] 0.0
    $region33: #{_lstm1_core.2} parent=1 // pred_fallthru
      _
    %v82 = vld [vmem:[%s1] sm:$0xf]
    %v83 = vld [vmem:[%s1 + $0x4] sm:$0xf]
    %v84 = vld [vmem:[%s3] sm:$0xff]
    %v85 = vld [vmem:[%s3 + $0x8] sm:$0xff]
    %v86 = vld [vmem:[%s3 + $0x10] sm:$0xff]
    %v87 = vld [vmem:[%s3 + $0x18] sm:$0xff]
    %v88 = vld [vmem:[%s3 + $0x20] sm:$0xff]
    %v89 = vld [vmem:[%s3 + $0x28] sm:$0xff]
    %v90 = vld [vmem:[%s3 + $0x30] sm:$0xff]
    %v91 = vld [vmem:[%s3 + $0x38] sm:$0xff]
    %v92 = vld [vmem:[%s5] sm:$0xf]
    %v94 = vlaneseq
    %v95 = vshrl.u32 %v94, 7
    %v96 = vsub.s32 0, %v95
    %v97 = vrot.slane %v92, %v96
    %v98 = vlaneseq
    %v99 = vshrl.u32 %v98, 7
    %v100 = vsub.s32 1, %v99
    %v101 = vrot.slane %v92, %v100
    %v102 = vlaneseq
    %v103 = vshrl.u32 %v102, 7
    %v104 = vsub.s32 2, %v103
    %v105 = vrot.slane %v92, %v104
    %v106 = vlaneseq
    %v107 = vshrl.u32 %v106, 7
    %v108 = vsub.s32 3, %v107
    %v109 = vrot.slane %v92, %v108
    %v116 = vunpack.c.l.b16 %v82
    %v117 = vunpack.c.l.b16 %v83
    %v118 = vpack.c.b16 %v117, %v116
    %v127 = vunpack.c.l.b16 %v84
    %v128 = vunpack.c.h.b16 %v84
    %v129 = vunpack.c.l.b16 %v85
    %v130 = vunpack.c.h.b16 %v85
    %v131 = vunpack.c.l.b16 %v86
    %v132 = vunpack.c.h.b16 %v86
    %v133 = vunpack.c.l.b16 %v87
    %v134 = vunpack.c.h.b16 %v87
    %v135 = vunpack.c.l.b16 %v88
    %v136 = vunpack.c.h.b16 %v88
    %v137 = vunpack.c.l.b16 %v89
    %v138 = vunpack.c.h.b16 %v89
    %v139 = vunpack.c.l.b16 %v90
    %v140 = vunpack.c.h.b16 %v90
    %v141 = vunpack.c.l.b16 %v91
    %v142 = vunpack.c.h.b16 %v91
    %v143 = vpack.c.b16 %v131, %v127
    %v144 = vpack.c.b16 %v132, %v128
    %v145 = vpack.c.b16 %v133, %v129
    %v146 = vpack.c.b16 %v134, %v130
    %v147 = vpack.c.b16 %v139, %v135
    %v148 = vpack.c.b16 %v140, %v136
    %v149 = vpack.c.b16 %v141, %v137
    %v150 = vpack.c.b16 %v142, %v138
    %vm159 = vcmask 261120
    %v161 = vsel %vm159, %v118, 0
    %163 = vmatprep.subr.bf16.mxu0 %v144
    %164 = vmatpush1.bf16.msra.mxu0 %v143
    %165 = vmatprep.subr.bf16.mxu0 %v148
    %166 = vmatpush1.bf16.msra.mxu0 %v147
    %167 = vmatprep.subr.bf16.mxu0 0
    %168 = vmatpush1.bf16.msra.mxu0 0
    %169 = vmatprep.subr.bf16.mxu0 0
    %170 = vmatpush1.bf16.msra.mxu0 0
    %171 = vmatprep.subr.bf16.mxu0 0
    %172 = vmatpush1.bf16.msra.mxu0 0
    %173 = vmatprep.subr.bf16.mxu0 0
    %174 = vmatpush1.bf16.msra.mxu0 0
    %175 = vmatprep.subr.bf16.mxu0 0
    %176 = vmatpush1.bf16.msra.mxu0 0
    %177 = vmatprep.subr.bf16.mxu0 0
    %178 = vmatpush1.bf16.msra.mxu0 0
    %179 = vmatprep.subr.bf16.mxu0 0
    %180 = vmatpush1.bf16.msra.mxu0 0
    %181 = vmatprep.subr.bf16.mxu0 0
    %182 = vmatpush1.bf16.msra.mxu0 0
    %183 = vmatprep.subr.bf16.mxu0 0
    %184 = vmatpush1.bf16.msra.mxu0 0
    %185 = vmatprep.subr.bf16.mxu0 0
    %186 = vmatpush1.bf16.msra.mxu0 0
    %187 = vmatprep.subr.bf16.mxu0 0
    %188 = vmatpush1.bf16.msra.mxu0 0
    %189 = vmatprep.subr.bf16.mxu0 0
    %190 = vmatpush1.bf16.msra.mxu0 0
    %191 = vmatprep.subr.bf16.mxu0 0
    %192 = vmatpush1.bf16.msra.mxu0 0
    %193 = vmatprep.subr.bf16.mxu0 0
    %194 = vmatpush1.bf16.msra.mxu0 0
    %195 = vmatprep.mubr.bf16.mxu0 0
    %196 = vmatmul.mubr.bf16.gmra.mrb[0].mxu0 %v161
    %v197 = vpop.f32.mrb[0].mxu0
    %v198 = vadd.f32 %v97, %v197
    %v199 = vpop.f32.mrb[0].mxu0
    %v200 = vadd.f32 %v101, %v199
    %v201 = vpop.f32.mrb[0].mxu0
    %v202 = vadd.f32 %v97, %v201
    %v203 = vpop.f32.mrb[0].mxu0
    %v204 = vadd.f32 %v101, %v203
    %205 = vdwg.mxu0
    %206 = vmatprep.subr.bf16.mxu0 %v146
    %207 = vmatpush1.bf16.msra.mxu0 %v145
    %208 = vmatprep.subr.bf16.mxu0 %v150
    %209 = vmatpush1.bf16.msra.mxu0 %v149
    %210 = vmatprep.subr.bf16.mxu0 0
    %211 = vmatpush1.bf16.msra.mxu0 0
    %212 = vmatprep.subr.bf16.mxu0 0
    %213 = vmatpush1.bf16.msra.mxu0 0
    %214 = vmatprep.subr.bf16.mxu0 0
    %215 = vmatpush1.bf16.msra.mxu0 0
    %216 = vmatprep.subr.bf16.mxu0 0
    %217 = vmatpush1.bf16.msra.mxu0 0
    %218 = vmatprep.subr.bf16.mxu0 0
    %219 = vmatpush1.bf16.msra.mxu0 0
    %220 = vmatprep.subr.bf16.mxu0 0
    %221 = vmatpush1.bf16.msra.mxu0 0
    %222 = vmatprep.subr.bf16.mxu0 0
    %223 = vmatpush1.bf16.msra.mxu0 0
    %224 = vmatprep.subr.bf16.mxu0 0
    %225 = vmatpush1.bf16.msra.mxu0 0
    %226 = vmatprep.subr.bf16.mxu0 0
    %227 = vmatpush1.bf16.msra.mxu0 0
    %228 = vmatprep.subr.bf16.mxu0 0
    %229 = vmatpush1.bf16.msra.mxu0 0
    %230 = vmatprep.subr.bf16.mxu0 0
    %231 = vmatpush1.bf16.msra.mxu0 0
    %232 = vmatprep.subr.bf16.mxu0 0
    %233 = vmatpush1.bf16.msra.mxu0 0
    %234 = vmatprep.subr.bf16.mxu0 0
    %235 = vmatpush1.bf16.msra.mxu0 0
    %236 = vmatprep.subr.bf16.mxu0 0
    %237 = vmatpush1.bf16.msra.mxu0 0
    %238 = vmatprep.mubr.bf16.mxu0 0
    %239 = vmatmul.mubr.bf16.gmra.mrb[0].mxu0 %v161
    %v240 = vpop.f32.mrb[0].mxu0
    %v241 = vadd.f32 %v105, %v240
    %v242 = vpop.f32.mrb[0].mxu0
    %v243 = vadd.f32 %v109, %v242
    %v244 = vpop.f32.mrb[0].mxu0
    %v245 = vadd.f32 %v105, %v244
    %v246 = vpop.f32.mrb[0].mxu0
    %v247 = vadd.f32 %v109, %v246
    %248 = vdwg.mxu0
    %v249 = vld [vmem:[%s63] sm:$0xf]
    %v250 = vld [vmem:[%s63 + $0x4] sm:$0xf]
    %s251 = scalar_lea.vmem %s3, 64
    %v252 = vld [vmem:[%s251] sm:$0xff]
    %v253 = vld [vmem:[%s251 + $0x8] sm:$0xff]
    %v254 = vld [vmem:[%s251 + $0x10] sm:$0xff]
    %v255 = vld [vmem:[%s251 + $0x18] sm:$0xff]
    %v256 = vld [vmem:[%s251 + $0x20] sm:$0xff]
    %v257 = vld [vmem:[%s251 + $0x28] sm:$0xff]
    %v258 = vld [vmem:[%s251 + $0x30] sm:$0xff]
    %v259 = vld [vmem:[%s251 + $0x38] sm:$0xff]
    %s260 = scalar_lea.vmem %s5, 4
    %v261 = vld [vmem:[%s260] sm:$0xf]
    %v263 = vlaneseq
    %v264 = vshrl.u32 %v263, 7
    %v265 = vsub.s32 0, %v264
    %v266 = vrot.slane %v261, %v265
    %v267 = vlaneseq
    %v268 = vshrl.u32 %v267, 7
    %v269 = vsub.s32 1, %v268
    %v270 = vrot.slane %v261, %v269
    %v271 = vlaneseq
    %v272 = vshrl.u32 %v271, 7
    %v273 = vsub.s32 2, %v272
    %v274 = vrot.slane %v261, %v273
    %v275 = vlaneseq
    %v276 = vshrl.u32 %v275, 7
    %v277 = vsub.s32 3, %v276
    %v278 = vrot.slane %v261, %v277
    %v285 = vunpack.c.l.b16 %v249
    %v286 = vunpack.c.l.b16 %v250
    %v287 = vpack.c.b16 %v286, %v285
    %v296 = vunpack.c.l.b16 %v252
    %v297 = vunpack.c.h.b16 %v252
    %v298 = vunpack.c.l.b16 %v253
    %v299 = vunpack.c.h.b16 %v253
    %v300 = vunpack.c.l.b16 %v254
    %v301 = vunpack.c.h.b16 %v254
    %v302 = vunpack.c.l.b16 %v255
    %v303 = vunpack.c.h.b16 %v255
    %v304 = vunpack.c.l.b16 %v256
    %v305 = vunpack.c.h.b16 %v256
    %v306 = vunpack.c.l.b16 %v257
    %v307 = vunpack.c.h.b16 %v257
    %v308 = vunpack.c.l.b16 %v258
    %v309 = vunpack.c.h.b16 %v258
    %v310 = vunpack.c.l.b16 %v259
    %v311 = vunpack.c.h.b16 %v259
    %v312 = vpack.c.b16 %v300, %v296
    %v313 = vpack.c.b16 %v301, %v297
    %v314 = vpack.c.b16 %v302, %v298
    %v315 = vpack.c.b16 %v303, %v299
    %v316 = vpack.c.b16 %v308, %v304
    %v317 = vpack.c.b16 %v309, %v305
    %v318 = vpack.c.b16 %v310, %v306
    %v319 = vpack.c.b16 %v311, %v307
    %v329 = vsel %vm159, %v287, 0
    %331 = vmatprep.subr.bf16.mxu0 %v313
    %332 = vmatpush1.bf16.msra.mxu0 %v312
    %333 = vmatprep.subr.bf16.mxu0 %v317
    %334 = vmatpush1.bf16.msra.mxu0 %v316
    %335 = vmatprep.subr.bf16.mxu0 0
    %336 = vmatpush1.bf16.msra.mxu0 0
    %337 = vmatprep.subr.bf16.mxu0 0
    %338 = vmatpush1.bf16.msra.mxu0 0
    %339 = vmatprep.subr.bf16.mxu0 0
    %340 = vmatpush1.bf16.msra.mxu0 0
    %341 = vmatprep.subr.bf16.mxu0 0
    %342 = vmatpush1.bf16.msra.mxu0 0
    %343 = vmatprep.subr.bf16.mxu0 0
    %344 = vmatpush1.bf16.msra.mxu0 0
    %345 = vmatprep.subr.bf16.mxu0 0
    %346 = vmatpush1.bf16.msra.mxu0 0
    %347 = vmatprep.subr.bf16.mxu0 0
    %348 = vmatpush1.bf16.msra.mxu0 0
    %349 = vmatprep.subr.bf16.mxu0 0
    %350 = vmatpush1.bf16.msra.mxu0 0
    %351 = vmatprep.subr.bf16.mxu0 0
    %352 = vmatpush1.bf16.msra.mxu0 0
    %353 = vmatprep.subr.bf16.mxu0 0
    %354 = vmatpush1.bf16.msra.mxu0 0
    %355 = vmatprep.subr.bf16.mxu0 0
    %356 = vmatpush1.bf16.msra.mxu0 0
    %357 = vmatprep.subr.bf16.mxu0 0
    %358 = vmatpush1.bf16.msra.mxu0 0
    %359 = vmatprep.subr.bf16.mxu0 0
    %360 = vmatpush1.bf16.msra.mxu0 0
    %361 = vmatprep.subr.bf16.mxu0 0
    %362 = vmatpush1.bf16.msra.mxu0 0
    %363 = vmatprep.mubr.bf16.mxu0 0
    %364 = vmatmul.mubr.bf16.gmra.mrb[0].mxu0 %v329
    %v365 = vpop.f32.mrb[0].mxu0
    %v366 = vadd.f32 %v266, %v365
    %v367 = vpop.f32.mrb[0].mxu0
    %v368 = vadd.f32 %v270, %v367
    %v369 = vpop.f32.mrb[0].mxu0
    %v370 = vadd.f32 %v266, %v369
    %v371 = vpop.f32.mrb[0].mxu0
    %v372 = vadd.f32 %v270, %v371
    %373 = vdwg.mxu0
    %374 = vmatprep.subr.bf16.mxu0 %v315
    %375 = vmatpush1.bf16.msra.mxu0 %v314
    %376 = vmatprep.subr.bf16.mxu0 %v319
    %377 = vmatpush1.bf16.msra.mxu0 %v318
    %378 = vmatprep.subr.bf16.mxu0 0
    %379 = vmatpush1.bf16.msra.mxu0 0
    %380 = vmatprep.subr.bf16.mxu0 0
    %381 = vmatpush1.bf16.msra.mxu0 0
    %382 = vmatprep.subr.bf16.mxu0 0
    %383 = vmatpush1.bf16.msra.mxu0 0
    %384 = vmatprep.subr.bf16.mxu0 0
    %385 = vmatpush1.bf16.msra.mxu0 0
    %386 = vmatprep.subr.bf16.mxu0 0
    %387 = vmatpush1.bf16.msra.mxu0 0
    %388 = vmatprep.subr.bf16.mxu0 0
    %389 = vmatpush1.bf16.msra.mxu0 0
    %390 = vmatprep.subr.bf16.mxu0 0
    %391 = vmatpush1.bf16.msra.mxu0 0
    %392 = vmatprep.subr.bf16.mxu0 0
    %393 = vmatpush1.bf16.msra.mxu0 0
    %394 = vmatprep.subr.bf16.mxu0 0
    %395 = vmatpush1.bf16.msra.mxu0 0
    %396 = vmatprep.subr.bf16.mxu0 0
    %397 = vmatpush1.bf16.msra.mxu0 0
    %398 = vmatprep.subr.bf16.mxu0 0
    %399 = vmatpush1.bf16.msra.mxu0 0
    %400 = vmatprep.subr.bf16.mxu0 0
    %401 = vmatpush1.bf16.msra.mxu0 0
    %402 = vmatprep.subr.bf16.mxu0 0
    %403 = vmatpush1.bf16.msra.mxu0 0
    %404 = vmatprep.subr.bf16.mxu0 0
    %405 = vmatpush1.bf16.msra.mxu0 0
    %406 = vmatprep.mubr.bf16.mxu0 0
    %407 = vmatmul.mubr.bf16.gmra.mrb[0].mxu0 %v329
    %v408 = vpop.f32.mrb[0].mxu0
    %v409 = vadd.f32 %v274, %v408
    %v410 = vpop.f32.mrb[0].mxu0
    %v411 = vadd.f32 %v278, %v410
    %v412 = vpop.f32.mrb[0].mxu0
    %v413 = vadd.f32 %v274, %v412
    %v414 = vpop.f32.mrb[0].mxu0
    %v415 = vadd.f32 %v278, %v414
    %416 = vdwg.mxu0
    %v421 = vcombine.low %v198, %v200
    %v422 = vcombine.low %v241, %v243
    %v424 = vunpack.c.l.s4 1983009808
    %v425 = vunpack.c.0.s8 %v424
    %v426 = vlaneseq
    %v427 = vshrl.u32 %v426, 7
    %v428 = vsub.s32 %v425, %v427
    %v429 = vrot.slane %v421, %v428
    %v431 = vunpack.c.l.s4 1983009808
    %v432 = vunpack.c.0.s8 %v431
    %v433 = vlaneseq
    %v434 = vshrl.u32 %v433, 7
    %v435 = vsub.s32 %v432, %v434
    %v436 = vrot.slane %v422, %v435
    %v437 = vcombine.low %v429, %v436
    %439 = vst [vmem:[#allocation2] sm:$0xff] %v437
    %v444 = vcombine.low %v366, %v368
    %v445 = vcombine.low %v409, %v411
    %v447 = vunpack.c.l.s4 1983009808
    %v448 = vunpack.c.0.s8 %v447
    %v449 = vlaneseq
    %v450 = vshrl.u32 %v449, 7
    %v451 = vsub.s32 %v448, %v450
    %v452 = vrot.slane %v444, %v451
    %v454 = vunpack.c.l.s4 1983009808
    %v455 = vunpack.c.0.s8 %v454
    %v456 = vlaneseq
    %v457 = vshrl.u32 %v456, 7
    %v458 = vsub.s32 %v455, %v457
    %v459 = vrot.slane %v445, %v458
    %v460 = vcombine.low %v452, %v459
    %462 = vst [vmem:[#allocation3] sm:$0xff] %v460
    %v463 = vcombine.high %v429, %v436
    %s465 = scalar_lea.vmem [#allocation2], 8
    %466 = vst [vmem:[%s465] sm:$0xff] %v463
    %v467 = vcombine.high %v452, %v459
    %s469 = scalar_lea.vmem [#allocation3], 8
    %470 = vst [vmem:[%s469] sm:$0xff] %v467
    %v471 = vcombine.high %v198, %v200
    %v472 = vcombine.high %v241, %v243
    %v474 = vunpack.c.l.s4 1983009808
    %v475 = vunpack.c.0.s8 %v474
    %v476 = vlaneseq
    %v477 = vshrl.u32 %v476, 7
    %v478 = vsub.s32 %v475, %v477
    %v479 = vrot.slane %v471, %v478
    %v481 = vunpack.c.l.s4 1983009808
    %v482 = vunpack.c.0.s8 %v481
    %v483 = vlaneseq
    %v484 = vshrl.u32 %v483, 7
    %v485 = vsub.s32 %v482, %v484
    %v486 = vrot.slane %v472, %v485
    %v487 = vcombine.low %v479, %v486
    %s489 = scalar_lea.vmem [#allocation2], 16
    %490 = vst [vmem:[%s489] sm:$0xff] %v487
    %v491 = vcombine.high %v366, %v368
    %v492 = vcombine.high %v409, %v411
    %v494 = vunpack.c.l.s4 1983009808
    %v495 = vunpack.c.0.s8 %v494
    %v496 = vlaneseq
    %v497 = vshrl.u32 %v496, 7
    %v498 = vsub.s32 %v495, %v497
    %v499 = vrot.slane %v491, %v498
    %v501 = vunpack.c.l.s4 1983009808
    %v502 = vunpack.c.0.s8 %v501
    %v503 = vlaneseq
    %v504 = vshrl.u32 %v503, 7
    %v505 = vsub.s32 %v502, %v504
    %v506 = vrot.slane %v492, %v505
    %v507 = vcombine.low %v499, %v506
    %s509 = scalar_lea.vmem [#allocation3], 16
    %510 = vst [vmem:[%s509] sm:$0xff] %v507
    %v511 = vcombine.high %v479, %v486
    %s513 = scalar_lea.vmem [#allocation2], 24
    %514 = vst [vmem:[%s513] sm:$0xff] %v511
    %v515 = vcombine.high %v499, %v506
    %s517 = scalar_lea.vmem [#allocation3], 24
    %518 = vst [vmem:[%s517] sm:$0xff] %v515
    %v523 = vcombine.low %v202, %v204
    %v524 = vcombine.low %v245, %v247
    %v526 = vunpack.c.l.s4 1983009808
    %v527 = vunpack.c.0.s8 %v526
    %v528 = vlaneseq
    %v529 = vshrl.u32 %v528, 7
    %v530 = vsub.s32 %v527, %v529
    %v531 = vrot.slane %v523, %v530
    %v533 = vunpack.c.l.s4 1983009808
    %v534 = vunpack.c.0.s8 %v533
    %v535 = vlaneseq
    %v536 = vshrl.u32 %v535, 7
    %v537 = vsub.s32 %v534, %v536
    %v538 = vrot.slane %v524, %v537
    %v539 = vcombine.low %v531, %v538
    %s541 = scalar_lea.vmem [#allocation2], 32
    %542 = vst [vmem:[%s541] sm:$0xff] %v539
    %v547 = vcombine.low %v370, %v372
    %v548 = vcombine.low %v413, %v415
    %v550 = vunpack.c.l.s4 1983009808
    %v551 = vunpack.c.0.s8 %v550
    %v552 = vlaneseq
    %v553 = vshrl.u32 %v552, 7
    %v554 = vsub.s32 %v551, %v553
    %v555 = vrot.slane %v547, %v554
    %v557 = vunpack.c.l.s4 1983009808
    %v558 = vunpack.c.0.s8 %v557
    %v559 = vlaneseq
    %v560 = vshrl.u32 %v559, 7
    %v561 = vsub.s32 %v558, %v560
    %v562 = vrot.slane %v548, %v561
    %v563 = vcombine.low %v555, %v562
    %s565 = scalar_lea.vmem [#allocation3], 32
    %566 = vst [vmem:[%s565] sm:$0xff] %v563
    %v567 = vcombine.high %v531, %v538
    %s569 = scalar_lea.vmem [#allocation2], 40
    %570 = vst [vmem:[%s569] sm:$0xff] %v567
    %v571 = vcombine.high %v555, %v562
    %s573 = scalar_lea.vmem [#allocation3], 40
    %574 = vst [vmem:[%s573] sm:$0xff] %v571
    %v575 = vcombine.high %v202, %v204
    %v576 = vcombine.high %v245, %v247
    %v578 = vunpack.c.l.s4 1983009808
    %v579 = vunpack.c.0.s8 %v578
    %v580 = vlaneseq
    %v581 = vshrl.u32 %v580, 7
    %v582 = vsub.s32 %v579, %v581
    %v583 = vrot.slane %v575, %v582
    %v585 = vunpack.c.l.s4 1983009808
    %v586 = vunpack.c.0.s8 %v585
    %v587 = vlaneseq
    %v588 = vshrl.u32 %v587, 7
    %v589 = vsub.s32 %v586, %v588
    %v590 = vrot.slane %v576, %v589
    %v591 = vcombine.low %v583, %v590
    %s593 = scalar_lea.vmem [#allocation2], 48
    %594 = vst [vmem:[%s593] sm:$0xff] %v591
    %v595 = vcombine.high %v370, %v372
    %v596 = vcombine.high %v413, %v415
    %v598 = vunpack.c.l.s4 1983009808
    %v599 = vunpack.c.0.s8 %v598
    %v600 = vlaneseq
    %v601 = vshrl.u32 %v600, 7
    %v602 = vsub.s32 %v599, %v601
    %v603 = vrot.slane %v595, %v602
    %v605 = vunpack.c.l.s4 1983009808
    %v606 = vunpack.c.0.s8 %v605
    %v607 = vlaneseq
    %v608 = vshrl.u32 %v607, 7
    %v609 = vsub.s32 %v606, %v608
    %v610 = vrot.slane %v596, %v609
    %v611 = vcombine.low %v603, %v610
    %s613 = scalar_lea.vmem [#allocation3], 48
    %614 = vst [vmem:[%s613] sm:$0xff] %v611
    %v615 = vcombine.high %v583, %v590
    %s617 = scalar_lea.vmem [#allocation2], 56
    %618 = vst [vmem:[%s617] sm:$0xff] %v615
    %v619 = vcombine.high %v603, %v610
    %s621 = scalar_lea.vmem [#allocation3], 56
    %622 = vst [vmem:[%s621] sm:$0xff] %v619
    %v623 = vld [vmem:[%s0] sm:$0x3]
    %s624 = smul.u32 0, 8
    %s625 = ssub.s32 0, 0
    %s626 = smul.u32 %s625, 8
    %v627 = vld [vmem:[#allocation4] sm:$0x3]
    %v628 = vld [vmem:[#allocation5] sm:$0x3]
    %v629 = vld [vmem:[#allocation6] sm:$0x3]
    %v630 = vld [vmem:[#allocation7] sm:$0x3]
    %v631 = vld [vmem:[#allocation2] sm:$0xff]
    %v632 = vpack.c.bf16 %v627, %v627
    %v633 = vld [vmem:[#allocation8] sm:$0xff]
    %v634 = vld [vmem:[#allocation8 + $0x8] sm:$0xff]
    %v635 = vld [vmem:[#allocation8 + $0x10] sm:$0xff]
    %v636 = vld [vmem:[#allocation8 + $0x18] sm:$0xff]
    %v637 = vld [vmem:[#allocation8 + $0x20] sm:$0xff]
    %v638 = vld [vmem:[#allocation8 + $0x28] sm:$0xff]
    %v639 = vld [vmem:[#allocation8 + $0x30] sm:$0xff]
    %v640 = vld [vmem:[#allocation8 + $0x38] sm:$0xff]
    %v641 = vld [vmem:[#allocation8 + $0x40] sm:$0xff]
    %v642 = vld [vmem:[#allocation8 + $0x48] sm:$0xff]
    %v643 = vld [vmem:[#allocation8 + $0x50] sm:$0xff]
    %v644 = vld [vmem:[#allocation8 + $0x58] sm:$0xff]
    %v645 = vld [vmem:[#allocation8 + $0x60] sm:$0xff]
    %v646 = vld [vmem:[#allocation8 + $0x68] sm:$0xff]
    %v647 = vld [vmem:[#allocation8 + $0x70] sm:$0xff]
    %v648 = vld [vmem:[#allocation8 + $0x78] sm:$0xff]
    %v649 = vld [vmem:[#allocation8 + $0x80] sm:$0xff]
    %v650 = vld [vmem:[#allocation8 + $0x88] sm:$0xff]
    %v651 = vld [vmem:[#allocation8 + $0x90] sm:$0xff]
    %v652 = vld [vmem:[#allocation8 + $0x98] sm:$0xff]
    %v653 = vld [vmem:[#allocation8 + $0xa0] sm:$0xff]
    %v654 = vld [vmem:[#allocation8 + $0xa8] sm:$0xff]
    %v655 = vld [vmem:[#allocation8 + $0xb0] sm:$0xff]
    %v656 = vld [vmem:[#allocation8 + $0xb8] sm:$0xff]
    %v657 = vld [vmem:[#allocation8 + $0xc0] sm:$0xff]
    %v658 = vld [vmem:[#allocation8 + $0xc8] sm:$0xff]
    %v659 = vld [vmem:[#allocation8 + $0xd0] sm:$0xff]
    %v660 = vld [vmem:[#allocation8 + $0xd8] sm:$0xff]
    %v661 = vld [vmem:[#allocation8 + $0xe0] sm:$0xff]
    %v662 = vld [vmem:[#allocation8 + $0xe8] sm:$0xff]
    %v663 = vld [vmem:[#allocation8 + $0xf0] sm:$0xff]
    %v664 = vld [vmem:[#allocation8 + $0xf8] sm:$0xff]
    %v697 = vunpack.c.l.b16 %v633
    %v698 = vunpack.c.h.b16 %v633
    %v699 = vunpack.c.l.b16 %v634
    %v700 = vunpack.c.h.b16 %v634
    %v701 = vunpack.c.l.b16 %v635
    %v702 = vunpack.c.h.b16 %v635
    %v703 = vunpack.c.l.b16 %v636
    %v704 = vunpack.c.h.b16 %v636
    %v705 = vunpack.c.l.b16 %v637
    %v706 = vunpack.c.h.b16 %v637
    %v707 = vunpack.c.l.b16 %v638
    %v708 = vunpack.c.h.b16 %v638
    %v709 = vunpack.c.l.b16 %v639
    %v710 = vunpack.c.h.b16 %v639
    %v711 = vunpack.c.l.b16 %v640
    %v712 = vunpack.c.h.b16 %v640
    %v713 = vunpack.c.l.b16 %v641
    %v714 = vunpack.c.h.b16 %v641
    %v715 = vunpack.c.l.b16 %v642
    %v716 = vunpack.c.h.b16 %v642
    %v717 = vunpack.c.l.b16 %v643
    %v718 = vunpack.c.h.b16 %v643
    %v719 = vunpack.c.l.b16 %v644
    %v720 = vunpack.c.h.b16 %v644
    %v721 = vunpack.c.l.b16 %v645
    %v722 = vunpack.c.h.b16 %v645
    %v723 = vunpack.c.l.b16 %v646
    %v724 = vunpack.c.h.b16 %v646
    %v725 = vunpack.c.l.b16 %v647
    %v726 = vunpack.c.h.b16 %v647
    %v727 = vunpack.c.l.b16 %v648
    %v728 = vunpack.c.h.b16 %v648
    %v729 = vunpack.c.l.b16 %v649
    %v730 = vunpack.c.h.b16 %v649
    %v731 = vunpack.c.l.b16 %v650
    %v732 = vunpack.c.h.b16 %v650
    %v733 = vunpack.c.l.b16 %v651
    %v734 = vunpack.c.h.b16 %v651
    %v735 = vunpack.c.l.b16 %v652
    %v736 = vunpack.c.h.b16 %v652
    %v737 = vunpack.c.l.b16 %v653
    %v738 = vunpack.c.h.b16 %v653
    %v739 = vunpack.c.l.b16 %v654
    %v740 = vunpack.c.h.b16 %v654
    %v741 = vunpack.c.l.b16 %v655
    %v742 = vunpack.c.h.b16 %v655
    %v743 = vunpack.c.l.b16 %v656
    %v744 = vunpack.c.h.b16 %v656
    %v745 = vunpack.c.l.b16 %v657
    %v746 = vunpack.c.h.b16 %v657
    %v747 = vunpack.c.l.b16 %v658
    %v748 = vunpack.c.h.b16 %v658
    %v749 = vunpack.c.l.b16 %v659
    %v750 = vunpack.c.h.b16 %v659
    %v751 = vunpack.c.l.b16 %v660
    %v752 = vunpack.c.h.b16 %v660
    %v753 = vunpack.c.l.b16 %v661
    %v754 = vunpack.c.h.b16 %v661
    %v755 = vunpack.c.l.b16 %v662
    %v756 = vunpack.c.h.b16 %v662
    %v757 = vunpack.c.l.b16 %v663
    %v758 = vunpack.c.h.b16 %v663
    %v759 = vunpack.c.l.b16 %v664
    %v760 = vunpack.c.h.b16 %v664
    %v761 = vpack.c.b16 %v701, %v697
    %v762 = vpack.c.b16 %v702, %v698
    %v763 = vpack.c.b16 %v703, %v699
    %v764 = vpack.c.b16 %v704, %v700
    %v765 = vpack.c.b16 %v709, %v705
    %v766 = vpack.c.b16 %v710, %v706
    %v767 = vpack.c.b16 %v711, %v707
    %v768 = vpack.c.b16 %v712, %v708
    %v769 = vpack.c.b16 %v717, %v713
    %v770 = vpack.c.b16 %v718, %v714
    %v771 = vpack.c.b16 %v719, %v715
    %v772 = vpack.c.b16 %v720, %v716
    %v773 = vpack.c.b16 %v725, %v721
    %v774 = vpack.c.b16 %v726, %v722
    %v775 = vpack.c.b16 %v727, %v723
    %v776 = vpack.c.b16 %v728, %v724
    %v777 = vpack.c.b16 %v733, %v729
    %v778 = vpack.c.b16 %v734, %v730
    %v779 = vpack.c.b16 %v735, %v731
    %v780 = vpack.c.b16 %v736, %v732
    %v781 = vpack.c.b16 %v741, %v737
    %v782 = vpack.c.b16 %v742, %v738
    %v783 = vpack.c.b16 %v743, %v739
    %v784 = vpack.c.b16 %v744, %v740
    %v785 = vpack.c.b16 %v749, %v745
    %v786 = vpack.c.b16 %v750, %v746
    %v787 = vpack.c.b16 %v751, %v747
    %v788 = vpack.c.b16 %v752, %v748
    %v789 = vpack.c.b16 %v757, %v753
    %v790 = vpack.c.b16 %v758, %v754
    %v791 = vpack.c.b16 %v759, %v755
    %v792 = vpack.c.b16 %v760, %v756
    %825 = vmatprep.subr.bf16.mxu0 %v762
    %826 = vmatpush1.bf16.msra.mxu0 %v761
    %827 = vmatprep.subr.bf16.mxu0 %v766
    %828 = vmatpush1.bf16.msra.mxu0 %v765
    %829 = vmatprep.subr.bf16.mxu0 %v770
    %830 = vmatpush1.bf16.msra.mxu0 %v769
    %831 = vmatprep.subr.bf16.mxu0 %v774
    %832 = vmatpush1.bf16.msra.mxu0 %v773
    %833 = vmatprep.subr.bf16.mxu0 %v778
    %834 = vmatpush1.bf16.msra.mxu0 %v777
    %835 = vmatprep.subr.bf16.mxu0 %v782
    %836 = vmatpush1.bf16.msra.mxu0 %v781
    %837 = vmatprep.subr.bf16.mxu0 %v786
    %838 = vmatpush1.bf16.msra.mxu0 %v785
    %839 = vmatprep.subr.bf16.mxu0 %v790
    %840 = vmatpush1.bf16.msra.mxu0 %v789
    %841 = vmatprep.subr.bf16.mxu0 0
    %842 = vmatpush1.bf16.msra.mxu0 0
    %843 = vmatprep.subr.bf16.mxu0 0
    %844 = vmatpush1.bf16.msra.mxu0 0
    %845 = vmatprep.subr.bf16.mxu0 0
    %846 = vmatpush1.bf16.msra.mxu0 0
    %847 = vmatprep.subr.bf16.mxu0 0
    %848 = vmatpush1.bf16.msra.mxu0 0
    %849 = vmatprep.subr.bf16.mxu0 0
    %850 = vmatpush1.bf16.msra.mxu0 0
    %851 = vmatprep.subr.bf16.mxu0 0
    %852 = vmatpush1.bf16.msra.mxu0 0
    %853 = vmatprep.subr.bf16.mxu0 0
    %854 = vmatpush1.bf16.msra.mxu0 0
    %855 = vmatprep.subr.bf16.mxu0 0
    %856 = vmatpush1.bf16.msra.mxu0 0
    %857 = vmatprep.mubr.bf16.mxu0 0
    %858 = vmatmul.mubr.bf16.gmra.mrb[0].mxu0 %v632
    %v859 = vpop.f32.mrb[0].mxu0
    %v860 = vadd.f32 0.0, %v859
    %v861 = vpop.f32.mrb[0].mxu0
    %v862 = vadd.f32 0.0, %v861
    %v863 = vpop.f32.mrb[0].mxu0
    %v864 = vpop.f32.mrb[0].mxu0
    %865 = vdwg.mxu0
    %866 = vmatprep.subr.bf16.mxu0 %v764
    %867 = vmatpush1.bf16.msra.mxu0 %v763
    %868 = vmatprep.subr.bf16.mxu0 %v768
    %869 = vmatpush1.bf16.msra.mxu0 %v767
    %870 = vmatprep.subr.bf16.mxu0 %v772
    %871 = vmatpush1.bf16.msra.mxu0 %v771
    %872 = vmatprep.subr.bf16.mxu0 %v776
    %873 = vmatpush1.bf16.msra.mxu0 %v775
    %874 = vmatprep.subr.bf16.mxu0 %v780
    %875 = vmatpush1.bf16.msra.mxu0 %v779
    %876 = vmatprep.subr.bf16.mxu0 %v784
    %877 = vmatpush1.bf16.msra.mxu0 %v783
    %878 = vmatprep.subr.bf16.mxu0 %v788
    %879 = vmatpush1.bf16.msra.mxu0 %v787
    %880 = vmatprep.subr.bf16.mxu0 %v792
    %881 = vmatpush1.bf16.msra.mxu0 %v791
    %882 = vmatprep.subr.bf16.mxu0 0
    %883 = vmatpush1.bf16.msra.mxu0 0
    %884 = vmatprep.subr.bf16.mxu0 0
    %885 = vmatpush1.bf16.msra.mxu0 0
    %886 = vmatprep.subr.bf16.mxu0 0
    %887 = vmatpush1.bf16.msra.mxu0 0
    %888 = vmatprep.subr.bf16.mxu0 0
    %889 = vmatpush1.bf16.msra.mxu0 0
    %890 = vmatprep.subr.bf16.mxu0 0
    %891 = vmatpush1.bf16.msra.mxu0 0
    %892 = vmatprep.subr.bf16.mxu0 0
    %893 = vmatpush1.bf16.msra.mxu0 0
    %894 = vmatprep.subr.bf16.mxu0 0
    %895 = vmatpush1.bf16.msra.mxu0 0
    %896 = vmatprep.subr.bf16.mxu0 0
    %897 = vmatpush1.bf16.msra.mxu0 0
    %898 = vmatprep.mubr.bf16.mxu0 0
    %899 = vmatmul.mubr.bf16.gmra.mrb[0].mxu0 %v632
    %v900 = vpop.f32.mrb[0].mxu0
    %v901 = vadd.f32 0.0, %v900
    %v902 = vpop.f32.mrb[0].mxu0
    %v903 = vadd.f32 0.0, %v902
    %v904 = vpop.f32.mrb[0].mxu0
    %v905 = vpop.f32.mrb[0].mxu0
    %906 = vdwg.mxu0
    %v911 = vcombine.low %v860, %v862
    %v912 = vcombine.low %v901, %v903
    %v914 = vunpack.c.l.s4 1983009808
    %v915 = vunpack.c.0.s8 %v914
    %v916 = vlaneseq
    %v917 = vshrl.u32 %v916, 7
    %v918 = vsub.s32 %v915, %v917
    %v919 = vrot.slane %v911, %v918
    %v921 = vunpack.c.l.s4 1983009808
    %v922 = vunpack.c.0.s8 %v921
    %v923 = vlaneseq
    %v924 = vshrl.u32 %v923, 7
    %v925 = vsub.s32 %v922, %v924
    %v926 = vrot.slane %v912, %v925
    %v927 = vcombine.low %v919, %v926
    %v929 = vadd.f32 %v631, %v927
    %v930 = vld [vmem:[%s621] sm:$0xff]
    %v931 = vpack.c.bf16 %v629, %v629
    %s932 = scalar_lea.vmem [#allocation8], 256
    %v933 = vld [vmem:[%s932] sm:$0xff]
    %v934 = vld [vmem:[%s932 + $0x8] sm:$0xff]
    %v935 = vld [vmem:[%s932 + $0x10] sm:$0xff]
    %v936 = vld [vmem:[%s932 + $0x18] sm:$0xff]
    %v937 = vld [vmem:[%s932 + $0x20] sm:$0xff]
    %v938 = vld [vmem:[%s932 + $0x28] sm:$0xff]
    %v939 = vld [vmem:[%s932 + $0x30] sm:$0xff]
    %v940 = vld [vmem:[%s932 + $0x38] sm:$0xff]
    %v941 = vld [vmem:[%s932 + $0x40] sm:$0xff]
    %v942 = vld [vmem:[%s932 + $0x48] sm:$0xff]
    %v943 = vld [vmem:[%s932 + $0x50] sm:$0xff]
    %v944 = vld [vmem:[%s932 + $0x58] sm:$0xff]
    %v945 = vld [vmem:[%s932 + $0x60] sm:$0xff]
    %v946 = vld [vmem:[%s932 + $0x68] sm:$0xff]
    %v947 = vld [vmem:[%s932 + $0x70] sm:$0xff]
    %v948 = vld [vmem:[%s932 + $0x78] sm:$0xff]
    %v949 = vld [vmem:[%s932 + $0x80] sm:$0xff]
    %v950 = vld [vmem:[%s932 + $0x88] sm:$0xff]
    %v951 = vld [vmem:[%s932 + $0x90] sm:$0xff]
    %v952 = vld [vmem:[%s932 + $0x98] sm:$0xff]
    %v953 = vld [vmem:[%s932 + $0xa0] sm:$0xff]
    %v954 = vld [vmem:[%s932 + $0xa8] sm:$0xff]
    %v955 = vld [vmem:[%s932 + $0xb0] sm:$0xff]
    %v956 = vld [vmem:[%s932 + $0xb8] sm:$0xff]
    %v957 = vld [vmem:[%s932 + $0xc0] sm:$0xff]
    %v958 = vld [vmem:[%s932 + $0xc8] sm:$0xff]
    %v959 = vld [vmem:[%s932 + $0xd0] sm:$0xff]
    %v960 = vld [vmem:[%s932 + $0xd8] sm:$0xff]
    %v961 = vld [vmem:[%s932 + $0xe0] sm:$0xff]
    %v962 = vld [vmem:[%s932 + $0xe8] sm:$0xff]
    %v963 = vld [vmem:[%s932 + $0xf0] sm:$0xff]
    %v964 = vld [vmem:[%s932 + $0xf8] sm:$0xff]
    %v997 = vunpack.c.l.b16 %v933
    %v998 = vunpack.c.h.b16 %v933
    %v999 = vunpack.c.l.b16 %v934
    %v1000 = vunpack.c.h.b16 %v934
    %v1001 = vunpack.c.l.b16 %v935
    %v1002 = vunpack.c.h.b16 %v935
    %v1003 = vunpack.c.l.b16 %v936
    %v1004 = vunpack.c.h.b16 %v936
    %v1005 = vunpack.c.l.b16 %v937
    %v1006 = vunpack.c.h.b16 %v937
    %v1007 = vunpack.c.l.b16 %v938
    %v1008 = vunpack.c.h.b16 %v938
    %v1009 = vunpack.c.l.b16 %v939
    %v1010 = vunpack.c.h.b16 %v939
    %v1011 = vunpack.c.l.b16 %v940
    %v1012 = vunpack.c.h.b16 %v940
    %v1013 = vunpack.c.l.b16 %v941
    %v1014 = vunpack.c.h.b16 %v941
    %v1015 = vunpack.c.l.b16 %v942
    %v1016 = vunpack.c.h.b16 %v942
    %v1017 = vunpack.c.l.b16 %v943
    %v1018 = vunpack.c.h.b16 %v943
    %v1019 = vunpack.c.l.b16 %v944
    %v1020 = vunpack.c.h.b16 %v944
    %v1021 = vunpack.c.l.b16 %v945
    %v1022 = vunpack.c.h.b16 %v945
    %v1023 = vunpack.c.l.b16 %v946
    %v1024 = vunpack.c.h.b16 %v946
    %v1025 = vunpack.c.l.b16 %v947
    %v1026 = vunpack.c.h.b16 %v947
    %v1027 = vunpack.c.l.b16 %v948
    %v1028 = vunpack.c.h.b16 %v948
    %v1029 = vunpack.c.l.b16 %v949
    %v1030 = vunpack.c.h.b16 %v949
    %v1031 = vunpack.c.l.b16 %v950
    %v1032 = vunpack.c.h.b16 %v950
    %v1033 = vunpack.c.l.b16 %v951
    %v1034 = vunpack.c.h.b16 %v951
    %v1035 = vunpack.c.l.b16 %v952
    %v1036 = vunpack.c.h.b16 %v952
    %v1037 = vunpack.c.l.b16 %v953
    %v1038 = vunpack.c.h.b16 %v953
    %v1039 = vunpack.c.l.b16 %v954
    %v1040 = vunpack.c.h.b16 %v954
    %v1041 = vunpack.c.l.b16 %v955
    %v1042 = vunpack.c.h.b16 %v955
    %v1043 = vunpack.c.l.b16 %v956
    %v1044 = vunpack.c.h.b16 %v956
    %v1045 = vunpack.c.l.b16 %v957
    %v1046 = vunpack.c.h.b16 %v957
    %v1047 = vunpack.c.l.b16 %v958
    %v1048 = vunpack.c.h.b16 %v958
    %v1049 = vunpack.c.l.b16 %v959
    %v1050 = vunpack.c.h.b16 %v959
    %v1051 = vunpack.c.l.b16 %v960
    %v1052 = vunpack.c.h.b16 %v960
    %v1053 = vunpack.c.l.b16 %v961
    %v1054 = vunpack.c.h.b16 %v961
    %v1055 = vunpack.c.l.b16 %v962
    %v1056 = vunpack.c.h.b16 %v962
    %v1057 = vunpack.c.l.b16 %v963
    %v1058 = vunpack.c.h.b16 %v963
    %v1059 = vunpack.c.l.b16 %v964
    %v1060 = vunpack.c.h.b16 %v964
    %v1061 = vpack.c.b16 %v1001, %v997
    %v1062 = vpack.c.b16 %v1002, %v998
    %v1063 = vpack.c.b16 %v1003, %v999
    %v1064 = vpack.c.b16 %v1004, %v1000
    %v1065 = vpack.c.b16 %v1009, %v1005
    %v1066 = vpack.c.b16 %v1010, %v1006
    %v1067 = vpack.c.b16 %v1011, %v1007
    %v1068 = vpack.c.b16 %v1012, %v1008
    %v1069 = vpack.c.b16 %v1017, %v1013
    %v1070 = vpack.c.b16 %v1018, %v1014
    %v1071 = vpack.c.b16 %v1019, %v1015
    %v1072 = vpack.c.b16 %v1020, %v1016
    %v1073 = vpack.c.b16 %v1025, %v1021
    %v1074 = vpack.c.b16 %v1026, %v1022
    %v1075 = vpack.c.b16 %v1027, %v1023
    %v1076 = vpack.c.b16 %v1028, %v1024
    %v1077 = vpack.c.b16 %v1033, %v1029
    %v1078 = vpack.c.b16 %v1034, %v1030
    %v1079 = vpack.c.b16 %v1035, %v1031
    %v1080 = vpack.c.b16 %v1036, %v1032
    %v1081 = vpack.c.b16 %v1041, %v1037
    %v1082 = vpack.c.b16 %v1042, %v1038
    %v1083 = vpack.c.b16 %v1043, %v1039
    %v1084 = vpack.c.b16 %v1044, %v1040
    %v1085 = vpack.c.b16 %v1049, %v1045
    %v1086 = vpack.c.b16 %v1050, %v1046
    %v1087 = vpack.c.b16 %v1051, %v1047
    %v1088 = vpack.c.b16 %v1052, %v1048
    %v1089 = vpack.c.b16 %v1057, %v1053
    %v1090 = vpack.c.b16 %v1058, %v1054
    %v1091 = vpack.c.b16 %v1059, %v1055
    %v1092 = vpack.c.b16 %v1060, %v1056
    %1125 = vmatprep.subr.bf16.mxu0 %v1062
    %1126 = vmatpush1.bf16.msra.mxu0 %v1061
    %1127 = vmatprep.subr.bf16.mxu0 %v1066
    %1128 = vmatpush1.bf16.msra.mxu0 %v1065
    %1129 = vmatprep.subr.bf16.mxu0 %v1070
    %1130 = vmatpush1.bf16.msra.mxu0 %v1069
    %1131 = vmatprep.subr.bf16.mxu0 %v1074
    %1132 = vmatpush1.bf16.msra.mxu0 %v1073
    %1133 = vmatprep.subr.bf16.mxu0 %v1078
    %1134 = vmatpush1.bf16.msra.mxu0 %v1077
    %1135 = vmatprep.subr.bf16.mxu0 %v1082
    %1136 = vmatpush1.bf16.msra.mxu0 %v1081
    %1137 = vmatprep.subr.bf16.mxu0 %v1086
    %1138 = vmatpush1.bf16.msra.mxu0 %v1085
    %1139 = vmatprep.subr.bf16.mxu0 %v1090
    %1140 = vmatpush1.bf16.msra.mxu0 %v1089
    %1141 = vmatprep.subr.bf16.mxu0 0
    %1142 = vmatpush1.bf16.msra.mxu0 0
    %1143 = vmatprep.subr.bf16.mxu0 0
    %1144 = vmatpush1.bf16.msra.mxu0 0
    %1145 = vmatprep.subr.bf16.mxu0 0
    %1146 = vmatpush1.bf16.msra.mxu0 0
    %1147 = vmatprep.subr.bf16.mxu0 0
    %1148 = vmatpush1.bf16.msra.mxu0 0
    %1149 = vmatprep.subr.bf16.mxu0 0
    %1150 = vmatpush1.bf16.msra.mxu0 0
    %1151 = vmatprep.subr.bf16.mxu0 0
    %1152 = vmatpush1.bf16.msra.mxu0 0
    %1153 = vmatprep.subr.bf16.mxu0 0
    %1154 = vmatpush1.bf16.msra.mxu0 0
    %1155 = vmatprep.subr.bf16.mxu0 0
    %1156 = vmatpush1.bf16.msra.mxu0 0
    %1157 = vmatprep.mubr.bf16.mxu0 0
    %1158 = vmatmul.mubr.bf16.gmra.mrb[0].mxu0 %v931
    %v1159 = vpop.f32.mrb[0].mxu0
    %v1160 = vadd.f32 0.0, %v1159
    %v1161 = vpop.f32.mrb[0].mxu0
    %v1162 = vadd.f32 0.0, %v1161
    %v1163 = vpop.f32.mrb[0].mxu0
    %v1164 = vpop.f32.mrb[0].mxu0
    %1165 = vdwg.mxu0
    %1166 = vmatprep.subr.bf16.mxu0 %v1064
    %1167 = vmatpush1.bf16.msra.mxu0 %v1063
    %1168 = vmatprep.subr.bf16.mxu0 %v1068
    %1169 = vmatpush1.bf16.msra.mxu0 %v1067
    %1170 = vmatprep.subr.bf16.mxu0 %v1072
    %1171 = vmatpush1.bf16.msra.mxu0 %v1071
    %1172 = vmatprep.subr.bf16.mxu0 %v1076
    %1173 = vmatpush1.bf16.msra.mxu0 %v1075
    %1174 = vmatprep.subr.bf16.mxu0 %v1080
    %1175 = vmatpush1.bf16.msra.mxu0 %v1079
    %1176 = vmatprep.subr.bf16.mxu0 %v1084
    %1177 = vmatpush1.bf16.msra.mxu0 %v1083
    %1178 = vmatprep.subr.bf16.mxu0 %v1088
    %1179 = vmatpush1.bf16.msra.mxu0 %v1087
    %1180 = vmatprep.subr.bf16.mxu0 %v1092
    %1181 = vmatpush1.bf16.msra.mxu0 %v1091
    %1182 = vmatprep.subr.bf16.mxu0 0
    %1183 = vmatpush1.bf16.msra.mxu0 0
    %1184 = vmatprep.subr.bf16.mxu0 0
    %1185 = vmatpush1.bf16.msra.mxu0 0
    %1186 = vmatprep.subr.bf16.mxu0 0
    %1187 = vmatpush1.bf16.msra.mxu0 0
    %1188 = vmatprep.subr.bf16.mxu0 0
    %1189 = vmatpush1.bf16.msra.mxu0 0
    %1190 = vmatprep.subr.bf16.mxu0 0
    %1191 = vmatpush1.bf16.msra.mxu0 0
    %1192 = vmatprep.subr.bf16.mxu0 0
    %1193 = vmatpush1.bf16.msra.mxu0 0
    %1194 = vmatprep.subr.bf16.mxu0 0
    %1195 = vmatpush1.bf16.msra.mxu0 0
    %1196 = vmatprep.subr.bf16.mxu0 0
    %1197 = vmatpush1.bf16.msra.mxu0 0
    %1198 = vmatprep.mubr.bf16.mxu0 0
    %1199 = vmatmul.mubr.bf16.gmra.mrb[0].mxu0 %v931
    %v1200 = vpop.f32.mrb[0].mxu0
    %v1201 = vadd.f32 0.0, %v1200
    %v1202 = vpop.f32.mrb[0].mxu0
    %v1203 = vadd.f32 0.0, %v1202
    %v1204 = vpop.f32.mrb[0].mxu0
    %v1205 = vpop.f32.mrb[0].mxu0
    %1206 = vdwg.mxu0
    %v1211 = vcombine.low %v1160, %v1162
    %v1212 = vcombine.low %v1201, %v1203
    %v1214 = vunpack.c.l.s4 1983009808
    %v1215 = vunpack.c.0.s8 %v1214
    %v1216 = vlaneseq
    %v1217 = vshrl.u32 %v1216, 7
    %v1218 = vsub.s32 %v1215, %v1217
    %v1219 = vrot.slane %v1211, %v1218
    %v1221 = vunpack.c.l.s4 1983009808
    %v1222 = vunpack.c.0.s8 %v1221
    %v1223 = vlaneseq
    %v1224 = vshrl.u32 %v1223, 7
    %v1225 = vsub.s32 %v1222, %v1224
    %v1226 = vrot.slane %v1212, %v1225
    %v1227 = vcombine.low %v1219, %v1226
    %v1229 = vadd.f32 %v930, %v1227
    %v1230 = vxor.u32 %v929, 2147483648
    %v1231 = vmul.f32 %v1230, 1.442695
    %v1232 = vpow.pop %v1231
    %v1233 = vadd.f32 %v1232, 1.0
    %v1234 = vrcp.pop %v1233
    %v1235 = vmul.f32 1.0, %v1234
    %v1237 = vrot.slane %v929, 2
    %v1239 = vxor.u32 %v1237, 2147483648
    %v1240 = vmul.f32 %v1239, 1.442695
    %v1241 = vpow.pop %v1240
    %v1242 = vadd.f32 %v1241, 1.0
    %v1243 = vrcp.pop %v1242
    %v1244 = vmul.f32 1.0, %v1243
    %v1245 = vrot.slane %v929, 4
    %v1247 = vtanh.pop %v1245
    %v1248 = vrot.slane %v929, 6
    %v1250 = vxor.u32 %v1248, 2147483648
    %v1251 = vmul.f32 %v1250, 1.442695
    %v1252 = vpow.pop %v1251
    %v1253 = vadd.f32 %v1252, 1.0
    %v1254 = vrcp.pop %v1253
    %v1255 = vmul.f32 1.0, %v1254
    %v1256 = vxor.u32 %v1229, 2147483648
    %v1257 = vmul.f32 %v1256, 1.442695
    %v1258 = vpow.pop %v1257
    %v1259 = vadd.f32 %v1258, 1.0
    %v1260 = vrcp.pop %v1259
    %v1261 = vmul.f32 1.0, %v1260
    %v1263 = vrot.slane %v1229, 2
    %v1265 = vxor.u32 %v1263, 2147483648
    %v1266 = vmul.f32 %v1265, 1.442695
    %v1267 = vpow.pop %v1266
    %v1268 = vadd.f32 %v1267, 1.0
    %v1269 = vrcp.pop %v1268
    %v1270 = vmul.f32 1.0, %v1269
    %v1271 = vrot.slane %v1229, 4
    %v1273 = vtanh.pop %v1271
    %v1274 = vrot.slane %v1229, 6
    %v1276 = vxor.u32 %v1274, 2147483648
    %v1277 = vmul.f32 %v1276, 1.442695
    %v1278 = vpow.pop %v1277
    %v1279 = vadd.f32 %v1278, 1.0
    %v1280 = vrcp.pop %v1279
    %v1281 = vmul.f32 1.0, %v1280
    %v1282 = vmul.f32 %v1244, %v628
    %v1283 = vmul.f32 %v1235, %v1247
    %v1284 = vadd.f32 %v1282, %v1283
    %v1285 = vmul.f32 %v1270, %v630
    %v1286 = vmul.f32 %v1261, %v1273
    %v1287 = vadd.f32 %v1285, %v1286
    %v1288 = vtanh.pop %v1284
    %v1289 = vmul.f32 %v1255, %v1288
    %v1290 = vtanh.pop %v1287
    %v1291 = vmul.f32 %v1281, %v1290
    %v1292 = vstv %s624
    %vm1293 = vcmp.lt.s32.totalorder %v1292, %v623
    %s1294 = sadd.s32 %s626, 7
    %v1295 = vstv %s1294
    %vm1296 = vcmp.lt.s32.totalorder %v1295, %v623
    %v1297 = vsel %vm1293, 1, 0
    %1298 = vset.pattern.permute.xlu0 0
    %1299 = vperm.xlu0 %1298, %v1297
    %v1300 = vpop.permute.xlu0 %1299
    %vm1301 = vcmp.eq.s32.totalorder %v1300, 1
    %v1302 = vsel %vm1301, %v1284, %v628
    %1303 = vst [vmem:[#allocation5] sm:$0x3] %v1302
    %v1304 = vsel %vm1301, %v1289, %v627
    %1305 = vst [vmem:[#allocation4] sm:$0x3] %v1304
    %v1306 = vsel %vm1296, 1, 0
    %1307 = vset.pattern.permute.xlu0 0
    %1308 = vperm.xlu0 %1307, %v1306
    %v1309 = vpop.permute.xlu0 %1308
    %vm1310 = vcmp.eq.s32.totalorder %v1309, 1
    %v1311 = vsel %vm1310, %v1287, %v630
    %1312 = vst [vmem:[#allocation7] sm:$0x3] %v1311
    %v1313 = vsel %vm1310, %v1291, %v629
    %1314 = vst [vmem:[#allocation6] sm:$0x3] %v1313
    %v1315 = vsel %vm1301, %v1289, 0.0
    %v1316 = vpack.c.bf16 %v1315, %v1315
    %1317 = vst [vmem:[%s6] sm:$0x1] %v1316
    %v1318 = vsel %vm1310, %v1291, 0.0
    %v1319 = vpack.c.bf16 %v1318, %v1318
    %s1320 = scalar_lea.vmem %s70, 7
    %1321 = vst [vmem:[%s1320] sm:$0x1] %v1319
    %v1322 = vld [vmem:[#allocation4] sm:$0x3]
    %v1323 = vld [vmem:[#allocation5] sm:$0x3]
    %v1324 = vld [vmem:[#allocation6] sm:$0x3]
    %v1325 = vld [vmem:[#allocation7] sm:$0x3]
    %v1326 = vld [vmem:[%s465] sm:$0xff]
    %v1327 = vpack.c.bf16 %v1322, %v1322
    %v1328 = vld [vmem:[#allocation8] sm:$0xff]
    %v1329 = vld [vmem:[#allocation8 + $0x8] sm:$0xff]
    %v1330 = vld [vmem:[#allocation8 + $0x10] sm:$0xff]
    %v1331 = vld [vmem:[#allocation8 + $0x18] sm:$0xff]
    %v1332 = vld [vmem:[#allocation8 + $0x20] sm:$0xff]
    %v1333 = vld [vmem:[#allocation8 + $0x28] sm:$0xff]
    %v1334 = vld [vmem:[#allocation8 + $0x30] sm:$0xff]
    %v1335 = vld [vmem:[#allocation8 + $0x38] sm:$0xff]
    %v1336 = vld [vmem:[#allocation8 + $0x40] sm:$0xff]
    %v1337 = vld [vmem:[#allocation8 + $0x48] sm:$0xff]
    %v1338 = vld [vmem:[#allocation8 + $0x50] sm:$0xff]
    %v1339 = vld [vmem:[#allocation8 + $0x58] sm:$0xff]
    %v1340 = vld [vmem:[#allocation8 + $0x60] sm:$0xff]
    %v1341 = vld [vmem:[#allocation8 + $0x68] sm:$0xff]
    %v1342 = vld [vmem:[#allocation8 + $0x70] sm:$0xff]
    %v1343 = vld [vmem:[#allocation8 + $0x78] sm:$0xff]
    %v1344 = vld [vmem:[#allocation8 + $0x80] sm:$0xff]
    %v1345 = vld [vmem:[#allocation8 + $0x88] sm:$0xff]
    %v1346 = vld [vmem:[#allocation8 + $0x90] sm:$0xff]
    %v1347 = vld [vmem:[#allocation8 + $0x98] sm:$0xff]
    %v1348 = vld [vmem:[#allocation8 + $0xa0] sm:$0xff]
    %v1349 = vld [vmem:[#allocation8 + $0xa8] sm:$0xff]
    %v1350 = vld [vmem:[#allocation8 + $0xb0] sm:$0xff]
    %v1351 = vld [vmem:[#allocation8 + $0xb8] sm:$0xff]
    %v1352 = vld [vmem:[#allocation8 + $0xc0] sm:$0xff]
    %v1353 = vld [vmem:[#allocation8 + $0xc8] sm:$0xff]
    %v1354 = vld [vmem:[#allocation8 + $0xd0] sm:$0xff]
    %v1355 = vld [vmem:[#allocation8 + $0xd8] sm:$0xff]
    %v1356 = vld [vmem:[#allocation8 + $0xe0] sm:$0xff]
    %v1357 = vld [vmem:[#allocation8 + $0xe8] sm:$0xff]
    %v1358 = vld [vmem:[#allocation8 + $0xf0] sm:$0xff]
    %v1359 = vld [vmem:[#allocation8 + $0xf8] sm:$0xff]
    %v1392 = vunpack.c.l.b16 %v1328
    %v1393 = vunpack.c.h.b16 %v1328
    %v1394 = vunpack.c.l.b16 %v1329
    %v1395 = vunpack.c.h.b16 %v1329
    %v1396 = vunpack.c.l.b16 %v1330
    %v1397 = vunpack.c.h.b16 %v1330
    %v1398 = vunpack.c.l.b16 %v1331
    %v1399 = vunpack.c.h.b16 %v1331
    %v1400 = vunpack.c.l.b16 %v1332
    %v1401 = vunpack.c.h.b16 %v1332
    %v1402 = vunpack.c.l.b16 %v1333
    %v1403 = vunpack.c.h.b16 %v1333
    %v1404 = vunpack.c.l.b16 %v1334
    %v1405 = vunpack.c.h.b16 %v1334
    %v1406 = vunpack.c.l.b16 %v1335
    %v1407 = vunpack.c.h.b16 %v1335
    %v1408 = vunpack.c.l.b16 %v1336
    %v1409 = vunpack.c.h.b16 %v1336
    %v1410 = vunpack.c.l.b16 %v1337
    %v1411 = vunpack.c.h.b16 %v1337
    %v1412 = vunpack.c.l.b16 %v1338
    %v1413 = vunpack.c.h.b16 %v1338
    %v1414 = vunpack.c.l.b16 %v1339
    %v1415 = vunpack.c.h.b16 %v1339
    %v1416 = vunpack.c.l.b16 %v1340
    %v1417 = vunpack.c.h.b16 %v1340
    %v1418 = vunpack.c.l.b16 %v1341
    %v1419 = vunpack.c.h.b16 %v1341
    %v1420 = vunpack.c.l.b16 %v1342
    %v1421 = vunpack.c.h.b16 %v1342
    %v1422 = vunpack.c.l.b16 %v1343
    %v1423 = vunpack.c.h.b16 %v1343
    %v1424 = vunpack.c.l.b16 %v1344
    %v1425 = vunpack.c.h.b16 %v1344
    %v1426 = vunpack.c.l.b16 %v1345
    %v1427 = vunpack.c.h.b16 %v1345
    %v1428 = vunpack.c.l.b16 %v1346
    %v1429 = vunpack.c.h.b16 %v1346
    %v1430 = vunpack.c.l.b16 %v1347
    %v1431 = vunpack.c.h.b16 %v1347
    %v1432 = vunpack.c.l.b16 %v1348
    %v1433 = vunpack.c.h.b16 %v1348
    %v1434 = vunpack.c.l.b16 %v1349
    %v1435 = vunpack.c.h.b16 %v1349
    %v1436 = vunpack.c.l.b16 %v1350
    %v1437 = vunpack.c.h.b16 %v1350
    %v1438 = vunpack.c.l.b16 %v1351
    %v1439 = vunpack.c.h.b16 %v1351
    %v1440 = vunpack.c.l.b16 %v1352
    %v1441 = vunpack.c.h.b16 %v1352
    %v1442 = vunpack.c.l.b16 %v1353
    %v1443 = vunpack.c.h.b16 %v1353
    %v1444 = vunpack.c.l.b16 %v1354
    %v1445 = vunpack.c.h.b16 %v1354
    %v1446 = vunpack.c.l.b16 %v1355
    %v1447 = vunpack.c.h.b16 %v1355
    %v1448 = vunpack.c.l.b16 %v1356
    %v1449 = vunpack.c.h.b16 %v1356
    %v1450 = vunpack.c.l.b16 %v1357
    %v1451 = vunpack.c.h.b16 %v1357
    %v1452 = vunpack.c.l.b16 %v1358
    %v1453 = vunpack.c.h.b16 %v1358
    %v1454 = vunpack.c.l.b16 %v1359
    %v1455 = vunpack.c.h.b16 %v1359
    %v1456 = vpack.c.b16 %v1396, %v1392
    %v1457 = vpack.c.b16 %v1397, %v1393
    %v1458 = vpack.c.b16 %v1398, %v1394
    %v1459 = vpack.c.b16 %v1399, %v1395
    %v1460 = vpack.c.b16 %v1404, %v1400
    %v1461 = vpack.c.b16 %v1405, %v1401
    %v1462 = vpack.c.b16 %v1406, %v1402
    %v1463 = vpack.c.b16 %v1407, %v1403
    %v1464 = vpack.c.b16 %v1412, %v1408
    %v1465 = vpack.c.b16 %v1413, %v1409
    %v1466 = vpack.c.b16 %v1414, %v1410
    %v1467 = vpack.c.b16 %v1415, %v1411
    %v1468 = vpack.c.b16 %v1420, %v1416
    %v1469 = vpack.c.b16 %v1421, %v1417
    %v1470 = vpack.c.b16 %v1422, %v1418
    %v1471 = vpack.c.b16 %v1423, %v1419
    %v1472 = vpack.c.b16 %v1428, %v1424
    %v1473 = vpack.c.b16 %v1429, %v1425
    %v1474 = vpack.c.b16 %v1430, %v1426
    %v1475 = vpack.c.b16 %v1431, %v1427
    %v1476 = vpack.c.b16 %v1436, %v1432
    %v1477 = vpack.c.b16 %v1437, %v1433
    %v1478 = vpack.c.b16 %v1438, %v1434
    %v1479 = vpack.c.b16 %v1439, %v1435
    %v1480 = vpack.c.b16 %v1444, %v1440
    %v1481 = vpack.c.b16 %v1445, %v1441
    %v1482 = vpack.c.b16 %v1446, %v1442
    %v1483 = vpack.c.b16 %v1447, %v1443
    %v1484 = vpack.c.b16 %v1452, %v1448
    %v1485 = vpack.c.b16 %v1453, %v1449
    %v1486 = vpack.c.b16 %v1454, %v1450
    %v1487 = vpack.c.b16 %v1455, %v1451
    %1520 = vmatprep.subr.bf16.mxu0 %v1457
    %1521 = vmatpush1.bf16.msra.mxu0 %v1456
    %1522 = vmatprep.subr.bf16.mxu0 %v1461
    %1523 = vmatpush1.bf16.msra.mxu0 %v1460
    %1524 = vmatprep.subr.bf16.mxu0 %v1465
    %1525 = vmatpush1.bf16.msra.mxu0 %v1464
    %1526 = vmatprep.subr.bf16.mxu0 %v1469
    %1527 = vmatpush1.bf16.msra.mxu0 %v1468
    %1528 = vmatprep.subr.bf16.mxu0 %v1473
    %1529 = vmatpush1.bf16.msra.mxu0 %v1472
    %1530 = vmatprep.subr.bf16.mxu0 %v1477
    %1531 = vmatpush1.bf16.msra.mxu0 %v1476
    %1532 = vmatprep.subr.bf16.mxu0 %v1481
    %1533 = vmatpush1.bf16.msra.mxu0 %v1480
    %1534 = vmatprep.subr.bf16.mxu0 %v1485
    %1535 = vmatpush1.bf16.msra.mxu0 %v1484
    %1536 = vmatprep.subr.bf16.mxu0 0
    %1537 = vmatpush1.bf16.msra.mxu0 0
    %1538 = vmatprep.subr.bf16.mxu0 0
    %1539 = vmatpush1.bf16.msra.mxu0 0
    %1540 = vmatprep.subr.bf16.mxu0 0
    %1541 = vmatpush1.bf16.msra.mxu0 0
    %1542 = vmatprep.subr.bf16.mxu0 0
    %1543 = vmatpush1.bf16.msra.mxu0 0
    %1544 = vmatprep.subr.bf16.mxu0 0
    %1545 = vmatpush1.bf16.msra.mxu0 0
    %1546 = vmatprep.subr.bf16.mxu0 0
    %1547 = vmatpush1.bf16.msra.mxu0 0
    %1548 = vmatprep.subr.bf16.mxu0 0
    %1549 = vmatpush1.bf16.msra.mxu0 0
    %1550 = vmatprep.subr.bf16.mxu0 0
    %1551 = vmatpush1.bf16.msra.mxu0 0
    %1552 = vmatprep.mubr.bf16.mxu0 0
    %1553 = vmatmul.mubr.bf16.gmra.mrb[0].mxu0 %v1327
    %v1554 = vpop.f32.mrb[0].mxu0
    %v1555 = vadd.f32 0.0, %v1554
    %v1556 = vpop.f32.mrb[0].mxu0
    %v1557 = vadd.f32 0.0, %v1556
    %v1558 = vpop.f32.mrb[0].mxu0
    %v1559 = vpop.f32.mrb[0].mxu0
    %1560 = vdwg.mxu0
    %1561 = vmatprep.subr.bf16.mxu0 %v1459
    %1562 = vmatpush1.bf16.msra.mxu0 %v1458
    %1563 = vmatprep.subr.bf16.mxu0 %v1463
    %1564 = vmatpush1.bf16.msra.mxu0 %v1462
    %1565 = vmatprep.subr.bf16.mxu0 %v1467
    %1566 = vmatpush1.bf16.msra.mxu0 %v1466
    %1567 = vmatprep.subr.bf16.mxu0 %v1471
    %1568 = vmatpush1.bf16.msra.mxu0 %v1470
    %1569 = vmatprep.subr.bf16.mxu0 %v1475
    %1570 = vmatpush1.bf16.msra.mxu0 %v1474
    %1571 = vmatprep.subr.bf16.mxu0 %v1479
    %1572 = vmatpush1.bf16.msra.mxu0 %v1478
    %1573 = vmatprep.subr.bf16.mxu0 %v1483
    %1574 = vmatpush1.bf16.msra.mxu0 %v1482
    %1575 = vmatprep.subr.bf16.mxu0 %v1487
    %1576 = vmatpush1.bf16.msra.mxu0 %v1486
    %1577 = vmatprep.subr.bf16.mxu0 0
    %1578 = vmatpush1.bf16.msra.mxu0 0
    %1579 = vmatprep.subr.bf16.mxu0 0
    %1580 = vmatpush1.bf16.msra.mxu0 0
    %1581 = vmatprep.subr.bf16.mxu0 0
    %1582 = vmatpush1.bf16.msra.mxu0 0
    %1583 = vmatprep.subr.bf16.mxu0 0
    %1584 = vmatpush1.bf16.msra.mxu0 0
    %1585 = vmatprep.subr.bf16.mxu0 0
    %1586 = vmatpush1.bf16.msra.mxu0 0
    %1587 = vmatprep.subr.bf16.mxu0 0
    %1588 = vmatpush1.bf16.msra.mxu0 0
    %1589 = vmatprep.subr.bf16.mxu0 0
    %1590 = vmatpush1.bf16.msra.mxu0 0
    %1591 = vmatprep.subr.bf16.mxu0 0
    %1592 = vmatpush1.bf16.msra.mxu0 0
    %1593 = vmatprep.mubr.bf16.mxu0 0
    %1594 = vmatmul.mubr.bf16.gmra.mrb[0].mxu0 %v1327
    %v1595 = vpop.f32.mrb[0].mxu0
    %v1596 = vadd.f32 0.0, %v1595
    %v1597 = vpop.f32.mrb[0].mxu0
    %v1598 = vadd.f32 0.0, %v1597
    %v1599 = vpop.f32.mrb[0].mxu0
    %v1600 = vpop.f32.mrb[0].mxu0
    %1601 = vdwg.mxu0
    %v1606 = vcombine.low %v1555, %v1557
    %v1607 = vcombine.low %v1596, %v1598
    %v1609 = vunpack.c.l.s4 1983009808
    %v1610 = vunpack.c.0.s8 %v1609
    %v1611 = vlaneseq
    %v1612 = vshrl.u32 %v1611, 7
    %v1613 = vsub.s32 %v1610, %v1612
    %v1614 = vrot.slane %v1606, %v1613
    %v1616 = vunpack.c.l.s4 1983009808
    %v1617 = vunpack.c.0.s8 %v1616
    %v1618 = vlaneseq
    %v1619 = vshrl.u32 %v1618, 7
    %v1620 = vsub.s32 %v1617, %v1619
    %v1621 = vrot.slane %v1607, %v1620
    %v1622 = vcombine.low %v1614, %v1621
    %v1624 = vadd.f32 %v1326, %v1622
    %v1625 = vld [vmem:[%s613] sm:$0xff]
    %v1626 = vpack.c.bf16 %v1324, %v1324
    %v1627 = vld [vmem:[%s932] sm:$0xff]
    %v1628 = vld [vmem:[%s932 + $0x8] sm:$0xff]
    %v1629 = vld [vmem:[%s932 + $0x10] sm:$0xff]
    %v1630 = vld [vmem:[%s932 + $0x18] sm:$0xff]
    %v1631 = vld [vmem:[%s932 + $0x20] sm:$0xff]
    %v1632 = vld [vmem:[%s932 + $0x28] sm:$0xff]
    %v1633 = vld [vmem:[%s932 + $0x30] sm:$0xff]
    %v1634 = vld [vmem:[%s932 + $0x38] sm:$0xff]
    %v1635 = vld [vmem:[%s932 + $0x40] sm:$0xff]
    %v1636 = vld [vmem:[%s932 + $0x48] sm:$0xff]
    %v1637 = vld [vmem:[%s932 + $0x50] sm:$0xff]
    %v1638 = vld [vmem:[%s932 + $0x58] sm:$0xff]
    %v1639 = vld [vmem:[%s932 + $0x60] sm:$0xff]
    %v1640 = vld [vmem:[%s932 + $0x68] sm:$0xff]
    %v1641 = vld [vmem:[%s932 + $0x70] sm:$0xff]
    %v1642 = vld [vmem:[%s932 + $0x78] sm:$0xff]
    %v1643 = vld [vmem:[%s932 + $0x80] sm:$0xff]
    %v1644 = vld [vmem:[%s932 + $0x88] sm:$0xff]
    %v1645 = vld [vmem:[%s932 + $0x90] sm:$0xff]
    %v1646 = vld [vmem:[%s932 + $0x98] sm:$0xff]
    %v1647 = vld [vmem:[%s932 + $0xa0] sm:$0xff]
    %v1648 = vld [vmem:[%s932 + $0xa8] sm:$0xff]
    %v1649 = vld [vmem:[%s932 + $0xb0] sm:$0xff]
    %v1650 = vld [vmem:[%s932 + $0xb8] sm:$0xff]
    %v1651 = vld [vmem:[%s932 + $0xc0] sm:$0xff]
    %v1652 = vld [vmem:[%s932 + $0xc8] sm:$0xff]
    %v1653 = vld [vmem:[%s932 + $0xd0] sm:$0xff]
    %v1654 = vld [vmem:[%s932 + $0xd8] sm:$0xff]
    %v1655 = vld [vmem:[%s932 + $0xe0] sm:$0xff]
    %v1656 = vld [vmem:[%s932 + $0xe8] sm:$0xff]
    %v1657 = vld [vmem:[%s932 + $0xf0] sm:$0xff]
    %v1658 = vld [vmem:[%s932 + $0xf8] sm:$0xff]
    %v1691 = vunpack.c.l.b16 %v1627
    %v1692 = vunpack.c.h.b16 %v1627
    %v1693 = vunpack.c.l.b16 %v1628
    %v1694 = vunpack.c.h.b16 %v1628
    %v1695 = vunpack.c.l.b16 %v1629
    %v1696 = vunpack.c.h.b16 %v1629
    %v1697 = vunpack.c.l.b16 %v1630
    %v1698 = vunpack.c.h.b16 %v1630
    %v1699 = vunpack.c.l.b16 %v1631
    %v1700 = vunpack.c.h.b16 %v1631
    %v1701 = vunpack.c.l.b16 %v1632
    %v1702 = vunpack.c.h.b16 %v1632
    %v1703 = vunpack.c.l.b16 %v1633
    %v1704 = vunpack.c.h.b16 %v1633
    %v1705 = vunpack.c.l.b16 %v1634
    %v1706 = vunpack.c.h.b16 %v1634
    %v1707 = vunpack.c.l.b16 %v1635
    %v1708 = vunpack.c.h.b16 %v1635
    %v1709 = vunpack.c.l.b16 %v1636
    %v1710 = vunpack.c.h.b16 %v1636
    %v1711 = vunpack.c.l.b16 %v1637
    %v1712 = vunpack.c.h.b16 %v1637
    %v1713 = vunpack.c.l.b16 %v1638
    %v1714 = vunpack.c.h.b16 %v1638
    %v1715 = vunpack.c.l.b16 %v1639
    %v1716 = vunpack.c.h.b16 %v1639
    %v1717 = vunpack.c.l.b16 %v1640
    %v1718 = vunpack.c.h.b16 %v1640
    %v1719 = vunpack.c.l.b16 %v1641
    %v1720 = vunpack.c.h.b16 %v1641
    %v1721 = vunpack.c.l.b16 %v1642
    %v1722 = vunpack.c.h.b16 %v1642
    %v1723 = vunpack.c.l.b16 %v1643
    %v1724 = vunpack.c.h.b16 %v1643
    %v1725 = vunpack.c.l.b16 %v1644
    %v1726 = vunpack.c.h.b16 %v1644
    %v1727 = vunpack.c.l.b16 %v1645
    %v1728 = vunpack.c.h.b16 %v1645
    %v1729 = vunpack.c.l.b16 %v1646
    %v1730 = vunpack.c.h.b16 %v1646
    %v1731 = vunpack.c.l.b16 %v1647
    %v1732 = vunpack.c.h.b16 %v1647
    %v1733 = vunpack.c.l.b16 %v1648
    %v1734 = vunpack.c.h.b16 %v1648
    %v1735 = vunpack.c.l.b16 %v1649
    %v1736 = vunpack.c.h.b16 %v1649
    %v1737 = vunpack.c.l.b16 %v1650
    %v1738 = vunpack.c.h.b16 %v1650
    %v1739 = vunpack.c.l.b16 %v1651
    %v1740 = vunpack.c.h.b16 %v1651
    %v1741 = vunpack.c.l.b16 %v1652
    %v1742 = vunpack.c.h.b16 %v1652
    %v1743 = vunpack.c.l.b16 %v1653
    %v1744 = vunpack.c.h.b16 %v1653
    %v1745 = vunpack.c.l.b16 %v1654
    %v1746 = vunpack.c.h.b16 %v1654
    %v1747 = vunpack.c.l.b16 %v1655
    %v1748 = vunpack.c.h.b16 %v1655
    %v1749 = vunpack.c.l.b16 %v1656
    %v1750 = vunpack.c.h.b16 %v1656
    %v1751 = vunpack.c.l.b16 %v1657
    %v1752 = vunpack.c.h.b16 %v1657
    %v1753 = vunpack.c.l.b16 %v1658
    %v1754 = vunpack.c.h.b16 %v1658
    %v1755 = vpack.c.b16 %v1695, %v1691
    %v1756 = vpack.c.b16 %v1696, %v1692
    %v1757 = vpack.c.b16 %v1697, %v1693
    %v1758 = vpack.c.b16 %v1698, %v1694
    %v1759 = vpack.c.b16 %v1703, %v1699
    %v1760 = vpack.c.b16 %v1704, %v1700
    %v1761 = vpack.c.b16 %v1705, %v1701
    %v1762 = vpack.c.b16 %v1706, %v1702
    %v1763 = vpack.c.b16 %v1711, %v1707
    %v1764 = vpack.c.b16 %v1712, %v1708
    %v1765 = vpack.c.b16 %v1713, %v1709
    %v1766 = vpack.c.b16 %v1714, %v1710
    %v1767 = vpack.c.b16 %v1719, %v1715
    %v1768 = vpack.c.b16 %v1720, %v1716
    %v1769 = vpack.c.b16 %v1721, %v1717
    %v1770 = vpack.c.b16 %v1722, %v1718
    %v1771 = vpack.c.b16 %v1727, %v1723
    %v1772 = vpack.c.b16 %v1728, %v1724
    %v1773 = vpack.c.b16 %v1729, %v1725
    %v1774 = vpack.c.b16 %v1730, %v1726
    %v1775 = vpack.c.b16 %v1735, %v1731
    %v1776 = vpack.c.b16 %v1736, %v1732
    %v1777 = vpack.c.b16 %v1737, %v1733
    %v1778 = vpack.c.b16 %v1738, %v1734
    %v1779 = vpack.c.b16 %v1743, %v1739
    %v1780 = vpack.c.b16 %v1744, %v1740
    %v1781 = vpack.c.b16 %v1745, %v1741
    %v1782 = vpack.c.b16 %v1746, %v1742
    %v1783 = vpack.c.b16 %v1751, %v1747
    %v1784 = vpack.c.b16 %v1752, %v1748
    %v1785 = vpack.c.b16 %v1753, %v1749
    %v1786 = vpack.c.b16 %v1754, %v1750
    %1819 = vmatprep.subr.bf16.mxu0 %v1756
    %1820 = vmatpush1.bf16.msra.mxu0 %v1755
    %1821 = vmatprep.subr.bf16.mxu0 %v1760
    %1822 = vmatpush1.bf16.msra.mxu0 %v1759
    %1823 = vmatprep.subr.bf16.mxu0 %v1764
    %1824 = vmatpush1.bf16.msra.mxu0 %v1763
    %1825 = vmatprep.subr.bf16.mxu0 %v1768
    %1826 = vmatpush1.bf16.msra.mxu0 %v1767
    %1827 = vmatprep.subr.bf16.mxu0 %v1772
    %1828 = vmatpush1.bf16.msra.mxu0 %v1771
    %1829 = vmatprep.subr.bf16.mxu0 %v1776
    %1830 = vmatpush1.bf16.msra.mxu0 %v1775
    %1831 = vmatprep.subr.bf16.mxu0 %v1780
    %1832 = vmatpush1.bf16.msra.mxu0 %v1779
    %1833 = vmatprep.subr.bf16.mxu0 %v1784
    %1834 = vmatpush1.bf16.msra.mxu0 %v1783
    %1835 = vmatprep.subr.bf16.mxu0 0
    %1836 = vmatpush1.bf16.msra.mxu0 0
    %1837 = vmatprep.subr.bf16.mxu0 0
    %1838 = vmatpush1.bf16.msra.mxu0 0
    %1839 = vmatprep.subr.bf16.mxu0 0
    %1840 = vmatpush1.bf16.msra.mxu0 0
    %1841 = vmatprep.subr.bf16.mxu0 0
    %1842 = vmatpush1.bf16.msra.mxu0 0
    %1843 = vmatprep.subr.bf16.mxu0 0
    %1844 = vmatpush1.bf16.msra.mxu0 0
    %1845 = vmatprep.subr.bf16.mxu0 0
    %1846 = vmatpush1.bf16.msra.mxu0 0
    %1847 = vmatprep.subr.bf16.mxu0 0
    %1848 = vmatpush1.bf16.msra.mxu0 0
    %1849 = vmatprep.subr.bf16.mxu0 0
    %1850 = vmatpush1.bf16.msra.mxu0 0
    %1851 = vmatprep.mubr.bf16.mxu0 0
    %1852 = vmatmul.mubr.bf16.gmra.mrb[0].mxu0 %v1626
    %v1853 = vpop.f32.mrb[0].mxu0
    %v1854 = vadd.f32 0.0, %v1853
    %v1855 = vpop.f32.mrb[0].mxu0
    %v1856 = vadd.f32 0.0, %v1855
    %v1857 = vpop.f32.mrb[0].mxu0
    %v1858 = vpop.f32.mrb[0].mxu0
    %1859 = vdwg.mxu0
    %1860 = vmatprep.subr.bf16.mxu0 %v1758
    %1861 = vmatpush1.bf16.msra.mxu0 %v1757
    %1862 = vmatprep.subr.bf16.mxu0 %v1762
    %1863 = vmatpush1.bf16.msra.mxu0 %v1761
    %1864 = vmatprep.subr.bf16.mxu0 %v1766
    %1865 = vmatpush1.bf16.msra.mxu0 %v1765
    %1866 = vmatprep.subr.bf16.mxu0 %v1770
    %1867 = vmatpush1.bf16.msra.mxu0 %v1769
    %1868 = vmatprep.subr.bf16.mxu0 %v1774
    %1869 = vmatpush1.bf16.msra.mxu0 %v1773
    %1870 = vmatprep.subr.bf16.mxu0 %v1778
    %1871 = vmatpush1.bf16.msra.mxu0 %v1777
    %1872 = vmatprep.subr.bf16.mxu0 %v1782
    %1873 = vmatpush1.bf16.msra.mxu0 %v1781
    %1874 = vmatprep.subr.bf16.mxu0 %v1786
    %1875 = vmatpush1.bf16.msra.mxu0 %v1785
    %1876 = vmatprep.subr.bf16.mxu0 0
    %1877 = vmatpush1.bf16.msra.mxu0 0
    %1878 = vmatprep.subr.bf16.mxu0 0
    %1879 = vmatpush1.bf16.msra.mxu0 0
    %1880 = vmatprep.subr.bf16.mxu0 0
    %1881 = vmatpush1.bf16.msra.mxu0 0
    %1882 = vmatprep.subr.bf16.mxu0 0
    %1883 = vmatpush1.bf16.msra.mxu0 0
    %1884 = vmatprep.subr.bf16.mxu0 0
    %1885 = vmatpush1.bf16.msra.mxu0 0
    %1886 = vmatprep.subr.bf16.mxu0 0
    %1887 = vmatpush1.bf16.msra.mxu0 0
    %1888 = vmatprep.subr.bf16.mxu0 0
    %1889 = vmatpush1.bf16.msra.mxu0 0
    %1890 = vmatprep.subr.bf16.mxu0 0
    %1891 = vmatpush1.bf16.msra.mxu0 0
    %1892 = vmatprep.mubr.bf16.mxu0 0
    %1893 = vmatmul.mubr.bf16.gmra.mrb[0].mxu0 %v1626
    %v1894 = vpop.f32.mrb[0].mxu0
    %v1895 = vadd.f32 0.0, %v1894
    %v1896 = vpop.f32.mrb[0].mxu0
    %v1897 = vadd.f32 0.0, %v1896
    %v1898 = vpop.f32.mrb[0].mxu0
    %v1899 = vpop.f32.mrb[0].mxu0
    %1900 = vdwg.mxu0
    %v1905 = vcombine.low %v1854, %v1856
    %v1906 = vcombine.low %v1895, %v1897
    %v1908 = vunpack.c.l.s4 1983009808
    %v1909 = vunpack.c.0.s8 %v1908
    %v1910 = vlaneseq
    %v1911 = vshrl.u32 %v1910, 7
    %v1912 = vsub.s32 %v1909, %v1911
    %v1913 = vrot.slane %v1905, %v1912
    %v1915 = vunpack.c.l.s4 1983009808
    %v1916 = vunpack.c.0.s8 %v1915
    %v1917 = vlaneseq
    %v1918 = vshrl.u32 %v1917, 7
    %v1919 = vsub.s32 %v1916, %v1918
    %v1920 = vrot.slane %v1906, %v1919
    %v1921 = vcombine.low %v1913, %v1920
    %v1923 = vadd.f32 %v1625, %v1921
    %v1924 = vxor.u32 %v1624, 2147483648
    %v1925 = vmul.f32 %v1924, 1.442695
    %v1926 = vpow.pop %v1925
    %v1927 = vadd.f32 %v1926, 1.0
    %v1928 = vrcp.pop %v1927
    %v1929 = vmul.f32 1.0, %v1928
    %v1931 = vrot.slane %v1624, 2
    %v1933 = vxor.u32 %v1931, 2147483648
    %v1934 = vmul.f32 %v1933, 1.442695
    %v1935 = vpow.pop %v1934
    %v1936 = vadd.f32 %v1935, 1.0
    %v1937 = vrcp.pop %v1936
    %v1938 = vmul.f32 1.0, %v1937
    %v1939 = vrot.slane %v1624, 4
    %v1941 = vtanh.pop %v1939
    %v1942 = vrot.slane %v1624, 6
    %v1944 = vxor.u32 %v1942, 2147483648
    %v1945 = vmul.f32 %v1944, 1.442695
    %v1946 = vpow.pop %v1945
    %v1947 = vadd.f32 %v1946, 1.0
    %v1948 = vrcp.pop %v1947
    %v1949 = vmul.f32 1.0, %v1948
    %v1950 = vxor.u32 %v1923, 2147483648
    %v1951 = vmul.f32 %v1950, 1.442695
    %v1952 = vpow.pop %v1951
    %v1953 = vadd.f32 %v1952, 1.0
    %v1954 = vrcp.pop %v1953
    %v1955 = vmul.f32 1.0, %v1954
    %v1957 = vrot.slane %v1923, 2
    %v1959 = vxor.u32 %v1957, 2147483648
    %v1960 = vmul.f32 %v1959, 1.442695
    %v1961 = vpow.pop %v1960
    %v1962 = vadd.f32 %v1961, 1.0
    %v1963 = vrcp.pop %v1962
    %v1964 = vmul.f32 1.0, %v1963
    %v1965 = vrot.slane %v1923, 4
    %v1967 = vtanh.pop %v1965
    %v1968 = vrot.slane %v1923, 6
    %v1970 = vxor.u32 %v1968, 2147483648
    %v1971 = vmul.f32 %v1970, 1.442695
    %v1972 = vpow.pop %v1971
    %v1973 = vadd.f32 %v1972, 1.0
    %v1974 = vrcp.pop %v1973
    %v1975 = vmul.f32 1.0, %v1974
    %v1976 = vmul.f32 %v1938, %v1323
    %v1977 = vmul.f32 %v1929, %v1941
    %v1978 = vadd.f32 %v1976, %v1977
    %v1979 = vmul.f32 %v1964, %v1325
    %v1980 = vmul.f32 %v1955, %v1967
    %v1981 = vadd.f32 %v1979, %v1980
    %v1982 = vtanh.pop %v1978
    %v1983 = vmul.f32 %v1949, %v1982
    %v1984 = vtanh.pop %v1981
    %v1985 = vmul.f32 %v1975, %v1984
    %s1986 = sadd.s32 %s624, 1
    %v1987 = vstv %s1986
    %vm1988 = vcmp.lt.s32.totalorder %v1987, %v623
    %s1989 = sadd.s32 %s626, 6
    %v1990 = vstv %s1989
    %vm1991 = vcmp.lt.s32.totalorder %v1990, %v623
    %v1992 = vsel %vm1988, 1, 0
    %1993 = vset.pattern.permute.xlu0 0
    %1994 = vperm.xlu0 %1993, %v1992
    %v1995 = vpop.permute.xlu0 %1994
    %vm1996 = vcmp.eq.s32.totalorder %v1995, 1
    %v1997 = vsel %vm1996, %v1978, %v1323
    %1998 = vst [vmem:[#allocation5] sm:$0x3] %v1997
    %v1999 = vsel %vm1996, %v1983, %v1322
    %2000 = vst [vmem:[#allocation4] sm:$0x3] %v1999
    %v2001 = vsel %vm1991, 1, 0
    %2002 = vset.pattern.permute.xlu0 0
    %2003 = vperm.xlu0 %2002, %v2001
    %v2004 = vpop.permute.xlu0 %2003
    %vm2005 = vcmp.eq.s32.totalorder %v2004, 1
    %v2006 = vsel %vm2005, %v1981, %v1325
    %2007 = vst [vmem:[#allocation7] sm:$0x3] %v2006
    %v2008 = vsel %vm2005, %v1985, %v1324
    %2009 = vst [vmem:[#allocation6] sm:$0x3] %v2008
    %v2010 = vsel %vm1996, %v1983, 0.0
    %v2011 = vpack.c.bf16 %v2010, %v2010
    %s2012 = scalar_lea.vmem %s6, 1
    %2013 = vst [vmem:[%s2012] sm:$0x1] %v2011
    %v2014 = vsel %vm2005, %v1985, 0.0
    %v2015 = vpack.c.bf16 %v2014, %v2014
    %s2016 = scalar_lea.vmem %s70, 6
    %2017 = vst [vmem:[%s2016] sm:$0x1] %v2015
    %v2018 = vld [vmem:[#allocation4] sm:$0x3]
    %v2019 = vld [vmem:[#allocation5] sm:$0x3]
    %v2020 = vld [vmem:[#allocation6] sm:$0x3]
    %v2021 = vld [vmem:[#allocation7] sm:$0x3]
    %v2022 = vld [vmem:[%s489] sm:$0xff]
    %v2023 = vpack.c.bf16 %v2018, %v2018
    %v2024 = vld [vmem:[#allocation8] sm:$0xff]
    %v2025 = vld [vmem:[#allocation8 + $0x8] sm:$0xff]
    %v2026 = vld [vmem:[#allocation8 + $0x10] sm:$0xff]
    %v2027 = vld [vmem:[#allocation8 + $0x18] sm:$0xff]
    %v2028 = vld [vmem:[#allocation8 + $0x20] sm:$0xff]
    %v2029 = vld [vmem:[#allocation8 + $0x28] sm:$0xff]
    %v2030 = vld [vmem:[#allocation8 + $0x30] sm:$0xff]
    %v2031 = vld [vmem:[#allocation8 + $0x38] sm:$0xff]
    %v2032 = vld [vmem:[#allocation8 + $0x40] sm:$0xff]
    %v2033 = vld [vmem:[#allocation8 + $0x48] sm:$0xff]
    %v2034 = vld [vmem:[#allocation8 + $0x50] sm:$0xff]
    %v2035 = vld [vmem:[#allocation8 + $0x58] sm:$0xff]
    %v2036 = vld [vmem:[#allocation8 + $0x60] sm:$0xff]
    %v2037 = vld [vmem:[#allocation8 + $0x68] sm:$0xff]
    %v2038 = vld [vmem:[#allocation8 + $0x70] sm:$0xff]
    %v2039 = vld [vmem:[#allocation8 + $0x78] sm:$0xff]
    %v2040 = vld [vmem:[#allocation8 + $0x80] sm:$0xff]
    %v2041 = vld [vmem:[#allocation8 + $0x88] sm:$0xff]
    %v2042 = vld [vmem:[#allocation8 + $0x90] sm:$0xff]
    %v2043 = vld [vmem:[#allocation8 + $0x98] sm:$0xff]
    %v2044 = vld [vmem:[#allocation8 + $0xa0] sm:$0xff]
    %v2045 = vld [vmem:[#allocation8 + $0xa8] sm:$0xff]
    %v2046 = vld [vmem:[#allocation8 + $0xb0] sm:$0xff]
    %v2047 = vld [vmem:[#allocation8 + $0xb8] sm:$0xff]
    %v2048 = vld [vmem:[#allocation8 + $0xc0] sm:$0xff]
    %v2049 = vld [vmem:[#allocation8 + $0xc8] sm:$0xff]
    %v2050 = vld [vmem:[#allocation8 + $0xd0] sm:$0xff]
    %v2051 = vld [vmem:[#allocation8 + $0xd8] sm:$0xff]
    %v2052 = vld [vmem:[#allocation8 + $0xe0] sm:$0xff]
    %v2053 = vld [vmem:[#allocation8 + $0xe8] sm:$0xff]
    %v2054 = vld [vmem:[#allocation8 + $0xf0] sm:$0xff]
    %v2055 = vld [vmem:[#allocation8 + $0xf8] sm:$0xff]
    %v2088 = vunpack.c.l.b16 %v2024
    %v2089 = vunpack.c.h.b16 %v2024
    %v2090 = vunpack.c.l.b16 %v2025
    %v2091 = vunpack.c.h.b16 %v2025
    %v2092 = vunpack.c.l.b16 %v2026
    %v2093 = vunpack.c.h.b16 %v2026
    %v2094 = vunpack.c.l.b16 %v2027
    %v2095 = vunpack.c.h.b16 %v2027
    %v2096 = vunpack.c.l.b16 %v2028
    %v2097 = vunpack.c.h.b16 %v2028
    %v2098 = vunpack.c.l.b16 %v2029
    %v2099 = vunpack.c.h.b16 %v2029
    %v2100 = vunpack.c.l.b16 %v2030
    %v2101 = vunpack.c.h.b16 %v2030
    %v2102 = vunpack.c.l.b16 %v2031
    %v2103 = vunpack.c.h.b16 %v2031
    %v2104 = vunpack.c.l.b16 %v2032
    %v2105 = vunpack.c.h.b16 %v2032
    %v2106 = vunpack.c.l.b16 %v2033
    %v2107 = vunpack.c.h.b16 %v2033
    %v2108 = vunpack.c.l.b16 %v2034
    %v2109 = vunpack.c.h.b16 %v2034
    %v2110 = vunpack.c.l.b16 %v2035
    %v2111 = vunpack.c.h.b16 %v2035
    %v2112 = vunpack.c.l.b16 %v2036
    %v2113 = vunpack.c.h.b16 %v2036
    %v2114 = vunpack.c.l.b16 %v2037
    %v2115 = vunpack.c.h.b16 %v2037
    %v2116 = vunpack.c.l.b16 %v2038
    %v2117 = vunpack.c.h.b16 %v2038
    %v2118 = vunpack.c.l.b16 %v2039
    %v2119 = vunpack.c.h.b16 %v2039
    %v2120 = vunpack.c.l.b16 %v2040
    %v2121 = vunpack.c.h.b16 %v2040
    %v2122 = vunpack.c.l.b16 %v2041
    %v2123 = vunpack.c.h.b16 %v2041
    %v2124 = vunpack.c.l.b16 %v2042
    %v2125 = vunpack.c.h.b16 %v2042
    %v2126 = vunpack.c.l.b16 %v2043
    %v2127 = vunpack.c.h.b16 %v2043
    %v2128 = vunpack.c.l.b16 %v2044
    %v2129 = vunpack.c.h.b16 %v2044
    %v2130 = vunpack.c.l.b16 %v2045
    %v2131 = vunpack.c.h.b16 %v2045
    %v2132 = vunpack.c.l.b16 %v2046
    %v2133 = vunpack.c.h.b16 %v2046
    %v2134 = vunpack.c.l.b16 %v2047
    %v2135 = vunpack.c.h.b16 %v2047
    %v2136 = vunpack.c.l.b16 %v2048
    %v2137 = vunpack.c.h.b16 %v2048
    %v2138 = vunpack.c.l.b16 %v2049
    %v2139 = vunpack.c.h.b16 %v2049
    %v2140 = vunpack.c.l.b16 %v2050
    %v2141 = vunpack.c.h.b16 %v2050
    %v2142 = vunpack.c.l.b16 %v2051
    %v2143 = vunpack.c.h.b16 %v2051
    %v2144 = vunpack.c.l.b16 %v2052
    %v2145 = vunpack.c.h.b16 %v2052
    %v2146 = vunpack.c.l.b16 %v2053
    %v2147 = vunpack.c.h.b16 %v2053
    %v2148 = vunpack.c.l.b16 %v2054
    %v2149 = vunpack.c.h.b16 %v2054
    %v2150 = vunpack.c.l.b16 %v2055
    %v2151 = vunpack.c.h.b16 %v2055
    %v2152 = vpack.c.b16 %v2092, %v2088
    %v2153 = vpack.c.b16 %v2093, %v2089
    %v2154 = vpack.c.b16 %v2094, %v2090
    %v2155 = vpack.c.b16 %v2095, %v2091
    %v2156 = vpack.c.b16 %v2100, %v2096
    %v2157 = vpack.c.b16 %v2101, %v2097
    %v2158 = vpack.c.b16 %v2102, %v2098
    %v2159 = vpack.c.b16 %v2103, %v2099
    %v2160 = vpack.c.b16 %v2108, %v2104
    %v2161 = vpack.c.b16 %v2109, %v2105
    %v2162 = vpack.c.b16 %v2110, %v2106
    %v2163 = vpack.c.b16 %v2111, %v2107
    %v2164 = vpack.c.b16 %v2116, %v2112
    %v2165 = vpack.c.b16 %v2117, %v2113
    %v2166 = vpack.c.b16 %v2118, %v2114
    %v2167 = vpack.c.b16 %v2119, %v2115
    %v2168 = vpack.c.b16 %v2124, %v2120
    %v2169 = vpack.c.b16 %v2125, %v2121
    %v2170 = vpack.c.b16 %v2126, %v2122
    %v2171 = vpack.c.b16 %v2127, %v2123
    %v2172 = vpack.c.b16 %v2132, %v2128
    %v2173 = vpack.c.b16 %v2133, %v2129
    %v2174 = vpack.c.b16 %v2134, %v2130
    %v2175 = vpack.c.b16 %v2135, %v2131
    %v2176 = vpack.c.b16 %v2140, %v2136
    %v2177 = vpack.c.b16 %v2141, %v2137
    %v2178 = vpack.c.b16 %v2142, %v2138
    %v2179 = vpack.c.b16 %v2143, %v2139
    %v2180 = vpack.c.b16 %v2148, %v2144
    %v2181 = vpack.c.b16 %v2149, %v2145
    %v2182 = vpack.c.b16 %v2150, %v2146
    %v2183 = vpack.c.b16 %v2151, %v2147
    %2216 = vmatprep.subr.bf16.mxu0 %v2153
    %2217 = vmatpush1.bf16.msra.mxu0 %v2152
    %2218 = vmatprep.subr.bf16.mxu0 %v2157
    %2219 = vmatpush1.bf16.msra.mxu0 %v2156
    %2220 = vmatprep.subr.bf16.mxu0 %v2161
    %2221 = vmatpush1.bf16.msra.mxu0 %v2160
    %2222 = vmatprep.subr.bf16.mxu0 %v2165
    %2223 = vmatpush1.bf16.msra.mxu0 %v2164
    %2224 = vmatprep.subr.bf16.mxu0 %v2169
    %2225 = vmatpush1.bf16.msra.mxu0 %v2168
    %2226 = vmatprep.subr.bf16.mxu0 %v2173
    %2227 = vmatpush1.bf16.msra.mxu0 %v2172
    %2228 = vmatprep.subr.bf16.mxu0 %v2177
    %2229 = vmatpush1.bf16.msra.mxu0 %v2176
    %2230 = vmatprep.subr.bf16.mxu0 %v2181
    %2231 = vmatpush1.bf16.msra.mxu0 %v2180
    %2232 = vmatprep.subr.bf16.mxu0 0
    %2233 = vmatpush1.bf16.msra.mxu0 0
    %2234 = vmatprep.subr.bf16.mxu0 0
    %2235 = vmatpush1.bf16.msra.mxu0 0
    %2236 = vmatprep.subr.bf16.mxu0 0
    %2237 = vmatpush1.bf16.msra.mxu0 0
    %2238 = vmatprep.subr.bf16.mxu0 0
    %2239 = vmatpush1.bf16.msra.mxu0 0
    %2240 = vmatprep.subr.bf16.mxu0 0
    %2241 = vmatpush1.bf16.msra.mxu0 0
    %2242 = vmatprep.subr.bf16.mxu0 0
    %2243 = vmatpush1.bf16.msra.mxu0 0
    %2244 = vmatprep.subr.bf16.mxu0 0
    %2245 = vmatpush1.bf16.msra.mxu0 0
    %2246 = vmatprep.subr.bf16.mxu0 0
    %2247 = vmatpush1.bf16.msra.mxu0 0
    %2248 = vmatprep.mubr.bf16.mxu0 0
    %2249 = vmatmul.mubr.bf16.gmra.mrb[0].mxu0 %v2023
    %v2250 = vpop.f32.mrb[0].mxu0
    %v2251 = vadd.f32 0.0, %v2250
    %v2252 = vpop.f32.mrb[0].mxu0
    %v2253 = vadd.f32 0.0, %v2252
    %v2254 = vpop.f32.mrb[0].mxu0
    %v2255 = vpop.f32.mrb[0].mxu0
    %2256 = vdwg.mxu0
    %2257 = vmatprep.subr.bf16.mxu0 %v2155
    %2258 = vmatpush1.bf16.msra.mxu0 %v2154
    %2259 = vmatprep.subr.bf16.mxu0 %v2159
    %2260 = vmatpush1.bf16.msra.mxu0 %v2158
    %2261 = vmatprep.subr.bf16.mxu0 %v2163
    %2262 = vmatpush1.bf16.msra.mxu0 %v2162
    %2263 = vmatprep.subr.bf16.mxu0 %v2167
    %2264 = vmatpush1.bf16.msra.mxu0 %v2166
    %2265 = vmatprep.subr.bf16.mxu0 %v2171
    %2266 = vmatpush1.bf16.msra.mxu0 %v2170
    %2267 = vmatprep.subr.bf16.mxu0 %v2175
    %2268 = vmatpush1.bf16.msra.mxu0 %v2174
    %2269 = vmatprep.subr.bf16.mxu0 %v2179
    %2270 = vmatpush1.bf16.msra.mxu0 %v2178
    %2271 = vmatprep.subr.bf16.mxu0 %v2183
    %2272 = vmatpush1.bf16.msra.mxu0 %v2182
    %2273 = vmatprep.subr.bf16.mxu0 0
    %2274 = vmatpush1.bf16.msra.mxu0 0
    %2275 = vmatprep.subr.bf16.mxu0 0
    %2276 = vmatpush1.bf16.msra.mxu0 0
    %2277 = vmatprep.subr.bf16.mxu0 0
    %2278 = vmatpush1.bf16.msra.mxu0 0
    %2279 = vmatprep.subr.bf16.mxu0 0
    %2280 = vmatpush1.bf16.msra.mxu0 0
    %2281 = vmatprep.subr.bf16.mxu0 0
    %2282 = vmatpush1.bf16.msra.mxu0 0
    %2283 = vmatprep.subr.bf16.mxu0 0
    %2284 = vmatpush1.bf16.msra.mxu0 0
    %2285 = vmatprep.subr.bf16.mxu0 0
    %2286 = vmatpush1.bf16.msra.mxu0 0
    %2287 = vmatprep.subr.bf16.mxu0 0
    %2288 = vmatpush1.bf16.msra.mxu0 0
    %2289 = vmatprep.mubr.bf16.mxu0 0
    %2290 = vmatmul.mubr.bf16.gmra.mrb[0].mxu0 %v2023
    %v2291 = vpop.f32.mrb[0].mxu0
    %v2292 = vadd.f32 0.0, %v2291
    %v2293 = vpop.f32.mrb[0].mxu0
    %v2294 = vadd.f32 0.0, %v2293
    %v2295 = vpop.f32.mrb[0].mxu0
    %v2296 = vpop.f32.mrb[0].mxu0
    %2297 = vdwg.mxu0
    %v2302 = vcombine.low %v2251, %v2253
    %v2303 = vcombine.low %v2292, %v2294
    %v2305 = vunpack.c.l.s4 1983009808
    %v2306 = vunpack.c.0.s8 %v2305
    %v2307 = vlaneseq
    %v2308 = vshrl.u32 %v2307, 7
    %v2309 = vsub.s32 %v2306, %v2308
    %v2310 = vrot.slane %v2302, %v2309
    %v2312 = vunpack.c.l.s4 1983009808
    %v2313 = vunpack.c.0.s8 %v2312
    %v2314 = vlaneseq
    %v2315 = vshrl.u32 %v2314, 7
    %v2316 = vsub.s32 %v2313, %v2315
    %v2317 = vrot.slane %v2303, %v2316
    %v2318 = vcombine.low %v2310, %v2317
    %v2320 = vadd.f32 %v2022, %v2318
    %v2321 = vld [vmem:[%s573] sm:$0xff]
    %v2322 = vpack.c.bf16 %v2020, %v2020
    %v2323 = vld [vmem:[%s932] sm:$0xff]
    %v2324 = vld [vmem:[%s932 + $0x8] sm:$0xff]
    %v2325 = vld [vmem:[%s932 + $0x10] sm:$0xff]
    %v2326 = vld [vmem:[%s932 + $0x18] sm:$0xff]
    %v2327 = vld [vmem:[%s932 + $0x20] sm:$0xff]
    %v2328 = vld [vmem:[%s932 + $0x28] sm:$0xff]
    %v2329 = vld [vmem:[%s932 + $0x30] sm:$0xff]
    %v2330 = vld [vmem:[%s932 + $0x38] sm:$0xff]
    %v2331 = vld [vmem:[%s932 + $0x40] sm:$0xff]
    %v2332 = vld [vmem:[%s932 + $0x48] sm:$0xff]
    %v2333 = vld [vmem:[%s932 + $0x50] sm:$0xff]
    %v2334 = vld [vmem:[%s932 + $0x58] sm:$0xff]
    %v2335 = vld [vmem:[%s932 + $0x60] sm:$0xff]
    %v2336 = vld [vmem:[%s932 + $0x68] sm:$0xff]
    %v2337 = vld [vmem:[%s932 + $0x70] sm:$0xff]
    %v2338 = vld [vmem:[%s932 + $0x78] sm:$0xff]
    %v2339 = vld [vmem:[%s932 + $0x80] sm:$0xff]
    %v2340 = vld [vmem:[%s932 + $0x88] sm:$0xff]
    %v2341 = vld [vmem:[%s932 + $0x90] sm:$0xff]
    %v2342 = vld [vmem:[%s932 + $0x98] sm:$0xff]
    %v2343 = vld [vmem:[%s932 + $0xa0] sm:$0xff]
    %v2344 = vld [vmem:[%s932 + $0xa8] sm:$0xff]
    %v2345 = vld [vmem:[%s932 + $0xb0] sm:$0xff]
    %v2346 = vld [vmem:[%s932 + $0xb8] sm:$0xff]
    %v2347 = vld [vmem:[%s932 + $0xc0] sm:$0xff]
    %v2348 = vld [vmem:[%s932 + $0xc8] sm:$0xff]
    %v2349 = vld [vmem:[%s932 + $0xd0] sm:$0xff]
    %v2350 = vld [vmem:[%s932 + $0xd8] sm:$0xff]
    %v2351 = vld [vmem:[%s932 + $0xe0] sm:$0xff]
    %v2352 = vld [vmem:[%s932 + $0xe8] sm:$0xff]
    %v2353 = vld [vmem:[%s932 + $0xf0] sm:$0xff]
    %v2354 = vld [vmem:[%s932 + $0xf8] sm:$0xff]
    %v2387 = vunpack.c.l.b16 %v2323
    %v2388 = vunpack.c.h.b16 %v2323
    %v2389 = vunpack.c.l.b16 %v2324
    %v2390 = vunpack.c.h.b16 %v2324
    %v2391 = vunpack.c.l.b16 %v2325
    %v2392 = vunpack.c.h.b16 %v2325
    %v2393 = vunpack.c.l.b16 %v2326
    %v2394 = vunpack.c.h.b16 %v2326
    %v2395 = vunpack.c.l.b16 %v2327
    %v2396 = vunpack.c.h.b16 %v2327
    %v2397 = vunpack.c.l.b16 %v2328
    %v2398 = vunpack.c.h.b16 %v2328
    %v2399 = vunpack.c.l.b16 %v2329
    %v2400 = vunpack.c.h.b16 %v2329
    %v2401 = vunpack.c.l.b16 %v2330
    %v2402 = vunpack.c.h.b16 %v2330
    %v2403 = vunpack.c.l.b16 %v2331
    %v2404 = vunpack.c.h.b16 %v2331
    %v2405 = vunpack.c.l.b16 %v2332
    %v2406 = vunpack.c.h.b16 %v2332
    %v2407 = vunpack.c.l.b16 %v2333
    %v2408 = vunpack.c.h.b16 %v2333
    %v2409 = vunpack.c.l.b16 %v2334
    %v2410 = vunpack.c.h.b16 %v2334
    %v2411 = vunpack.c.l.b16 %v2335
    %v2412 = vunpack.c.h.b16 %v2335
    %v2413 = vunpack.c.l.b16 %v2336
    %v2414 = vunpack.c.h.b16 %v2336
    %v2415 = vunpack.c.l.b16 %v2337
    %v2416 = vunpack.c.h.b16 %v2337
    %v2417 = vunpack.c.l.b16 %v2338
    %v2418 = vunpack.c.h.b16 %v2338
    %v2419 = vunpack.c.l.b16 %v2339
    %v2420 = vunpack.c.h.b16 %v2339
    %v2421 = vunpack.c.l.b16 %v2340
    %v2422 = vunpack.c.h.b16 %v2340
    %v2423 = vunpack.c.l.b16 %v2341
    %v2424 = vunpack.c.h.b16 %v2341
    %v2425 = vunpack.c.l.b16 %v2342
    %v2426 = vunpack.c.h.b16 %v2342
    %v2427 = vunpack.c.l.b16 %v2343
    %v2428 = vunpack.c.h.b16 %v2343
    %v2429 = vunpack.c.l.b16 %v2344
    %v2430 = vunpack.c.h.b16 %v2344
    %v2431 = vunpack.c.l.b16 %v2345
    %v2432 = vunpack.c.h.b16 %v2345
    %v2433 = vunpack.c.l.b16 %v2346
    %v2434 = vunpack.c.h.b16 %v2346
    %v2435 = vunpack.c.l.b16 %v2347
    %v2436 = vunpack.c.h.b16 %v2347
    %v2437 = vunpack.c.l.b16 %v2348
    %v2438 = vunpack.c.h.b16 %v2348
    %v2439 = vunpack.c.l.b16 %v2349
    %v2440 = vunpack.c.h.b16 %v2349
    %v2441 = vunpack.c.l.b16 %v2350
    %v2442 = vunpack.c.h.b16 %v2350
    %v2443 = vunpack.c.l.b16 %v2351
    %v2444 = vunpack.c.h.b16 %v2351
    %v2445 = vunpack.c.l.b16 %v2352
    %v2446 = vunpack.c.h.b16 %v2352
    %v2447 = vunpack.c.l.b16 %v2353
    %v2448 = vunpack.c.h.b16 %v2353
    %v2449 = vunpack.c.l.b16 %v2354
    %v2450 = vunpack.c.h.b16 %v2354
    %v2451 = vpack.c.b16 %v2391, %v2387
    %v2452 = vpack.c.b16 %v2392, %v2388
    %v2453 = vpack.c.b16 %v2393, %v2389
    %v2454 = vpack.c.b16 %v2394, %v2390
    %v2455 = vpack.c.b16 %v2399, %v2395
    %v2456 = vpack.c.b16 %v2400, %v2396
    %v2457 = vpack.c.b16 %v2401, %v2397
    %v2458 = vpack.c.b16 %v2402, %v2398
    %v2459 = vpack.c.b16 %v2407, %v2403
    %v2460 = vpack.c.b16 %v2408, %v2404
    %v2461 = vpack.c.b16 %v2409, %v2405
    %v2462 = vpack.c.b16 %v2410, %v2406
    %v2463 = vpack.c.b16 %v2415, %v2411
    %v2464 = vpack.c.b16 %v2416, %v2412
    %v2465 = vpack.c.b16 %v2417, %v2413
    %v2466 = vpack.c.b16 %v2418, %v2414
    %v2467 = vpack.c.b16 %v2423, %v2419
    %v2468 = vpack.c.b16 %v2424, %v2420
    %v2469 = vpack.c.b16 %v2425, %v2421
    %v2470 = vpack.c.b16 %v2426, %v2422
    %v2471 = vpack.c.b16 %v2431, %v2427
    %v2472 = vpack.c.b16 %v2432, %v2428
    %v2473 = vpack.c.b16 %v2433, %v2429
    %v2474 = vpack.c.b16 %v2434, %v2430
    %v2475 = vpack.c.b16 %v2439, %v2435
    %v2476 = vpack.c.b16 %v2440, %v2436
    %v2477 = vpack.c.b16 %v2441, %v2437
    %v2478 = vpack.c.b16 %v2442, %v2438
    %v2479 = vpack.c.b16 %v2447, %v2443
    %v2480 = vpack.c.b16 %v2448, %v2444
    %v2481 = vpack.c.b16 %v2449, %v2445
    %v2482 = vpack.c.b16 %v2450, %v2446
    %2515 = vmatprep.subr.bf16.mxu0 %v2452
    %2516 = vmatpush1.bf16.msra.mxu0 %v2451
    %2517 = vmatprep.subr.bf16.mxu0 %v2456
    %2518 = vmatpush1.bf16.msra.mxu0 %v2455
    %2519 = vmatprep.subr.bf16.mxu0 %v2460
    %2520 = vmatpush1.bf16.msra.mxu0 %v2459
    %2521 = vmatprep.subr.bf16.mxu0 %v2464
    %2522 = vmatpush1.bf16.msra.mxu0 %v2463
    %2523 = vmatprep.subr.bf16.mxu0 %v2468
    %2524 = vmatpush1.bf16.msra.mxu0 %v2467
    %2525 = vmatprep.subr.bf16.mxu0 %v2472
    %2526 = vmatpush1.bf16.msra.mxu0 %v2471
    %2527 = vmatprep.subr.bf16.mxu0 %v2476
    %2528 = vmatpush1.bf16.msra.mxu0 %v2475
    %2529 = vmatprep.subr.bf16.mxu0 %v2480
    %2530 = vmatpush1.bf16.msra.mxu0 %v2479
    %2531 = vmatprep.subr.bf16.mxu0 0
    %2532 = vmatpush1.bf16.msra.mxu0 0
    %2533 = vmatprep.subr.bf16.mxu0 0
    %2534 = vmatpush1.bf16.msra.mxu0 0
    %2535 = vmatprep.subr.bf16.mxu0 0
    %2536 = vmatpush1.bf16.msra.mxu0 0
    %2537 = vmatprep.subr.bf16.mxu0 0
    %2538 = vmatpush1.bf16.msra.mxu0 0
    %2539 = vmatprep.subr.bf16.mxu0 0
    %2540 = vmatpush1.bf16.msra.mxu0 0
    %2541 = vmatprep.subr.bf16.mxu0 0
    %2542 = vmatpush1.bf16.msra.mxu0 0
    %2543 = vmatprep.subr.bf16.mxu0 0
    %2544 = vmatpush1.bf16.msra.mxu0 0
    %2545 = vmatprep.subr.bf16.mxu0 0
    %2546 = vmatpush1.bf16.msra.mxu0 0
    %2547 = vmatprep.mubr.bf16.mxu0 0
    %2548 = vmatmul.mubr.bf16.gmra.mrb[0].mxu0 %v2322
    %v2549 = vpop.f32.mrb[0].mxu0
    %v2550 = vadd.f32 0.0, %v2549
    %v2551 = vpop.f32.mrb[0].mxu0
    %v2552 = vadd.f32 0.0, %v2551
    %v2553 = vpop.f32.mrb[0].mxu0
    %v2554 = vpop.f32.mrb[0].mxu0
    %2555 = vdwg.mxu0
    %2556 = vmatprep.subr.bf16.mxu0 %v2454
    %2557 = vmatpush1.bf16.msra.mxu0 %v2453
    %2558 = vmatprep.subr.bf16.mxu0 %v2458
    %2559 = vmatpush1.bf16.msra.mxu0 %v2457
    %2560 = vmatprep.subr.bf16.mxu0 %v2462
    %2561 = vmatpush1.bf16.msra.mxu0 %v2461
    %2562 = vmatprep.subr.bf16.mxu0 %v2466
    %2563 = vmatpush1.bf16.msra.mxu0 %v2465
    %2564 = vmatprep.subr.bf16.mxu0 %v2470
    %2565 = vmatpush1.bf16.msra.mxu0 %v2469
    %2566 = vmatprep.subr.bf16.mxu0 %v2474
    %2567 = vmatpush1.bf16.msra.mxu0 %v2473
    %2568 = vmatprep.subr.bf16.mxu0 %v2478
    %2569 = vmatpush1.bf16.msra.mxu0 %v2477
    %2570 = vmatprep.subr.bf16.mxu0 %v2482
    %2571 = vmatpush1.bf16.msra.mxu0 %v2481
    %2572 = vmatprep.subr.bf16.mxu0 0
    %2573 = vmatpush1.bf16.msra.mxu0 0
    %2574 = vmatprep.subr.bf16.mxu0 0
    %2575 = vmatpush1.bf16.msra.mxu0 0
    %2576 = vmatprep.subr.bf16.mxu0 0
    %2577 = vmatpush1.bf16.msra.mxu0 0
    %2578 = vmatprep.subr.bf16.mxu0 0
    %2579 = vmatpush1.bf16.msra.mxu0 0
    %2580 = vmatprep.subr.bf16.mxu0 0
    %2581 = vmatpush1.bf16.msra.mxu0 0
    %2582 = vmatprep.subr.bf16.mxu0 0
    %2583 = vmatpush1.bf16.msra.mxu0 0
    %2584 = vmatprep.subr.bf16.mxu0 0
    %2585 = vmatpush1.bf16.msra.mxu0 0
    %2586 = vmatprep.subr.bf16.mxu0 0
    %2587 = vmatpush1.bf16.msra.mxu0 0
    %2588 = vmatprep.mubr.bf16.mxu0 0
    %2589 = vmatmul.mubr.bf16.gmra.mrb[0].mxu0 %v2322
    %v2590 = vpop.f32.mrb[0].mxu0
    %v2591 = vadd.f32 0.0, %v2590
    %v2592 = vpop.f32.mrb[0].mxu0
    %v2593 = vadd.f32 0.0, %v2592
    %v2594 = vpop.f32.mrb[0].mxu0
    %v2595 = vpop.f32.mrb[0].mxu0
    %2596 = vdwg.mxu0
    %v2601 = vcombine.low %v2550, %v2552
    %v2602 = vcombine.low %v2591, %v2593
    %v2604 = vunpack.c.l.s4 1983009808
    %v2605 = vunpack.c.0.s8 %v2604
    %v2606 = vlaneseq
    %v2607 = vshrl.u32 %v2606, 7
    %v2608 = vsub.s32 %v2605, %v2607
    %v2609 = vrot.slane %v2601, %v2608
    %v2611 = vunpack.c.l.s4 1983009808
    %v2612 = vunpack.c.0.s8 %v2611
    %v2613 = vlaneseq
    %v2614 = vshrl.u32 %v2613, 7
    %v2615 = vsub.s32 %v2612, %v2614
    %v2616 = vrot.slane %v2602, %v2615
    %v2617 = vcombine.low %v2609, %v2616
    %v2619 = vadd.f32 %v2321, %v2617
    %v2620 = vxor.u32 %v2320, 2147483648
    %v2621 = vmul.f32 %v2620, 1.442695
    %v2622 = vpow.pop %v2621
    %v2623 = vadd.f32 %v2622, 1.0
    %v2624 = vrcp.pop %v2623
    %v2625 = vmul.f32 1.0, %v2624
    %v2627 = vrot.slane %v2320, 2
    %v2629 = vxor.u32 %v2627, 2147483648
    %v2630 = vmul.f32 %v2629, 1.442695
    %v2631 = vpow.pop %v2630
    %v2632 = vadd.f32 %v2631, 1.0
    %v2633 = vrcp.pop %v2632
    %v2634 = vmul.f32 1.0, %v2633
    %v2635 = vrot.slane %v2320, 4
    %v2637 = vtanh.pop %v2635
    %v2638 = vrot.slane %v2320, 6
    %v2640 = vxor.u32 %v2638, 2147483648
    %v2641 = vmul.f32 %v2640, 1.442695
    %v2642 = vpow.pop %v2641
    %v2643 = vadd.f32 %v2642, 1.0
    %v2644 = vrcp.pop %v2643
    %v2645 = vmul.f32 1.0, %v2644
    %v2646 = vxor.u32 %v2619, 2147483648
    %v2647 = vmul.f32 %v2646, 1.442695
    %v2648 = vpow.pop %v2647
    %v2649 = vadd.f32 %v2648, 1.0
    %v2650 = vrcp.pop %v2649
    %v2651 = vmul.f32 1.0, %v2650
    %v2653 = vrot.slane %v2619, 2
    %v2655 = vxor.u32 %v2653, 2147483648
    %v2656 = vmul.f32 %v2655, 1.442695
    %v2657 = vpow.pop %v2656
    %v2658 = vadd.f32 %v2657, 1.0
    %v2659 = vrcp.pop %v2658
    %v2660 = vmul.f32 1.0, %v2659
    %v2661 = vrot.slane %v2619, 4
    %v2663 = vtanh.pop %v2661
    %v2664 = vrot.slane %v2619, 6
    %v2666 = vxor.u32 %v2664, 2147483648
    %v2667 = vmul.f32 %v2666, 1.442695
    %v2668 = vpow.pop %v2667
    %v2669 = vadd.f32 %v2668, 1.0
    %v2670 = vrcp.pop %v2669
    %v2671 = vmul.f32 1.0, %v2670
    %v2672 = vmul.f32 %v2634, %v2019
    %v2673 = vmul.f32 %v2625, %v2637
    %v2674 = vadd.f32 %v2672, %v2673
    %v2675 = vmul.f32 %v2660, %v2021
    %v2676 = vmul.f32 %v2651, %v2663
    %v2677 = vadd.f32 %v2675, %v2676
    %v2678 = vtanh.pop %v2674
    %v2679 = vmul.f32 %v2645, %v2678
    %v2680 = vtanh.pop %v2677
    %v2681 = vmul.f32 %v2671, %v2680
    %s2682 = sadd.s32 %s624, 2
    %v2683 = vstv %s2682
    %vm2684 = vcmp.lt.s32.totalorder %v2683, %v623
    %s2685 = sadd.s32 %s626, 5
    %v2686 = vstv %s2685
    %vm2687 = vcmp.lt.s32.totalorder %v2686, %v623
    %v2688 = vsel %vm2684, 1, 0
    %2689 = vset.pattern.permute.xlu0 0
    %2690 = vperm.xlu0 %2689, %v2688
    %v2691 = vpop.permute.xlu0 %2690
    %vm2692 = vcmp.eq.s32.totalorder %v2691, 1
    %v2693 = vsel %vm2692, %v2674, %v2019
    %2694 = vst [vmem:[#allocation5] sm:$0x3] %v2693
    %v2695 = vsel %vm2692, %v2679, %v2018
    %2696 = vst [vmem:[#allocation4] sm:$0x3] %v2695
    %v2697 = vsel %vm2687, 1, 0
    %2698 = vset.pattern.permute.xlu0 0
    %2699 = vperm.xlu0 %2698, %v2697
    %v2700 = vpop.permute.xlu0 %2699
    %vm2701 = vcmp.eq.s32.totalorder %v2700, 1
    %v2702 = vsel %vm2701, %v2677, %v2021
    %2703 = vst [vmem:[#allocation7] sm:$0x3] %v2702
    %v2704 = vsel %vm2701, %v2681, %v2020
    %2705 = vst [vmem:[#allocation6] sm:$0x3] %v2704
    %v2706 = vsel %vm2692, %v2679, 0.0
    %v2707 = vpack.c.bf16 %v2706, %v2706
    %s2708 = scalar_lea.vmem %s6, 2
    %2709 = vst [vmem:[%s2708] sm:$0x1] %v2707
    %v2710 = vsel %vm2701, %v2681, 0.0
    %v2711 = vpack.c.bf16 %v2710, %v2710
    %s2712 = scalar_lea.vmem %s70, 5
    %2713 = vst [vmem:[%s2712] sm:$0x1] %v2711
    %v2714 = vld [vmem:[#allocation4] sm:$0x3]
    %v2715 = vld [vmem:[#allocation5] sm:$0x3]
    %v2716 = vld [vmem:[#allocation6] sm:$0x3]
    %v2717 = vld [vmem:[#allocation7] sm:$0x3]
    %v2718 = vld [vmem:[%s513] sm:$0xff]
    %v2719 = vpack.c.bf16 %v2714, %v2714
    %v2720 = vld [vmem:[#allocation8] sm:$0xff]
    %v2721 = vld [vmem:[#allocation8 + $0x8] sm:$0xff]
    %v2722 = vld [vmem:[#allocation8 + $0x10] sm:$0xff]
    %v2723 = vld [vmem:[#allocation8 + $0x18] sm:$0xff]
    %v2724 = vld [vmem:[#allocation8 + $0x20] sm:$0xff]
    %v2725 = vld [vmem:[#allocation8 + $0x28] sm:$0xff]
    %v2726 = vld [vmem:[#allocation8 + $0x30] sm:$0xff]
    %v2727 = vld [vmem:[#allocation8 + $0x38] sm:$0xff]
    %v2728 = vld [vmem:[#allocation8 + $0x40] sm:$0xff]
    %v2729 = vld [vmem:[#allocation8 + $0x48] sm:$0xff]
    %v2730 = vld [vmem:[#allocation8 + $0x50] sm:$0xff]
    %v2731 = vld [vmem:[#allocation8 + $0x58] sm:$0xff]
    %v2732 = vld [vmem:[#allocation8 + $0x60] sm:$0xff]
    %v2733 = vld [vmem:[#allocation8 + $0x68] sm:$0xff]
    %v2734 = vld [vmem:[#allocation8 + $0x70] sm:$0xff]
    %v2735 = vld [vmem:[#allocation8 + $0x78] sm:$0xff]
    %v2736 = vld [vmem:[#allocation8 + $0x80] sm:$0xff]
    %v2737 = vld [vmem:[#allocation8 + $0x88] sm:$0xff]
    %v2738 = vld [vmem:[#allocation8 + $0x90] sm:$0xff]
    %v2739 = vld [vmem:[#allocation8 + $0x98] sm:$0xff]
    %v2740 = vld [vmem:[#allocation8 + $0xa0] sm:$0xff]
    %v2741 = vld [vmem:[#allocation8 + $0xa8] sm:$0xff]
    %v2742 = vld [vmem:[#allocation8 + $0xb0] sm:$0xff]
    %v2743 = vld [vmem:[#allocation8 + $0xb8] sm:$0xff]
    %v2744 = vld [vmem:[#allocation8 + $0xc0] sm:$0xff]
    %v2745 = vld [vmem:[#allocation8 + $0xc8] sm:$0xff]
    %v2746 = vld [vmem:[#allocation8 + $0xd0] sm:$0xff]
    %v2747 = vld [vmem:[#allocation8 + $0xd8] sm:$0xff]
    %v2748 = vld [vmem:[#allocation8 + $0xe0] sm:$0xff]
    %v2749 = vld [vmem:[#allocation8 + $0xe8] sm:$0xff]
    %v2750 = vld [vmem:[#allocation8 + $0xf0] sm:$0xff]
    %v2751 = vld [vmem:[#allocation8 + $0xf8] sm:$0xff]
    %v2784 = vunpack.c.l.b16 %v2720
    %v2785 = vunpack.c.h.b16 %v2720
    %v2786 = vunpack.c.l.b16 %v2721
    %v2787 = vunpack.c.h.b16 %v2721
    %v2788 = vunpack.c.l.b16 %v2722
    %v2789 = vunpack.c.h.b16 %v2722
    %v2790 = vunpack.c.l.b16 %v2723
    %v2791 = vunpack.c.h.b16 %v2723
    %v2792 = vunpack.c.l.b16 %v2724
    %v2793 = vunpack.c.h.b16 %v2724
    %v2794 = vunpack.c.l.b16 %v2725
    %v2795 = vunpack.c.h.b16 %v2725
    %v2796 = vunpack.c.l.b16 %v2726
    %v2797 = vunpack.c.h.b16 %v2726
    %v2798 = vunpack.c.l.b16 %v2727
    %v2799 = vunpack.c.h.b16 %v2727
    %v2800 = vunpack.c.l.b16 %v2728
    %v2801 = vunpack.c.h.b16 %v2728
    %v2802 = vunpack.c.l.b16 %v2729
    %v2803 = vunpack.c.h.b16 %v2729
    %v2804 = vunpack.c.l.b16 %v2730
    %v2805 = vunpack.c.h.b16 %v2730
    %v2806 = vunpack.c.l.b16 %v2731
    %v2807 = vunpack.c.h.b16 %v2731
    %v2808 = vunpack.c.l.b16 %v2732
    %v2809 = vunpack.c.h.b16 %v2732
    %v2810 = vunpack.c.l.b16 %v2733
    %v2811 = vunpack.c.h.b16 %v2733
    %v2812 = vunpack.c.l.b16 %v2734
    %v2813 = vunpack.c.h.b16 %v2734
    %v2814 = vunpack.c.l.b16 %v2735
    %v2815 = vunpack.c.h.b16 %v2735
    %v2816 = vunpack.c.l.b16 %v2736
    %v2817 = vunpack.c.h.b16 %v2736
    %v2818 = vunpack.c.l.b16 %v2737
    %v2819 = vunpack.c.h.b16 %v2737
    %v2820 = vunpack.c.l.b16 %v2738
    %v2821 = vunpack.c.h.b16 %v2738
    %v2822 = vunpack.c.l.b16 %v2739
    %v2823 = vunpack.c.h.b16 %v2739
    %v2824 = vunpack.c.l.b16 %v2740
    %v2825 = vunpack.c.h.b16 %v2740
    %v2826 = vunpack.c.l.b16 %v2741
    %v2827 = vunpack.c.h.b16 %v2741
    %v2828 = vunpack.c.l.b16 %v2742
    %v2829 = vunpack.c.h.b16 %v2742
    %v2830 = vunpack.c.l.b16 %v2743
    %v2831 = vunpack.c.h.b16 %v2743
    %v2832 = vunpack.c.l.b16 %v2744
    %v2833 = vunpack.c.h.b16 %v2744
    %v2834 = vunpack.c.l.b16 %v2745
    %v2835 = vunpack.c.h.b16 %v2745
    %v2836 = vunpack.c.l.b16 %v2746
    %v2837 = vunpack.c.h.b16 %v2746
    %v2838 = vunpack.c.l.b16 %v2747
    %v2839 = vunpack.c.h.b16 %v2747
    %v2840 = vunpack.c.l.b16 %v2748
    %v2841 = vunpack.c.h.b16 %v2748
    %v2842 = vunpack.c.l.b16 %v2749
    %v2843 = vunpack.c.h.b16 %v2749
    %v2844 = vunpack.c.l.b16 %v2750
    %v2845 = vunpack.c.h.b16 %v2750
    %v2846 = vunpack.c.l.b16 %v2751
    %v2847 = vunpack.c.h.b16 %v2751
    %v2848 = vpack.c.b16 %v2788, %v2784
    %v2849 = vpack.c.b16 %v2789, %v2785
    %v2850 = vpack.c.b16 %v2790, %v2786
    %v2851 = vpack.c.b16 %v2791, %v2787
    %v2852 = vpack.c.b16 %v2796, %v2792
    %v2853 = vpack.c.b16 %v2797, %v2793
    %v2854 = vpack.c.b16 %v2798, %v2794
    %v2855 = vpack.c.b16 %v2799, %v2795
    %v2856 = vpack.c.b16 %v2804, %v2800
    %v2857 = vpack.c.b16 %v2805, %v2801
    %v2858 = vpack.c.b16 %v2806, %v2802
    %v2859 = vpack.c.b16 %v2807, %v2803
    %v2860 = vpack.c.b16 %v2812, %v2808
    %v2861 = vpack.c.b16 %v2813, %v2809
    %v2862 = vpack.c.b16 %v2814, %v2810
    %v2863 = vpack.c.b16 %v2815, %v2811
    %v2864 = vpack.c.b16 %v2820, %v2816
    %v2865 = vpack.c.b16 %v2821, %v2817
    %v2866 = vpack.c.b16 %v2822, %v2818
    %v2867 = vpack.c.b16 %v2823, %v2819
    %v2868 = vpack.c.b16 %v2828, %v2824
    %v2869 = vpack.c.b16 %v2829, %v2825
    %v2870 = vpack.c.b16 %v2830, %v2826
    %v2871 = vpack.c.b16 %v2831, %v2827
    %v2872 = vpack.c.b16 %v2836, %v2832
    %v2873 = vpack.c.b16 %v2837, %v2833
    %v2874 = vpack.c.b16 %v2838, %v2834
    %v2875 = vpack.c.b16 %v2839, %v2835
    %v2876 = vpack.c.b16 %v2844, %v2840
    %v2877 = vpack.c.b16 %v2845, %v2841
    %v2878 = vpack.c.b16 %v2846, %v2842
    %v2879 = vpack.c.b16 %v2847, %v2843
    %2912 = vmatprep.subr.bf16.mxu0 %v2849
    %2913 = vmatpush1.bf16.msra.mxu0 %v2848
    %2914 = vmatprep.subr.bf16.mxu0 %v2853
    %2915 = vmatpush1.bf16.msra.mxu0 %v2852
    %2916 = vmatprep.subr.bf16.mxu0 %v2857
    %2917 = vmatpush1.bf16.msra.mxu0 %v2856
    %2918 = vmatprep.subr.bf16.mxu0 %v2861
    %2919 = vmatpush1.bf16.msra.mxu0 %v2860
    %2920 = vmatprep.subr.bf16.mxu0 %v2865
    %2921 = vmatpush1.bf16.msra.mxu0 %v2864
    %2922 = vmatprep.subr.bf16.mxu0 %v2869
    %2923 = vmatpush1.bf16.msra.mxu0 %v2868
    %2924 = vmatprep.subr.bf16.mxu0 %v2873
    %2925 = vmatpush1.bf16.msra.mxu0 %v2872
    %2926 = vmatprep.subr.bf16.mxu0 %v2877
    %2927 = vmatpush1.bf16.msra.mxu0 %v2876
    %2928 = vmatprep.subr.bf16.mxu0 0
    %2929 = vmatpush1.bf16.msra.mxu0 0
    %2930 = vmatprep.subr.bf16.mxu0 0
    %2931 = vmatpush1.bf16.msra.mxu0 0
    %2932 = vmatprep.subr.bf16.mxu0 0
    %2933 = vmatpush1.bf16.msra.mxu0 0
    %2934 = vmatprep.subr.bf16.mxu0 0
    %2935 = vmatpush1.bf16.msra.mxu0 0
    %2936 = vmatprep.subr.bf16.mxu0 0
    %2937 = vmatpush1.bf16.msra.mxu0 0
    %2938 = vmatprep.subr.bf16.mxu0 0
    %2939 = vmatpush1.bf16.msra.mxu0 0
    %2940 = vmatprep.subr.bf16.mxu0 0
    %2941 = vmatpush1.bf16.msra.mxu0 0
    %2942 = vmatprep.subr.bf16.mxu0 0
    %2943 = vmatpush1.bf16.msra.mxu0 0
    %2944 = vmatprep.mubr.bf16.mxu0 0
    %2945 = vmatmul.mubr.bf16.gmra.mrb[0].mxu0 %v2719
    %v2946 = vpop.f32.mrb[0].mxu0
    %v2947 = vadd.f32 0.0, %v2946
    %v2948 = vpop.f32.mrb[0].mxu0
    %v2949 = vadd.f32 0.0, %v2948
    %v2950 = vpop.f32.mrb[0].mxu0
    %v2951 = vpop.f32.mrb[0].mxu0
    %2952 = vdwg.mxu0
    %2953 = vmatprep.subr.bf16.mxu0 %v2851
    %2954 = vmatpush1.bf16.msra.mxu0 %v2850
    %2955 = vmatprep.subr.bf16.mxu0 %v2855
    %2956 = vmatpush1.bf16.msra.mxu0 %v2854
    %2957 = vmatprep.subr.bf16.mxu0 %v2859
    %2958 = vmatpush1.bf16.msra.mxu0 %v2858
    %2959 = vmatprep.subr.bf16.mxu0 %v2863
    %2960 = vmatpush1.bf16.msra.mxu0 %v2862
    %2961 = vmatprep.subr.bf16.mxu0 %v2867
    %2962 = vmatpush1.bf16.msra.mxu0 %v2866
    %2963 = vmatprep.subr.bf16.mxu0 %v2871
    %2964 = vmatpush1.bf16.msra.mxu0 %v2870
    %2965 = vmatprep.subr.bf16.mxu0 %v2875
    %2966 = vmatpush1.bf16.msra.mxu0 %v2874
    %2967 = vmatprep.subr.bf16.mxu0 %v2879
    %2968 = vmatpush1.bf16.msra.mxu0 %v2878
    %2969 = vmatprep.subr.bf16.mxu0 0
    %2970 = vmatpush1.bf16.msra.mxu0 0
    %2971 = vmatprep.subr.bf16.mxu0 0
    %2972 = vmatpush1.bf16.msra.mxu0 0
    %2973 = vmatprep.subr.bf16.mxu0 0
    %2974 = vmatpush1.bf16.msra.mxu0 0
    %2975 = vmatprep.subr.bf16.mxu0 0
    %2976 = vmatpush1.bf16.msra.mxu0 0
    %2977 = vmatprep.subr.bf16.mxu0 0
    %2978 = vmatpush1.bf16.msra.mxu0 0
    %2979 = vmatprep.subr.bf16.mxu0 0
    %2980 = vmatpush1.bf16.msra.mxu0 0
    %2981 = vmatprep.subr.bf16.mxu0 0
    %2982 = vmatpush1.bf16.msra.mxu0 0
    %2983 = vmatprep.subr.bf16.mxu0 0
    %2984 = vmatpush1.bf16.msra.mxu0 0
    %2985 = vmatprep.mubr.bf16.mxu0 0
    %2986 = vmatmul.mubr.bf16.gmra.mrb[0].mxu0 %v2719
    %v2987 = vpop.f32.mrb[0].mxu0
    %v2988 = vadd.f32 0.0, %v2987
    %v2989 = vpop.f32.mrb[0].mxu0
    %v2990 = vadd.f32 0.0, %v2989
    %v2991 = vpop.f32.mrb[0].mxu0
    %v2992 = vpop.f32.mrb[0].mxu0
    %2993 = vdwg.mxu0
    %v2998 = vcombine.low %v2947, %v2949
    %v2999 = vcombine.low %v2988, %v2990
    %v3001 = vunpack.c.l.s4 1983009808
    %v3002 = vunpack.c.0.s8 %v3001
    %v3003 = vlaneseq
    %v3004 = vshrl.u32 %v3003, 7
    %v3005 = vsub.s32 %v3002, %v3004
    %v3006 = vrot.slane %v2998, %v3005
    %v3008 = vunpack.c.l.s4 1983009808
    %v3009 = vunpack.c.0.s8 %v3008
    %v3010 = vlaneseq
    %v3011 = vshrl.u32 %v3010, 7
    %v3012 = vsub.s32 %v3009, %v3011
    %v3013 = vrot.slane %v2999, %v3012
    %v3014 = vcombine.low %v3006, %v3013
    %v3016 = vadd.f32 %v2718, %v3014
    %v3017 = vld [vmem:[%s565] sm:$0xff]
    %v3018 = vpack.c.bf16 %v2716, %v2716
    %v3019 = vld [vmem:[%s932] sm:$0xff]
    %v3020 = vld [vmem:[%s932 + $0x8] sm:$0xff]
    %v3021 = vld [vmem:[%s932 + $0x10] sm:$0xff]
    %v3022 = vld [vmem:[%s932 + $0x18] sm:$0xff]
    %v3023 = vld [vmem:[%s932 + $0x20] sm:$0xff]
    %v3024 = vld [vmem:[%s932 + $0x28] sm:$0xff]
    %v3025 = vld [vmem:[%s932 + $0x30] sm:$0xff]
    %v3026 = vld [vmem:[%s932 + $0x38] sm:$0xff]
    %v3027 = vld [vmem:[%s932 + $0x40] sm:$0xff]
    %v3028 = vld [vmem:[%s932 + $0x48] sm:$0xff]
    %v3029 = vld [vmem:[%s932 + $0x50] sm:$0xff]
    %v3030 = vld [vmem:[%s932 + $0x58] sm:$0xff]
    %v3031 = vld [vmem:[%s932 + $0x60] sm:$0xff]
    %v3032 = vld [vmem:[%s932 + $0x68] sm:$0xff]
    %v3033 = vld [vmem:[%s932 + $0x70] sm:$0xff]
    %v3034 = vld [vmem:[%s932 + $0x78] sm:$0xff]
    %v3035 = vld [vmem:[%s932 + $0x80] sm:$0xff]
    %v3036 = vld [vmem:[%s932 + $0x88] sm:$0xff]
    %v3037 = vld [vmem:[%s932 + $0x90] sm:$0xff]
    %v3038 = vld [vmem:[%s932 + $0x98] sm:$0xff]
    %v3039 = vld [vmem:[%s932 + $0xa0] sm:$0xff]
    %v3040 = vld [vmem:[%s932 + $0xa8] sm:$0xff]
    %v3041 = vld [vmem:[%s932 + $0xb0] sm:$0xff]
    %v3042 = vld [vmem:[%s932 + $0xb8] sm:$0xff]
    %v3043 = vld [vmem:[%s932 + $0xc0] sm:$0xff]
    %v3044 = vld [vmem:[%s932 + $0xc8] sm:$0xff]
    %v3045 = vld [vmem:[%s932 + $0xd0] sm:$0xff]
    %v3046 = vld [vmem:[%s932 + $0xd8] sm:$0xff]
    %v3047 = vld [vmem:[%s932 + $0xe0] sm:$0xff]
    %v3048 = vld [vmem:[%s932 + $0xe8] sm:$0xff]
    %v3049 = vld [vmem:[%s932 + $0xf0] sm:$0xff]
    %v3050 = vld [vmem:[%s932 + $0xf8] sm:$0xff]
    %v3083 = vunpack.c.l.b16 %v3019
    %v3084 = vunpack.c.h.b16 %v3019
    %v3085 = vunpack.c.l.b16 %v3020
    %v3086 = vunpack.c.h.b16 %v3020
    %v3087 = vunpack.c.l.b16 %v3021
    %v3088 = vunpack.c.h.b16 %v3021
    %v3089 = vunpack.c.l.b16 %v3022
    %v3090 = vunpack.c.h.b16 %v3022
    %v3091 = vunpack.c.l.b16 %v3023
    %v3092 = vunpack.c.h.b16 %v3023
    %v3093 = vunpack.c.l.b16 %v3024
    %v3094 = vunpack.c.h.b16 %v3024
    %v3095 = vunpack.c.l.b16 %v3025
    %v3096 = vunpack.c.h.b16 %v3025
    %v3097 = vunpack.c.l.b16 %v3026
    %v3098 = vunpack.c.h.b16 %v3026
    %v3099 = vunpack.c.l.b16 %v3027
    %v3100 = vunpack.c.h.b16 %v3027
    %v3101 = vunpack.c.l.b16 %v3028
    %v3102 = vunpack.c.h.b16 %v3028
    %v3103 = vunpack.c.l.b16 %v3029
    %v3104 = vunpack.c.h.b16 %v3029
    %v3105 = vunpack.c.l.b16 %v3030
    %v3106 = vunpack.c.h.b16 %v3030
    %v3107 = vunpack.c.l.b16 %v3031
    %v3108 = vunpack.c.h.b16 %v3031
    %v3109 = vunpack.c.l.b16 %v3032
    %v3110 = vunpack.c.h.b16 %v3032
    %v3111 = vunpack.c.l.b16 %v3033
    %v3112 = vunpack.c.h.b16 %v3033
    %v3113 = vunpack.c.l.b16 %v3034
    %v3114 = vunpack.c.h.b16 %v3034
    %v3115 = vunpack.c.l.b16 %v3035
    %v3116 = vunpack.c.h.b16 %v3035
    %v3117 = vunpack.c.l.b16 %v3036
    %v3118 = vunpack.c.h.b16 %v3036
    %v3119 = vunpack.c.l.b16 %v3037
    %v3120 = vunpack.c.h.b16 %v3037
    %v3121 = vunpack.c.l.b16 %v3038
    %v3122 = vunpack.c.h.b16 %v3038
    %v3123 = vunpack.c.l.b16 %v3039
    %v3124 = vunpack.c.h.b16 %v3039
    %v3125 = vunpack.c.l.b16 %v3040
    %v3126 = vunpack.c.h.b16 %v3040
    %v3127 = vunpack.c.l.b16 %v3041
    %v3128 = vunpack.c.h.b16 %v3041
    %v3129 = vunpack.c.l.b16 %v3042
    %v3130 = vunpack.c.h.b16 %v3042
    %v3131 = vunpack.c.l.b16 %v3043
    %v3132 = vunpack.c.h.b16 %v3043
    %v3133 = vunpack.c.l.b16 %v3044
    %v3134 = vunpack.c.h.b16 %v3044
    %v3135 = vunpack.c.l.b16 %v3045
    %v3136 = vunpack.c.h.b16 %v3045
    %v3137 = vunpack.c.l.b16 %v3046
    %v3138 = vunpack.c.h.b16 %v3046
    %v3139 = vunpack.c.l.b16 %v3047
    %v3140 = vunpack.c.h.b16 %v3047
    %v3141 = vunpack.c.l.b16 %v3048
    %v3142 = vunpack.c.h.b16 %v3048
    %v3143 = vunpack.c.l.b16 %v3049
    %v3144 = vunpack.c.h.b16 %v3049
    %v3145 = vunpack.c.l.b16 %v3050
    %v3146 = vunpack.c.h.b16 %v3050
    %v3147 = vpack.c.b16 %v3087, %v3083
    %v3148 = vpack.c.b16 %v3088, %v3084
    %v3149 = vpack.c.b16 %v3089, %v3085
    %v3150 = vpack.c.b16 %v3090, %v3086
    %v3151 = vpack.c.b16 %v3095, %v3091
    %v3152 = vpack.c.b16 %v3096, %v3092
    %v3153 = vpack.c.b16 %v3097, %v3093
    %v3154 = vpack.c.b16 %v3098, %v3094
    %v3155 = vpack.c.b16 %v3103, %v3099
    %v3156 = vpack.c.b16 %v3104, %v3100
    %v3157 = vpack.c.b16 %v3105, %v3101
    %v3158 = vpack.c.b16 %v3106, %v3102
    %v3159 = vpack.c.b16 %v3111, %v3107
    %v3160 = vpack.c.b16 %v3112, %v3108
    %v3161 = vpack.c.b16 %v3113, %v3109
    %v3162 = vpack.c.b16 %v3114, %v3110
    %v3163 = vpack.c.b16 %v3119, %v3115
    %v3164 = vpack.c.b16 %v3120, %v3116
    %v3165 = vpack.c.b16 %v3121, %v3117
    %v3166 = vpack.c.b16 %v3122, %v3118
    %v3167 = vpack.c.b16 %v3127, %v3123
    %v3168 = vpack.c.b16 %v3128, %v3124
    %v3169 = vpack.c.b16 %v3129, %v3125
    %v3170 = vpack.c.b16 %v3130, %v3126
    %v3171 = vpack.c.b16 %v3135, %v3131
    %v3172 = vpack.c.b16 %v3136, %v3132
    %v3173 = vpack.c.b16 %v3137, %v3133
    %v3174 = vpack.c.b16 %v3138, %v3134
    %v3175 = vpack.c.b16 %v3143, %v3139
    %v3176 = vpack.c.b16 %v3144, %v3140
    %v3177 = vpack.c.b16 %v3145, %v3141
    %v3178 = vpack.c.b16 %v3146, %v3142
    %3211 = vmatprep.subr.bf16.mxu0 %v3148
    %3212 = vmatpush1.bf16.msra.mxu0 %v3147
    %3213 = vmatprep.subr.bf16.mxu0 %v3152
    %3214 = vmatpush1.bf16.msra.mxu0 %v3151
    %3215 = vmatprep.subr.bf16.mxu0 %v3156
    %3216 = vmatpush1.bf16.msra.mxu0 %v3155
    %3217 = vmatprep.subr.bf16.mxu0 %v3160
    %3218 = vmatpush1.bf16.msra.mxu0 %v3159
    %3219 = vmatprep.subr.bf16.mxu0 %v3164
    %3220 = vmatpush1.bf16.msra.mxu0 %v3163
    %3221 = vmatprep.subr.bf16.mxu0 %v3168
    %3222 = vmatpush1.bf16.msra.mxu0 %v3167
    %3223 = vmatprep.subr.bf16.mxu0 %v3172
    %3224 = vmatpush1.bf16.msra.mxu0 %v3171
    %3225 = vmatprep.subr.bf16.mxu0 %v3176
    %3226 = vmatpush1.bf16.msra.mxu0 %v3175
    %3227 = vmatprep.subr.bf16.mxu0 0
    %3228 = vmatpush1.bf16.msra.mxu0 0
    %3229 = vmatprep.subr.bf16.mxu0 0
    %3230 = vmatpush1.bf16.msra.mxu0 0
    %3231 = vmatprep.subr.bf16.mxu0 0
    %3232 = vmatpush1.bf16.msra.mxu0 0
    %3233 = vmatprep.subr.bf16.mxu0 0
    %3234 = vmatpush1.bf16.msra.mxu0 0
    %3235 = vmatprep.subr.bf16.mxu0 0
    %3236 = vmatpush1.bf16.msra.mxu0 0
    %3237 = vmatprep.subr.bf16.mxu0 0
    %3238 = vmatpush1.bf16.msra.mxu0 0
    %3239 = vmatprep.subr.bf16.mxu0 0
    %3240 = vmatpush1.bf16.msra.mxu0 0
    %3241 = vmatprep.subr.bf16.mxu0 0
    %3242 = vmatpush1.bf16.msra.mxu0 0
    %3243 = vmatprep.mubr.bf16.mxu0 0
    %3244 = vmatmul.mubr.bf16.gmra.mrb[0].mxu0 %v3018
    %v3245 = vpop.f32.mrb[0].mxu0
    %v3246 = vadd.f32 0.0, %v3245
    %v3247 = vpop.f32.mrb[0].mxu0
    %v3248 = vadd.f32 0.0, %v3247
    %v3249 = vpop.f32.mrb[0].mxu0
    %v3250 = vpop.f32.mrb[0].mxu0
    %3251 = vdwg.mxu0
    %3252 = vmatprep.subr.bf16.mxu0 %v3150
    %3253 = vmatpush1.bf16.msra.mxu0 %v3149
    %3254 = vmatprep.subr.bf16.mxu0 %v3154
    %3255 = vmatpush1.bf16.msra.mxu0 %v3153
    %3256 = vmatprep.subr.bf16.mxu0 %v3158
    %3257 = vmatpush1.bf16.msra.mxu0 %v3157
    %3258 = vmatprep.subr.bf16.mxu0 %v3162
    %3259 = vmatpush1.bf16.msra.mxu0 %v3161
    %3260 = vmatprep.subr.bf16.mxu0 %v3166
    %3261 = vmatpush1.bf16.msra.mxu0 %v3165
    %3262 = vmatprep.subr.bf16.mxu0 %v3170
    %3263 = vmatpush1.bf16.msra.mxu0 %v3169
    %3264 = vmatprep.subr.bf16.mxu0 %v3174
    %3265 = vmatpush1.bf16.msra.mxu0 %v3173
    %3266 = vmatprep.subr.bf16.mxu0 %v3178
    %3267 = vmatpush1.bf16.msra.mxu0 %v3177
    %3268 = vmatprep.subr.bf16.mxu0 0
    %3269 = vmatpush1.bf16.msra.mxu0 0
    %3270 = vmatprep.subr.bf16.mxu0 0
    %3271 = vmatpush1.bf16.msra.mxu0 0
    %3272 = vmatprep.subr.bf16.mxu0 0
    %3273 = vmatpush1.bf16.msra.mxu0 0
    %3274 = vmatprep.subr.bf16.mxu0 0
    %3275 = vmatpush1.bf16.msra.mxu0 0
    %3276 = vmatprep.subr.bf16.mxu0 0
    %3277 = vmatpush1.bf16.msra.mxu0 0
    %3278 = vmatprep.subr.bf16.mxu0 0
    %3279 = vmatpush1.bf16.msra.mxu0 0
    %3280 = vmatprep.subr.bf16.mxu0 0
    %3281 = vmatpush1.bf16.msra.mxu0 0
    %3282 = vmatprep.subr.bf16.mxu0 0
    %3283 = vmatpush1.bf16.msra.mxu0 0
    %3284 = vmatprep.mubr.bf16.mxu0 0
    %3285 = vmatmul.mubr.bf16.gmra.mrb[0].mxu0 %v3018
    %v3286 = vpop.f32.mrb[0].mxu0
    %v3287 = vadd.f32 0.0, %v3286
    %v3288 = vpop.f32.mrb[0].mxu0
    %v3289 = vadd.f32 0.0, %v3288
    %v3290 = vpop.f32.mrb[0].mxu0
    %v3291 = vpop.f32.mrb[0].mxu0
    %3292 = vdwg.mxu0
    %v3297 = vcombine.low %v3246, %v3248
    %v3298 = vcombine.low %v3287, %v3289
    %v3300 = vunpack.c.l.s4 1983009808
    %v3301 = vunpack.c.0.s8 %v3300
    %v3302 = vlaneseq
    %v3303 = vshrl.u32 %v3302, 7
    %v3304 = vsub.s32 %v3301, %v3303
    %v3305 = vrot.slane %v3297, %v3304
    %v3307 = vunpack.c.l.s4 1983009808
    %v3308 = vunpack.c.0.s8 %v3307
    %v3309 = vlaneseq
    %v3310 = vshrl.u32 %v3309, 7
    %v3311 = vsub.s32 %v3308, %v3310
    %v3312 = vrot.slane %v3298, %v3311
    %v3313 = vcombine.low %v3305, %v3312
    %v3315 = vadd.f32 %v3017, %v3313
    %v3316 = vxor.u32 %v3016, 2147483648
    %v3317 = vmul.f32 %v3316, 1.442695
    %v3318 = vpow.pop %v3317
    %v3319 = vadd.f32 %v3318, 1.0
    %v3320 = vrcp.pop %v3319
    %v3321 = vmul.f32 1.0, %v3320
    %v3323 = vrot.slane %v3016, 2
    %v3325 = vxor.u32 %v3323, 2147483648
    %v3326 = vmul.f32 %v3325, 1.442695
    %v3327 = vpow.pop %v3326
    %v3328 = vadd.f32 %v3327, 1.0
    %v3329 = vrcp.pop %v3328
    %v3330 = vmul.f32 1.0, %v3329
    %v3331 = vrot.slane %v3016, 4
    %v3333 = vtanh.pop %v3331
    %v3334 = vrot.slane %v3016, 6
    %v3336 = vxor.u32 %v3334, 2147483648
    %v3337 = vmul.f32 %v3336, 1.442695
    %v3338 = vpow.pop %v3337
    %v3339 = vadd.f32 %v3338, 1.0
    %v3340 = vrcp.pop %v3339
    %v3341 = vmul.f32 1.0, %v3340
    %v3342 = vxor.u32 %v3315, 2147483648
    %v3343 = vmul.f32 %v3342, 1.442695
    %v3344 = vpow.pop %v3343
    %v3345 = vadd.f32 %v3344, 1.0
    %v3346 = vrcp.pop %v3345
    %v3347 = vmul.f32 1.0, %v3346
    %v3349 = vrot.slane %v3315, 2
    %v3351 = vxor.u32 %v3349, 2147483648
    %v3352 = vmul.f32 %v3351, 1.442695
    %v3353 = vpow.pop %v3352
    %v3354 = vadd.f32 %v3353, 1.0
    %v3355 = vrcp.pop %v3354
    %v3356 = vmul.f32 1.0, %v3355
    %v3357 = vrot.slane %v3315, 4
    %v3359 = vtanh.pop %v3357
    %v3360 = vrot.slane %v3315, 6
    %v3362 = vxor.u32 %v3360, 2147483648
    %v3363 = vmul.f32 %v3362, 1.442695
    %v3364 = vpow.pop %v3363
    %v3365 = vadd.f32 %v3364, 1.0
    %v3366 = vrcp.pop %v3365
    %v3367 = vmul.f32 1.0, %v3366
    %v3368 = vmul.f32 %v3330, %v2715
    %v3369 = vmul.f32 %v3321, %v3333
    %v3370 = vadd.f32 %v3368, %v3369
    %v3371 = vmul.f32 %v3356, %v2717
    %v3372 = vmul.f32 %v3347, %v3359
    %v3373 = vadd.f32 %v3371, %v3372
    %v3374 = vtanh.pop %v3370
    %v3375 = vmul.f32 %v3341, %v3374
    %v3376 = vtanh.pop %v3373
    %v3377 = vmul.f32 %v3367, %v3376
    %s3378 = sadd.s32 %s624, 3
    %v3379 = vstv %s3378
    %vm3380 = vcmp.lt.s32.totalorder %v3379, %v623
    %s3381 = sadd.s32 %s626, 4
    %v3382 = vstv %s3381
    %vm3383 = vcmp.lt.s32.totalorder %v3382, %v623
    %v3384 = vsel %vm3380, 1, 0
    %3385 = vset.pattern.permute.xlu0 0
    %3386 = vperm.xlu0 %3385, %v3384
    %v3387 = vpop.permute.xlu0 %3386
    %vm3388 = vcmp.eq.s32.totalorder %v3387, 1
    %v3389 = vsel %vm3388, %v3370, %v2715
    %3390 = vst [vmem:[#allocation5] sm:$0x3] %v3389
    %v3391 = vsel %vm3388, %v3375, %v2714
    %3392 = vst [vmem:[#allocation4] sm:$0x3] %v3391
    %v3393 = vsel %vm3383, 1, 0
    %3394 = vset.pattern.permute.xlu0 0
    %3395 = vperm.xlu0 %3394, %v3393
    %v3396 = vpop.permute.xlu0 %3395
    %vm3397 = vcmp.eq.s32.totalorder %v3396, 1
    %v3398 = vsel %vm3397, %v3373, %v2717
    %3399 = vst [vmem:[#allocation7] sm:$0x3] %v3398
    %v3400 = vsel %vm3397, %v3377, %v2716
    %3401 = vst [vmem:[#allocation6] sm:$0x3] %v3400
    %v3402 = vsel %vm3388, %v3375, 0.0
    %v3403 = vpack.c.bf16 %v3402, %v3402
    %s3404 = scalar_lea.vmem %s6, 3
    %3405 = vst [vmem:[%s3404] sm:$0x1] %v3403
    %v3406 = vsel %vm3397, %v3377, 0.0
    %v3407 = vpack.c.bf16 %v3406, %v3406
    %s3408 = scalar_lea.vmem %s70, 4
    %3409 = vst [vmem:[%s3408] sm:$0x1] %v3407
    %v3410 = vld [vmem:[#allocation4] sm:$0x3]
    %v3411 = vld [vmem:[#allocation5] sm:$0x3]
    %v3412 = vld [vmem:[#allocation6] sm:$0x3]
    %v3413 = vld [vmem:[#allocation7] sm:$0x3]
    %v3414 = vld [vmem:[%s541] sm:$0xff]
    %v3415 = vpack.c.bf16 %v3410, %v3410
    %v3416 = vld [vmem:[#allocation8] sm:$0xff]
    %v3417 = vld [vmem:[#allocation8 + $0x8] sm:$0xff]
    %v3418 = vld [vmem:[#allocation8 + $0x10] sm:$0xff]
    %v3419 = vld [vmem:[#allocation8 + $0x18] sm:$0xff]
    %v3420 = vld [vmem:[#allocation8 + $0x20] sm:$0xff]
    %v3421 = vld [vmem:[#allocation8 + $0x28] sm:$0xff]
    %v3422 = vld [vmem:[#allocation8 + $0x30] sm:$0xff]
    %v3423 = vld [vmem:[#allocation8 + $0x38] sm:$0xff]
    %v3424 = vld [vmem:[#allocation8 + $0x40] sm:$0xff]
    %v3425 = vld [vmem:[#allocation8 + $0x48] sm:$0xff]
    %v3426 = vld [vmem:[#allocation8 + $0x50] sm:$0xff]
    %v3427 = vld [vmem:[#allocation8 + $0x58] sm:$0xff]
    %v3428 = vld [vmem:[#allocation8 + $0x60] sm:$0xff]
    %v3429 = vld [vmem:[#allocation8 + $0x68] sm:$0xff]
    %v3430 = vld [vmem:[#allocation8 + $0x70] sm:$0xff]
    %v3431 = vld [vmem:[#allocation8 + $0x78] sm:$0xff]
    %v3432 = vld [vmem:[#allocation8 + $0x80] sm:$0xff]
    %v3433 = vld [vmem:[#allocation8 + $0x88] sm:$0xff]
    %v3434 = vld [vmem:[#allocation8 + $0x90] sm:$0xff]
    %v3435 = vld [vmem:[#allocation8 + $0x98] sm:$0xff]
    %v3436 = vld [vmem:[#allocation8 + $0xa0] sm:$0xff]
    %v3437 = vld [vmem:[#allocation8 + $0xa8] sm:$0xff]
    %v3438 = vld [vmem:[#allocation8 + $0xb0] sm:$0xff]
    %v3439 = vld [vmem:[#allocation8 + $0xb8] sm:$0xff]
    %v3440 = vld [vmem:[#allocation8 + $0xc0] sm:$0xff]
    %v3441 = vld [vmem:[#allocation8 + $0xc8] sm:$0xff]
    %v3442 = vld [vmem:[#allocation8 + $0xd0] sm:$0xff]
    %v3443 = vld [vmem:[#allocation8 + $0xd8] sm:$0xff]
    %v3444 = vld [vmem:[#allocation8 + $0xe0] sm:$0xff]
    %v3445 = vld [vmem:[#allocation8 + $0xe8] sm:$0xff]
    %v3446 = vld [vmem:[#allocation8 + $0xf0] sm:$0xff]
    %v3447 = vld [vmem:[#allocation8 + $0xf8] sm:$0xff]
    %v3480 = vunpack.c.l.b16 %v3416
    %v3481 = vunpack.c.h.b16 %v3416
    %v3482 = vunpack.c.l.b16 %v3417
    %v3483 = vunpack.c.h.b16 %v3417
    %v3484 = vunpack.c.l.b16 %v3418
    %v3485 = vunpack.c.h.b16 %v3418
    %v3486 = vunpack.c.l.b16 %v3419
    %v3487 = vunpack.c.h.b16 %v3419
    %v3488 = vunpack.c.l.b16 %v3420
    %v3489 = vunpack.c.h.b16 %v3420
    %v3490 = vunpack.c.l.b16 %v3421
    %v3491 = vunpack.c.h.b16 %v3421
    %v3492 = vunpack.c.l.b16 %v3422
    %v3493 = vunpack.c.h.b16 %v3422
    %v3494 = vunpack.c.l.b16 %v3423
    %v3495 = vunpack.c.h.b16 %v3423
    %v3496 = vunpack.c.l.b16 %v3424
    %v3497 = vunpack.c.h.b16 %v3424
    %v3498 = vunpack.c.l.b16 %v3425
    %v3499 = vunpack.c.h.b16 %v3425
    %v3500 = vunpack.c.l.b16 %v3426
    %v3501 = vunpack.c.h.b16 %v3426
    %v3502 = vunpack.c.l.b16 %v3427
    %v3503 = vunpack.c.h.b16 %v3427
    %v3504 = vunpack.c.l.b16 %v3428
    %v3505 = vunpack.c.h.b16 %v3428
    %v3506 = vunpack.c.l.b16 %v3429
    %v3507 = vunpack.c.h.b16 %v3429
    %v3508 = vunpack.c.l.b16 %v3430
    %v3509 = vunpack.c.h.b16 %v3430
    %v3510 = vunpack.c.l.b16 %v3431
    %v3511 = vunpack.c.h.b16 %v3431
    %v3512 = vunpack.c.l.b16 %v3432
    %v3513 = vunpack.c.h.b16 %v3432
    %v3514 = vunpack.c.l.b16 %v3433
    %v3515 = vunpack.c.h.b16 %v3433
    %v3516 = vunpack.c.l.b16 %v3434
    %v3517 = vunpack.c.h.b16 %v3434
    %v3518 = vunpack.c.l.b16 %v3435
    %v3519 = vunpack.c.h.b16 %v3435
    %v3520 = vunpack.c.l.b16 %v3436
    %v3521 = vunpack.c.h.b16 %v3436
    %v3522 = vunpack.c.l.b16 %v3437
    %v3523 = vunpack.c.h.b16 %v3437
    %v3524 = vunpack.c.l.b16 %v3438
    %v3525 = vunpack.c.h.b16 %v3438
    %v3526 = vunpack.c.l.b16 %v3439
    %v3527 = vunpack.c.h.b16 %v3439
    %v3528 = vunpack.c.l.b16 %v3440
    %v3529 = vunpack.c.h.b16 %v3440
    %v3530 = vunpack.c.l.b16 %v3441
    %v3531 = vunpack.c.h.b16 %v3441
    %v3532 = vunpack.c.l.b16 %v3442
    %v3533 = vunpack.c.h.b16 %v3442
    %v3534 = vunpack.c.l.b16 %v3443
    %v3535 = vunpack.c.h.b16 %v3443
    %v3536 = vunpack.c.l.b16 %v3444
    %v3537 = vunpack.c.h.b16 %v3444
    %v3538 = vunpack.c.l.b16 %v3445
    %v3539 = vunpack.c.h.b16 %v3445
    %v3540 = vunpack.c.l.b16 %v3446
    %v3541 = vunpack.c.h.b16 %v3446
    %v3542 = vunpack.c.l.b16 %v3447
    %v3543 = vunpack.c.h.b16 %v3447
    %v3544 = vpack.c.b16 %v3484, %v3480
    %v3545 = vpack.c.b16 %v3485, %v3481
    %v3546 = vpack.c.b16 %v3486, %v3482
    %v3547 = vpack.c.b16 %v3487, %v3483
    %v3548 = vpack.c.b16 %v3492, %v3488
    %v3549 = vpack.c.b16 %v3493, %v3489
    %v3550 = vpack.c.b16 %v3494, %v3490
    %v3551 = vpack.c.b16 %v3495, %v3491
    %v3552 = vpack.c.b16 %v3500, %v3496
    %v3553 = vpack.c.b16 %v3501, %v3497
    %v3554 = vpack.c.b16 %v3502, %v3498
    %v3555 = vpack.c.b16 %v3503, %v3499
    %v3556 = vpack.c.b16 %v3508, %v3504
    %v3557 = vpack.c.b16 %v3509, %v3505
    %v3558 = vpack.c.b16 %v3510, %v3506
    %v3559 = vpack.c.b16 %v3511, %v3507
    %v3560 = vpack.c.b16 %v3516, %v3512
    %v3561 = vpack.c.b16 %v3517, %v3513
    %v3562 = vpack.c.b16 %v3518, %v3514
    %v3563 = vpack.c.b16 %v3519, %v3515
    %v3564 = vpack.c.b16 %v3524, %v3520
    %v3565 = vpack.c.b16 %v3525, %v3521
    %v3566 = vpack.c.b16 %v3526, %v3522
    %v3567 = vpack.c.b16 %v3527, %v3523
    %v3568 = vpack.c.b16 %v3532, %v3528
    %v3569 = vpack.c.b16 %v3533, %v3529
    %v3570 = vpack.c.b16 %v3534, %v3530
    %v3571 = vpack.c.b16 %v3535, %v3531
    %v3572 = vpack.c.b16 %v3540, %v3536
    %v3573 = vpack.c.b16 %v3541, %v3537
    %v3574 = vpack.c.b16 %v3542, %v3538
    %v3575 = vpack.c.b16 %v3543, %v3539
    %3608 = vmatprep.subr.bf16.mxu0 %v3545
    %3609 = vmatpush1.bf16.msra.mxu0 %v3544
    %3610 = vmatprep.subr.bf16.mxu0 %v3549
    %3611 = vmatpush1.bf16.msra.mxu0 %v3548
    %3612 = vmatprep.subr.bf16.mxu0 %v3553
    %3613 = vmatpush1.bf16.msra.mxu0 %v3552
    %3614 = vmatprep.subr.bf16.mxu0 %v3557
    %3615 = vmatpush1.bf16.msra.mxu0 %v3556
    %3616 = vmatprep.subr.bf16.mxu0 %v3561
    %3617 = vmatpush1.bf16.msra.mxu0 %v3560
    %3618 = vmatprep.subr.bf16.mxu0 %v3565
    %3619 = vmatpush1.bf16.msra.mxu0 %v3564
    %3620 = vmatprep.subr.bf16.mxu0 %v3569
    %3621 = vmatpush1.bf16.msra.mxu0 %v3568
    %3622 = vmatprep.subr.bf16.mxu0 %v3573
    %3623 = vmatpush1.bf16.msra.mxu0 %v3572
    %3624 = vmatprep.subr.bf16.mxu0 0
    %3625 = vmatpush1.bf16.msra.mxu0 0
    %3626 = vmatprep.subr.bf16.mxu0 0
    %3627 = vmatpush1.bf16.msra.mxu0 0
    %3628 = vmatprep.subr.bf16.mxu0 0
    %3629 = vmatpush1.bf16.msra.mxu0 0
    %3630 = vmatprep.subr.bf16.mxu0 0
    %3631 = vmatpush1.bf16.msra.mxu0 0
    %3632 = vmatprep.subr.bf16.mxu0 0
    %3633 = vmatpush1.bf16.msra.mxu0 0
    %3634 = vmatprep.subr.bf16.mxu0 0
    %3635 = vmatpush1.bf16.msra.mxu0 0
    %3636 = vmatprep.subr.bf16.mxu0 0
    %3637 = vmatpush1.bf16.msra.mxu0 0
    %3638 = vmatprep.subr.bf16.mxu0 0
    %3639 = vmatpush1.bf16.msra.mxu0 0
    %3640 = vmatprep.mubr.bf16.mxu0 0
    %3641 = vmatmul.mubr.bf16.gmra.mrb[0].mxu0 %v3415
    %v3642 = vpop.f32.mrb[0].mxu0
    %v3643 = vadd.f32 0.0, %v3642
    %v3644 = vpop.f32.mrb[0].mxu0
    %v3645 = vadd.f32 0.0, %v3644
    %v3646 = vpop.f32.mrb[0].mxu0
    %v3647 = vpop.f32.mrb[0].mxu0
    %3648 = vdwg.mxu0
    %3649 = vmatprep.subr.bf16.mxu0 %v3547
    %3650 = vmatpush1.bf16.msra.mxu0 %v3546
    %3651 = vmatprep.subr.bf16.mxu0 %v3551
    %3652 = vmatpush1.bf16.msra.mxu0 %v3550
    %3653 = vmatprep.subr.bf16.mxu0 %v3555
    %3654 = vmatpush1.bf16.msra.mxu0 %v3554
    %3655 = vmatprep.subr.bf16.mxu0 %v3559
    %3656 = vmatpush1.bf16.msra.mxu0 %v3558
    %3657 = vmatprep.subr.bf16.mxu0 %v3563
    %3658 = vmatpush1.bf16.msra.mxu0 %v3562
    %3659 = vmatprep.subr.bf16.mxu0 %v3567
    %3660 = vmatpush1.bf16.msra.mxu0 %v3566
    %3661 = vmatprep.subr.bf16.mxu0 %v3571
    %3662 = vmatpush1.bf16.msra.mxu0 %v3570
    %3663 = vmatprep.subr.bf16.mxu0 %v3575
    %3664 = vmatpush1.bf16.msra.mxu0 %v3574
    %3665 = vmatprep.subr.bf16.mxu0 0
    %3666 = vmatpush1.bf16.msra.mxu0 0
    %3667 = vmatprep.subr.bf16.mxu0 0
    %3668 = vmatpush1.bf16.msra.mxu0 0
    %3669 = vmatprep.subr.bf16.mxu0 0
    %3670 = vmatpush1.bf16.msra.mxu0 0
    %3671 = vmatprep.subr.bf16.mxu0 0
    %3672 = vmatpush1.bf16.msra.mxu0 0
    %3673 = vmatprep.subr.bf16.mxu0 0
    %3674 = vmatpush1.bf16.msra.mxu0 0
    %3675 = vmatprep.subr.bf16.mxu0 0
    %3676 = vmatpush1.bf16.msra.mxu0 0
    %3677 = vmatprep.subr.bf16.mxu0 0
    %3678 = vmatpush1.bf16.msra.mxu0 0
    %3679 = vmatprep.subr.bf16.mxu0 0
    %3680 = vmatpush1.bf16.msra.mxu0 0
    %3681 = vmatprep.mubr.bf16.mxu0 0
    %3682 = vmatmul.mubr.bf16.gmra.mrb[0].mxu0 %v3415
    %v3683 = vpop.f32.mrb[0].mxu0
    %v3684 = vadd.f32 0.0, %v3683
    %v3685 = vpop.f32.mrb[0].mxu0
    %v3686 = vadd.f32 0.0, %v3685
    %v3687 = vpop.f32.mrb[0].mxu0
    %v3688 = vpop.f32.mrb[0].mxu0
    %3689 = vdwg.mxu0
    %v3694 = vcombine.low %v3643, %v3645
    %v3695 = vcombine.low %v3684, %v3686
    %v3697 = vunpack.c.l.s4 1983009808
    %v3698 = vunpack.c.0.s8 %v3697
    %v3699 = vlaneseq
    %v3700 = vshrl.u32 %v3699, 7
    %v3701 = vsub.s32 %v3698, %v3700
    %v3702 = vrot.slane %v3694, %v3701
    %v3704 = vunpack.c.l.s4 1983009808
    %v3705 = vunpack.c.0.s8 %v3704
    %v3706 = vlaneseq
    %v3707 = vshrl.u32 %v3706, 7
    %v3708 = vsub.s32 %v3705, %v3707
    %v3709 = vrot.slane %v3695, %v3708
    %v3710 = vcombine.low %v3702, %v3709
    %v3712 = vadd.f32 %v3414, %v3710
    %v3713 = vld [vmem:[%s517] sm:$0xff]
    %v3714 = vpack.c.bf16 %v3412, %v3412
    %v3715 = vld [vmem:[%s932] sm:$0xff]
    %v3716 = vld [vmem:[%s932 + $0x8] sm:$0xff]
    %v3717 = vld [vmem:[%s932 + $0x10] sm:$0xff]
    %v3718 = vld [vmem:[%s932 + $0x18] sm:$0xff]
    %v3719 = vld [vmem:[%s932 + $0x20] sm:$0xff]
    %v3720 = vld [vmem:[%s932 + $0x28] sm:$0xff]
    %v3721 = vld [vmem:[%s932 + $0x30] sm:$0xff]
    %v3722 = vld [vmem:[%s932 + $0x38] sm:$0xff]
    %v3723 = vld [vmem:[%s932 + $0x40] sm:$0xff]
    %v3724 = vld [vmem:[%s932 + $0x48] sm:$0xff]
    %v3725 = vld [vmem:[%s932 + $0x50] sm:$0xff]
    %v3726 = vld [vmem:[%s932 + $0x58] sm:$0xff]
    %v3727 = vld [vmem:[%s932 + $0x60] sm:$0xff]
    %v3728 = vld [vmem:[%s932 + $0x68] sm:$0xff]
    %v3729 = vld [vmem:[%s932 + $0x70] sm:$0xff]
    %v3730 = vld [vmem:[%s932 + $0x78] sm:$0xff]
    %v3731 = vld [vmem:[%s932 + $0x80] sm:$0xff]
    %v3732 = vld [vmem:[%s932 + $0x88] sm:$0xff]
    %v3733 = vld [vmem:[%s932 + $0x90] sm:$0xff]
    %v3734 = vld [vmem:[%s932 + $0x98] sm:$0xff]
    %v3735 = vld [vmem:[%s932 + $0xa0] sm:$0xff]
    %v3736 = vld [vmem:[%s932 + $0xa8] sm:$0xff]
    %v3737 = vld [vmem:[%s932 + $0xb0] sm:$0xff]
    %v3738 = vld [vmem:[%s932 + $0xb8] sm:$0xff]
    %v3739 = vld [vmem:[%s932 + $0xc0] sm:$0xff]
    %v3740 = vld [vmem:[%s932 + $0xc8] sm:$0xff]
    %v3741 = vld [vmem:[%s932 + $0xd0] sm:$0xff]
    %v3742 = vld [vmem:[%s932 + $0xd8] sm:$0xff]
    %v3743 = vld [vmem:[%s932 + $0xe0] sm:$0xff]
    %v3744 = vld [vmem:[%s932 + $0xe8] sm:$0xff]
    %v3745 = vld [vmem:[%s932 + $0xf0] sm:$0xff]
    %v3746 = vld [vmem:[%s932 + $0xf8] sm:$0xff]
    %v3779 = vunpack.c.l.b16 %v3715
    %v3780 = vunpack.c.h.b16 %v3715
    %v3781 = vunpack.c.l.b16 %v3716
    %v3782 = vunpack.c.h.b16 %v3716
    %v3783 = vunpack.c.l.b16 %v3717
    %v3784 = vunpack.c.h.b16 %v3717
    %v3785 = vunpack.c.l.b16 %v3718
    %v3786 = vunpack.c.h.b16 %v3718
    %v3787 = vunpack.c.l.b16 %v3719
    %v3788 = vunpack.c.h.b16 %v3719
    %v3789 = vunpack.c.l.b16 %v3720
    %v3790 = vunpack.c.h.b16 %v3720
    %v3791 = vunpack.c.l.b16 %v3721
    %v3792 = vunpack.c.h.b16 %v3721
    %v3793 = vunpack.c.l.b16 %v3722
    %v3794 = vunpack.c.h.b16 %v3722
    %v3795 = vunpack.c.l.b16 %v3723
    %v3796 = vunpack.c.h.b16 %v3723
    %v3797 = vunpack.c.l.b16 %v3724
    %v3798 = vunpack.c.h.b16 %v3724
    %v3799 = vunpack.c.l.b16 %v3725
    %v3800 = vunpack.c.h.b16 %v3725
    %v3801 = vunpack.c.l.b16 %v3726
    %v3802 = vunpack.c.h.b16 %v3726
    %v3803 = vunpack.c.l.b16 %v3727
    %v3804 = vunpack.c.h.b16 %v3727
    %v3805 = vunpack.c.l.b16 %v3728
    %v3806 = vunpack.c.h.b16 %v3728
    %v3807 = vunpack.c.l.b16 %v3729
    %v3808 = vunpack.c.h.b16 %v3729
    %v3809 = vunpack.c.l.b16 %v3730
    %v3810 = vunpack.c.h.b16 %v3730
    %v3811 = vunpack.c.l.b16 %v3731
    %v3812 = vunpack.c.h.b16 %v3731
    %v3813 = vunpack.c.l.b16 %v3732
    %v3814 = vunpack.c.h.b16 %v3732
    %v3815 = vunpack.c.l.b16 %v3733
    %v3816 = vunpack.c.h.b16 %v3733
    %v3817 = vunpack.c.l.b16 %v3734
    %v3818 = vunpack.c.h.b16 %v3734
    %v3819 = vunpack.c.l.b16 %v3735
    %v3820 = vunpack.c.h.b16 %v3735
    %v3821 = vunpack.c.l.b16 %v3736
    %v3822 = vunpack.c.h.b16 %v3736
    %v3823 = vunpack.c.l.b16 %v3737
    %v3824 = vunpack.c.h.b16 %v3737
    %v3825 = vunpack.c.l.b16 %v3738
    %v3826 = vunpack.c.h.b16 %v3738
    %v3827 = vunpack.c.l.b16 %v3739
    %v3828 = vunpack.c.h.b16 %v3739
    %v3829 = vunpack.c.l.b16 %v3740
    %v3830 = vunpack.c.h.b16 %v3740
    %v3831 = vunpack.c.l.b16 %v3741
    %v3832 = vunpack.c.h.b16 %v3741
    %v3833 = vunpack.c.l.b16 %v3742
    %v3834 = vunpack.c.h.b16 %v3742
    %v3835 = vunpack.c.l.b16 %v3743
    %v3836 = vunpack.c.h.b16 %v3743
    %v3837 = vunpack.c.l.b16 %v3744
    %v3838 = vunpack.c.h.b16 %v3744
    %v3839 = vunpack.c.l.b16 %v3745
    %v3840 = vunpack.c.h.b16 %v3745
    %v3841 = vunpack.c.l.b16 %v3746
    %v3842 = vunpack.c.h.b16 %v3746
    %v3843 = vpack.c.b16 %v3783, %v3779
    %v3844 = vpack.c.b16 %v3784, %v3780
    %v3845 = vpack.c.b16 %v3785, %v3781
    %v3846 = vpack.c.b16 %v3786, %v3782
    %v3847 = vpack.c.b16 %v3791, %v3787
    %v3848 = vpack.c.b16 %v3792, %v3788
    %v3849 = vpack.c.b16 %v3793, %v3789
    %v3850 = vpack.c.b16 %v3794, %v3790
    %v3851 = vpack.c.b16 %v3799, %v3795
    %v3852 = vpack.c.b16 %v3800, %v3796
    %v3853 = vpack.c.b16 %v3801, %v3797
    %v3854 = vpack.c.b16 %v3802, %v3798
    %v3855 = vpack.c.b16 %v3807, %v3803
    %v3856 = vpack.c.b16 %v3808, %v3804
    %v3857 = vpack.c.b16 %v3809, %v3805
    %v3858 = vpack.c.b16 %v3810, %v3806
    %v3859 = vpack.c.b16 %v3815, %v3811
    %v3860 = vpack.c.b16 %v3816, %v3812
    %v3861 = vpack.c.b16 %v3817, %v3813
    %v3862 = vpack.c.b16 %v3818, %v3814
    %v3863 = vpack.c.b16 %v3823, %v3819
    %v3864 = vpack.c.b16 %v3824, %v3820
    %v3865 = vpack.c.b16 %v3825, %v3821
    %v3866 = vpack.c.b16 %v3826, %v3822
    %v3867 = vpack.c.b16 %v3831, %v3827
    %v3868 = vpack.c.b16 %v3832, %v3828
    %v3869 = vpack.c.b16 %v3833, %v3829
    %v3870 = vpack.c.b16 %v3834, %v3830
    %v3871 = vpack.c.b16 %v3839, %v3835
    %v3872 = vpack.c.b16 %v3840, %v3836
    %v3873 = vpack.c.b16 %v3841, %v3837
    %v3874 = vpack.c.b16 %v3842, %v3838
    %3907 = vmatprep.subr.bf16.mxu0 %v3844
    %3908 = vmatpush1.bf16.msra.mxu0 %v3843
    %3909 = vmatprep.subr.bf16.mxu0 %v3848
    %3910 = vmatpush1.bf16.msra.mxu0 %v3847
    %3911 = vmatprep.subr.bf16.mxu0 %v3852
    %3912 = vmatpush1.bf16.msra.mxu0 %v3851
    %3913 = vmatprep.subr.bf16.mxu0 %v3856
    %3914 = vmatpush1.bf16.msra.mxu0 %v3855
    %3915 = vmatprep.subr.bf16.mxu0 %v3860
    %3916 = vmatpush1.bf16.msra.mxu0 %v3859
    %3917 = vmatprep.subr.bf16.mxu0 %v3864
    %3918 = vmatpush1.bf16.msra.mxu0 %v3863
    %3919 = vmatprep.subr.bf16.mxu0 %v3868
    %3920 = vmatpush1.bf16.msra.mxu0 %v3867
    %3921 = vmatprep.subr.bf16.mxu0 %v3872
    %3922 = vmatpush1.bf16.msra.mxu0 %v3871
    %3923 = vmatprep.subr.bf16.mxu0 0
    %3924 = vmatpush1.bf16.msra.mxu0 0
    %3925 = vmatprep.subr.bf16.mxu0 0
    %3926 = vmatpush1.bf16.msra.mxu0 0
    %3927 = vmatprep.subr.bf16.mxu0 0
    %3928 = vmatpush1.bf16.msra.mxu0 0
    %3929 = vmatprep.subr.bf16.mxu0 0
    %3930 = vmatpush1.bf16.msra.mxu0 0
    %3931 = vmatprep.subr.bf16.mxu0 0
    %3932 = vmatpush1.bf16.msra.mxu0 0
    %3933 = vmatprep.subr.bf16.mxu0 0
    %3934 = vmatpush1.bf16.msra.mxu0 0
    %3935 = vmatprep.subr.bf16.mxu0 0
    %3936 = vmatpush1.bf16.msra.mxu0 0
    %3937 = vmatprep.subr.bf16.mxu0 0
    %3938 = vmatpush1.bf16.msra.mxu0 0
    %3939 = vmatprep.mubr.bf16.mxu0 0
    %3940 = vmatmul.mubr.bf16.gmra.mrb[0].mxu0 %v3714
    %v3941 = vpop.f32.mrb[0].mxu0
    %v3942 = vadd.f32 0.0, %v3941
    %v3943 = vpop.f32.mrb[0].mxu0
    %v3944 = vadd.f32 0.0, %v3943
    %v3945 = vpop.f32.mrb[0].mxu0
    %v3946 = vpop.f32.mrb[0].mxu0
    %3947 = vdwg.mxu0
    %3948 = vmatprep.subr.bf16.mxu0 %v3846
    %3949 = vmatpush1.bf16.msra.mxu0 %v3845
    %3950 = vmatprep.subr.bf16.mxu0 %v3850
    %3951 = vmatpush1.bf16.msra.mxu0 %v3849
    %3952 = vmatprep.subr.bf16.mxu0 %v3854
    %3953 = vmatpush1.bf16.msra.mxu0 %v3853
    %3954 = vmatprep.subr.bf16.mxu0 %v3858
    %3955 = vmatpush1.bf16.msra.mxu0 %v3857
    %3956 = vmatprep.subr.bf16.mxu0 %v3862
    %3957 = vmatpush1.bf16.msra.mxu0 %v3861
    %3958 = vmatprep.subr.bf16.mxu0 %v3866
    %3959 = vmatpush1.bf16.msra.mxu0 %v3865
    %3960 = vmatprep.subr.bf16.mxu0 %v3870
    %3961 = vmatpush1.bf16.msra.mxu0 %v3869
    %3962 = vmatprep.subr.bf16.mxu0 %v3874
    %3963 = vmatpush1.bf16.msra.mxu0 %v3873
    %3964 = vmatprep.subr.bf16.mxu0 0
    %3965 = vmatpush1.bf16.msra.mxu0 0
    %3966 = vmatprep.subr.bf16.mxu0 0
    %3967 = vmatpush1.bf16.msra.mxu0 0
    %3968 = vmatprep.subr.bf16.mxu0 0
    %3969 = vmatpush1.bf16.msra.mxu0 0
    %3970 = vmatprep.subr.bf16.mxu0 0
    %3971 = vmatpush1.bf16.msra.mxu0 0
    %3972 = vmatprep.subr.bf16.mxu0 0
    %3973 = vmatpush1.bf16.msra.mxu0 0
    %3974 = vmatprep.subr.bf16.mxu0 0
    %3975 = vmatpush1.bf16.msra.mxu0 0
    %3976 = vmatprep.subr.bf16.mxu0 0
    %3977 = vmatpush1.bf16.msra.mxu0 0
    %3978 = vmatprep.subr.bf16.mxu0 0
    %3979 = vmatpush1.bf16.msra.mxu0 0
    %3980 = vmatprep.mubr.bf16.mxu0 0
    %3981 = vmatmul.mubr.bf16.gmra.mrb[0].mxu0 %v3714
    %v3982 = vpop.f32.mrb[0].mxu0
    %v3983 = vadd.f32 0.0, %v3982
    %v3984 = vpop.f32.mrb[0].mxu0
    %v3985 = vadd.f32 0.0, %v3984
    %v3986 = vpop.f32.mrb[0].mxu0
    %v3987 = vpop.f32.mrb[0].mxu0
    %3988 = vdwg.mxu0
    %v3993 = vcombine.low %v3942, %v3944
    %v3994 = vcombine.low %v3983, %v3985
    %v3996 = vunpack.c.l.s4 1983009808
    %v3997 = vunpack.c.0.s8 %v3996
    %v3998 = vlaneseq
    %v3999 = vshrl.u32 %v3998, 7
    %v4000 = vsub.s32 %v3997, %v3999
    %v4001 = vrot.slane %v3993, %v4000
    %v4003 = vunpack.c.l.s4 1983009808
    %v4004 = vunpack.c.0.s8 %v4003
    %v4005 = vlaneseq
    %v4006 = vshrl.u32 %v4005, 7
    %v4007 = vsub.s32 %v4004, %v4006
    %v4008 = vrot.slane %v3994, %v4007
    %v4009 = vcombine.low %v4001, %v4008
    %v4011 = vadd.f32 %v3713, %v4009
    %v4012 = vxor.u32 %v3712, 2147483648
    %v4013 = vmul.f32 %v4012, 1.442695
    %v4014 = vpow.pop %v4013
    %v4015 = vadd.f32 %v4014, 1.0
    %v4016 = vrcp.pop %v4015
    %v4017 = vmul.f32 1.0, %v4016
    %v4019 = vrot.slane %v3712, 2
    %v4021 = vxor.u32 %v4019, 2147483648
    %v4022 = vmul.f32 %v4021, 1.442695
    %v4023 = vpow.pop %v4022
    %v4024 = vadd.f32 %v4023, 1.0
    %v4025 = vrcp.pop %v4024
    %v4026 = vmul.f32 1.0, %v4025
    %v4027 = vrot.slane %v3712, 4
    %v4029 = vtanh.pop %v4027
    %v4030 = vrot.slane %v3712, 6
    %v4032 = vxor.u32 %v4030, 2147483648
    %v4033 = vmul.f32 %v4032, 1.442695
    %v4034 = vpow.pop %v4033
    %v4035 = vadd.f32 %v4034, 1.0
    %v4036 = vrcp.pop %v4035
    %v4037 = vmul.f32 1.0, %v4036
    %v4038 = vxor.u32 %v4011, 2147483648
    %v4039 = vmul.f32 %v4038, 1.442695
    %v4040 = vpow.pop %v4039
    %v4041 = vadd.f32 %v4040, 1.0
    %v4042 = vrcp.pop %v4041
    %v4043 = vmul.f32 1.0, %v4042
    %v4045 = vrot.slane %v4011, 2
    %v4047 = vxor.u32 %v4045, 2147483648
    %v4048 = vmul.f32 %v4047, 1.442695
    %v4049 = vpow.pop %v4048
    %v4050 = vadd.f32 %v4049, 1.0
    %v4051 = vrcp.pop %v4050
    %v4052 = vmul.f32 1.0, %v4051
    %v4053 = vrot.slane %v4011, 4
    %v4055 = vtanh.pop %v4053
    %v4056 = vrot.slane %v4011, 6
    %v4058 = vxor.u32 %v4056, 2147483648
    %v4059 = vmul.f32 %v4058, 1.442695
    %v4060 = vpow.pop %v4059
    %v4061 = vadd.f32 %v4060, 1.0
    %v4062 = vrcp.pop %v4061
    %v4063 = vmul.f32 1.0, %v4062
    %v4064 = vmul.f32 %v4026, %v3411
    %v4065 = vmul.f32 %v4017, %v4029
    %v4066 = vadd.f32 %v4064, %v4065
    %v4067 = vmul.f32 %v4052, %v3413
    %v4068 = vmul.f32 %v4043, %v4055
    %v4069 = vadd.f32 %v4067, %v4068
    %v4070 = vtanh.pop %v4066
    %v4071 = vmul.f32 %v4037, %v4070
    %v4072 = vtanh.pop %v4069
    %v4073 = vmul.f32 %v4063, %v4072
    %s4074 = sadd.s32 %s624, 4
    %v4075 = vstv %s4074
    %vm4076 = vcmp.lt.s32.totalorder %v4075, %v623
    %s4077 = sadd.s32 %s626, 3
    %v4078 = vstv %s4077
    %vm4079 = vcmp.lt.s32.totalorder %v4078, %v623
    %v4080 = vsel %vm4076, 1, 0
    %4081 = vset.pattern.permute.xlu0 0
    %4082 = vperm.xlu0 %4081, %v4080
    %v4083 = vpop.permute.xlu0 %4082
    %vm4084 = vcmp.eq.s32.totalorder %v4083, 1
    %v4085 = vsel %vm4084, %v4066, %v3411
    %4086 = vst [vmem:[#allocation5] sm:$0x3] %v4085
    %v4087 = vsel %vm4084, %v4071, %v3410
    %4088 = vst [vmem:[#allocation4] sm:$0x3] %v4087
    %v4089 = vsel %vm4079, 1, 0
    %4090 = vset.pattern.permute.xlu0 0
    %4091 = vperm.xlu0 %4090, %v4089
    %v4092 = vpop.permute.xlu0 %4091
    %vm4093 = vcmp.eq.s32.totalorder %v4092, 1
    %v4094 = vsel %vm4093, %v4069, %v3413
    %4095 = vst [vmem:[#allocation7] sm:$0x3] %v4094
    %v4096 = vsel %vm4093, %v4073, %v3412
    %4097 = vst [vmem:[#allocation6] sm:$0x3] %v4096
    %v4098 = vsel %vm4084, %v4071, 0.0
    %v4099 = vpack.c.bf16 %v4098, %v4098
    %s4100 = scalar_lea.vmem %s6, 4
    %4101 = vst [vmem:[%s4100] sm:$0x1] %v4099
    %v4102 = vsel %vm4093, %v4073, 0.0
    %v4103 = vpack.c.bf16 %v4102, %v4102
    %s4104 = scalar_lea.vmem %s70, 3
    %4105 = vst [vmem:[%s4104] sm:$0x1] %v4103
    %v4106 = vld [vmem:[#allocation4] sm:$0x3]
    %v4107 = vld [vmem:[#allocation5] sm:$0x3]
    %v4108 = vld [vmem:[#allocation6] sm:$0x3]
    %v4109 = vld [vmem:[#allocation7] sm:$0x3]
    %v4110 = vld [vmem:[%s569] sm:$0xff]
    %v4111 = vpack.c.bf16 %v4106, %v4106
    %v4112 = vld [vmem:[#allocation8] sm:$0xff]
    %v4113 = vld [vmem:[#allocation8 + $0x8] sm:$0xff]
    %v4114 = vld [vmem:[#allocation8 + $0x10] sm:$0xff]
    %v4115 = vld [vmem:[#allocation8 + $0x18] sm:$0xff]
    %v4116 = vld [vmem:[#allocation8 + $0x20] sm:$0xff]
    %v4117 = vld [vmem:[#allocation8 + $0x28] sm:$0xff]
    %v4118 = vld [vmem:[#allocation8 + $0x30] sm:$0xff]
    %v4119 = vld [vmem:[#allocation8 + $0x38] sm:$0xff]
    %v4120 = vld [vmem:[#allocation8 + $0x40] sm:$0xff]
    %v4121 = vld [vmem:[#allocation8 + $0x48] sm:$0xff]
    %v4122 = vld [vmem:[#allocation8 + $0x50] sm:$0xff]
    %v4123 = vld [vmem:[#allocation8 + $0x58] sm:$0xff]
    %v4124 = vld [vmem:[#allocation8 + $0x60] sm:$0xff]
    %v4125 = vld [vmem:[#allocation8 + $0x68] sm:$0xff]
    %v4126 = vld [vmem:[#allocation8 + $0x70] sm:$0xff]
    %v4127 = vld [vmem:[#allocation8 + $0x78] sm:$0xff]
    %v4128 = vld [vmem:[#allocation8 + $0x80] sm:$0xff]
    %v4129 = vld [vmem:[#allocation8 + $0x88] sm:$0xff]
    %v4130 = vld [vmem:[#allocation8 + $0x90] sm:$0xff]
    %v4131 = vld [vmem:[#allocation8 + $0x98] sm:$0xff]
    %v4132 = vld [vmem:[#allocation8 + $0xa0] sm:$0xff]
    %v4133 = vld [vmem:[#allocation8 + $0xa8] sm:$0xff]
    %v4134 = vld [vmem:[#allocation8 + $0xb0] sm:$0xff]
    %v4135 = vld [vmem:[#allocation8 + $0xb8] sm:$0xff]
    %v4136 = vld [vmem:[#allocation8 + $0xc0] sm:$0xff]
    %v4137 = vld [vmem:[#allocation8 + $0xc8] sm:$0xff]
    %v4138 = vld [vmem:[#allocation8 + $0xd0] sm:$0xff]
    %v4139 = vld [vmem:[#allocation8 + $0xd8] sm:$0xff]
    %v4140 = vld [vmem:[#allocation8 + $0xe0] sm:$0xff]
    %v4141 = vld [vmem:[#allocation8 + $0xe8] sm:$0xff]
    %v4142 = vld [vmem:[#allocation8 + $0xf0] sm:$0xff]
    %v4143 = vld [vmem:[#allocation8 + $0xf8] sm:$0xff]
    %v4176 = vunpack.c.l.b16 %v4112
    %v4177 = vunpack.c.h.b16 %v4112
    %v4178 = vunpack.c.l.b16 %v4113
    %v4179 = vunpack.c.h.b16 %v4113
    %v4180 = vunpack.c.l.b16 %v4114
    %v4181 = vunpack.c.h.b16 %v4114
    %v4182 = vunpack.c.l.b16 %v4115
    %v4183 = vunpack.c.h.b16 %v4115
    %v4184 = vunpack.c.l.b16 %v4116
    %v4185 = vunpack.c.h.b16 %v4116
    %v4186 = vunpack.c.l.b16 %v4117
    %v4187 = vunpack.c.h.b16 %v4117
    %v4188 = vunpack.c.l.b16 %v4118
    %v4189 = vunpack.c.h.b16 %v4118
    %v4190 = vunpack.c.l.b16 %v4119
    %v4191 = vunpack.c.h.b16 %v4119
    %v4192 = vunpack.c.l.b16 %v4120
    %v4193 = vunpack.c.h.b16 %v4120
    %v4194 = vunpack.c.l.b16 %v4121
    %v4195 = vunpack.c.h.b16 %v4121
    %v4196 = vunpack.c.l.b16 %v4122
    %v4197 = vunpack.c.h.b16 %v4122
    %v4198 = vunpack.c.l.b16 %v4123
    %v4199 = vunpack.c.h.b16 %v4123
    %v4200 = vunpack.c.l.b16 %v4124
    %v4201 = vunpack.c.h.b16 %v4124
    %v4202 = vunpack.c.l.b16 %v4125
    %v4203 = vunpack.c.h.b16 %v4125
    %v4204 = vunpack.c.l.b16 %v4126
    %v4205 = vunpack.c.h.b16 %v4126
    %v4206 = vunpack.c.l.b16 %v4127
    %v4207 = vunpack.c.h.b16 %v4127
    %v4208 = vunpack.c.l.b16 %v4128
    %v4209 = vunpack.c.h.b16 %v4128
    %v4210 = vunpack.c.l.b16 %v4129
    %v4211 = vunpack.c.h.b16 %v4129
    %v4212 = vunpack.c.l.b16 %v4130
    %v4213 = vunpack.c.h.b16 %v4130
    %v4214 = vunpack.c.l.b16 %v4131
    %v4215 = vunpack.c.h.b16 %v4131
    %v4216 = vunpack.c.l.b16 %v4132
    %v4217 = vunpack.c.h.b16 %v4132
    %v4218 = vunpack.c.l.b16 %v4133
    %v4219 = vunpack.c.h.b16 %v4133
    %v4220 = vunpack.c.l.b16 %v4134
    %v4221 = vunpack.c.h.b16 %v4134
    %v4222 = vunpack.c.l.b16 %v4135
    %v4223 = vunpack.c.h.b16 %v4135
    %v4224 = vunpack.c.l.b16 %v4136
    %v4225 = vunpack.c.h.b16 %v4136
    %v4226 = vunpack.c.l.b16 %v4137
    %v4227 = vunpack.c.h.b16 %v4137
    %v4228 = vunpack.c.l.b16 %v4138
    %v4229 = vunpack.c.h.b16 %v4138
    %v4230 = vunpack.c.l.b16 %v4139
    %v4231 = vunpack.c.h.b16 %v4139
    %v4232 = vunpack.c.l.b16 %v4140
    %v4233 = vunpack.c.h.b16 %v4140
    %v4234 = vunpack.c.l.b16 %v4141
    %v4235 = vunpack.c.h.b16 %v4141
    %v4236 = vunpack.c.l.b16 %v4142
    %v4237 = vunpack.c.h.b16 %v4142
    %v4238 = vunpack.c.l.b16 %v4143
    %v4239 = vunpack.c.h.b16 %v4143
    %v4240 = vpack.c.b16 %v4180, %v4176
    %v4241 = vpack.c.b16 %v4181, %v4177
    %v4242 = vpack.c.b16 %v4182, %v4178
    %v4243 = vpack.c.b16 %v4183, %v4179
    %v4244 = vpack.c.b16 %v4188, %v4184
    %v4245 = vpack.c.b16 %v4189, %v4185
    %v4246 = vpack.c.b16 %v4190, %v4186
    %v4247 = vpack.c.b16 %v4191, %v4187
    %v4248 = vpack.c.b16 %v4196, %v4192
    %v4249 = vpack.c.b16 %v4197, %v4193
    %v4250 = vpack.c.b16 %v4198, %v4194
    %v4251 = vpack.c.b16 %v4199, %v4195
    %v4252 = vpack.c.b16 %v4204, %v4200
    %v4253 = vpack.c.b16 %v4205, %v4201
    %v4254 = vpack.c.b16 %v4206, %v4202
    %v4255 = vpack.c.b16 %v4207, %v4203
    %v4256 = vpack.c.b16 %v4212, %v4208
    %v4257 = vpack.c.b16 %v4213, %v4209
    %v4258 = vpack.c.b16 %v4214, %v4210
    %v4259 = vpack.c.b16 %v4215, %v4211
    %v4260 = vpack.c.b16 %v4220, %v4216
    %v4261 = vpack.c.b16 %v4221, %v4217
    %v4262 = vpack.c.b16 %v4222, %v4218
    %v4263 = vpack.c.b16 %v4223, %v4219
    %v4264 = vpack.c.b16 %v4228, %v4224
    %v4265 = vpack.c.b16 %v4229, %v4225
    %v4266 = vpack.c.b16 %v4230, %v4226
    %v4267 = vpack.c.b16 %v4231, %v4227
    %v4268 = vpack.c.b16 %v4236, %v4232
    %v4269 = vpack.c.b16 %v4237, %v4233
    %v4270 = vpack.c.b16 %v4238, %v4234
    %v4271 = vpack.c.b16 %v4239, %v4235
    %4304 = vmatprep.subr.bf16.mxu0 %v4241
    %4305 = vmatpush1.bf16.msra.mxu0 %v4240
    %4306 = vmatprep.subr.bf16.mxu0 %v4245
    %4307 = vmatpush1.bf16.msra.mxu0 %v4244
    %4308 = vmatprep.subr.bf16.mxu0 %v4249
    %4309 = vmatpush1.bf16.msra.mxu0 %v4248
    %4310 = vmatprep.subr.bf16.mxu0 %v4253
    %4311 = vmatpush1.bf16.msra.mxu0 %v4252
    %4312 = vmatprep.subr.bf16.mxu0 %v4257
    %4313 = vmatpush1.bf16.msra.mxu0 %v4256
    %4314 = vmatprep.subr.bf16.mxu0 %v4261
    %4315 = vmatpush1.bf16.msra.mxu0 %v4260
    %4316 = vmatprep.subr.bf16.mxu0 %v4265
    %4317 = vmatpush1.bf16.msra.mxu0 %v4264
    %4318 = vmatprep.subr.bf16.mxu0 %v4269
    %4319 = vmatpush1.bf16.msra.mxu0 %v4268
    %4320 = vmatprep.subr.bf16.mxu0 0
    %4321 = vmatpush1.bf16.msra.mxu0 0
    %4322 = vmatprep.subr.bf16.mxu0 0
    %4323 = vmatpush1.bf16.msra.mxu0 0
    %4324 = vmatprep.subr.bf16.mxu0 0
    %4325 = vmatpush1.bf16.msra.mxu0 0
    %4326 = vmatprep.subr.bf16.mxu0 0
    %4327 = vmatpush1.bf16.msra.mxu0 0
    %4328 = vmatprep.subr.bf16.mxu0 0
    %4329 = vmatpush1.bf16.msra.mxu0 0
    %4330 = vmatprep.subr.bf16.mxu0 0
    %4331 = vmatpush1.bf16.msra.mxu0 0
    %4332 = vmatprep.subr.bf16.mxu0 0
    %4333 = vmatpush1.bf16.msra.mxu0 0
    %4334 = vmatprep.subr.bf16.mxu0 0
    %4335 = vmatpush1.bf16.msra.mxu0 0
    %4336 = vmatprep.mubr.bf16.mxu0 0
    %4337 = vmatmul.mubr.bf16.gmra.mrb[0].mxu0 %v4111
    %v4338 = vpop.f32.mrb[0].mxu0
    %v4339 = vadd.f32 0.0, %v4338
    %v4340 = vpop.f32.mrb[0].mxu0
    %v4341 = vadd.f32 0.0, %v4340
    %v4342 = vpop.f32.mrb[0].mxu0
    %v4343 = vpop.f32.mrb[0].mxu0
    %4344 = vdwg.mxu0
    %4345 = vmatprep.subr.bf16.mxu0 %v4243
    %4346 = vmatpush1.bf16.msra.mxu0 %v4242
    %4347 = vmatprep.subr.bf16.mxu0 %v4247
    %4348 = vmatpush1.bf16.msra.mxu0 %v4246
    %4349 = vmatprep.subr.bf16.mxu0 %v4251
    %4350 = vmatpush1.bf16.msra.mxu0 %v4250
    %4351 = vmatprep.subr.bf16.mxu0 %v4255
    %4352 = vmatpush1.bf16.msra.mxu0 %v4254
    %4353 = vmatprep.subr.bf16.mxu0 %v4259
    %4354 = vmatpush1.bf16.msra.mxu0 %v4258
    %4355 = vmatprep.subr.bf16.mxu0 %v4263
    %4356 = vmatpush1.bf16.msra.mxu0 %v4262
    %4357 = vmatprep.subr.bf16.mxu0 %v4267
    %4358 = vmatpush1.bf16.msra.mxu0 %v4266
    %4359 = vmatprep.subr.bf16.mxu0 %v4271
    %4360 = vmatpush1.bf16.msra.mxu0 %v4270
    %4361 = vmatprep.subr.bf16.mxu0 0
    %4362 = vmatpush1.bf16.msra.mxu0 0
    %4363 = vmatprep.subr.bf16.mxu0 0
    %4364 = vmatpush1.bf16.msra.mxu0 0
    %4365 = vmatprep.subr.bf16.mxu0 0
    %4366 = vmatpush1.bf16.msra.mxu0 0
    %4367 = vmatprep.subr.bf16.mxu0 0
    %4368 = vmatpush1.bf16.msra.mxu0 0
    %4369 = vmatprep.subr.bf16.mxu0 0
    %4370 = vmatpush1.bf16.msra.mxu0 0
    %4371 = vmatprep.subr.bf16.mxu0 0
    %4372 = vmatpush1.bf16.msra.mxu0 0
    %4373 = vmatprep.subr.bf16.mxu0 0
    %4374 = vmatpush1.bf16.msra.mxu0 0
    %4375 = vmatprep.subr.bf16.mxu0 0
    %4376 = vmatpush1.bf16.msra.mxu0 0
    %4377 = vmatprep.mubr.bf16.mxu0 0
    %4378 = vmatmul.mubr.bf16.gmra.mrb[0].mxu0 %v4111
    %v4379 = vpop.f32.mrb[0].mxu0
    %v4380 = vadd.f32 0.0, %v4379
    %v4381 = vpop.f32.mrb[0].mxu0
    %v4382 = vadd.f32 0.0, %v4381
    %v4383 = vpop.f32.mrb[0].mxu0
    %v4384 = vpop.f32.mrb[0].mxu0
    %4385 = vdwg.mxu0
    %v4390 = vcombine.low %v4339, %v4341
    %v4391 = vcombine.low %v4380, %v4382
    %v4393 = vunpack.c.l.s4 1983009808
    %v4394 = vunpack.c.0.s8 %v4393
    %v4395 = vlaneseq
    %v4396 = vshrl.u32 %v4395, 7
    %v4397 = vsub.s32 %v4394, %v4396
    %v4398 = vrot.slane %v4390, %v4397
    %v4400 = vunpack.c.l.s4 1983009808
    %v4401 = vunpack.c.0.s8 %v4400
    %v4402 = vlaneseq
    %v4403 = vshrl.u32 %v4402, 7
    %v4404 = vsub.s32 %v4401, %v4403
    %v4405 = vrot.slane %v4391, %v4404
    %v4406 = vcombine.low %v4398, %v4405
    %v4408 = vadd.f32 %v4110, %v4406
    %v4409 = vld [vmem:[%s509] sm:$0xff]
    %v4410 = vpack.c.bf16 %v4108, %v4108
    %v4411 = vld [vmem:[%s932] sm:$0xff]
    %v4412 = vld [vmem:[%s932 + $0x8] sm:$0xff]
    %v4413 = vld [vmem:[%s932 + $0x10] sm:$0xff]
    %v4414 = vld [vmem:[%s932 + $0x18] sm:$0xff]
    %v4415 = vld [vmem:[%s932 + $0x20] sm:$0xff]
    %v4416 = vld [vmem:[%s932 + $0x28] sm:$0xff]
    %v4417 = vld [vmem:[%s932 + $0x30] sm:$0xff]
    %v4418 = vld [vmem:[%s932 + $0x38] sm:$0xff]
    %v4419 = vld [vmem:[%s932 + $0x40] sm:$0xff]
    %v4420 = vld [vmem:[%s932 + $0x48] sm:$0xff]
    %v4421 = vld [vmem:[%s932 + $0x50] sm:$0xff]
    %v4422 = vld [vmem:[%s932 + $0x58] sm:$0xff]
    %v4423 = vld [vmem:[%s932 + $0x60] sm:$0xff]
    %v4424 = vld [vmem:[%s932 + $0x68] sm:$0xff]
    %v4425 = vld [vmem:[%s932 + $0x70] sm:$0xff]
    %v4426 = vld [vmem:[%s932 + $0x78] sm:$0xff]
    %v4427 = vld [vmem:[%s932 + $0x80] sm:$0xff]
    %v4428 = vld [vmem:[%s932 + $0x88] sm:$0xff]
    %v4429 = vld [vmem:[%s932 + $0x90] sm:$0xff]
    %v4430 = vld [vmem:[%s932 + $0x98] sm:$0xff]
    %v4431 = vld [vmem:[%s932 + $0xa0] sm:$0xff]
    %v4432 = vld [vmem:[%s932 + $0xa8] sm:$0xff]
    %v4433 = vld [vmem:[%s932 + $0xb0] sm:$0xff]
    %v4434 = vld [vmem:[%s932 + $0xb8] sm:$0xff]
    %v4435 = vld [vmem:[%s932 + $0xc0] sm:$0xff]
    %v4436 = vld [vmem:[%s932 + $0xc8] sm:$0xff]
    %v4437 = vld [vmem:[%s932 + $0xd0] sm:$0xff]
    %v4438 = vld [vmem:[%s932 + $0xd8] sm:$0xff]
    %v4439 = vld [vmem:[%s932 + $0xe0] sm:$0xff]
    %v4440 = vld [vmem:[%s932 + $0xe8] sm:$0xff]
    %v4441 = vld [vmem:[%s932 + $0xf0] sm:$0xff]
    %v4442 = vld [vmem:[%s932 + $0xf8] sm:$0xff]
    %v4475 = vunpack.c.l.b16 %v4411
    %v4476 = vunpack.c.h.b16 %v4411
    %v4477 = vunpack.c.l.b16 %v4412
    %v4478 = vunpack.c.h.b16 %v4412
    %v4479 = vunpack.c.l.b16 %v4413
    %v4480 = vunpack.c.h.b16 %v4413
    %v4481 = vunpack.c.l.b16 %v4414
    %v4482 = vunpack.c.h.b16 %v4414
    %v4483 = vunpack.c.l.b16 %v4415
    %v4484 = vunpack.c.h.b16 %v4415
    %v4485 = vunpack.c.l.b16 %v4416
    %v4486 = vunpack.c.h.b16 %v4416
    %v4487 = vunpack.c.l.b16 %v4417
    %v4488 = vunpack.c.h.b16 %v4417
    %v4489 = vunpack.c.l.b16 %v4418
    %v4490 = vunpack.c.h.b16 %v4418
    %v4491 = vunpack.c.l.b16 %v4419
    %v4492 = vunpack.c.h.b16 %v4419
    %v4493 = vunpack.c.l.b16 %v4420
    %v4494 = vunpack.c.h.b16 %v4420
    %v4495 = vunpack.c.l.b16 %v4421
    %v4496 = vunpack.c.h.b16 %v4421
    %v4497 = vunpack.c.l.b16 %v4422
    %v4498 = vunpack.c.h.b16 %v4422
    %v4499 = vunpack.c.l.b16 %v4423
    %v4500 = vunpack.c.h.b16 %v4423
    %v4501 = vunpack.c.l.b16 %v4424
    %v4502 = vunpack.c.h.b16 %v4424
    %v4503 = vunpack.c.l.b16 %v4425
    %v4504 = vunpack.c.h.b16 %v4425
    %v4505 = vunpack.c.l.b16 %v4426
    %v4506 = vunpack.c.h.b16 %v4426
    %v4507 = vunpack.c.l.b16 %v4427
    %v4508 = vunpack.c.h.b16 %v4427
    %v4509 = vunpack.c.l.b16 %v4428
    %v4510 = vunpack.c.h.b16 %v4428
    %v4511 = vunpack.c.l.b16 %v4429
    %v4512 = vunpack.c.h.b16 %v4429
    %v4513 = vunpack.c.l.b16 %v4430
    %v4514 = vunpack.c.h.b16 %v4430
    %v4515 = vunpack.c.l.b16 %v4431
    %v4516 = vunpack.c.h.b16 %v4431
    %v4517 = vunpack.c.l.b16 %v4432
    %v4518 = vunpack.c.h.b16 %v4432
    %v4519 = vunpack.c.l.b16 %v4433
    %v4520 = vunpack.c.h.b16 %v4433
    %v4521 = vunpack.c.l.b16 %v4434
    %v4522 = vunpack.c.h.b16 %v4434
    %v4523 = vunpack.c.l.b16 %v4435
    %v4524 = vunpack.c.h.b16 %v4435
    %v4525 = vunpack.c.l.b16 %v4436
    %v4526 = vunpack.c.h.b16 %v4436
    %v4527 = vunpack.c.l.b16 %v4437
    %v4528 = vunpack.c.h.b16 %v4437
    %v4529 = vunpack.c.l.b16 %v4438
    %v4530 = vunpack.c.h.b16 %v4438
    %v4531 = vunpack.c.l.b16 %v4439
    %v4532 = vunpack.c.h.b16 %v4439
    %v4533 = vunpack.c.l.b16 %v4440
    %v4534 = vunpack.c.h.b16 %v4440
    %v4535 = vunpack.c.l.b16 %v4441
    %v4536 = vunpack.c.h.b16 %v4441
    %v4537 = vunpack.c.l.b16 %v4442
    %v4538 = vunpack.c.h.b16 %v4442
    %v4539 = vpack.c.b16 %v4479, %v4475
    %v4540 = vpack.c.b16 %v4480, %v4476
    %v4541 = vpack.c.b16 %v4481, %v4477
    %v4542 = vpack.c.b16 %v4482, %v4478
    %v4543 = vpack.c.b16 %v4487, %v4483
    %v4544 = vpack.c.b16 %v4488, %v4484
    %v4545 = vpack.c.b16 %v4489, %v4485
    %v4546 = vpack.c.b16 %v4490, %v4486
    %v4547 = vpack.c.b16 %v4495, %v4491
    %v4548 = vpack.c.b16 %v4496, %v4492
    %v4549 = vpack.c.b16 %v4497, %v4493
    %v4550 = vpack.c.b16 %v4498, %v4494
    %v4551 = vpack.c.b16 %v4503, %v4499
    %v4552 = vpack.c.b16 %v4504, %v4500
    %v4553 = vpack.c.b16 %v4505, %v4501
    %v4554 = vpack.c.b16 %v4506, %v4502
    %v4555 = vpack.c.b16 %v4511, %v4507
    %v4556 = vpack.c.b16 %v4512, %v4508
    %v4557 = vpack.c.b16 %v4513, %v4509
    %v4558 = vpack.c.b16 %v4514, %v4510
    %v4559 = vpack.c.b16 %v4519, %v4515
    %v4560 = vpack.c.b16 %v4520, %v4516
    %v4561 = vpack.c.b16 %v4521, %v4517
    %v4562 = vpack.c.b16 %v4522, %v4518
    %v4563 = vpack.c.b16 %v4527, %v4523
    %v4564 = vpack.c.b16 %v4528, %v4524
    %v4565 = vpack.c.b16 %v4529, %v4525
    %v4566 = vpack.c.b16 %v4530, %v4526
    %v4567 = vpack.c.b16 %v4535, %v4531
    %v4568 = vpack.c.b16 %v4536, %v4532
    %v4569 = vpack.c.b16 %v4537, %v4533
    %v4570 = vpack.c.b16 %v4538, %v4534
    %4603 = vmatprep.subr.bf16.mxu0 %v4540
    %4604 = vmatpush1.bf16.msra.mxu0 %v4539
    %4605 = vmatprep.subr.bf16.mxu0 %v4544
    %4606 = vmatpush1.bf16.msra.mxu0 %v4543
    %4607 = vmatprep.subr.bf16.mxu0 %v4548
    %4608 = vmatpush1.bf16.msra.mxu0 %v4547
    %4609 = vmatprep.subr.bf16.mxu0 %v4552
    %4610 = vmatpush1.bf16.msra.mxu0 %v4551
    %4611 = vmatprep.subr.bf16.mxu0 %v4556
    %4612 = vmatpush1.bf16.msra.mxu0 %v4555
    %4613 = vmatprep.subr.bf16.mxu0 %v4560
    %4614 = vmatpush1.bf16.msra.mxu0 %v4559
    %4615 = vmatprep.subr.bf16.mxu0 %v4564
    %4616 = vmatpush1.bf16.msra.mxu0 %v4563
    %4617 = vmatprep.subr.bf16.mxu0 %v4568
    %4618 = vmatpush1.bf16.msra.mxu0 %v4567
    %4619 = vmatprep.subr.bf16.mxu0 0
    %4620 = vmatpush1.bf16.msra.mxu0 0
    %4621 = vmatprep.subr.bf16.mxu0 0
    %4622 = vmatpush1.bf16.msra.mxu0 0
    %4623 = vmatprep.subr.bf16.mxu0 0
    %4624 = vmatpush1.bf16.msra.mxu0 0
    %4625 = vmatprep.subr.bf16.mxu0 0
    %4626 = vmatpush1.bf16.msra.mxu0 0
    %4627 = vmatprep.subr.bf16.mxu0 0
    %4628 = vmatpush1.bf16.msra.mxu0 0
    %4629 = vmatprep.subr.bf16.mxu0 0
    %4630 = vmatpush1.bf16.msra.mxu0 0
    %4631 = vmatprep.subr.bf16.mxu0 0
    %4632 = vmatpush1.bf16.msra.mxu0 0
    %4633 = vmatprep.subr.bf16.mxu0 0
    %4634 = vmatpush1.bf16.msra.mxu0 0
    %4635 = vmatprep.mubr.bf16.mxu0 0
    %4636 = vmatmul.mubr.bf16.gmra.mrb[0].mxu0 %v4410
    %v4637 = vpop.f32.mrb[0].mxu0
    %v4638 = vadd.f32 0.0, %v4637
    %v4639 = vpop.f32.mrb[0].mxu0
    %v4640 = vadd.f32 0.0, %v4639
    %v4641 = vpop.f32.mrb[0].mxu0
    %v4642 = vpop.f32.mrb[0].mxu0
    %4643 = vdwg.mxu0
    %4644 = vmatprep.subr.bf16.mxu0 %v4542
    %4645 = vmatpush1.bf16.msra.mxu0 %v4541
    %4646 = vmatprep.subr.bf16.mxu0 %v4546
    %4647 = vmatpush1.bf16.msra.mxu0 %v4545
    %4648 = vmatprep.subr.bf16.mxu0 %v4550
    %4649 = vmatpush1.bf16.msra.mxu0 %v4549
    %4650 = vmatprep.subr.bf16.mxu0 %v4554
    %4651 = vmatpush1.bf16.msra.mxu0 %v4553
    %4652 = vmatprep.subr.bf16.mxu0 %v4558
    %4653 = vmatpush1.bf16.msra.mxu0 %v4557
    %4654 = vmatprep.subr.bf16.mxu0 %v4562
    %4655 = vmatpush1.bf16.msra.mxu0 %v4561
    %4656 = vmatprep.subr.bf16.mxu0 %v4566
    %4657 = vmatpush1.bf16.msra.mxu0 %v4565
    %4658 = vmatprep.subr.bf16.mxu0 %v4570
    %4659 = vmatpush1.bf16.msra.mxu0 %v4569
    %4660 = vmatprep.subr.bf16.mxu0 0
    %4661 = vmatpush1.bf16.msra.mxu0 0
    %4662 = vmatprep.subr.bf16.mxu0 0
    %4663 = vmatpush1.bf16.msra.mxu0 0
    %4664 = vmatprep.subr.bf16.mxu0 0
    %4665 = vmatpush1.bf16.msra.mxu0 0
    %4666 = vmatprep.subr.bf16.mxu0 0
    %4667 = vmatpush1.bf16.msra.mxu0 0
    %4668 = vmatprep.subr.bf16.mxu0 0
    %4669 = vmatpush1.bf16.msra.mxu0 0
    %4670 = vmatprep.subr.bf16.mxu0 0
    %4671 = vmatpush1.bf16.msra.mxu0 0
    %4672 = vmatprep.subr.bf16.mxu0 0
    %4673 = vmatpush1.bf16.msra.mxu0 0
    %4674 = vmatprep.subr.bf16.mxu0 0
    %4675 = vmatpush1.bf16.msra.mxu0 0
    %4676 = vmatprep.mubr.bf16.mxu0 0
    %4677 = vmatmul.mubr.bf16.gmra.mrb[0].mxu0 %v4410
    %v4678 = vpop.f32.mrb[0].mxu0
    %v4679 = vadd.f32 0.0, %v4678
    %v4680 = vpop.f32.mrb[0].mxu0
    %v4681 = vadd.f32 0.0, %v4680
    %v4682 = vpop.f32.mrb[0].mxu0
    %v4683 = vpop.f32.mrb[0].mxu0
    %4684 = vdwg.mxu0
    %v4689 = vcombine.low %v4638, %v4640
    %v4690 = vcombine.low %v4679, %v4681
    %v4692 = vunpack.c.l.s4 1983009808
    %v4693 = vunpack.c.0.s8 %v4692
    %v4694 = vlaneseq
    %v4695 = vshrl.u32 %v4694, 7
    %v4696 = vsub.s32 %v4693, %v4695
    %v4697 = vrot.slane %v4689, %v4696
    %v4699 = vunpack.c.l.s4 1983009808
    %v4700 = vunpack.c.0.s8 %v4699
    %v4701 = vlaneseq
    %v4702 = vshrl.u32 %v4701, 7
    %v4703 = vsub.s32 %v4700, %v4702
    %v4704 = vrot.slane %v4690, %v4703
    %v4705 = vcombine.low %v4697, %v4704
    %v4707 = vadd.f32 %v4409, %v4705
    %v4708 = vxor.u32 %v4408, 2147483648
    %v4709 = vmul.f32 %v4708, 1.442695
    %v4710 = vpow.pop %v4709
    %v4711 = vadd.f32 %v4710, 1.0
    %v4712 = vrcp.pop %v4711
    %v4713 = vmul.f32 1.0, %v4712
    %v4715 = vrot.slane %v4408, 2
    %v4717 = vxor.u32 %v4715, 2147483648
    %v4718 = vmul.f32 %v4717, 1.442695
    %v4719 = vpow.pop %v4718
    %v4720 = vadd.f32 %v4719, 1.0
    %v4721 = vrcp.pop %v4720
    %v4722 = vmul.f32 1.0, %v4721
    %v4723 = vrot.slane %v4408, 4
    %v4725 = vtanh.pop %v4723
    %v4726 = vrot.slane %v4408, 6
    %v4728 = vxor.u32 %v4726, 2147483648
    %v4729 = vmul.f32 %v4728, 1.442695
    %v4730 = vpow.pop %v4729
    %v4731 = vadd.f32 %v4730, 1.0
    %v4732 = vrcp.pop %v4731
    %v4733 = vmul.f32 1.0, %v4732
    %v4734 = vxor.u32 %v4707, 2147483648
    %v4735 = vmul.f32 %v4734, 1.442695
    %v4736 = vpow.pop %v4735
    %v4737 = vadd.f32 %v4736, 1.0
    %v4738 = vrcp.pop %v4737
    %v4739 = vmul.f32 1.0, %v4738
    %v4741 = vrot.slane %v4707, 2
    %v4743 = vxor.u32 %v4741, 2147483648
    %v4744 = vmul.f32 %v4743, 1.442695
    %v4745 = vpow.pop %v4744
    %v4746 = vadd.f32 %v4745, 1.0
    %v4747 = vrcp.pop %v4746
    %v4748 = vmul.f32 1.0, %v4747
    %v4749 = vrot.slane %v4707, 4
    %v4751 = vtanh.pop %v4749
    %v4752 = vrot.slane %v4707, 6
    %v4754 = vxor.u32 %v4752, 2147483648
    %v4755 = vmul.f32 %v4754, 1.442695
    %v4756 = vpow.pop %v4755
    %v4757 = vadd.f32 %v4756, 1.0
    %v4758 = vrcp.pop %v4757
    %v4759 = vmul.f32 1.0, %v4758
    %v4760 = vmul.f32 %v4722, %v4107
    %v4761 = vmul.f32 %v4713, %v4725
    %v4762 = vadd.f32 %v4760, %v4761
    %v4763 = vmul.f32 %v4748, %v4109
    %v4764 = vmul.f32 %v4739, %v4751
    %v4765 = vadd.f32 %v4763, %v4764
    %v4766 = vtanh.pop %v4762
    %v4767 = vmul.f32 %v4733, %v4766
    %v4768 = vtanh.pop %v4765
    %v4769 = vmul.f32 %v4759, %v4768
    %s4770 = sadd.s32 %s624, 5
    %v4771 = vstv %s4770
    %vm4772 = vcmp.lt.s32.totalorder %v4771, %v623
    %s4773 = sadd.s32 %s626, 2
    %v4774 = vstv %s4773
    %vm4775 = vcmp.lt.s32.totalorder %v4774, %v623
    %v4776 = vsel %vm4772, 1, 0
    %4777 = vset.pattern.permute.xlu0 0
    %4778 = vperm.xlu0 %4777, %v4776
    %v4779 = vpop.permute.xlu0 %4778
    %vm4780 = vcmp.eq.s32.totalorder %v4779, 1
    %v4781 = vsel %vm4780, %v4762, %v4107
    %4782 = vst [vmem:[#allocation5] sm:$0x3] %v4781
    %v4783 = vsel %vm4780, %v4767, %v4106
    %4784 = vst [vmem:[#allocation4] sm:$0x3] %v4783
    %v4785 = vsel %vm4775, 1, 0
    %4786 = vset.pattern.permute.xlu0 0
    %4787 = vperm.xlu0 %4786, %v4785
    %v4788 = vpop.permute.xlu0 %4787
    %vm4789 = vcmp.eq.s32.totalorder %v4788, 1
    %v4790 = vsel %vm4789, %v4765, %v4109
    %4791 = vst [vmem:[#allocation7] sm:$0x3] %v4790
    %v4792 = vsel %vm4789, %v4769, %v4108
    %4793 = vst [vmem:[#allocation6] sm:$0x3] %v4792
    %v4794 = vsel %vm4780, %v4767, 0.0
    %v4795 = vpack.c.bf16 %v4794, %v4794
    %s4796 = scalar_lea.vmem %s6, 5
    %4797 = vst [vmem:[%s4796] sm:$0x1] %v4795
    %v4798 = vsel %vm4789, %v4769, 0.0
    %v4799 = vpack.c.bf16 %v4798, %v4798
    %s4800 = scalar_lea.vmem %s70, 2
    %4801 = vst [vmem:[%s4800] sm:$0x1] %v4799
    %v4802 = vld [vmem:[#allocation4] sm:$0x3]
    %v4803 = vld [vmem:[#allocation5] sm:$0x3]
    %v4804 = vld [vmem:[#allocation6] sm:$0x3]
    %v4805 = vld [vmem:[#allocation7] sm:$0x3]
    %v4806 = vld [vmem:[%s593] sm:$0xff]
    %v4807 = vpack.c.bf16 %v4802, %v4802
    %v4808 = vld [vmem:[#allocation8] sm:$0xff]
    %v4809 = vld [vmem:[#allocation8 + $0x8] sm:$0xff]
    %v4810 = vld [vmem:[#allocation8 + $0x10] sm:$0xff]
    %v4811 = vld [vmem:[#allocation8 + $0x18] sm:$0xff]
    %v4812 = vld [vmem:[#allocation8 + $0x20] sm:$0xff]
    %v4813 = vld [vmem:[#allocation8 + $0x28] sm:$0xff]
    %v4814 = vld [vmem:[#allocation8 + $0x30] sm:$0xff]
    %v4815 = vld [vmem:[#allocation8 + $0x38] sm:$0xff]
    %v4816 = vld [vmem:[#allocation8 + $0x40] sm:$0xff]
    %v4817 = vld [vmem:[#allocation8 + $0x48] sm:$0xff]
    %v4818 = vld [vmem:[#allocation8 + $0x50] sm:$0xff]
    %v4819 = vld [vmem:[#allocation8 + $0x58] sm:$0xff]
    %v4820 = vld [vmem:[#allocation8 + $0x60] sm:$0xff]
    %v4821 = vld [vmem:[#allocation8 + $0x68] sm:$0xff]
    %v4822 = vld [vmem:[#allocation8 + $0x70] sm:$0xff]
    %v4823 = vld [vmem:[#allocation8 + $0x78] sm:$0xff]
    %v4824 = vld [vmem:[#allocation8 + $0x80] sm:$0xff]
    %v4825 = vld [vmem:[#allocation8 + $0x88] sm:$0xff]
    %v4826 = vld [vmem:[#allocation8 + $0x90] sm:$0xff]
    %v4827 = vld [vmem:[#allocation8 + $0x98] sm:$0xff]
    %v4828 = vld [vmem:[#allocation8 + $0xa0] sm:$0xff]
    %v4829 = vld [vmem:[#allocation8 + $0xa8] sm:$0xff]
    %v4830 = vld [vmem:[#allocation8 + $0xb0] sm:$0xff]
    %v4831 = vld [vmem:[#allocation8 + $0xb8] sm:$0xff]
    %v4832 = vld [vmem:[#allocation8 + $0xc0] sm:$0xff]
    %v4833 = vld [vmem:[#allocation8 + $0xc8] sm:$0xff]
    %v4834 = vld [vmem:[#allocation8 + $0xd0] sm:$0xff]
    %v4835 = vld [vmem:[#allocation8 + $0xd8] sm:$0xff]
    %v4836 = vld [vmem:[#allocation8 + $0xe0] sm:$0xff]
    %v4837 = vld [vmem:[#allocation8 + $0xe8] sm:$0xff]
    %v4838 = vld [vmem:[#allocation8 + $0xf0] sm:$0xff]
    %v4839 = vld [vmem:[#allocation8 + $0xf8] sm:$0xff]
    %v4872 = vunpack.c.l.b16 %v4808
    %v4873 = vunpack.c.h.b16 %v4808
    %v4874 = vunpack.c.l.b16 %v4809
    %v4875 = vunpack.c.h.b16 %v4809
    %v4876 = vunpack.c.l.b16 %v4810
    %v4877 = vunpack.c.h.b16 %v4810
    %v4878 = vunpack.c.l.b16 %v4811
    %v4879 = vunpack.c.h.b16 %v4811
    %v4880 = vunpack.c.l.b16 %v4812
    %v4881 = vunpack.c.h.b16 %v4812
    %v4882 = vunpack.c.l.b16 %v4813
    %v4883 = vunpack.c.h.b16 %v4813
    %v4884 = vunpack.c.l.b16 %v4814
    %v4885 = vunpack.c.h.b16 %v4814
    %v4886 = vunpack.c.l.b16 %v4815
    %v4887 = vunpack.c.h.b16 %v4815
    %v4888 = vunpack.c.l.b16 %v4816
    %v4889 = vunpack.c.h.b16 %v4816
    %v4890 = vunpack.c.l.b16 %v4817
    %v4891 = vunpack.c.h.b16 %v4817
    %v4892 = vunpack.c.l.b16 %v4818
    %v4893 = vunpack.c.h.b16 %v4818
    %v4894 = vunpack.c.l.b16 %v4819
    %v4895 = vunpack.c.h.b16 %v4819
    %v4896 = vunpack.c.l.b16 %v4820
    %v4897 = vunpack.c.h.b16 %v4820
    %v4898 = vunpack.c.l.b16 %v4821
    %v4899 = vunpack.c.h.b16 %v4821
    %v4900 = vunpack.c.l.b16 %v4822
    %v4901 = vunpack.c.h.b16 %v4822
    %v4902 = vunpack.c.l.b16 %v4823
    %v4903 = vunpack.c.h.b16 %v4823
    %v4904 = vunpack.c.l.b16 %v4824
    %v4905 = vunpack.c.h.b16 %v4824
    %v4906 = vunpack.c.l.b16 %v4825
    %v4907 = vunpack.c.h.b16 %v4825
    %v4908 = vunpack.c.l.b16 %v4826
    %v4909 = vunpack.c.h.b16 %v4826
    %v4910 = vunpack.c.l.b16 %v4827
    %v4911 = vunpack.c.h.b16 %v4827
    %v4912 = vunpack.c.l.b16 %v4828
    %v4913 = vunpack.c.h.b16 %v4828
    %v4914 = vunpack.c.l.b16 %v4829
    %v4915 = vunpack.c.h.b16 %v4829
    %v4916 = vunpack.c.l.b16 %v4830
    %v4917 = vunpack.c.h.b16 %v4830
    %v4918 = vunpack.c.l.b16 %v4831
    %v4919 = vunpack.c.h.b16 %v4831
    %v4920 = vunpack.c.l.b16 %v4832
    %v4921 = vunpack.c.h.b16 %v4832
    %v4922 = vunpack.c.l.b16 %v4833
    %v4923 = vunpack.c.h.b16 %v4833
    %v4924 = vunpack.c.l.b16 %v4834
    %v4925 = vunpack.c.h.b16 %v4834
    %v4926 = vunpack.c.l.b16 %v4835
    %v4927 = vunpack.c.h.b16 %v4835
    %v4928 = vunpack.c.l.b16 %v4836
    %v4929 = vunpack.c.h.b16 %v4836
    %v4930 = vunpack.c.l.b16 %v4837
    %v4931 = vunpack.c.h.b16 %v4837
    %v4932 = vunpack.c.l.b16 %v4838
    %v4933 = vunpack.c.h.b16 %v4838
    %v4934 = vunpack.c.l.b16 %v4839
    %v4935 = vunpack.c.h.b16 %v4839
    %v4936 = vpack.c.b16 %v4876, %v4872
    %v4937 = vpack.c.b16 %v4877, %v4873
    %v4938 = vpack.c.b16 %v4878, %v4874
    %v4939 = vpack.c.b16 %v4879, %v4875
    %v4940 = vpack.c.b16 %v4884, %v4880
    %v4941 = vpack.c.b16 %v4885, %v4881
    %v4942 = vpack.c.b16 %v4886, %v4882
    %v4943 = vpack.c.b16 %v4887, %v4883
    %v4944 = vpack.c.b16 %v4892, %v4888
    %v4945 = vpack.c.b16 %v4893, %v4889
    %v4946 = vpack.c.b16 %v4894, %v4890
    %v4947 = vpack.c.b16 %v4895, %v4891
    %v4948 = vpack.c.b16 %v4900, %v4896
    %v4949 = vpack.c.b16 %v4901, %v4897
    %v4950 = vpack.c.b16 %v4902, %v4898
    %v4951 = vpack.c.b16 %v4903, %v4899
    %v4952 = vpack.c.b16 %v4908, %v4904
    %v4953 = vpack.c.b16 %v4909, %v4905
    %v4954 = vpack.c.b16 %v4910, %v4906
    %v4955 = vpack.c.b16 %v4911, %v4907
    %v4956 = vpack.c.b16 %v4916, %v4912
    %v4957 = vpack.c.b16 %v4917, %v4913
    %v4958 = vpack.c.b16 %v4918, %v4914
    %v4959 = vpack.c.b16 %v4919, %v4915
    %v4960 = vpack.c.b16 %v4924, %v4920
    %v4961 = vpack.c.b16 %v4925, %v4921
    %v4962 = vpack.c.b16 %v4926, %v4922
    %v4963 = vpack.c.b16 %v4927, %v4923
    %v4964 = vpack.c.b16 %v4932, %v4928
    %v4965 = vpack.c.b16 %v4933, %v4929
    %v4966 = vpack.c.b16 %v4934, %v4930
    %v4967 = vpack.c.b16 %v4935, %v4931
    %5000 = vmatprep.subr.bf16.mxu0 %v4937
    %5001 = vmatpush1.bf16.msra.mxu0 %v4936
    %5002 = vmatprep.subr.bf16.mxu0 %v4941
    %5003 = vmatpush1.bf16.msra.mxu0 %v4940
    %5004 = vmatprep.subr.bf16.mxu0 %v4945
    %5005 = vmatpush1.bf16.msra.mxu0 %v4944
    %5006 = vmatprep.subr.bf16.mxu0 %v4949
    %5007 = vmatpush1.bf16.msra.mxu0 %v4948
    %5008 = vmatprep.subr.bf16.mxu0 %v4953
    %5009 = vmatpush1.bf16.msra.mxu0 %v4952
    %5010 = vmatprep.subr.bf16.mxu0 %v4957
    %5011 = vmatpush1.bf16.msra.mxu0 %v4956
    %5012 = vmatprep.subr.bf16.mxu0 %v4961
    %5013 = vmatpush1.bf16.msra.mxu0 %v4960
    %5014 = vmatprep.subr.bf16.mxu0 %v4965
    %5015 = vmatpush1.bf16.msra.mxu0 %v4964
    %5016 = vmatprep.subr.bf16.mxu0 0
    %5017 = vmatpush1.bf16.msra.mxu0 0
    %5018 = vmatprep.subr.bf16.mxu0 0
    %5019 = vmatpush1.bf16.msra.mxu0 0
    %5020 = vmatprep.subr.bf16.mxu0 0
    %5021 = vmatpush1.bf16.msra.mxu0 0
    %5022 = vmatprep.subr.bf16.mxu0 0
    %5023 = vmatpush1.bf16.msra.mxu0 0
    %5024 = vmatprep.subr.bf16.mxu0 0
    %5025 = vmatpush1.bf16.msra.mxu0 0
    %5026 = vmatprep.subr.bf16.mxu0 0
    %5027 = vmatpush1.bf16.msra.mxu0 0
    %5028 = vmatprep.subr.bf16.mxu0 0
    %5029 = vmatpush1.bf16.msra.mxu0 0
    %5030 = vmatprep.subr.bf16.mxu0 0
    %5031 = vmatpush1.bf16.msra.mxu0 0
    %5032 = vmatprep.mubr.bf16.mxu0 0
    %5033 = vmatmul.mubr.bf16.gmra.mrb[0].mxu0 %v4807
    %v5034 = vpop.f32.mrb[0].mxu0
    %v5035 = vadd.f32 0.0, %v5034
    %v5036 = vpop.f32.mrb[0].mxu0
    %v5037 = vadd.f32 0.0, %v5036
    %v5038 = vpop.f32.mrb[0].mxu0
    %v5039 = vpop.f32.mrb[0].mxu0
    %5040 = vdwg.mxu0
    %5041 = vmatprep.subr.bf16.mxu0 %v4939
    %5042 = vmatpush1.bf16.msra.mxu0 %v4938
    %5043 = vmatprep.subr.bf16.mxu0 %v4943
    %5044 = vmatpush1.bf16.msra.mxu0 %v4942
    %5045 = vmatprep.subr.bf16.mxu0 %v4947
    %5046 = vmatpush1.bf16.msra.mxu0 %v4946
    %5047 = vmatprep.subr.bf16.mxu0 %v4951
    %5048 = vmatpush1.bf16.msra.mxu0 %v4950
    %5049 = vmatprep.subr.bf16.mxu0 %v4955
    %5050 = vmatpush1.bf16.msra.mxu0 %v4954
    %5051 = vmatprep.subr.bf16.mxu0 %v4959
    %5052 = vmatpush1.bf16.msra.mxu0 %v4958
    %5053 = vmatprep.subr.bf16.mxu0 %v4963
    %5054 = vmatpush1.bf16.msra.mxu0 %v4962
    %5055 = vmatprep.subr.bf16.mxu0 %v4967
    %5056 = vmatpush1.bf16.msra.mxu0 %v4966
    %5057 = vmatprep.subr.bf16.mxu0 0
    %5058 = vmatpush1.bf16.msra.mxu0 0
    %5059 = vmatprep.subr.bf16.mxu0 0
    %5060 = vmatpush1.bf16.msra.mxu0 0
    %5061 = vmatprep.subr.bf16.mxu0 0
    %5062 = vmatpush1.bf16.msra.mxu0 0
    %5063 = vmatprep.subr.bf16.mxu0 0
    %5064 = vmatpush1.bf16.msra.mxu0 0
    %5065 = vmatprep.subr.bf16.mxu0 0
    %5066 = vmatpush1.bf16.msra.mxu0 0
    %5067 = vmatprep.subr.bf16.mxu0 0
    %5068 = vmatpush1.bf16.msra.mxu0 0
    %5069 = vmatprep.subr.bf16.mxu0 0
    %5070 = vmatpush1.bf16.msra.mxu0 0
    %5071 = vmatprep.subr.bf16.mxu0 0
    %5072 = vmatpush1.bf16.msra.mxu0 0
    %5073 = vmatprep.mubr.bf16.mxu0 0
    %5074 = vmatmul.mubr.bf16.gmra.mrb[0].mxu0 %v4807
    %v5075 = vpop.f32.mrb[0].mxu0
    %v5076 = vadd.f32 0.0, %v5075
    %v5077 = vpop.f32.mrb[0].mxu0
    %v5078 = vadd.f32 0.0, %v5077
    %v5079 = vpop.f32.mrb[0].mxu0
    %v5080 = vpop.f32.mrb[0].mxu0
    %5081 = vdwg.mxu0
    %v5086 = vcombine.low %v5035, %v5037
    %v5087 = vcombine.low %v5076, %v5078
    %v5089 = vunpack.c.l.s4 1983009808
    %v5090 = vunpack.c.0.s8 %v5089
    %v5091 = vlaneseq
    %v5092 = vshrl.u32 %v5091, 7
    %v5093 = vsub.s32 %v5090, %v5092
    %v5094 = vrot.slane %v5086, %v5093
    %v5096 = vunpack.c.l.s4 1983009808
    %v5097 = vunpack.c.0.s8 %v5096
    %v5098 = vlaneseq
    %v5099 = vshrl.u32 %v5098, 7
    %v5100 = vsub.s32 %v5097, %v5099
    %v5101 = vrot.slane %v5087, %v5100
    %v5102 = vcombine.low %v5094, %v5101
    %v5104 = vadd.f32 %v4806, %v5102
    %v5105 = vld [vmem:[%s469] sm:$0xff]
    %v5106 = vpack.c.bf16 %v4804, %v4804
    %v5107 = vld [vmem:[%s932] sm:$0xff]
    %v5108 = vld [vmem:[%s932 + $0x8] sm:$0xff]
    %v5109 = vld [vmem:[%s932 + $0x10] sm:$0xff]
    %v5110 = vld [vmem:[%s932 + $0x18] sm:$0xff]
    %v5111 = vld [vmem:[%s932 + $0x20] sm:$0xff]
    %v5112 = vld [vmem:[%s932 + $0x28] sm:$0xff]
    %v5113 = vld [vmem:[%s932 + $0x30] sm:$0xff]
    %v5114 = vld [vmem:[%s932 + $0x38] sm:$0xff]
    %v5115 = vld [vmem:[%s932 + $0x40] sm:$0xff]
    %v5116 = vld [vmem:[%s932 + $0x48] sm:$0xff]
    %v5117 = vld [vmem:[%s932 + $0x50] sm:$0xff]
    %v5118 = vld [vmem:[%s932 + $0x58] sm:$0xff]
    %v5119 = vld [vmem:[%s932 + $0x60] sm:$0xff]
    %v5120 = vld [vmem:[%s932 + $0x68] sm:$0xff]
    %v5121 = vld [vmem:[%s932 + $0x70] sm:$0xff]
    %v5122 = vld [vmem:[%s932 + $0x78] sm:$0xff]
    %v5123 = vld [vmem:[%s932 + $0x80] sm:$0xff]
    %v5124 = vld [vmem:[%s932 + $0x88] sm:$0xff]
    %v5125 = vld [vmem:[%s932 + $0x90] sm:$0xff]
    %v5126 = vld [vmem:[%s932 + $0x98] sm:$0xff]
    %v5127 = vld [vmem:[%s932 + $0xa0] sm:$0xff]
    %v5128 = vld [vmem:[%s932 + $0xa8] sm:$0xff]
    %v5129 = vld [vmem:[%s932 + $0xb0] sm:$0xff]
    %v5130 = vld [vmem:[%s932 + $0xb8] sm:$0xff]
    %v5131 = vld [vmem:[%s932 + $0xc0] sm:$0xff]
    %v5132 = vld [vmem:[%s932 + $0xc8] sm:$0xff]
    %v5133 = vld [vmem:[%s932 + $0xd0] sm:$0xff]
    %v5134 = vld [vmem:[%s932 + $0xd8] sm:$0xff]
    %v5135 = vld [vmem:[%s932 + $0xe0] sm:$0xff]
    %v5136 = vld [vmem:[%s932 + $0xe8] sm:$0xff]
    %v5137 = vld [vmem:[%s932 + $0xf0] sm:$0xff]
    %v5138 = vld [vmem:[%s932 + $0xf8] sm:$0xff]
    %v5171 = vunpack.c.l.b16 %v5107
    %v5172 = vunpack.c.h.b16 %v5107
    %v5173 = vunpack.c.l.b16 %v5108
    %v5174 = vunpack.c.h.b16 %v5108
    %v5175 = vunpack.c.l.b16 %v5109
    %v5176 = vunpack.c.h.b16 %v5109
    %v5177 = vunpack.c.l.b16 %v5110
    %v5178 = vunpack.c.h.b16 %v5110
    %v5179 = vunpack.c.l.b16 %v5111
    %v5180 = vunpack.c.h.b16 %v5111
    %v5181 = vunpack.c.l.b16 %v5112
    %v5182 = vunpack.c.h.b16 %v5112
    %v5183 = vunpack.c.l.b16 %v5113
    %v5184 = vunpack.c.h.b16 %v5113
    %v5185 = vunpack.c.l.b16 %v5114
    %v5186 = vunpack.c.h.b16 %v5114
    %v5187 = vunpack.c.l.b16 %v5115
    %v5188 = vunpack.c.h.b16 %v5115
    %v5189 = vunpack.c.l.b16 %v5116
    %v5190 = vunpack.c.h.b16 %v5116
    %v5191 = vunpack.c.l.b16 %v5117
    %v5192 = vunpack.c.h.b16 %v5117
    %v5193 = vunpack.c.l.b16 %v5118
    %v5194 = vunpack.c.h.b16 %v5118
    %v5195 = vunpack.c.l.b16 %v5119
    %v5196 = vunpack.c.h.b16 %v5119
    %v5197 = vunpack.c.l.b16 %v5120
    %v5198 = vunpack.c.h.b16 %v5120
    %v5199 = vunpack.c.l.b16 %v5121
    %v5200 = vunpack.c.h.b16 %v5121
    %v5201 = vunpack.c.l.b16 %v5122
    %v5202 = vunpack.c.h.b16 %v5122
    %v5203 = vunpack.c.l.b16 %v5123
    %v5204 = vunpack.c.h.b16 %v5123
    %v5205 = vunpack.c.l.b16 %v5124
    %v5206 = vunpack.c.h.b16 %v5124
    %v5207 = vunpack.c.l.b16 %v5125
    %v5208 = vunpack.c.h.b16 %v5125
    %v5209 = vunpack.c.l.b16 %v5126
    %v5210 = vunpack.c.h.b16 %v5126
    %v5211 = vunpack.c.l.b16 %v5127
    %v5212 = vunpack.c.h.b16 %v5127
    %v5213 = vunpack.c.l.b16 %v5128
    %v5214 = vunpack.c.h.b16 %v5128
    %v5215 = vunpack.c.l.b16 %v5129
    %v5216 = vunpack.c.h.b16 %v5129
    %v5217 = vunpack.c.l.b16 %v5130
    %v5218 = vunpack.c.h.b16 %v5130
    %v5219 = vunpack.c.l.b16 %v5131
    %v5220 = vunpack.c.h.b16 %v5131
    %v5221 = vunpack.c.l.b16 %v5132
    %v5222 = vunpack.c.h.b16 %v5132
    %v5223 = vunpack.c.l.b16 %v5133
    %v5224 = vunpack.c.h.b16 %v5133
    %v5225 = vunpack.c.l.b16 %v5134
    %v5226 = vunpack.c.h.b16 %v5134
    %v5227 = vunpack.c.l.b16 %v5135
    %v5228 = vunpack.c.h.b16 %v5135
    %v5229 = vunpack.c.l.b16 %v5136
    %v5230 = vunpack.c.h.b16 %v5136
    %v5231 = vunpack.c.l.b16 %v5137
    %v5232 = vunpack.c.h.b16 %v5137
    %v5233 = vunpack.c.l.b16 %v5138
    %v5234 = vunpack.c.h.b16 %v5138
    %v5235 = vpack.c.b16 %v5175, %v5171
    %v5236 = vpack.c.b16 %v5176, %v5172
    %v5237 = vpack.c.b16 %v5177, %v5173
    %v5238 = vpack.c.b16 %v5178, %v5174
    %v5239 = vpack.c.b16 %v5183, %v5179
    %v5240 = vpack.c.b16 %v5184, %v5180
    %v5241 = vpack.c.b16 %v5185, %v5181
    %v5242 = vpack.c.b16 %v5186, %v5182
    %v5243 = vpack.c.b16 %v5191, %v5187
    %v5244 = vpack.c.b16 %v5192, %v5188
    %v5245 = vpack.c.b16 %v5193, %v5189
    %v5246 = vpack.c.b16 %v5194, %v5190
    %v5247 = vpack.c.b16 %v5199, %v5195
    %v5248 = vpack.c.b16 %v5200, %v5196
    %v5249 = vpack.c.b16 %v5201, %v5197
    %v5250 = vpack.c.b16 %v5202, %v5198
    %v5251 = vpack.c.b16 %v5207, %v5203
    %v5252 = vpack.c.b16 %v5208, %v5204
    %v5253 = vpack.c.b16 %v5209, %v5205
    %v5254 = vpack.c.b16 %v5210, %v5206
    %v5255 = vpack.c.b16 %v5215, %v5211
    %v5256 = vpack.c.b16 %v5216, %v5212
    %v5257 = vpack.c.b16 %v5217, %v5213
    %v5258 = vpack.c.b16 %v5218, %v5214
    %v5259 = vpack.c.b16 %v5223, %v5219
    %v5260 = vpack.c.b16 %v5224, %v5220
    %v5261 = vpack.c.b16 %v5225, %v5221
    %v5262 = vpack.c.b16 %v5226, %v5222
    %v5263 = vpack.c.b16 %v5231, %v5227
    %v5264 = vpack.c.b16 %v5232, %v5228
    %v5265 = vpack.c.b16 %v5233, %v5229
    %v5266 = vpack.c.b16 %v5234, %v5230
    %5299 = vmatprep.subr.bf16.mxu0 %v5236
    %5300 = vmatpush1.bf16.msra.mxu0 %v5235
    %5301 = vmatprep.subr.bf16.mxu0 %v5240
    %5302 = vmatpush1.bf16.msra.mxu0 %v5239
    %5303 = vmatprep.subr.bf16.mxu0 %v5244
    %5304 = vmatpush1.bf16.msra.mxu0 %v5243
    %5305 = vmatprep.subr.bf16.mxu0 %v5248
    %5306 = vmatpush1.bf16.msra.mxu0 %v5247
    %5307 = vmatprep.subr.bf16.mxu0 %v5252
    %5308 = vmatpush1.bf16.msra.mxu0 %v5251
    %5309 = vmatprep.subr.bf16.mxu0 %v5256
    %5310 = vmatpush1.bf16.msra.mxu0 %v5255
    %5311 = vmatprep.subr.bf16.mxu0 %v5260
    %5312 = vmatpush1.bf16.msra.mxu0 %v5259
    %5313 = vmatprep.subr.bf16.mxu0 %v5264
    %5314 = vmatpush1.bf16.msra.mxu0 %v5263
    %5315 = vmatprep.subr.bf16.mxu0 0
    %5316 = vmatpush1.bf16.msra.mxu0 0
    %5317 = vmatprep.subr.bf16.mxu0 0
    %5318 = vmatpush1.bf16.msra.mxu0 0
    %5319 = vmatprep.subr.bf16.mxu0 0
    %5320 = vmatpush1.bf16.msra.mxu0 0
    %5321 = vmatprep.subr.bf16.mxu0 0
    %5322 = vmatpush1.bf16.msra.mxu0 0
    %5323 = vmatprep.subr.bf16.mxu0 0
    %5324 = vmatpush1.bf16.msra.mxu0 0
    %5325 = vmatprep.subr.bf16.mxu0 0
    %5326 = vmatpush1.bf16.msra.mxu0 0
    %5327 = vmatprep.subr.bf16.mxu0 0
    %5328 = vmatpush1.bf16.msra.mxu0 0
    %5329 = vmatprep.subr.bf16.mxu0 0
    %5330 = vmatpush1.bf16.msra.mxu0 0
    %5331 = vmatprep.mubr.bf16.mxu0 0
    %5332 = vmatmul.mubr.bf16.gmra.mrb[0].mxu0 %v5106
    %v5333 = vpop.f32.mrb[0].mxu0
    %v5334 = vadd.f32 0.0, %v5333
    %v5335 = vpop.f32.mrb[0].mxu0
    %v5336 = vadd.f32 0.0, %v5335
    %v5337 = vpop.f32.mrb[0].mxu0
    %v5338 = vpop.f32.mrb[0].mxu0
    %5339 = vdwg.mxu0
    %5340 = vmatprep.subr.bf16.mxu0 %v5238
    %5341 = vmatpush1.bf16.msra.mxu0 %v5237
    %5342 = vmatprep.subr.bf16.mxu0 %v5242
    %5343 = vmatpush1.bf16.msra.mxu0 %v5241
    %5344 = vmatprep.subr.bf16.mxu0 %v5246
    %5345 = vmatpush1.bf16.msra.mxu0 %v5245
    %5346 = vmatprep.subr.bf16.mxu0 %v5250
    %5347 = vmatpush1.bf16.msra.mxu0 %v5249
    %5348 = vmatprep.subr.bf16.mxu0 %v5254
    %5349 = vmatpush1.bf16.msra.mxu0 %v5253
    %5350 = vmatprep.subr.bf16.mxu0 %v5258
    %5351 = vmatpush1.bf16.msra.mxu0 %v5257
    %5352 = vmatprep.subr.bf16.mxu0 %v5262
    %5353 = vmatpush1.bf16.msra.mxu0 %v5261
    %5354 = vmatprep.subr.bf16.mxu0 %v5266
    %5355 = vmatpush1.bf16.msra.mxu0 %v5265
    %5356 = vmatprep.subr.bf16.mxu0 0
    %5357 = vmatpush1.bf16.msra.mxu0 0
    %5358 = vmatprep.subr.bf16.mxu0 0
    %5359 = vmatpush1.bf16.msra.mxu0 0
    %5360 = vmatprep.subr.bf16.mxu0 0
    %5361 = vmatpush1.bf16.msra.mxu0 0
    %5362 = vmatprep.subr.bf16.mxu0 0
    %5363 = vmatpush1.bf16.msra.mxu0 0
    %5364 = vmatprep.subr.bf16.mxu0 0
    %5365 = vmatpush1.bf16.msra.mxu0 0
    %5366 = vmatprep.subr.bf16.mxu0 0
    %5367 = vmatpush1.bf16.msra.mxu0 0
    %5368 = vmatprep.subr.bf16.mxu0 0
    %5369 = vmatpush1.bf16.msra.mxu0 0
    %5370 = vmatprep.subr.bf16.mxu0 0
    %5371 = vmatpush1.bf16.msra.mxu0 0
    %5372 = vmatprep.mubr.bf16.mxu0 0
    %5373 = vmatmul.mubr.bf16.gmra.mrb[0].mxu0 %v5106
    %v5374 = vpop.f32.mrb[0].mxu0
    %v5375 = vadd.f32 0.0, %v5374
    %v5376 = vpop.f32.mrb[0].mxu0
    %v5377 = vadd.f32 0.0, %v5376
    %v5378 = vpop.f32.mrb[0].mxu0
    %v5379 = vpop.f32.mrb[0].mxu0
    %5380 = vdwg.mxu0
    %v5385 = vcombine.low %v5334, %v5336
    %v5386 = vcombine.low %v5375, %v5377
    %v5388 = vunpack.c.l.s4 1983009808
    %v5389 = vunpack.c.0.s8 %v5388
    %v5390 = vlaneseq
    %v5391 = vshrl.u32 %v5390, 7
    %v5392 = vsub.s32 %v5389, %v5391
    %v5393 = vrot.slane %v5385, %v5392
    %v5395 = vunpack.c.l.s4 1983009808
    %v5396 = vunpack.c.0.s8 %v5395
    %v5397 = vlaneseq
    %v5398 = vshrl.u32 %v5397, 7
    %v5399 = vsub.s32 %v5396, %v5398
    %v5400 = vrot.slane %v5386, %v5399
    %v5401 = vcombine.low %v5393, %v5400
    %v5403 = vadd.f32 %v5105, %v5401
    %v5404 = vxor.u32 %v5104, 2147483648
    %v5405 = vmul.f32 %v5404, 1.442695
    %v5406 = vpow.pop %v5405
    %v5407 = vadd.f32 %v5406, 1.0
    %v5408 = vrcp.pop %v5407
    %v5409 = vmul.f32 1.0, %v5408
    %v5411 = vrot.slane %v5104, 2
    %v5413 = vxor.u32 %v5411, 2147483648
    %v5414 = vmul.f32 %v5413, 1.442695
    %v5415 = vpow.pop %v5414
    %v5416 = vadd.f32 %v5415, 1.0
    %v5417 = vrcp.pop %v5416
    %v5418 = vmul.f32 1.0, %v5417
    %v5419 = vrot.slane %v5104, 4
    %v5421 = vtanh.pop %v5419
    %v5422 = vrot.slane %v5104, 6
    %v5424 = vxor.u32 %v5422, 2147483648
    %v5425 = vmul.f32 %v5424, 1.442695
    %v5426 = vpow.pop %v5425
    %v5427 = vadd.f32 %v5426, 1.0
    %v5428 = vrcp.pop %v5427
    %v5429 = vmul.f32 1.0, %v5428
    %v5430 = vxor.u32 %v5403, 2147483648
    %v5431 = vmul.f32 %v5430, 1.442695
    %v5432 = vpow.pop %v5431
    %v5433 = vadd.f32 %v5432, 1.0
    %v5434 = vrcp.pop %v5433
    %v5435 = vmul.f32 1.0, %v5434
    %v5437 = vrot.slane %v5403, 2
    %v5439 = vxor.u32 %v5437, 2147483648
    %v5440 = vmul.f32 %v5439, 1.442695
    %v5441 = vpow.pop %v5440
    %v5442 = vadd.f32 %v5441, 1.0
    %v5443 = vrcp.pop %v5442
    %v5444 = vmul.f32 1.0, %v5443
    %v5445 = vrot.slane %v5403, 4
    %v5447 = vtanh.pop %v5445
    %v5448 = vrot.slane %v5403, 6
    %v5450 = vxor.u32 %v5448, 2147483648
    %v5451 = vmul.f32 %v5450, 1.442695
    %v5452 = vpow.pop %v5451
    %v5453 = vadd.f32 %v5452, 1.0
    %v5454 = vrcp.pop %v5453
    %v5455 = vmul.f32 1.0, %v5454
    %v5456 = vmul.f32 %v5418, %v4803
    %v5457 = vmul.f32 %v5409, %v5421
    %v5458 = vadd.f32 %v5456, %v5457
    %v5459 = vmul.f32 %v5444, %v4805
    %v5460 = vmul.f32 %v5435, %v5447
    %v5461 = vadd.f32 %v5459, %v5460
    %v5462 = vtanh.pop %v5458
    %v5463 = vmul.f32 %v5429, %v5462
    %v5464 = vtanh.pop %v5461
    %v5465 = vmul.f32 %v5455, %v5464
    %s5466 = sadd.s32 %s624, 6
    %v5467 = vstv %s5466
    %vm5468 = vcmp.lt.s32.totalorder %v5467, %v623
    %s5469 = sadd.s32 %s626, 1
    %v5470 = vstv %s5469
    %vm5471 = vcmp.lt.s32.totalorder %v5470, %v623
    %v5472 = vsel %vm5468, 1, 0
    %5473 = vset.pattern.permute.xlu0 0
    %5474 = vperm.xlu0 %5473, %v5472
    %v5475 = vpop.permute.xlu0 %5474
    %vm5476 = vcmp.eq.s32.totalorder %v5475, 1
    %v5477 = vsel %vm5476, %v5458, %v4803
    %5478 = vst [vmem:[#allocation5] sm:$0x3] %v5477
    %v5479 = vsel %vm5476, %v5463, %v4802
    %5480 = vst [vmem:[#allocation4] sm:$0x3] %v5479
    %v5481 = vsel %vm5471, 1, 0
    %5482 = vset.pattern.permute.xlu0 0
    %5483 = vperm.xlu0 %5482, %v5481
    %v5484 = vpop.permute.xlu0 %5483
    %vm5485 = vcmp.eq.s32.totalorder %v5484, 1
    %v5486 = vsel %vm5485, %v5461, %v4805
    %5487 = vst [vmem:[#allocation7] sm:$0x3] %v5486
    %v5488 = vsel %vm5485, %v5465, %v4804
    %5489 = vst [vmem:[#allocation6] sm:$0x3] %v5488
    %v5490 = vsel %vm5476, %v5463, 0.0
    %v5491 = vpack.c.bf16 %v5490, %v5490
    %s5492 = scalar_lea.vmem %s6, 6
    %5493 = vst [vmem:[%s5492] sm:$0x1] %v5491
    %v5494 = vsel %vm5485, %v5465, 0.0
    %v5495 = vpack.c.bf16 %v5494, %v5494
    %s5496 = scalar_lea.vmem %s70, 1
    %5497 = vst [vmem:[%s5496] sm:$0x1] %v5495
    %v5498 = vld [vmem:[#allocation4] sm:$0x3]
    %v5499 = vld [vmem:[#allocation5] sm:$0x3]
    %v5500 = vld [vmem:[#allocation6] sm:$0x3]
    %v5501 = vld [vmem:[#allocation7] sm:$0x3]
    %v5502 = vld [vmem:[%s617] sm:$0xff]
    %v5503 = vpack.c.bf16 %v5498, %v5498
    %v5504 = vld [vmem:[#allocation8] sm:$0xff]
    %v5505 = vld [vmem:[#allocation8 + $0x8] sm:$0xff]
    %v5506 = vld [vmem:[#allocation8 + $0x10] sm:$0xff]
    %v5507 = vld [vmem:[#allocation8 + $0x18] sm:$0xff]
    %v5508 = vld [vmem:[#allocation8 + $0x20] sm:$0xff]
    %v5509 = vld [vmem:[#allocation8 + $0x28] sm:$0xff]
    %v5510 = vld [vmem:[#allocation8 + $0x30] sm:$0xff]
    %v5511 = vld [vmem:[#allocation8 + $0x38] sm:$0xff]
    %v5512 = vld [vmem:[#allocation8 + $0x40] sm:$0xff]
    %v5513 = vld [vmem:[#allocation8 + $0x48] sm:$0xff]
    %v5514 = vld [vmem:[#allocation8 + $0x50] sm:$0xff]
    %v5515 = vld [vmem:[#allocation8 + $0x58] sm:$0xff]
    %v5516 = vld [vmem:[#allocation8 + $0x60] sm:$0xff]
    %v5517 = vld [vmem:[#allocation8 + $0x68] sm:$0xff]
    %v5518 = vld [vmem:[#allocation8 + $0x70] sm:$0xff]
    %v5519 = vld [vmem:[#allocation8 + $0x78] sm:$0xff]
    %v5520 = vld [vmem:[#allocation8 + $0x80] sm:$0xff]
    %v5521 = vld [vmem:[#allocation8 + $0x88] sm:$0xff]
    %v5522 = vld [vmem:[#allocation8 + $0x90] sm:$0xff]
    %v5523 = vld [vmem:[#allocation8 + $0x98] sm:$0xff]
    %v5524 = vld [vmem:[#allocation8 + $0xa0] sm:$0xff]
    %v5525 = vld [vmem:[#allocation8 + $0xa8] sm:$0xff]
    %v5526 = vld [vmem:[#allocation8 + $0xb0] sm:$0xff]
    %v5527 = vld [vmem:[#allocation8 + $0xb8] sm:$0xff]
    %v5528 = vld [vmem:[#allocation8 + $0xc0] sm:$0xff]
    %v5529 = vld [vmem:[#allocation8 + $0xc8] sm:$0xff]
    %v5530 = vld [vmem:[#allocation8 + $0xd0] sm:$0xff]
    %v5531 = vld [vmem:[#allocation8 + $0xd8] sm:$0xff]
    %v5532 = vld [vmem:[#allocation8 + $0xe0] sm:$0xff]
    %v5533 = vld [vmem:[#allocation8 + $0xe8] sm:$0xff]
    %v5534 = vld [vmem:[#allocation8 + $0xf0] sm:$0xff]
    %v5535 = vld [vmem:[#allocation8 + $0xf8] sm:$0xff]
    %v5568 = vunpack.c.l.b16 %v5504
    %v5569 = vunpack.c.h.b16 %v5504
    %v5570 = vunpack.c.l.b16 %v5505
    %v5571 = vunpack.c.h.b16 %v5505
    %v5572 = vunpack.c.l.b16 %v5506
    %v5573 = vunpack.c.h.b16 %v5506
    %v5574 = vunpack.c.l.b16 %v5507
    %v5575 = vunpack.c.h.b16 %v5507
    %v5576 = vunpack.c.l.b16 %v5508
    %v5577 = vunpack.c.h.b16 %v5508
    %v5578 = vunpack.c.l.b16 %v5509
    %v5579 = vunpack.c.h.b16 %v5509
    %v5580 = vunpack.c.l.b16 %v5510
    %v5581 = vunpack.c.h.b16 %v5510
    %v5582 = vunpack.c.l.b16 %v5511
    %v5583 = vunpack.c.h.b16 %v5511
    %v5584 = vunpack.c.l.b16 %v5512
    %v5585 = vunpack.c.h.b16 %v5512
    %v5586 = vunpack.c.l.b16 %v5513
    %v5587 = vunpack.c.h.b16 %v5513
    %v5588 = vunpack.c.l.b16 %v5514
    %v5589 = vunpack.c.h.b16 %v5514
    %v5590 = vunpack.c.l.b16 %v5515
    %v5591 = vunpack.c.h.b16 %v5515
    %v5592 = vunpack.c.l.b16 %v5516
    %v5593 = vunpack.c.h.b16 %v5516
    %v5594 = vunpack.c.l.b16 %v5517
    %v5595 = vunpack.c.h.b16 %v5517
    %v5596 = vunpack.c.l.b16 %v5518
    %v5597 = vunpack.c.h.b16 %v5518
    %v5598 = vunpack.c.l.b16 %v5519
    %v5599 = vunpack.c.h.b16 %v5519
    %v5600 = vunpack.c.l.b16 %v5520
    %v5601 = vunpack.c.h.b16 %v5520
    %v5602 = vunpack.c.l.b16 %v5521
    %v5603 = vunpack.c.h.b16 %v5521
    %v5604 = vunpack.c.l.b16 %v5522
    %v5605 = vunpack.c.h.b16 %v5522
    %v5606 = vunpack.c.l.b16 %v5523
    %v5607 = vunpack.c.h.b16 %v5523
    %v5608 = vunpack.c.l.b16 %v5524
    %v5609 = vunpack.c.h.b16 %v5524
    %v5610 = vunpack.c.l.b16 %v5525
    %v5611 = vunpack.c.h.b16 %v5525
    %v5612 = vunpack.c.l.b16 %v5526
    %v5613 = vunpack.c.h.b16 %v5526
    %v5614 = vunpack.c.l.b16 %v5527
    %v5615 = vunpack.c.h.b16 %v5527
    %v5616 = vunpack.c.l.b16 %v5528
    %v5617 = vunpack.c.h.b16 %v5528
    %v5618 = vunpack.c.l.b16 %v5529
    %v5619 = vunpack.c.h.b16 %v5529
    %v5620 = vunpack.c.l.b16 %v5530
    %v5621 = vunpack.c.h.b16 %v5530
    %v5622 = vunpack.c.l.b16 %v5531
    %v5623 = vunpack.c.h.b16 %v5531
    %v5624 = vunpack.c.l.b16 %v5532
    %v5625 = vunpack.c.h.b16 %v5532
    %v5626 = vunpack.c.l.b16 %v5533
    %v5627 = vunpack.c.h.b16 %v5533
    %v5628 = vunpack.c.l.b16 %v5534
    %v5629 = vunpack.c.h.b16 %v5534
    %v5630 = vunpack.c.l.b16 %v5535
    %v5631 = vunpack.c.h.b16 %v5535
    %v5632 = vpack.c.b16 %v5572, %v5568
    %v5633 = vpack.c.b16 %v5573, %v5569
    %v5634 = vpack.c.b16 %v5574, %v5570
    %v5635 = vpack.c.b16 %v5575, %v5571
    %v5636 = vpack.c.b16 %v5580, %v5576
    %v5637 = vpack.c.b16 %v5581, %v5577
    %v5638 = vpack.c.b16 %v5582, %v5578
    %v5639 = vpack.c.b16 %v5583, %v5579
    %v5640 = vpack.c.b16 %v5588, %v5584
    %v5641 = vpack.c.b16 %v5589, %v5585
    %v5642 = vpack.c.b16 %v5590, %v5586
    %v5643 = vpack.c.b16 %v5591, %v5587
    %v5644 = vpack.c.b16 %v5596, %v5592
    %v5645 = vpack.c.b16 %v5597, %v5593
    %v5646 = vpack.c.b16 %v5598, %v5594
    %v5647 = vpack.c.b16 %v5599, %v5595
    %v5648 = vpack.c.b16 %v5604, %v5600
    %v5649 = vpack.c.b16 %v5605, %v5601
    %v5650 = vpack.c.b16 %v5606, %v5602
    %v5651 = vpack.c.b16 %v5607, %v5603
    %v5652 = vpack.c.b16 %v5612, %v5608
    %v5653 = vpack.c.b16 %v5613, %v5609
    %v5654 = vpack.c.b16 %v5614, %v5610
    %v5655 = vpack.c.b16 %v5615, %v5611
    %v5656 = vpack.c.b16 %v5620, %v5616
    %v5657 = vpack.c.b16 %v5621, %v5617
    %v5658 = vpack.c.b16 %v5622, %v5618
    %v5659 = vpack.c.b16 %v5623, %v5619
    %v5660 = vpack.c.b16 %v5628, %v5624
    %v5661 = vpack.c.b16 %v5629, %v5625
    %v5662 = vpack.c.b16 %v5630, %v5626
    %v5663 = vpack.c.b16 %v5631, %v5627
    %5696 = vmatprep.subr.bf16.mxu0 %v5633
    %5697 = vmatpush1.bf16.msra.mxu0 %v5632
    %5698 = vmatprep.subr.bf16.mxu0 %v5637
    %5699 = vmatpush1.bf16.msra.mxu0 %v5636
    %5700 = vmatprep.subr.bf16.mxu0 %v5641
    %5701 = vmatpush1.bf16.msra.mxu0 %v5640
    %5702 = vmatprep.subr.bf16.mxu0 %v5645
    %5703 = vmatpush1.bf16.msra.mxu0 %v5644
    %5704 = vmatprep.subr.bf16.mxu0 %v5649
    %5705 = vmatpush1.bf16.msra.mxu0 %v5648
    %5706 = vmatprep.subr.bf16.mxu0 %v5653
    %5707 = vmatpush1.bf16.msra.mxu0 %v5652
    %5708 = vmatprep.subr.bf16.mxu0 %v5657
    %5709 = vmatpush1.bf16.msra.mxu0 %v5656
    %5710 = vmatprep.subr.bf16.mxu0 %v5661
    %5711 = vmatpush1.bf16.msra.mxu0 %v5660
    %5712 = vmatprep.subr.bf16.mxu0 0
    %5713 = vmatpush1.bf16.msra.mxu0 0
    %5714 = vmatprep.subr.bf16.mxu0 0
    %5715 = vmatpush1.bf16.msra.mxu0 0
    %5716 = vmatprep.subr.bf16.mxu0 0
    %5717 = vmatpush1.bf16.msra.mxu0 0
    %5718 = vmatprep.subr.bf16.mxu0 0
    %5719 = vmatpush1.bf16.msra.mxu0 0
    %5720 = vmatprep.subr.bf16.mxu0 0
    %5721 = vmatpush1.bf16.msra.mxu0 0
    %5722 = vmatprep.subr.bf16.mxu0 0
    %5723 = vmatpush1.bf16.msra.mxu0 0
    %5724 = vmatprep.subr.bf16.mxu0 0
    %5725 = vmatpush1.bf16.msra.mxu0 0
    %5726 = vmatprep.subr.bf16.mxu0 0
    %5727 = vmatpush1.bf16.msra.mxu0 0
    %5728 = vmatprep.mubr.bf16.mxu0 0
    %5729 = vmatmul.mubr.bf16.gmra.mrb[0].mxu0 %v5503
    %v5730 = vpop.f32.mrb[0].mxu0
    %v5731 = vadd.f32 0.0, %v5730
    %v5732 = vpop.f32.mrb[0].mxu0
    %v5733 = vadd.f32 0.0, %v5732
    %v5734 = vpop.f32.mrb[0].mxu0
    %v5735 = vpop.f32.mrb[0].mxu0
    %5736 = vdwg.mxu0
    %5737 = vmatprep.subr.bf16.mxu0 %v5635
    %5738 = vmatpush1.bf16.msra.mxu0 %v5634
    %5739 = vmatprep.subr.bf16.mxu0 %v5639
    %5740 = vmatpush1.bf16.msra.mxu0 %v5638
    %5741 = vmatprep.subr.bf16.mxu0 %v5643
    %5742 = vmatpush1.bf16.msra.mxu0 %v5642
    %5743 = vmatprep.subr.bf16.mxu0 %v5647
    %5744 = vmatpush1.bf16.msra.mxu0 %v5646
    %5745 = vmatprep.subr.bf16.mxu0 %v5651
    %5746 = vmatpush1.bf16.msra.mxu0 %v5650
    %5747 = vmatprep.subr.bf16.mxu0 %v5655
    %5748 = vmatpush1.bf16.msra.mxu0 %v5654
    %5749 = vmatprep.subr.bf16.mxu0 %v5659
    %5750 = vmatpush1.bf16.msra.mxu0 %v5658
    %5751 = vmatprep.subr.bf16.mxu0 %v5663
    %5752 = vmatpush1.bf16.msra.mxu0 %v5662
    %5753 = vmatprep.subr.bf16.mxu0 0
    %5754 = vmatpush1.bf16.msra.mxu0 0
    %5755 = vmatprep.subr.bf16.mxu0 0
    %5756 = vmatpush1.bf16.msra.mxu0 0
    %5757 = vmatprep.subr.bf16.mxu0 0
    %5758 = vmatpush1.bf16.msra.mxu0 0
    %5759 = vmatprep.subr.bf16.mxu0 0
    %5760 = vmatpush1.bf16.msra.mxu0 0
    %5761 = vmatprep.subr.bf16.mxu0 0
    %5762 = vmatpush1.bf16.msra.mxu0 0
    %5763 = vmatprep.subr.bf16.mxu0 0
    %5764 = vmatpush1.bf16.msra.mxu0 0
    %5765 = vmatprep.subr.bf16.mxu0 0
    %5766 = vmatpush1.bf16.msra.mxu0 0
    %5767 = vmatprep.subr.bf16.mxu0 0
    %5768 = vmatpush1.bf16.msra.mxu0 0
    %5769 = vmatprep.mubr.bf16.mxu0 0
    %5770 = vmatmul.mubr.bf16.gmra.mrb[0].mxu0 %v5503
    %v5771 = vpop.f32.mrb[0].mxu0
    %v5772 = vadd.f32 0.0, %v5771
    %v5773 = vpop.f32.mrb[0].mxu0
    %v5774 = vadd.f32 0.0, %v5773
    %v5775 = vpop.f32.mrb[0].mxu0
    %v5776 = vpop.f32.mrb[0].mxu0
    %5777 = vdwg.mxu0
    %v5782 = vcombine.low %v5731, %v5733
    %v5783 = vcombine.low %v5772, %v5774
    %v5785 = vunpack.c.l.s4 1983009808
    %v5786 = vunpack.c.0.s8 %v5785
    %v5787 = vlaneseq
    %v5788 = vshrl.u32 %v5787, 7
    %v5789 = vsub.s32 %v5786, %v5788
    %v5790 = vrot.slane %v5782, %v5789
    %v5792 = vunpack.c.l.s4 1983009808
    %v5793 = vunpack.c.0.s8 %v5792
    %v5794 = vlaneseq
    %v5795 = vshrl.u32 %v5794, 7
    %v5796 = vsub.s32 %v5793, %v5795
    %v5797 = vrot.slane %v5783, %v5796
    %v5798 = vcombine.low %v5790, %v5797
    %v5800 = vadd.f32 %v5502, %v5798
    %v5801 = vld [vmem:[#allocation3] sm:$0xff]
    %v5802 = vpack.c.bf16 %v5500, %v5500
    %v5803 = vld [vmem:[%s932] sm:$0xff]
    %v5804 = vld [vmem:[%s932 + $0x8] sm:$0xff]
    %v5805 = vld [vmem:[%s932 + $0x10] sm:$0xff]
    %v5806 = vld [vmem:[%s932 + $0x18] sm:$0xff]
    %v5807 = vld [vmem:[%s932 + $0x20] sm:$0xff]
    %v5808 = vld [vmem:[%s932 + $0x28] sm:$0xff]
    %v5809 = vld [vmem:[%s932 + $0x30] sm:$0xff]
    %v5810 = vld [vmem:[%s932 + $0x38] sm:$0xff]
    %v5811 = vld [vmem:[%s932 + $0x40] sm:$0xff]
    %v5812 = vld [vmem:[%s932 + $0x48] sm:$0xff]
    %v5813 = vld [vmem:[%s932 + $0x50] sm:$0xff]
    %v5814 = vld [vmem:[%s932 + $0x58] sm:$0xff]
    %v5815 = vld [vmem:[%s932 + $0x60] sm:$0xff]
    %v5816 = vld [vmem:[%s932 + $0x68] sm:$0xff]
    %v5817 = vld [vmem:[%s932 + $0x70] sm:$0xff]
    %v5818 = vld [vmem:[%s932 + $0x78] sm:$0xff]
    %v5819 = vld [vmem:[%s932 + $0x80] sm:$0xff]
    %v5820 = vld [vmem:[%s932 + $0x88] sm:$0xff]
    %v5821 = vld [vmem:[%s932 + $0x90] sm:$0xff]
    %v5822 = vld [vmem:[%s932 + $0x98] sm:$0xff]
    %v5823 = vld [vmem:[%s932 + $0xa0] sm:$0xff]
    %v5824 = vld [vmem:[%s932 + $0xa8] sm:$0xff]
    %v5825 = vld [vmem:[%s932 + $0xb0] sm:$0xff]
    %v5826 = vld [vmem:[%s932 + $0xb8] sm:$0xff]
    %v5827 = vld [vmem:[%s932 + $0xc0] sm:$0xff]
    %v5828 = vld [vmem:[%s932 + $0xc8] sm:$0xff]
    %v5829 = vld [vmem:[%s932 + $0xd0] sm:$0xff]
    %v5830 = vld [vmem:[%s932 + $0xd8] sm:$0xff]
    %v5831 = vld [vmem:[%s932 + $0xe0] sm:$0xff]
    %v5832 = vld [vmem:[%s932 + $0xe8] sm:$0xff]
    %v5833 = vld [vmem:[%s932 + $0xf0] sm:$0xff]
    %v5834 = vld [vmem:[%s932 + $0xf8] sm:$0xff]
    %v5867 = vunpack.c.l.b16 %v5803
    %v5868 = vunpack.c.h.b16 %v5803
    %v5869 = vunpack.c.l.b16 %v5804
    %v5870 = vunpack.c.h.b16 %v5804
    %v5871 = vunpack.c.l.b16 %v5805
    %v5872 = vunpack.c.h.b16 %v5805
    %v5873 = vunpack.c.l.b16 %v5806
    %v5874 = vunpack.c.h.b16 %v5806
    %v5875 = vunpack.c.l.b16 %v5807
    %v5876 = vunpack.c.h.b16 %v5807
    %v5877 = vunpack.c.l.b16 %v5808
    %v5878 = vunpack.c.h.b16 %v5808
    %v5879 = vunpack.c.l.b16 %v5809
    %v5880 = vunpack.c.h.b16 %v5809
    %v5881 = vunpack.c.l.b16 %v5810
    %v5882 = vunpack.c.h.b16 %v5810
    %v5883 = vunpack.c.l.b16 %v5811
    %v5884 = vunpack.c.h.b16 %v5811
    %v5885 = vunpack.c.l.b16 %v5812
    %v5886 = vunpack.c.h.b16 %v5812
    %v5887 = vunpack.c.l.b16 %v5813
    %v5888 = vunpack.c.h.b16 %v5813
    %v5889 = vunpack.c.l.b16 %v5814
    %v5890 = vunpack.c.h.b16 %v5814
    %v5891 = vunpack.c.l.b16 %v5815
    %v5892 = vunpack.c.h.b16 %v5815
    %v5893 = vunpack.c.l.b16 %v5816
    %v5894 = vunpack.c.h.b16 %v5816
    %v5895 = vunpack.c.l.b16 %v5817
    %v5896 = vunpack.c.h.b16 %v5817
    %v5897 = vunpack.c.l.b16 %v5818
    %v5898 = vunpack.c.h.b16 %v5818
    %v5899 = vunpack.c.l.b16 %v5819
    %v5900 = vunpack.c.h.b16 %v5819
    %v5901 = vunpack.c.l.b16 %v5820
    %v5902 = vunpack.c.h.b16 %v5820
    %v5903 = vunpack.c.l.b16 %v5821
    %v5904 = vunpack.c.h.b16 %v5821
    %v5905 = vunpack.c.l.b16 %v5822
    %v5906 = vunpack.c.h.b16 %v5822
    %v5907 = vunpack.c.l.b16 %v5823
    %v5908 = vunpack.c.h.b16 %v5823
    %v5909 = vunpack.c.l.b16 %v5824
    %v5910 = vunpack.c.h.b16 %v5824
    %v5911 = vunpack.c.l.b16 %v5825
    %v5912 = vunpack.c.h.b16 %v5825
    %v5913 = vunpack.c.l.b16 %v5826
    %v5914 = vunpack.c.h.b16 %v5826
    %v5915 = vunpack.c.l.b16 %v5827
    %v5916 = vunpack.c.h.b16 %v5827
    %v5917 = vunpack.c.l.b16 %v5828
    %v5918 = vunpack.c.h.b16 %v5828
    %v5919 = vunpack.c.l.b16 %v5829
    %v5920 = vunpack.c.h.b16 %v5829
    %v5921 = vunpack.c.l.b16 %v5830
    %v5922 = vunpack.c.h.b16 %v5830
    %v5923 = vunpack.c.l.b16 %v5831
    %v5924 = vunpack.c.h.b16 %v5831
    %v5925 = vunpack.c.l.b16 %v5832
    %v5926 = vunpack.c.h.b16 %v5832
    %v5927 = vunpack.c.l.b16 %v5833
    %v5928 = vunpack.c.h.b16 %v5833
    %v5929 = vunpack.c.l.b16 %v5834
    %v5930 = vunpack.c.h.b16 %v5834
    %v5931 = vpack.c.b16 %v5871, %v5867
    %v5932 = vpack.c.b16 %v5872, %v5868
    %v5933 = vpack.c.b16 %v5873, %v5869
    %v5934 = vpack.c.b16 %v5874, %v5870
    %v5935 = vpack.c.b16 %v5879, %v5875
    %v5936 = vpack.c.b16 %v5880, %v5876
    %v5937 = vpack.c.b16 %v5881, %v5877
    %v5938 = vpack.c.b16 %v5882, %v5878
    %v5939 = vpack.c.b16 %v5887, %v5883
    %v5940 = vpack.c.b16 %v5888, %v5884
    %v5941 = vpack.c.b16 %v5889, %v5885
    %v5942 = vpack.c.b16 %v5890, %v5886
    %v5943 = vpack.c.b16 %v5895, %v5891
    %v5944 = vpack.c.b16 %v5896, %v5892
    %v5945 = vpack.c.b16 %v5897, %v5893
    %v5946 = vpack.c.b16 %v5898, %v5894
    %v5947 = vpack.c.b16 %v5903, %v5899
    %v5948 = vpack.c.b16 %v5904, %v5900
    %v5949 = vpack.c.b16 %v5905, %v5901
    %v5950 = vpack.c.b16 %v5906, %v5902
    %v5951 = vpack.c.b16 %v5911, %v5907
    %v5952 = vpack.c.b16 %v5912, %v5908
    %v5953 = vpack.c.b16 %v5913, %v5909
    %v5954 = vpack.c.b16 %v5914, %v5910
    %v5955 = vpack.c.b16 %v5919, %v5915
    %v5956 = vpack.c.b16 %v5920, %v5916
    %v5957 = vpack.c.b16 %v5921, %v5917
    %v5958 = vpack.c.b16 %v5922, %v5918
    %v5959 = vpack.c.b16 %v5927, %v5923
    %v5960 = vpack.c.b16 %v5928, %v5924
    %v5961 = vpack.c.b16 %v5929, %v5925
    %v5962 = vpack.c.b16 %v5930, %v5926
    %5995 = vmatprep.subr.bf16.mxu0 %v5932
    %5996 = vmatpush1.bf16.msra.mxu0 %v5931
    %5997 = vmatprep.subr.bf16.mxu0 %v5936
    %5998 = vmatpush1.bf16.msra.mxu0 %v5935
    %5999 = vmatprep.subr.bf16.mxu0 %v5940
    %6000 = vmatpush1.bf16.msra.mxu0 %v5939
    %6001 = vmatprep.subr.bf16.mxu0 %v5944
    %6002 = vmatpush1.bf16.msra.mxu0 %v5943
    %6003 = vmatprep.subr.bf16.mxu0 %v5948
    %6004 = vmatpush1.bf16.msra.mxu0 %v5947
    %6005 = vmatprep.subr.bf16.mxu0 %v5952
    %6006 = vmatpush1.bf16.msra.mxu0 %v5951
    %6007 = vmatprep.subr.bf16.mxu0 %v5956
    %6008 = vmatpush1.bf16.msra.mxu0 %v5955
    %6009 = vmatprep.subr.bf16.mxu0 %v5960
    %6010 = vmatpush1.bf16.msra.mxu0 %v5959
    %6011 = vmatprep.subr.bf16.mxu0 0
    %6012 = vmatpush1.bf16.msra.mxu0 0
    %6013 = vmatprep.subr.bf16.mxu0 0
    %6014 = vmatpush1.bf16.msra.mxu0 0
    %6015 = vmatprep.subr.bf16.mxu0 0
    %6016 = vmatpush1.bf16.msra.mxu0 0
    %6017 = vmatprep.subr.bf16.mxu0 0
    %6018 = vmatpush1.bf16.msra.mxu0 0
    %6019 = vmatprep.subr.bf16.mxu0 0
    %6020 = vmatpush1.bf16.msra.mxu0 0
    %6021 = vmatprep.subr.bf16.mxu0 0
    %6022 = vmatpush1.bf16.msra.mxu0 0
    %6023 = vmatprep.subr.bf16.mxu0 0
    %6024 = vmatpush1.bf16.msra.mxu0 0
    %6025 = vmatprep.subr.bf16.mxu0 0
    %6026 = vmatpush1.bf16.msra.mxu0 0
    %6027 = vmatprep.mubr.bf16.mxu0 0
    %6028 = vmatmul.mubr.bf16.gmra.mrb[0].mxu0 %v5802
    %v6029 = vpop.f32.mrb[0].mxu0
    %v6030 = vadd.f32 0.0, %v6029
    %v6031 = vpop.f32.mrb[0].mxu0
    %v6032 = vadd.f32 0.0, %v6031
    %v6033 = vpop.f32.mrb[0].mxu0
    %v6034 = vpop.f32.mrb[0].mxu0
    %6035 = vdwg.mxu0
    %6036 = vmatprep.subr.bf16.mxu0 %v5934
    %6037 = vmatpush1.bf16.msra.mxu0 %v5933
    %6038 = vmatprep.subr.bf16.mxu0 %v5938
    %6039 = vmatpush1.bf16.msra.mxu0 %v5937
    %6040 = vmatprep.subr.bf16.mxu0 %v5942
    %6041 = vmatpush1.bf16.msra.mxu0 %v5941
    %6042 = vmatprep.subr.bf16.mxu0 %v5946
    %6043 = vmatpush1.bf16.msra.mxu0 %v5945
    %6044 = vmatprep.subr.bf16.mxu0 %v5950
    %6045 = vmatpush1.bf16.msra.mxu0 %v5949
    %6046 = vmatprep.subr.bf16.mxu0 %v5954
    %6047 = vmatpush1.bf16.msra.mxu0 %v5953
    %6048 = vmatprep.subr.bf16.mxu0 %v5958
    %6049 = vmatpush1.bf16.msra.mxu0 %v5957
    %6050 = vmatprep.subr.bf16.mxu0 %v5962
    %6051 = vmatpush1.bf16.msra.mxu0 %v5961
    %6052 = vmatprep.subr.bf16.mxu0 0
    %6053 = vmatpush1.bf16.msra.mxu0 0
    %6054 = vmatprep.subr.bf16.mxu0 0
    %6055 = vmatpush1.bf16.msra.mxu0 0
    %6056 = vmatprep.subr.bf16.mxu0 0
    %6057 = vmatpush1.bf16.msra.mxu0 0
    %6058 = vmatprep.subr.bf16.mxu0 0
    %6059 = vmatpush1.bf16.msra.mxu0 0
    %6060 = vmatprep.subr.bf16.mxu0 0
    %6061 = vmatpush1.bf16.msra.mxu0 0
    %6062 = vmatprep.subr.bf16.mxu0 0
    %6063 = vmatpush1.bf16.msra.mxu0 0
    %6064 = vmatprep.subr.bf16.mxu0 0
    %6065 = vmatpush1.bf16.msra.mxu0 0
    %6066 = vmatprep.subr.bf16.mxu0 0
    %6067 = vmatpush1.bf16.msra.mxu0 0
    %6068 = vmatprep.mubr.bf16.mxu0 0
    %6069 = vmatmul.mubr.bf16.gmra.mrb[0].mxu0 %v5802
    %v6070 = vpop.f32.mrb[0].mxu0
    %v6071 = vadd.f32 0.0, %v6070
    %v6072 = vpop.f32.mrb[0].mxu0
    %v6073 = vadd.f32 0.0, %v6072
    %v6074 = vpop.f32.mrb[0].mxu0
    %v6075 = vpop.f32.mrb[0].mxu0
    %6076 = vdwg.mxu0
    %v6081 = vcombine.low %v6030, %v6032
    %v6082 = vcombine.low %v6071, %v6073
    %v6084 = vunpack.c.l.s4 1983009808
    %v6085 = vunpack.c.0.s8 %v6084
    %v6086 = vlaneseq
    %v6087 = vshrl.u32 %v6086, 7
    %v6088 = vsub.s32 %v6085, %v6087
    %v6089 = vrot.slane %v6081, %v6088
    %v6091 = vunpack.c.l.s4 1983009808
    %v6092 = vunpack.c.0.s8 %v6091
    %v6093 = vlaneseq
    %v6094 = vshrl.u32 %v6093, 7
    %v6095 = vsub.s32 %v6092, %v6094
    %v6096 = vrot.slane %v6082, %v6095
    %v6097 = vcombine.low %v6089, %v6096
    %v6099 = vadd.f32 %v5801, %v6097
    %v6100 = vxor.u32 %v5800, 2147483648
    %v6101 = vmul.f32 %v6100, 1.442695
    %v6102 = vpow.pop %v6101
    %v6103 = vadd.f32 %v6102, 1.0
    %v6104 = vrcp.pop %v6103
    %v6105 = vmul.f32 1.0, %v6104
    %v6107 = vrot.slane %v5800, 2
    %v6109 = vxor.u32 %v6107, 2147483648
    %v6110 = vmul.f32 %v6109, 1.442695
    %v6111 = vpow.pop %v6110
    %v6112 = vadd.f32 %v6111, 1.0
    %v6113 = vrcp.pop %v6112
    %v6114 = vmul.f32 1.0, %v6113
    %v6115 = vrot.slane %v5800, 4
    %v6117 = vtanh.pop %v6115
    %v6118 = vrot.slane %v5800, 6
    %v6120 = vxor.u32 %v6118, 2147483648
    %v6121 = vmul.f32 %v6120, 1.442695
    %v6122 = vpow.pop %v6121
    %v6123 = vadd.f32 %v6122, 1.0
    %v6124 = vrcp.pop %v6123
    %v6125 = vmul.f32 1.0, %v6124
    %v6126 = vxor.u32 %v6099, 2147483648
    %v6127 = vmul.f32 %v6126, 1.442695
    %v6128 = vpow.pop %v6127
    %v6129 = vadd.f32 %v6128, 1.0
    %v6130 = vrcp.pop %v6129
    %v6131 = vmul.f32 1.0, %v6130
    %v6133 = vrot.slane %v6099, 2
    %v6135 = vxor.u32 %v6133, 2147483648
    %v6136 = vmul.f32 %v6135, 1.442695
    %v6137 = vpow.pop %v6136
    %v6138 = vadd.f32 %v6137, 1.0
    %v6139 = vrcp.pop %v6138
    %v6140 = vmul.f32 1.0, %v6139
    %v6141 = vrot.slane %v6099, 4
    %v6143 = vtanh.pop %v6141
    %v6144 = vrot.slane %v6099, 6
    %v6146 = vxor.u32 %v6144, 2147483648
    %v6147 = vmul.f32 %v6146, 1.442695
    %v6148 = vpow.pop %v6147
    %v6149 = vadd.f32 %v6148, 1.0
    %v6150 = vrcp.pop %v6149
    %v6151 = vmul.f32 1.0, %v6150
    %v6152 = vmul.f32 %v6114, %v5499
    %v6153 = vmul.f32 %v6105, %v6117
    %v6154 = vadd.f32 %v6152, %v6153
    %v6155 = vmul.f32 %v6140, %v5501
    %v6156 = vmul.f32 %v6131, %v6143
    %v6157 = vadd.f32 %v6155, %v6156
    %v6158 = vtanh.pop %v6154
    %v6159 = vmul.f32 %v6125, %v6158
    %v6160 = vtanh.pop %v6157
    %v6161 = vmul.f32 %v6151, %v6160
    %s6162 = sadd.s32 %s624, 7
    %v6163 = vstv %s6162
    %vm6164 = vcmp.lt.s32.totalorder %v6163, %v623
    %v6165 = vstv %s626
    %vm6166 = vcmp.lt.s32.totalorder %v6165, %v623
    %v6167 = vsel %vm6164, 1, 0
    %6168 = vset.pattern.permute.xlu0 0
    %6169 = vperm.xlu0 %6168, %v6167
    %v6170 = vpop.permute.xlu0 %6169
    %vm6171 = vcmp.eq.s32.totalorder %v6170, 1
    %v6172 = vsel %vm6171, %v6154, %v5499
    %6173 = vst [vmem:[#allocation5] sm:$0x3] %v6172
    %v6174 = vsel %vm6171, %v6159, %v5498
    %6175 = vst [vmem:[#allocation4] sm:$0x3] %v6174
    %v6176 = vsel %vm6166, 1, 0
    %6177 = vset.pattern.permute.xlu0 0
    %6178 = vperm.xlu0 %6177, %v6176
    %v6179 = vpop.permute.xlu0 %6178
    %vm6180 = vcmp.eq.s32.totalorder %v6179, 1
    %v6181 = vsel %vm6180, %v6157, %v5501
    %6182 = vst [vmem:[#allocation7] sm:$0x3] %v6181
    %v6183 = vsel %vm6180, %v6161, %v5500
    %6184 = vst [vmem:[#allocation6] sm:$0x3] %v6183
    %v6185 = vsel %vm6171, %v6159, 0.0
    %v6186 = vpack.c.bf16 %v6185, %v6185
    %s6187 = scalar_lea.vmem %s6, 7
    %6188 = vst [vmem:[%s6187] sm:$0x1] %v6186
    %v6189 = vsel %vm6180, %v6161, 0.0
    %v6190 = vpack.c.bf16 %v6189, %v6189
    %6191 = vst [vmem:[%s70] sm:$0x1] %v6190
    %s6192 = ssub.s32 0, 0
    %s6193 = smul.u32 8, %s6192
    %p6194 = scmp.lt.s32.totalorder %s6193, 7
    %s6195 = scalar_select %p6194, %s6193, 7
    %s6196 = scalar_lea.vmem %s7, %s6195
    // Predicated region
    $region34: #{_lstm1_core.2} parent=1 // pred_check
      _
    $region35: #{_lstm1_core.2} parent=1 // pred_check_branch
      %6198 = sbr.rel (0) target = $region37
    $region36: #{_lstm1_core.2} parent=1 // pred_region
      _
    $region37: #{_lstm1_core.2} parent=1 // pred_fallthru
      _
    // Predicated region
    $region38: #{_lstm1_core.2} parent=1 // pred_check
      _
    $region39: #{_lstm1_core.2} parent=1 // pred_check_branch
      %6200 = sbr.rel (0) target = $region41
    $region40: #{_lstm1_core.2} parent=1 // pred_region
      %s6201 = ssub.s32 0, 0
      %s6202 = smul.u32 8, %s6201
    $region41: #{_lstm1_core.2} parent=1 // pred_fallthru
      _
    // Predicated region
    $region42: #{_lstm1_core.2} parent=1 // pred_check
      _
    $region43: #{_lstm1_core.2} parent=1 // pred_check_branch
      %6204 = sbr.rel (0) target = $region45
    $region44: #{_lstm1_core.2} parent=1 // pred_region
      _
    $region45: #{_lstm1_core.2} parent=1 // pred_fallthru
      _
    // Predicated region
    $region46: #{_lstm1_core.2} parent=1 // pred_check
      _
    $region47: #{_lstm1_core.2} parent=1 // pred_check_branch
      %6206 = sbr.rel (0) target = $region49
    $region48: #{_lstm1_core.2} parent=1 // pred_region
      %s6207 = ssub.s32 0, 0
      %s6208 = smul.u32 8, %s6207
      %p6209 = scmp.lt.s32.totalorder %s6208, 7
      %s6210 = scalar_select %p6209, %s6208, 7
      %s6211 = scalar_lea.vmem %s7, %s6210
    $region49: #{_lstm1_core.2} parent=1 // pred_fallthru
      _
    %6212 = vsyncpa [#allocation9], 1

</llo_original>
